<compile_context>
chip_gen: v7x
topology: tpu7x:2x2x1
jax: 0.10.0
libtpu: 0.0.40
codegen_flags: <defaults>
</compile_context>

<pallas_src>
from functools import partial

import jax
import jax.numpy as jnp
from jax.experimental import pallas as pl
from jax.experimental.pallas import tpu as pltpu

_ROW_TILE = 4096                      # row tile for matmul-style kernels


def _round8(v):
    return ((v + 7) // 8) * 8


def _vmem_limit_bytes():
    # ~3/4 of physical VMEM, capped at 96 MiB (v5e/v6e: 96 MiB, v7x: 48 MiB).
    try:
        cap = int(pltpu.get_tpu_info().vmem_capacity_bytes)
    except Exception:
        return 48 * 1024 * 1024
    return int(min(96 * 1024 * 1024, max(32 * 1024 * 1024, (cap * 3) // 4)))


_VMEM_LIMIT = _vmem_limit_bytes()
_COMPILER_PARAMS = pltpu.CompilerParams(
    dimension_semantics=("parallel",),
    vmem_limit_bytes=_VMEM_LIMIT,
)


# ----------------------------------------------------------------------------
# Pallas kernels
# ----------------------------------------------------------------------------
def _mm_bias_act_kernel(x_ref, w_ref, b_ref, o_ref, *, relu):
    """Row tile of (R, Cin) @ (Cin, Cout) + per-channel bias (+ ReLU)."""
    y = jnp.dot(x_ref[...], w_ref[...], preferred_element_type=jnp.float32)
    y = y + b_ref[...]
    if relu:
        y = jnp.maximum(y, 0.0)
    o_ref[...] = y.astype(o_ref.dtype)


def _maxpool3x3_s2_kernel(x_ref, o_ref):
    """3x3 / stride-2 max-pool for one image (phase-decomposed, -inf padded).

    Runs in the input dtype (bf16): max is exact, and the centre tap of every
    window is a valid pixel so -inf padding never reaches the output.
    """
    ho, wo, _ = o_ref.shape
    m = None
    for kh in range(3):
        for kw in range(3):
            phase = (kh % 2) * 2 + (kw % 2)
            tap = x_ref[phase,
                        kh // 2:kh // 2 + ho,
                        kw // 2:kw // 2 + wo, :]
            m = tap if m is None else jnp.maximum(m, tap)
    o_ref[...] = m.astype(o_ref.dtype)


def _fused_unit_s1_kernel(x_ref, w1_ref, b1_ref, wd_ref, bd_ref, w2_ref,
                          b2_ref, s_ref, o_ref, pad_ref, *, w):
    """Fully fused stride-1 ShuffleNetV2 unit for one image.

    x_ref : (H*W, C) unit input (physical layout == reference layout).
    w1_ref: (C, Cb) pw1 weights; rows [0, Cb) are zero -> acts only on the
            "branch" half of the channel split.
    w2_ref: (Cb, C) pw2 weights spread into the ODD output channels.
    s_ref : (C, C) one-hot selector putting input channel k into output
            channel 2k (identity half of concat + groups=2 shuffle); exact
            for bf16 values under f32 accumulation.
    pad_ref: ((off + H*W + tail), Cb) f32 scratch with zero row halos; the 9
            depthwise taps are contiguous slices, borders handled by masks.
    o_ref : (H*W, C) shuffled unit output.
    """
    hw, c = o_ref.shape
    cb = w1_ref.shape[1]
    off = _round8(w + 1)
    tail = _round8(w + 1)

    x = x_ref[...]

    # --- 1x1 conv (+folded BN) + ReLU on the branch half --------------------
    t1 = jnp.dot(x, w1_ref[...], preferred_element_type=jnp.float32)
    t1 = jnp.maximum(t1 + b1_ref[...], 0.0)

    # --- depthwise 3x3 (stride 1, pad 1) + folded BN -------------------------
    # Zero only the halo rows (cheap), every step (megacore-safe), then write
    # the body.
    pad_ref[0:off, :] = jnp.zeros((off, cb), jnp.float32)
    pad_ref[off + hw:off + hw + tail, :] = jnp.zeros((tail, cb), jnp.float32)
    pad_ref[off:off + hw, :] = t1

    # Hoisted left/right border masks (applied once per kw column group).
    col = jax.lax.broadcasted_iota(jnp.int32, (hw, 1), 0) % w
    mask_l = jnp.broadcast_to(col != 0, (hw, cb)).astype(jnp.float32)
    mask_r = jnp.broadcast_to(col != (w - 1), (hw, cb)).astype(jnp.float32)

    acc_l = jnp.zeros((hw, cb), jnp.float32)
    acc_c = jnp.zeros((hw, cb), jnp.float32)
    acc_r = jnp.zeros((hw, cb), jnp.float32)
    for kh in range(3):
        row0 = off + (kh - 1) * w
        acc_l = acc_l + pad_ref[row0 - 1:row0 - 1 + hw, :] * wd_ref[kh, 0, :]
        acc_c = acc_c + pad_ref[row0:row0 + hw, :] * wd_ref[kh, 1, :]
        acc_r = acc_r + pad_ref[row0 + 1:row0 + 1 + hw, :] * wd_ref[kh, 2, :]
    acc = acc_l * mask_l + acc_c + acc_r * mask_r + bd_ref[...]

    # --- pw2 (+folded BN) + ReLU into odd channels, identity into even -------
    branch = jnp.dot(acc.astype(w2_ref.dtype), w2_ref[...],
                     preferred_element_type=jnp.float32)
    branch = jnp.maximum(branch + b2_ref[...], 0.0)      # even cols exactly 0
    ident = jnp.dot(x, s_ref[...], preferred_element_type=jnp.float32)
    o_ref[...] = (branch + ident).astype(o_ref.dtype)


def _dual_dw3x3_s2_kernel(phx_ref, pht_ref, wdx_ref, bdx_ref, wdt_ref,
                          bdt_ref, ox_ref, ot_ref):
    """Both stride-2 depthwise 3x3 convs of a downsample unit for one image.

    phx_ref/pht_ref: (4, Hp/2, Wp/2, C*) 2x2 phase decompositions of the
    zero-padded unit input and of the pw1 output, so every tap is a
    contiguous static slice.  No ReLU (BN folded into weights/bias).
    """
    for ph, wdr, bdr, odr in ((phx_ref, wdx_ref, bdx_ref, ox_ref),
                              (pht_ref, wdt_ref, bdt_ref, ot_ref)):
        ho, wo, cc = odr.shape
        acc = jnp.zeros((ho, wo, cc), jnp.float32)
        for kh in range(3):
            for kw in range(3):
                phase = (kh % 2) * 2 + (kw % 2)
                tap = ph[phase,
                         kh // 2:kh // 2 + ho,
                         kw // 2:kw // 2 + wo, :]
                acc = acc + tap.astype(jnp.float32) * wdr[kh, kw, :]
        acc = acc + bdr[...]
        odr[...] = acc.astype(odr.dtype)


def _dual_mm_shuffle_kernel(xi_ref, xm_ref, wi_ref, bi_ref, wm_ref, bm_ref,
                            o_ref):
    """Fused final 1x1 convs of a downsample unit + concat + channel shuffle.

    wi (identity branch) is column-spread to the EVEN output channels and wm
    (main branch) to the ODD output channels, so the sum of the two ReLU'd
    matmuls is exactly the shuffled concatenation.
    """
    yi = jnp.dot(xi_ref[...], wi_ref[...], preferred_element_type=jnp.float32)
    yi = jnp.maximum(yi + bi_ref[...], 0.0)
    ym = jnp.dot(xm_ref[...], wm_ref[...], preferred_element_type=jnp.float32)
    ym = jnp.maximum(ym + bm_ref[...], 0.0)
    o_ref[...] = (yi + ym).astype(o_ref.dtype)


# ----------------------------------------------------------------------------
# Layer wrappers (XLA glue + pallas_call plumbing)
# ----------------------------------------------------------------------------
def _matmul_bias_act(x2d, w, bias, relu):
    r, cin = x2d.shape
    cout = w.shape[1]
    tr = r if r <= _ROW_TILE else _ROW_TILE
    return pl.pallas_call(
        partial(_mm_bias_act_kernel, relu=relu),
        out_shape=jax.ShapeDtypeStruct((r, cout), x2d.dtype),
        grid=(pl.cdiv(r, tr),),
        in_specs=[
            pl.BlockSpec((tr, cin), lambda i: (i, 0)),
            pl.BlockSpec((cin, cout), lambda i: (0, 0)),
            pl.BlockSpec((1, cout), lambda i: (0, 0)),
        ],
        out_specs=pl.BlockSpec((tr, cout), lambda i: (i, 0)),
        compiler_params=_COMPILER_PARAMS,
    )(x2d, w, bias)


def pointwise_conv(x, w, bias, relu):
    n, h, wd, cin = x.shape
    cout = w.shape[1]
    out = _matmul_bias_act(x.reshape(n * h * wd, cin), w, bias, relu)
    return out.reshape(n, h, wd, cout)


def dense_conv3x3_s2(x, w, bias, relu):
    """3x3 / stride-2 / pad-1 dense conv via im2col (stem only; Cin is tiny)."""
    n, h, wd, cin = x.shape
    cout = w.shape[1]
    ho, wo = (h - 1) // 2 + 1, (wd - 1) // 2 + 1
    xp = jnp.pad(x, ((0, 0), (1, 1), (1, 1), (0, 0)))
    taps = []
    for kh in range(3):
        for kw in range(3):
            taps.append(xp[:, kh:kh + 2 * ho - 1:2, kw:kw + 2 * wo - 1:2, :])
    cols = jnp.concatenate(taps, axis=-1).reshape(n * ho * wo, 9 * cin)
    out = _matmul_bias_act(cols, w, bias, relu)
    return out.reshape(n, ho, wo, cout)


def _phase_split_padded(x, pad_value):
    """Pad H,W by 1, pad to even extents, return the 2x2 phase decomposition
    (N, 4, Hp/2, Wp/2, C) so stride-2 kernels only need contiguous slices."""
    pad_value = jnp.asarray(pad_value, x.dtype)
    xp = jnp.pad(x, ((0, 0), (1, 1), (1, 1), (0, 0)), constant_values=pad_value)
    n, hp, wp, c = xp.shape
    if hp % 2 or wp % 2:
        xp = jnp.pad(xp, ((0, 0), (0, hp % 2), (0, wp % 2), (0, 0)),
                     constant_values=pad_value)
        n, hp, wp, c = xp.shape
    xp = xp.reshape(n, hp // 2, 2, wp // 2, 2, c)
    xp = jnp.transpose(xp, (0, 2, 4, 1, 3, 5))
    return xp.reshape(n, 4, hp // 2, wp // 2, c)


def maxpool3x3_s2(x):
    n, h, w, c = x.shape
    ho, wo = (h - 1) // 2 + 1, (w - 1) // 2 + 1
    ph = _phase_split_padded(x, -jnp.inf)
    hp2, wp2 = ph.shape[2], ph.shape[3]
    return pl.pallas_call(
        _maxpool3x3_s2_kernel,
        out_shape=jax.ShapeDtypeStruct((n, ho, wo, c), x.dtype),
        grid=(n,),
        in_specs=[
            pl.BlockSpec((None, 4, hp2, wp2, c), lambda i: (i, 0, 0, 0, 0)),
        ],
        out_specs=pl.BlockSpec((None, ho, wo, c), lambda i: (i, 0, 0, 0)),
        compiler_params=_COMPILER_PARAMS,
    )(ph)


def fused_unit_s1(x, p):
    """Fully fused non-downsampling ShuffleNetV2 unit (split/concat/shuffle
    folded into the weights; one HBM read + one HBM write per unit)."""
    n, h, w, c = x.shape
    cb = c // 2
    hw = h * w
    off = _round8(w + 1)
    tail = _round8(w + 1)
    out = pl.pallas_call(
        partial(_fused_unit_s1_kernel, w=w),
        out_shape=jax.ShapeDtypeStruct((n, hw, c), x.dtype),
        grid=(n,),
        in_specs=[
            pl.BlockSpec((None, hw, c), lambda i: (i, 0, 0)),
            pl.BlockSpec((c, cb), lambda i: (0, 0)),
            pl.BlockSpec((1, cb), lambda i: (0, 0)),
            pl.BlockSpec((3, 3, cb), lambda i: (0, 0, 0)),
            pl.BlockSpec((1, cb), lambda i: (0, 0)),
            pl.BlockSpec((cb, c), lambda i: (0, 0)),
            pl.BlockSpec((1, c), lambda i: (0, 0)),
            pl.BlockSpec((c, c), lambda i: (0, 0)),
        ],
        out_specs=pl.BlockSpec((None, hw, c), lambda i: (i, 0, 0)),
        scratch_shapes=[pltpu.VMEM((off + hw + tail, cb), jnp.float32)],
        compiler_params=_COMPILER_PARAMS,
    )(x.reshape(n, hw, c), p["pw1_w"], p["pw1_b"], p["dw_w"], p["dw_b"],
      p["pw2_w"], p["pw2_b"], p["sel"])
    return out.reshape(n, h, w, c)


def dual_depthwise3x3_s2(x, t1, wdx, bdx, wdt, bdt):
    """Both stride-2 depthwise branches of a downsample unit in one kernel."""
    n, h, w, cin = x.shape
    cb = t1.shape[-1]
    ho, wo = (h - 1) // 2 + 1, (w - 1) // 2 + 1
    phx = _phase_split_padded(x, 0.0)
    pht = _phase_split_padded(t1, 0.0)
    hx2, wx2 = phx.shape[2], phx.shape[3]
    ht2, wt2 = pht.shape[2], pht.shape[3]
    return pl.pallas_call(
        _dual_dw3x3_s2_kernel,
        out_shape=(jax.ShapeDtypeStruct((n, ho, wo, cin), x.dtype),
                   jax.ShapeDtypeStruct((n, ho, wo, cb), x.dtype)),
        grid=(n,),
        in_specs=[
            pl.BlockSpec((None, 4, hx2, wx2, cin), lambda i: (i, 0, 0, 0, 0)),
            pl.BlockSpec((None, 4, ht2, wt2, cb), lambda i: (i, 0, 0, 0, 0)),
            pl.BlockSpec((3, 3, cin), lambda i: (0, 0, 0)),
            pl.BlockSpec((1, cin), lambda i: (0, 0)),
            pl.BlockSpec((3, 3, cb), lambda i: (0, 0, 0)),
            pl.BlockSpec((1, cb), lambda i: (0, 0)),
        ],
        out_specs=(pl.BlockSpec((None, ho, wo, cin), lambda i: (i, 0, 0, 0)),
                   pl.BlockSpec((None, ho, wo, cb), lambda i: (i, 0, 0, 0))),
        compiler_params=_COMPILER_PARAMS,
    )(phx, pht, wdx, bdx, wdt, bdt)


def dual_pointwise_shuffle(xi, xm, wi, bi, wm, bm, out_c):
    """Fused final 1x1 convs + concat + channel shuffle of a downsample unit."""
    n, ho, wo, cin = xi.shape
    cb = xm.shape[-1]
    r = n * ho * wo
    xi2 = xi.reshape(r, cin)
    xm2 = xm.reshape(r, cb)
    tr = r if r <= _ROW_TILE else _ROW_TILE
    out = pl.pallas_call(
        _dual_mm_shuffle_kernel,
        out_shape=jax.ShapeDtypeStruct((r, out_c), xi.dtype),
        grid=(pl.cdiv(r, tr),),
        in_specs=[
            pl.BlockSpec((tr, cin), lambda i: (i, 0)),
            pl.BlockSpec((tr, cb), lambda i: (i, 0)),
            pl.BlockSpec((cin, out_c), lambda i: (0, 0)),
            pl.BlockSpec((1, out_c), lambda i: (0, 0)),
            pl.BlockSpec((cb, out_c), lambda i: (0, 0)),
            pl.BlockSpec((1, out_c), lambda i: (0, 0)),
        ],
        out_specs=pl.BlockSpec((tr, out_c), lambda i: (i, 0)),
        compiler_params=_COMPILER_PARAMS,
    )(xi2, xm2, wi, bi, wm, bm)
    return out.reshape(n, ho, wo, out_c)


# ----------------------------------------------------------------------------
# Parameter init (deterministic, synthetic; BN folded into conv weights,
# concat + channel-shuffle folded into the final 1x1 weight columns)
# ----------------------------------------------------------------------------
class _KeyGen:
    def __init__(self, key):
        self._key = key

    def __call__(self):
        self._key, sub = jax.random.split(self._key)
        return sub


def _bn_fold(kg, c, eps=1e-5):
    gamma = jax.random.uniform(kg(), (c,), jnp.float32, 0.5, 1.5)
    beta = jax.random.normal(kg(), (c,), jnp.float32) * 0.1
    mean = jax.random.normal(kg(), (c,), jnp.float32) * 0.1
    var = jax.random.uniform(kg(), (c,), jnp.float32, 0.5, 1.5)
    scale = gamma / jnp.sqrt(var + eps)
    bias = beta - mean * scale
    return scale, bias


def _pw_params(kg, cin, cout):
    w = jax.random.normal(kg(), (cin, cout), jnp.float32) * (1.0 / cin ** 0.5)
    scale, bias = _bn_fold(kg, cout)
    return (w * scale[None, :]).astype(jnp.bfloat16), bias[None, :]


def _dense3x3_params(kg, cin, cout):
    w = jax.random.normal(kg(), (3, 3, cin, cout), jnp.float32)
    w = w * (1.0 / (9 * cin) ** 0.5)
    scale, bias = _bn_fold(kg, cout)
    w = (w * scale).reshape(9 * cin, cout)     # rows ordered (kh, kw, cin)
    return w.astype(jnp.bfloat16), bias[None, :]


def _dw3x3_params(kg, c):
    w = jax.random.normal(kg(), (3, 3, c), jnp.float32) * (1.0 / 3.0)
    scale, bias = _bn_fold(kg, c)
    return w * scale, bias[None, :]


def _spread_cols(w, out_c, offset):
    """Scatter columns of `w` into columns offset::2 of a zero (.., out_c)."""
    out = jnp.zeros(w.shape[:-1] + (out_c,), w.dtype)
    return out.at[..., offset::2].set(w)


def _unit_params(kg, in_c, out_c, with_downsample):
    bc = out_c // 2
    p = {"downsample": bool(with_downsample), "out_c": int(out_c)}
    if with_downsample:
        p["ds_dw_w"], p["ds_dw_b"] = _dw3x3_params(kg, in_c)
        ds_pw_w, ds_pw_b = _pw_params(kg, in_c, bc)
        p["pw1_w"], p["pw1_b"] = _pw_params(kg, in_c, bc)
        p["dw_w"], p["dw_b"] = _dw3x3_params(kg, bc)
        pw2_w, pw2_b = _pw_params(kg, bc, bc)
        # identity branch -> even output channels, main branch -> odd channels
        p["ds_pw_w"] = _spread_cols(ds_pw_w, out_c, 0)
        p["ds_pw_b"] = _spread_cols(ds_pw_b, out_c, 0)
        p["pw2_w"] = _spread_cols(pw2_w, out_c, 1)
        p["pw2_b"] = _spread_cols(pw2_b, out_c, 1)
    else:
        # Unit input has out_c channels; branch half is channels [bc, out_c).
        pw1_w, pw1_b = _pw_params(kg, in_c, bc)
        p["pw1_w"] = jnp.zeros((out_c, bc), pw1_w.dtype).at[bc:, :].set(pw1_w)
        p["pw1_b"] = pw1_b
        p["dw_w"], p["dw_b"] = _dw3x3_params(kg, bc)
        pw2_w, pw2_b = _pw_params(kg, bc, bc)
        p["pw2_w"] = _spread_cols(pw2_w, out_c, 1)
        p["pw2_b"] = _spread_cols(pw2_b, out_c, 1)
        sel = jnp.zeros((out_c, out_c), jnp.float32)
        sel = sel.at[jnp.arange(bc), jnp.arange(bc) * 2].set(1.0)
        p["sel"] = sel.astype(jnp.bfloat16)
    return p


def init_params(key, in_channels, base_channels, out_channels,
                stage_channels, stage_blocks, downsamples):
    kg = _KeyGen(key)
    params = {}
    params["stem_w"], params["stem_b"] = _dense3x3_params(kg, in_channels,
                                                          base_channels)
    stages = []
    ic = base_channels
    for oc, nb, ds in zip(stage_channels, stage_blocks, downsamples):
        blocks = [_unit_params(kg, ic, oc, bool(ds))]
        for _ in range(1, nb):
            blocks.append(_unit_params(kg, oc // 2, oc, False))
        stages.append(blocks)
        ic = oc
    params["stages"] = stages
    params["last_w"], params["last_b"] = _pw_params(kg, stage_channels[-1],
                                                    out_channels)
    return params


# ----------------------------------------------------------------------------
# Forward pass (mirrors ShuffleNetV2Backbone.forward)
# ----------------------------------------------------------------------------
def unit_forward(x, p):
    if p["downsample"]:
        # main-branch 1x1 + BN + ReLU (row-tiled matmul)
        t1 = pointwise_conv(x, p["pw1_w"], p["pw1_b"], relu=True)
        # both stride-2 depthwise convs (+ folded BN), fused per image
        idt_dw, main_dw = dual_depthwise3x3_s2(x, t1,
                                               p["ds_dw_w"], p["ds_dw_b"],
                                               p["dw_w"], p["dw_b"])
        # both final 1x1 convs + concat + channel shuffle, fused
        return dual_pointwise_shuffle(idt_dw, main_dw,
                                      p["ds_pw_w"], p["ds_pw_b"],
                                      p["pw2_w"], p["pw2_b"], p["out_c"])
    # non-downsampling unit: fully fused (split/concat/shuffle in the weights)
    return fused_unit_s1(x, p)


def backbone_forward(x_nchw, params):
    # NCHW in / NCHW out; NHWC bf16 internally (channels on lanes).
    x = jnp.transpose(x_nchw, (0, 2, 3, 1)).astype(jnp.bfloat16)
    # first_stem: conv3x3 s2 + BN + ReLU, maxpool3x3 s2
    x = dense_conv3x3_s2(x, params["stem_w"], params["stem_b"], relu=True)
    x = maxpool3x3_s2(x)
    # stage1..stageN
    for stage in params["stages"]:
        for blk in stage:
            x = unit_forward(x, blk)
    # last_stem: conv1x1 + BN + ReLU
    x = pointwise_conv(x, params["last_w"], params["last_b"], relu=True)
    return jnp.transpose(x, (0, 3, 1, 2)).astype(jnp.float32)


# ----------------------------------------------------------------------------
if __name__ == "__main__":
    # Scaled-down ShuffleNetV2 config (same topology as the default
    # (116, 232, 464)/(4, 8, 4) backbone, smaller channels/blocks for a quick
    # deterministic test run).
    IN_CHANNELS = 3
    BASE_CHANNELS = 8
    OUT_CHANNELS = 64
    STAGE_CHANNELS = (16, 32, 64)
    STAGE_BLOCKS = (2, 2, 2)
    DOWNSAMPLES = (1, 1, 1)

    root = jax.random.PRNGKey(0)
    k_x, k_p = jax.random.split(root)

    x = jax.random.normal(k_x, (2, IN_CHANNELS, 32, 32), jnp.float32)  # NCHW
    params = init_params(k_p, IN_CHANNELS, BASE_CHANNELS, OUT_CHANNELS,
                         STAGE_CHANNELS, STAGE_BLOCKS, DOWNSAMPLES)

    fwd = jax.jit(lambda inp: backbone_forward(inp, params))
    y = jax.block_until_ready(fwd(x))
    assert y.shape == (2, OUT_CHANNELS, 1, 1), y.shape
    assert bool(jnp.all(jnp.isfinite(y)))
    print("KERNEL_OK")
</pallas_src>

<mosaic_0001>
module attributes {stable_mosaic.version = 11 : i64} {
  func.func @_mm_bias_act_kernel(%arg0: i32, %arg1: memref<512x27xbf16, #tpu.memory_space<vmem>>, %arg2: memref<27x8xbf16, #tpu.memory_space<vmem>>, %arg3: memref<1x8xf32, #tpu.memory_space<vmem>>, %arg4: memref<512x8xbf16, #tpu.memory_space<vmem>>) attributes {dimension_semantics = [#tpu.dimension_semantics<parallel>], iteration_bounds = array<i64: 1>, scalar_prefetch = 0 : i64, scratch_operands = 0 : i64, tpu.core_type = #tpu.core_type<tc>, window_params = [{transform_indices = @transform_0, window_bounds = array<i64: 512, 27>}, {pipeline_mode = #tpu.pipeline_mode<synchronous>, transform_indices = @transform_1, window_bounds = array<i64: 27, 8>}, {pipeline_mode = #tpu.pipeline_mode<synchronous>, transform_indices = @transform_2, window_bounds = array<i64: 1, 8>}, {transform_indices = @transform_3, window_bounds = array<i64: 512, 8>}]} {
    %c0 = arith.constant 0 : index
    %c0_0 = arith.constant 0 : index
    %0 = vector.load %arg1[%c0, %c0_0] : memref<512x27xbf16, #tpu.memory_space<vmem>>, vector<512x27xbf16>
    %c0_1 = arith.constant 0 : index
    %c0_2 = arith.constant 0 : index
    %1 = vector.load %arg2[%c0_1, %c0_2] : memref<27x8xbf16, #tpu.memory_space<vmem>>, vector<27x8xbf16>
    %cst = arith.constant dense<0.000000e+00> : vector<512x8xf32>
    %2 = tpu.matmul %0, %1, %cst {dimension_numbers = #tpu.dot_dimension_numbers<[1], [0], [0], [1], [0, 0, 1, 1], [], []>} : vector<512x27xbf16>, vector<27x8xbf16>, vector<512x8xf32> -> vector<512x8xf32>
    %c0_3 = arith.constant 0 : index
    %c0_4 = arith.constant 0 : index
    %3 = vector.load %arg3[%c0_3, %c0_4] : memref<1x8xf32, #tpu.memory_space<vmem>>, vector<1x8xf32>
    %4 = vector.broadcast %3 : vector<1x8xf32> to vector<512x8xf32>
    %5 = arith.addf %2, %4 : vector<512x8xf32>
    %cst_5 = arith.constant 0.000000e+00 : f32
    %6 = vector.broadcast %cst_5 : f32 to vector<512x8xf32>
    %7 = arith.maximumf %5, %6 : vector<512x8xf32>
    %8 = arith.truncf %7 : vector<512x8xf32> to vector<512x8xbf16>
    %c0_6 = arith.constant 0 : index
    %c0_7 = arith.constant 0 : index
    %9 = vector.load %arg4[%c0_6, %c0_7] : memref<512x8xbf16, #tpu.memory_space<vmem>>, vector<512x8xbf16>
    tpu.vector_store %arg4[%c0_6, %c0_7], %8 {strides = array<i32>} : memref<512x8xbf16, #tpu.memory_space<vmem>>, vector<512x8xbf16>,
    return
  }
  func.func @transform_0(%arg0: i32) -> (i32, i32) {
    %c0_i32 = arith.constant 0 : i32
    %c0_i32_0 = arith.constant 0 : i32
    return %arg0, %c0_i32 : i32, i32
  }
  func.func @transform_1(%arg0: i32) -> (i32, i32) {
    %c0_i32 = arith.constant 0 : i32
    %c0_i32_0 = arith.constant 0 : i32
    %c0_i32_1 = arith.constant 0 : i32
    return %c0_i32, %c0_i32_0 : i32, i32
  }
  func.func @transform_2(%arg0: i32) -> (i32, i32) {
    %c0_i32 = arith.constant 0 : i32
    %c0_i32_0 = arith.constant 0 : i32
    %c0_i32_1 = arith.constant 0 : i32
    return %c0_i32, %c0_i32_0 : i32, i32
  }
  func.func @transform_3(%arg0: i32) -> (i32, i32) {
    %c0_i32 = arith.constant 0 : i32
    %c0_i32_0 = arith.constant 0 : i32
    return %arg0, %c0_i32 : i32, i32
  }
}

module attributes {stable_mosaic.version = 11 : i64} {
  func.func @_maxpool3x3_s2_kernel(%arg0: i32, %arg1: memref<1x4x9x9x8xbf16, #tpu.memory_space<vmem>>, %arg2: memref<1x8x8x8xbf16, #tpu.memory_space<vmem>>) attributes {dimension_semantics = [#tpu.dimension_semantics<parallel>], iteration_bounds = array<i64: 2>, scalar_prefetch = 0 : i64, scratch_operands = 0 : i64, tpu.core_type = #tpu.core_type<tc>, window_params = [{transform_indices = @transform_0, window_bounds = array<i64: 1, 4, 9, 9, 8>}, {transform_indices = @transform_1, window_bounds = array<i64: 1, 8, 8, 8>}]} {
    %c0 = arith.constant 0 : index
    %c0_0 = arith.constant 0 : index
    %c0_1 = arith.constant 0 : index
    %c0_2 = arith.constant 0 : index
    %c0_3 = arith.constant 0 : index
    %0 = vector.load %arg1[%c0, %c0_0, %c0_1, %c0_2, %c0_3] : memref<1x4x9x9x8xbf16, #tpu.memory_space<vmem>>, vector<1x1x8x8x8xbf16>
    %1 = vector.shape_cast %0 : vector<1x1x8x8x8xbf16> to vector<8x8x8xbf16>
    %c0_4 = arith.constant 0 : index
    %c1 = arith.constant 1 : index
    %c0_5 = arith.constant 0 : index
    %c0_6 = arith.constant 0 : index
    %c0_7 = arith.constant 0 : index
    %2 = vector.load %arg1[%c0_4, %c1, %c0_5, %c0_6, %c0_7] : memref<1x4x9x9x8xbf16, #tpu.memory_space<vmem>>, vector<1x1x8x8x8xbf16>
    %3 = vector.shape_cast %2 : vector<1x1x8x8x8xbf16> to vector<8x8x8xbf16>
    %4 = arith.maximumf %1, %3 : vector<8x8x8xbf16>
    %c0_8 = arith.constant 0 : index
    %c0_9 = arith.constant 0 : index
    %c0_10 = arith.constant 0 : index
    %c1_11 = arith.constant 1 : index
    %c0_12 = arith.constant 0 : index
    %5 = vector.load %arg1[%c0_8, %c0_9, %c0_10, %c1_11, %c0_12] : memref<1x4x9x9x8xbf16, #tpu.memory_space<vmem>>, vector<1x1x8x8x8xbf16>
    %6 = vector.shape_cast %5 : vector<1x1x8x8x8xbf16> to vector<8x8x8xbf16>
    %7 = arith.maximumf %4, %6 : vector<8x8x8xbf16>
    %c0_13 = arith.constant 0 : index
    %c2 = arith.constant 2 : index
    %c0_14 = arith.constant 0 : index
    %c0_15 = arith.constant 0 : index
    %c0_16 = arith.constant 0 : index
    %8 = vector.load %arg1[%c0_13, %c2, %c0_14, %c0_15, %c0_16] : memref<1x4x9x9x8xbf16, #tpu.memory_space<vmem>>, vector<1x1x8x8x8xbf16>
    %9 = vector.shape_cast %8 : vector<1x1x8x8x8xbf16> to vector<8x8x8xbf16>
    %10 = arith.maximumf %7, %9 : vector<8x8x8xbf16>
    %c0_17 = arith.constant 0 : index
    %c3 = arith.constant 3 : index
    %c0_18 = arith.constant 0 : index
    %c0_19 = arith.constant 0 : index
    %c0_20 = arith.constant 0 : index
    %11 = vector.load %arg1[%c0_17, %c3, %c0_18, %c0_19, %c0_20] : memref<1x4x9x9x8xbf16, #tpu.memory_space<vmem>>, vector<1x1x8x8x8xbf16>
    %12 = vector.shape_cast %11 : vector<1x1x8x8x8xbf16> to vector<8x8x8xbf16>
    %13 = arith.maximumf %10, %12 : vector<8x8x8xbf16>
    %c0_21 = arith.constant 0 : index
    %c2_22 = arith.constant 2 : index
    %c0_23 = arith.constant 0 : index
    %c1_24 = arith.constant 1 : index
    %c0_25 = arith.constant 0 : index
    %14 = vector.load %arg1[%c0_21, %c2_22, %c0_23, %c1_24, %c0_25] : memref<1x4x9x9x8xbf16, #tpu.memory_space<vmem>>, vector<1x1x8x8x8xbf16>
    %15 = vector.shape_cast %14 : vector<1x1x8x8x8xbf16> to vector<8x8x8xbf16>
    %16 = arith.maximumf %13, %15 : vector<8x8x8xbf16>
    %c0_26 = arith.constant 0 : index
    %c0_27 = arith.constant 0 : index
    %c1_28 = arith.constant 1 : index
    %c0_29 = arith.constant 0 : index
    %c0_30 = arith.constant 0 : index
    %17 = vector.load %arg1[%c0_26, %c0_27, %c1_28, %c0_29, %c0_30] : memref<1x4x9x9x8xbf16, #tpu.memory_space<vmem>>, vector<1x1x8x8x8xbf16>
    %18 = vector.shape_cast %17 : vector<1x1x8x8x8xbf16> to vector<8x8x8xbf16>
    %19 = arith.maximumf %16, %18 : vector<8x8x8xbf16>
    %c0_31 = arith.constant 0 : index
    %c1_32 = arith.constant 1 : index
    %c1_33 = arith.constant 1 : index
    %c0_34 = arith.constant 0 : index
    %c0_35 = arith.constant 0 : index
    %20 = vector.load %arg1[%c0_31, %c1_32, %c1_33, %c0_34, %c0_35] : memref<1x4x9x9x8xbf16, #tpu.memory_space<vmem>>, vector<1x1x8x8x8xbf16>
    %21 = vector.shape_cast %20 : vector<1x1x8x8x8xbf16> to vector<8x8x8xbf16>
    %22 = arith.maximumf %19, %21 : vector<8x8x8xbf16>
    %c0_36 = arith.constant 0 : index
    %c0_37 = arith.constant 0 : index
    %c1_38 = arith.constant 1 : index
    %c1_39 = arith.constant 1 : index
    %c0_40 = arith.constant 0 : index
    %23 = vector.load %arg1[%c0_36, %c0_37, %c1_38, %c1_39, %c0_40] : memref<1x4x9x9x8xbf16, #tpu.memory_space<vmem>>, vector<1x1x8x8x8xbf16>
    %24 = vector.shape_cast %23 : vector<1x1x8x8x8xbf16> to vector<8x8x8xbf16>
    %25 = arith.maximumf %22, %24 : vector<8x8x8xbf16>
    %c0_41 = arith.constant 0 : index
    %c0_42 = arith.constant 0 : index
    %c0_43 = arith.constant 0 : index
    %c0_44 = arith.constant 0 : index
    %26 = vector.load %arg2[%c0_41, %c0_42, %c0_43, %c0_44] : memref<1x8x8x8xbf16, #tpu.memory_space<vmem>>, vector<1x8x8x8xbf16>
    %27 = vector.shape_cast %26 : vector<1x8x8x8xbf16> to vector<8x8x8xbf16>
    %28 = vector.shape_cast %25 : vector<8x8x8xbf16> to vector<1x8x8x8xbf16>
    tpu.vector_store %arg2[%c0_41, %c0_42, %c0_43, %c0_44], %28 {strides = array<i32>} : memref<1x8x8x8xbf16, #tpu.memory_space<vmem>>, vector<1x8x8x8xbf16>,
    return
  }
  func.func @transform_0(%arg0: i32) -> (i32, i32, i32, i32, i32) {
    %c0_i32 = arith.constant 0 : i32
    %c0_i32_0 = arith.constant 0 : i32
    %c0_i32_1 = arith.constant 0 : i32
    %c0_i32_2 = arith.constant 0 : i32
    %c0_i32_3 = arith.constant 0 : i32
    return %arg0, %c0_i32, %c0_i32_0, %c0_i32_1, %c0_i32_2 : i32, i32, i32, i32, i32
  }
  func.func @transform_1(%arg0: i32) -> (i32, i32, i32, i32) {
    %c0_i32 = arith.constant 0 : i32
    %c0_i32_0 = arith.constant 0 : i32
    %c0_i32_1 = arith.constant 0 : i32
    %c0_i32_2 = arith.constant 0 : i32
    return %arg0, %c0_i32, %c0_i32_0, %c0_i32_1 : i32, i32, i32, i32
  }
}

module attributes {stable_mosaic.version = 11 : i64} {
  func.func @_mm_bias_act_kernel(%arg0: i32, %arg1: memref<128x8xbf16, #tpu.memory_space<vmem>>, %arg2: memref<8x8xbf16, #tpu.memory_space<vmem>>, %arg3: memref<1x8xf32, #tpu.memory_space<vmem>>, %arg4: memref<128x8xbf16, #tpu.memory_space<vmem>>) attributes {dimension_semantics = [#tpu.dimension_semantics<parallel>], iteration_bounds = array<i64: 1>, scalar_prefetch = 0 : i64, scratch_operands = 0 : i64, tpu.core_type = #tpu.core_type<tc>, window_params = [{transform_indices = @transform_0, window_bounds = array<i64: 128, 8>}, {pipeline_mode = #tpu.pipeline_mode<synchronous>, transform_indices = @transform_1, window_bounds = array<i64: 8, 8>}, {pipeline_mode = #tpu.pipeline_mode<synchronous>, transform_indices = @transform_2, window_bounds = array<i64: 1, 8>}, {transform_indices = @transform_3, window_bounds = array<i64: 128, 8>}]} {
    %c0 = arith.constant 0 : index
    %c0_0 = arith.constant 0 : index
    %0 = vector.load %arg1[%c0, %c0_0] : memref<128x8xbf16, #tpu.memory_space<vmem>>, vector<128x8xbf16>
    %c0_1 = arith.constant 0 : index
    %c0_2 = arith.constant 0 : index
    %1 = vector.load %arg2[%c0_1, %c0_2] : memref<8x8xbf16, #tpu.memory_space<vmem>>, vector<8x8xbf16>
    %cst = arith.constant dense<0.000000e+00> : vector<128x8xf32>
    %2 = tpu.matmul %0, %1, %cst {dimension_numbers = #tpu.dot_dimension_numbers<[1], [0], [0], [1], [0, 0, 1, 1], [], []>} : vector<128x8xbf16>, vector<8x8xbf16>, vector<128x8xf32> -> vector<128x8xf32>
    %c0_3 = arith.constant 0 : index
    %c0_4 = arith.constant 0 : index
    %3 = vector.load %arg3[%c0_3, %c0_4] : memref<1x8xf32, #tpu.memory_space<vmem>>, vector<1x8xf32>
    %4 = vector.broadcast %3 : vector<1x8xf32> to vector<128x8xf32>
    %5 = arith.addf %2, %4 : vector<128x8xf32>
    %cst_5 = arith.constant 0.000000e+00 : f32
    %6 = vector.broadcast %cst_5 : f32 to vector<128x8xf32>
    %7 = arith.maximumf %5, %6 : vector<128x8xf32>
    %8 = arith.truncf %7 : vector<128x8xf32> to vector<128x8xbf16>
    %c0_6 = arith.constant 0 : index
    %c0_7 = arith.constant 0 : index
    %9 = vector.load %arg4[%c0_6, %c0_7] : memref<128x8xbf16, #tpu.memory_space<vmem>>, vector<128x8xbf16>
    tpu.vector_store %arg4[%c0_6, %c0_7], %8 {strides = array<i32>} : memref<128x8xbf16, #tpu.memory_space<vmem>>, vector<128x8xbf16>,
    return
  }
  func.func @transform_0(%arg0: i32) -> (i32, i32) {
    %c0_i32 = arith.constant 0 : i32
    %c0_i32_0 = arith.constant 0 : i32
    return %arg0, %c0_i32 : i32, i32
  }
  func.func @transform_1(%arg0: i32) -> (i32, i32) {
    %c0_i32 = arith.constant 0 : i32
    %c0_i32_0 = arith.constant 0 : i32
    %c0_i32_1 = arith.constant 0 : i32
    return %c0_i32, %c0_i32_0 : i32, i32
  }
  func.func @transform_2(%arg0: i32) -> (i32, i32) {
    %c0_i32 = arith.constant 0 : i32
    %c0_i32_0 = arith.constant 0 : i32
    %c0_i32_1 = arith.constant 0 : i32
    return %c0_i32, %c0_i32_0 : i32, i32
  }
  func.func @transform_3(%arg0: i32) -> (i32, i32) {
    %c0_i32 = arith.constant 0 : i32
    %c0_i32_0 = arith.constant 0 : i32
    return %arg0, %c0_i32 : i32, i32
  }
}

module attributes {stable_mosaic.version = 11 : i64} {
  func.func @_dual_mm_shuffle_kernel(%arg0: i32, %arg1: memref<32x8xbf16, #tpu.memory_space<vmem>>, %arg2: memref<32x8xbf16, #tpu.memory_space<vmem>>, %arg3: memref<8x16xbf16, #tpu.memory_space<vmem>>, %arg4: memref<1x16xf32, #tpu.memory_space<vmem>>, %arg5: memref<8x16xbf16, #tpu.memory_space<vmem>>, %arg6: memref<1x16xf32, #tpu.memory_space<vmem>>, %arg7: memref<32x16xbf16, #tpu.memory_space<vmem>>) attributes {dimension_semantics = [#tpu.dimension_semantics<parallel>], iteration_bounds = array<i64: 1>, scalar_prefetch = 0 : i64, scratch_operands = 0 : i64, tpu.core_type = #tpu.core_type<tc>, window_params = [{transform_indices = @transform_0, window_bounds = array<i64: 32, 8>}, {transform_indices = @transform_1, window_bounds = array<i64: 32, 8>}, {pipeline_mode = #tpu.pipeline_mode<synchronous>, transform_indices = @transform_2, window_bounds = array<i64: 8, 16>}, {pipeline_mode = #tpu.pipeline_mode<synchronous>, transform_indices = @transform_3, window_bounds = array<i64: 1, 16>}, {pipeline_mode = #tpu.pipeline_mode<synchronous>, transform_indices = @transform_4, window_bounds = array<i64: 8, 16>}, {pipeline_mode = #tpu.pipeline_mode<synchronous>, transform_indices = @transform_5, window_bounds = array<i64: 1, 16>}, {transform_indices = @transform_6, window_bounds = array<i64: 32, 16>}]} {
    %c0 = arith.constant 0 : index
    %c0_0 = arith.constant 0 : index
    %0 = vector.load %arg1[%c0, %c0_0] : memref<32x8xbf16, #tpu.memory_space<vmem>>, vector<32x8xbf16>
    %c0_1 = arith.constant 0 : index
    %c0_2 = arith.constant 0 : index
    %1 = vector.load %arg3[%c0_1, %c0_2] : memref<8x16xbf16, #tpu.memory_space<vmem>>, vector<8x16xbf16>
    %cst = arith.constant dense<0.000000e+00> : vector<32x16xf32>
    %2 = tpu.matmul %0, %1, %cst {dimension_numbers = #tpu.dot_dimension_numbers<[1], [0], [0], [1], [0, 0, 1, 1], [], []>} : vector<32x8xbf16>, vector<8x16xbf16>, vector<32x16xf32> -> vector<32x16xf32>
    %c0_3 = arith.constant 0 : index
    %c0_4 = arith.constant 0 : index
    %3 = vector.load %arg4[%c0_3, %c0_4] : memref<1x16xf32, #tpu.memory_space<vmem>>, vector<1x16xf32>
    %4 = vector.broadcast %3 : vector<1x16xf32> to vector<32x16xf32>
    %5 = arith.addf %2, %4 : vector<32x16xf32>
    %cst_5 = arith.constant 0.000000e+00 : f32
    %6 = vector.broadcast %cst_5 : f32 to vector<32x16xf32>
    %7 = arith.maximumf %5, %6 : vector<32x16xf32>
    %c0_6 = arith.constant 0 : index
    %c0_7 = arith.constant 0 : index
    %8 = vector.load %arg2[%c0_6, %c0_7] : memref<32x8xbf16, #tpu.memory_space<vmem>>, vector<32x8xbf16>
    %c0_8 = arith.constant 0 : index
    %c0_9 = arith.constant 0 : index
    %9 = vector.load %arg5[%c0_8, %c0_9] : memref<8x16xbf16, #tpu.memory_space<vmem>>, vector<8x16xbf16>
    %cst_10 = arith.constant dense<0.000000e+00> : vector<32x16xf32>
    %10 = tpu.matmul %8, %9, %cst_10 {dimension_numbers = #tpu.dot_dimension_numbers<[1], [0], [0], [1], [0, 0, 1, 1], [], []>} : vector<32x8xbf16>, vector<8x16xbf16>, vector<32x16xf32> -> vector<32x16xf32>
    %c0_11 = arith.constant 0 : index
    %c0_12 = arith.constant 0 : index
    %11 = vector.load %arg6[%c0_11, %c0_12] : memref<1x16xf32, #tpu.memory_space<vmem>>, vector<1x16xf32>
    %12 = vector.broadcast %11 : vector<1x16xf32> to vector<32x16xf32>
    %13 = arith.addf %10, %12 : vector<32x16xf32>
    %cst_13 = arith.constant 0.000000e+00 : f32
    %14 = vector.broadcast %cst_13 : f32 to vector<32x16xf32>
    %15 = arith.maximumf %13, %14 : vector<32x16xf32>
    %16 = arith.addf %7, %15 : vector<32x16xf32>
    %17 = arith.truncf %16 : vector<32x16xf32> to vector<32x16xbf16>
    %c0_14 = arith.constant 0 : index
    %c0_15 = arith.constant 0 : index
    %18 = vector.load %arg7[%c0_14, %c0_15] : memref<32x16xbf16, #tpu.memory_space<vmem>>, vector<32x16xbf16>
    tpu.vector_store %arg7[%c0_14, %c0_15], %17 {strides = array<i32>} : memref<32x16xbf16, #tpu.memory_space<vmem>>, vector<32x16xbf16>,
    return
  }
  func.func @transform_0(%arg0: i32) -> (i32, i32) {
    %c0_i32 = arith.constant 0 : i32
    %c0_i32_0 = arith.constant 0 : i32
    return %arg0, %c0_i32 : i32, i32
  }
  func.func @transform_1(%arg0: i32) -> (i32, i32) {
    %c0_i32 = arith.constant 0 : i32
    %c0_i32_0 = arith.constant 0 : i32
    return %arg0, %c0_i32 : i32, i32
  }
  func.func @transform_2(%arg0: i32) -> (i32, i32) {
    %c0_i32 = arith.constant 0 : i32
    %c0_i32_0 = arith.constant 0 : i32
    %c0_i32_1 = arith.constant 0 : i32
    return %c0_i32, %c0_i32_0 : i32, i32
  }
  func.func @transform_3(%arg0: i32) -> (i32, i32) {
    %c0_i32 = arith.constant 0 : i32
    %c0_i32_0 = arith.constant 0 : i32
    %c0_i32_1 = arith.constant 0 : i32
    return %c0_i32, %c0_i32_0 : i32, i32
  }
  func.func @transform_4(%arg0: i32) -> (i32, i32) {
    %c0_i32 = arith.constant 0 : i32
    %c0_i32_0 = arith.constant 0 : i32
    %c0_i32_1 = arith.constant 0 : i32
    return %c0_i32, %c0_i32_0 : i32, i32
  }
  func.func @transform_5(%arg0: i32) -> (i32, i32) {
    %c0_i32 = arith.constant 0 : i32
    %c0_i32_0 = arith.constant 0 : i32
    %c0_i32_1 = arith.constant 0 : i32
    return %c0_i32, %c0_i32_0 : i32, i32
  }
  func.func @transform_6(%arg0: i32) -> (i32, i32) {
    %c0_i32 = arith.constant 0 : i32
    %c0_i32_0 = arith.constant 0 : i32
    return %arg0, %c0_i32 : i32, i32
  }
}

module attributes {stable_mosaic.version = 11 : i64} {
  func.func @_fused_unit_s1_kernel(%arg0: i32, %arg1: memref<1x16x16xbf16, #tpu.memory_space<vmem>>, %arg2: memref<16x8xbf16, #tpu.memory_space<vmem>>, %arg3: memref<1x8xf32, #tpu.memory_space<vmem>>, %arg4: memref<3x3x8xf32, #tpu.memory_space<vmem>>, %arg5: memref<1x8xf32, #tpu.memory_space<vmem>>, %arg6: memref<8x16xbf16, #tpu.memory_space<vmem>>, %arg7: memref<1x16xf32, #tpu.memory_space<vmem>>, %arg8: memref<16x16xbf16, #tpu.memory_space<vmem>>, %arg9: memref<1x16x16xbf16, #tpu.memory_space<vmem>>, %arg10: memref<32x8xf32, #tpu.memory_space<vmem>>) attributes {dimension_semantics = [#tpu.dimension_semantics<parallel>], iteration_bounds = array<i64: 2>, scalar_prefetch = 0 : i64, scratch_operands = 1 : i64, tpu.core_type = #tpu.core_type<tc>, window_params = [{transform_indices = @transform_0, window_bounds = array<i64: 1, 16, 16>}, {pipeline_mode = #tpu.pipeline_mode<synchronous>, transform_indices = @transform_1, window_bounds = array<i64: 16, 8>}, {pipeline_mode = #tpu.pipeline_mode<synchronous>, transform_indices = @transform_2, window_bounds = array<i64: 1, 8>}, {pipeline_mode = #tpu.pipeline_mode<synchronous>, transform_indices = @transform_3, window_bounds = array<i64: 3, 3, 8>}, {pipeline_mode = #tpu.pipeline_mode<synchronous>, transform_indices = @transform_4, window_bounds = array<i64: 1, 8>}, {pipeline_mode = #tpu.pipeline_mode<synchronous>, transform_indices = @transform_5, window_bounds = array<i64: 8, 16>}, {pipeline_mode = #tpu.pipeline_mode<synchronous>, transform_indices = @transform_6, window_bounds = array<i64: 1, 16>}, {pipeline_mode = #tpu.pipeline_mode<synchronous>, transform_indices = @transform_7, window_bounds = array<i64: 16, 16>}, {transform_indices = @transform_8, window_bounds = array<i64: 1, 16, 16>}]} {
    %c0 = arith.constant 0 : index
    %c0_0 = arith.constant 0 : index
    %c0_1 = arith.constant 0 : index
    %0 = vector.load %arg1[%c0, %c0_0, %c0_1] : memref<1x16x16xbf16, #tpu.memory_space<vmem>>, vector<1x16x16xbf16>
    %1 = vector.shape_cast %0 : vector<1x16x16xbf16> to vector<16x16xbf16>
    %c0_2 = arith.constant 0 : index
    %c0_3 = arith.constant 0 : index
    %2 = vector.load %arg2[%c0_2, %c0_3] : memref<16x8xbf16, #tpu.memory_space<vmem>>, vector<16x8xbf16>
    %cst = arith.constant dense<0.000000e+00> : vector<16x8xf32>
    %3 = tpu.matmul %1, %2, %cst {dimension_numbers = #tpu.dot_dimension_numbers<[1], [0], [0], [1], [0, 0, 1, 1], [], []>} : vector<16x16xbf16>, vector<16x8xbf16>, vector<16x8xf32> -> vector<16x8xf32>
    %c0_4 = arith.constant 0 : index
    %c0_5 = arith.constant 0 : index
    %4 = vector.load %arg3[%c0_4, %c0_5] : memref<1x8xf32, #tpu.memory_space<vmem>>, vector<1x8xf32>
    %5 = vector.broadcast %4 : vector<1x8xf32> to vector<16x8xf32>
    %6 = arith.addf %3, %5 : vector<16x8xf32>
    %cst_6 = arith.constant 0.000000e+00 : f32
    %7 = vector.broadcast %cst_6 : f32 to vector<16x8xf32>
    %8 = arith.maximumf %6, %7 : vector<16x8xf32>
    %cst_7 = arith.constant 0.000000e+00 : f32
    %9 = vector.broadcast %cst_7 : f32 to vector<8x8xf32>
    %c0_8 = arith.constant 0 : index
    %c0_9 = arith.constant 0 : index
    %10 = vector.load %arg10[%c0_8, %c0_9] : memref<32x8xf32, #tpu.memory_space<vmem>>, vector<8x8xf32>
    tpu.vector_store %arg10[%c0_8, %c0_9], %9 {strides = array<i32>} : memref<32x8xf32, #tpu.memory_space<vmem>>, vector<8x8xf32>,
    %cst_10 = arith.constant 0.000000e+00 : f32
    %11 = vector.broadcast %cst_10 : f32 to vector<8x8xf32>
    %c24 = arith.constant 24 : index
    %c0_11 = arith.constant 0 : index
    %12 = vector.load %arg10[%c24, %c0_11] : memref<32x8xf32, #tpu.memory_space<vmem>>, vector<8x8xf32>
    tpu.vector_store %arg10[%c24, %c0_11], %11 {strides = array<i32>} : memref<32x8xf32, #tpu.memory_space<vmem>>, vector<8x8xf32>,
    %c8 = arith.constant 8 : index
    %c0_12 = arith.constant 0 : index
    %13 = vector.load %arg10[%c8, %c0_12] : memref<32x8xf32, #tpu.memory_space<vmem>>, vector<16x8xf32>
    tpu.vector_store %arg10[%c8, %c0_12], %8 {strides = array<i32>} : memref<32x8xf32, #tpu.memory_space<vmem>>, vector<16x8xf32>,
    %14 = tpu.iota {dimensions = array<i32: 0>} : vector<16x1xi32>
    %c4_i32 = arith.constant 4 : i32
    %c0_i32 = arith.constant 0 : i32
    %15 = arith.cmpi eq, %c4_i32, %c0_i32 : i32
    %c1_i32 = arith.constant 1 : i32
    %16 = arith.select %15, %c1_i32, %c4_i32 : i32
    %17 = vector.broadcast %16 : i32 to vector<16x1xi32>
    %18 = arith.remsi %14, %17 : vector<16x1xi32>
    %c0_i32_13 = arith.constant 0 : i32
    %19 = vector.broadcast %c0_i32_13 : i32 to vector<16x1xi32>
    %20 = arith.cmpi ne, %18, %19 : vector<16x1xi32>
    %c0_i32_14 = arith.constant 0 : i32
    %21 = vector.broadcast %c0_i32_14 : i32 to vector<16x1xi32>
    %22 = arith.cmpi slt, %18, %21 : vector<16x1xi32>
    %c0_i32_15 = arith.constant 0 : i32
    %23 = arith.cmpi slt, %16, %c0_i32_15 : i32
    %24 = vector.broadcast %23 : i1 to vector<16x1xi1>
    %25 = vector.broadcast %24 : vector<16x1xi1> to vector<16x1xi1>
    %26 = arith.xori %22, %25 : vector<16x1xi1>
    %27 = arith.andi %26, %20 : vector<16x1xi1>
    %28 = vector.broadcast %16 : i32 to vector<16x1xi32>
    %29 = arith.addi %18, %28 : vector<16x1xi32>
    %30 = arith.select %27, %29, %18 : vector<16x1xi1>, vector<16x1xi32>
    %c0_i32_16 = arith.constant 0 : i32
    %31 = vector.broadcast %c0_i32_16 : i32 to vector<16x1xi32>
    %32 = arith.cmpi ne, %30, %31 : vector<16x1xi32>
    %33 = vector.shape_cast %32 : vector<16x1xi1> to vector<16x1xi1>
    %34 = vector.broadcast %33 : vector<16x1xi1> to vector<16x8xi1>
    %35 = arith.extui %34 : vector<16x8xi1> to vector<16x8xi32>
    %36 = arith.sitofp %35 : vector<16x8xi32> to vector<16x8xf32>
    %c3_i32 = arith.constant 3 : i32
    %37 = vector.broadcast %c3_i32 : i32 to vector<16x1xi32>
    %38 = arith.cmpi ne, %30, %37 : vector<16x1xi32>
    %39 = vector.shape_cast %38 : vector<16x1xi1> to vector<16x1xi1>
    %40 = vector.broadcast %39 : vector<16x1xi1> to vector<16x8xi1>
    %41 = arith.extui %40 : vector<16x8xi1> to vector<16x8xi32>
    %42 = arith.sitofp %41 : vector<16x8xi32> to vector<16x8xf32>
    %cst_17 = arith.constant 0.000000e+00 : f32
    %43 = vector.broadcast %cst_17 : f32 to vector<16x8xf32>
    %cst_18 = arith.constant 0.000000e+00 : f32
    %44 = vector.broadcast %cst_18 : f32 to vector<16x8xf32>
    %cst_19 = arith.constant 0.000000e+00 : f32
    %45 = vector.broadcast %cst_19 : f32 to vector<16x8xf32>
    %c3 = arith.constant 3 : index
    %c0_20 = arith.constant 0 : index
    %46 = vector.load %arg10[%c3, %c0_20] : memref<32x8xf32, #tpu.memory_space<vmem>>, vector<16x8xf32>
    %c0_21 = arith.constant 0 : index
    %c0_22 = arith.constant 0 : index
    %c0_23 = arith.constant 0 : index
    %47 = vector.load %arg4[%c0_21, %c0_22, %c0_23] : memref<3x3x8xf32, #tpu.memory_space<vmem>>, vector<1x1x8xf32>
    %48 = vector.shape_cast %47 : vector<1x1x8xf32> to vector<8xf32>
    %49 = vector.shape_cast %48 : vector<8xf32> to vector<1x8xf32>
    %50 = vector.broadcast %49 : vector<1x8xf32> to vector<16x8xf32>
    %51 = arith.mulf %46, %50 : vector<16x8xf32>
    %52 = arith.addf %43, %51 : vector<16x8xf32>
    %c4 = arith.constant 4 : index
    %c0_24 = arith.constant 0 : index
    %53 = vector.load %arg10[%c4, %c0_24] : memref<32x8xf32, #tpu.memory_space<vmem>>, vector<16x8xf32>
    %c0_25 = arith.constant 0 : index
    %c1 = arith.constant 1 : index
    %c0_26 = arith.constant 0 : index
    %54 = vector.load %arg4[%c0_25, %c1, %c0_26] : memref<3x3x8xf32, #tpu.memory_space<vmem>>, vector<1x1x8xf32>
    %55 = vector.shape_cast %54 : vector<1x1x8xf32> to vector<8xf32>
    %56 = vector.shape_cast %55 : vector<8xf32> to vector<1x8xf32>
    %57 = vector.broadcast %56 : vector<1x8xf32> to vector<16x8xf32>
    %58 = arith.mulf %53, %57 : vector<16x8xf32>
    %59 = arith.addf %44, %58 : vector<16x8xf32>
    %c5 = arith.constant 5 : index
    %c0_27 = arith.constant 0 : index
    %60 = vector.load %arg10[%c5, %c0_27] : memref<32x8xf32, #tpu.memory_space<vmem>>, vector<16x8xf32>
    %c0_28 = arith.constant 0 : index
    %c2 = arith.constant 2 : index
    %c0_29 = arith.constant 0 : index
    %61 = vector.load %arg4[%c0_28, %c2, %c0_29] : memref<3x3x8xf32, #tpu.memory_space<vmem>>, vector<1x1x8xf32>
    %62 = vector.shape_cast %61 : vector<1x1x8xf32> to vector<8xf32>
    %63 = vector.shape_cast %62 : vector<8xf32> to vector<1x8xf32>
    %64 = vector.broadcast %63 : vector<1x8xf32> to vector<16x8xf32>
    %65 = arith.mulf %60, %64 : vector<16x8xf32>
    %66 = arith.addf %45, %65 : vector<16x8xf32>
    %c7 = arith.constant 7 : index
    %c0_30 = arith.constant 0 : index
    %67 = vector.load %arg10[%c7, %c0_30] : memref<32x8xf32, #tpu.memory_space<vmem>>, vector<16x8xf32>
    %c1_31 = arith.constant 1 : index
    %c0_32 = arith.constant 0 : index
    %c0_33 = arith.constant 0 : index
    %68 = vector.load %arg4[%c1_31, %c0_32, %c0_33] : memref<3x3x8xf32, #tpu.memory_space<vmem>>, vector<1x1x8xf32>
    %69 = vector.shape_cast %68 : vector<1x1x8xf32> to vector<8xf32>
    %70 = vector.shape_cast %69 : vector<8xf32> to vector<1x8xf32>
    %71 = vector.broadcast %70 : vector<1x8xf32> to vector<16x8xf32>
    %72 = arith.mulf %67, %71 : vector<16x8xf32>
    %73 = arith.addf %52, %72 : vector<16x8xf32>
    %c8_34 = arith.constant 8 : index
    %c0_35 = arith.constant 0 : index
    %74 = vector.load %arg10[%c8_34, %c0_35] : memref<32x8xf32, #tpu.memory_space<vmem>>, vector<16x8xf32>
    %c1_36 = arith.constant 1 : index
    %c1_37 = arith.constant 1 : index
    %c0_38 = arith.constant 0 : index
    %75 = vector.load %arg4[%c1_36, %c1_37, %c0_38] : memref<3x3x8xf32, #tpu.memory_space<vmem>>, vector<1x1x8xf32>
    %76 = vector.shape_cast %75 : vector<1x1x8xf32> to vector<8xf32>
    %77 = vector.shape_cast %76 : vector<8xf32> to vector<1x8xf32>
    %78 = vector.broadcast %77 : vector<1x8xf32> to vector<16x8xf32>
    %79 = arith.mulf %74, %78 : vector<16x8xf32>
    %80 = arith.addf %59, %79 : vector<16x8xf32>
    %c9 = arith.constant 9 : index
    %c0_39 = arith.constant 0 : index
    %81 = vector.load %arg10[%c9, %c0_39] : memref<32x8xf32, #tpu.memory_space<vmem>>, vector<16x8xf32>
    %c1_40 = arith.constant 1 : index
    %c2_41 = arith.constant 2 : index
    %c0_42 = arith.constant 0 : index
    %82 = vector.load %arg4[%c1_40, %c2_41, %c0_42] : memref<3x3x8xf32, #tpu.memory_space<vmem>>, vector<1x1x8xf32>
    %83 = vector.shape_cast %82 : vector<1x1x8xf32> to vector<8xf32>
    %84 = vector.shape_cast %83 : vector<8xf32> to vector<1x8xf32>
    %85 = vector.broadcast %84 : vector<1x8xf32> to vector<16x8xf32>
    %86 = arith.mulf %81, %85 : vector<16x8xf32>
    %87 = arith.addf %66, %86 : vector<16x8xf32>
    %c11 = arith.constant 11 : index
    %c0_43 = arith.constant 0 : index
    %88 = vector.load %arg10[%c11, %c0_43] : memref<32x8xf32, #tpu.memory_space<vmem>>, vector<16x8xf32>
    %c2_44 = arith.constant 2 : index
    %c0_45 = arith.constant 0 : index
    %c0_46 = arith.constant 0 : index
    %89 = vector.load %arg4[%c2_44, %c0_45, %c0_46] : memref<3x3x8xf32, #tpu.memory_space<vmem>>, vector<1x1x8xf32>
    %90 = vector.shape_cast %89 : vector<1x1x8xf32> to vector<8xf32>
    %91 = vector.shape_cast %90 : vector<8xf32> to vector<1x8xf32>
    %92 = vector.broadcast %91 : vector<1x8xf32> to vector<16x8xf32>
    %93 = arith.mulf %88, %92 : vector<16x8xf32>
    %94 = arith.addf %73, %93 : vector<16x8xf32>
    %c12 = arith.constant 12 : index
    %c0_47 = arith.constant 0 : index
    %95 = vector.load %arg10[%c12, %c0_47] : memref<32x8xf32, #tpu.memory_space<vmem>>, vector<16x8xf32>
    %c2_48 = arith.constant 2 : index
    %c1_49 = arith.constant 1 : index
    %c0_50 = arith.constant 0 : index
    %96 = vector.load %arg4[%c2_48, %c1_49, %c0_50] : memref<3x3x8xf32, #tpu.memory_space<vmem>>, vector<1x1x8xf32>
    %97 = vector.shape_cast %96 : vector<1x1x8xf32> to vector<8xf32>
    %98 = vector.shape_cast %97 : vector<8xf32> to vector<1x8xf32>
    %99 = vector.broadcast %98 : vector<1x8xf32> to vector<16x8xf32>
    %100 = arith.mulf %95, %99 : vector<16x8xf32>
    %101 = arith.addf %80, %100 : vector<16x8xf32>
    %c13 = arith.constant 13 : index
    %c0_51 = arith.constant 0 : index
    %102 = vector.load %arg10[%c13, %c0_51] : memref<32x8xf32, #tpu.memory_space<vmem>>, vector<16x8xf32>
    %c2_52 = arith.constant 2 : index
    %c2_53 = arith.constant 2 : index
    %c0_54 = arith.constant 0 : index
    %103 = vector.load %arg4[%c2_52, %c2_53, %c0_54] : memref<3x3x8xf32, #tpu.memory_space<vmem>>, vector<1x1x8xf32>
    %104 = vector.shape_cast %103 : vector<1x1x8xf32> to vector<8xf32>
    %105 = vector.shape_cast %104 : vector<8xf32> to vector<1x8xf32>
    %106 = vector.broadcast %105 : vector<1x8xf32> to vector<16x8xf32>
    %107 = arith.mulf %102, %106 : vector<16x8xf32>
    %108 = arith.addf %87, %107 : vector<16x8xf32>
    %109 = arith.mulf %94, %36 : vector<16x8xf32>
    %110 = arith.addf %109, %101 : vector<16x8xf32>
    %111 = arith.mulf %108, %42 : vector<16x8xf32>
    %112 = arith.addf %110, %111 : vector<16x8xf32>
    %c0_55 = arith.constant 0 : index
    %c0_56 = arith.constant 0 : index
    %113 = vector.load %arg5[%c0_55, %c0_56] : memref<1x8xf32, #tpu.memory_space<vmem>>, vector<1x8xf32>
    %114 = vector.broadcast %113 : vector<1x8xf32> to vector<16x8xf32>
    %115 = arith.addf %112, %114 : vector<16x8xf32>
    %116 = arith.truncf %115 : vector<16x8xf32> to vector<16x8xbf16>
    %c0_57 = arith.constant 0 : index
    %c0_58 = arith.constant 0 : index
    %117 = vector.load %arg6[%c0_57, %c0_58] : memref<8x16xbf16, #tpu.memory_space<vmem>>, vector<8x16xbf16>
    %cst_59 = arith.constant dense<0.000000e+00> : vector<16x16xf32>
    %118 = tpu.matmul %116, %117, %cst_59 {dimension_numbers = #tpu.dot_dimension_numbers<[1], [0], [0], [1], [0, 0, 1, 1], [], []>} : vector<16x8xbf16>, vector<8x16xbf16>, vector<16x16xf32> -> vector<16x16xf32>
    %c0_60 = arith.constant 0 : index
    %c0_61 = arith.constant 0 : index
    %119 = vector.load %arg7[%c0_60, %c0_61] : memref<1x16xf32, #tpu.memory_space<vmem>>, vector<1x16xf32>
    %120 = vector.broadcast %119 : vector<1x16xf32> to vector<16x16xf32>
    %121 = arith.addf %118, %120 : vector<16x16xf32>
    %cst_62 = arith.constant 0.000000e+00 : f32
    %122 = vector.broadcast %cst_62 : f32 to vector<16x16xf32>
    %123 = arith.maximumf %121, %122 : vector<16x16xf32>
    %c0_63 = arith.constant 0 : index
    %c0_64 = arith.constant 0 : index
    %124 = vector.load %arg8[%c0_63, %c0_64] : memref<16x16xbf16, #tpu.memory_space<vmem>>, vector<16x16xbf16>
    %cst_65 = arith.constant dense<0.000000e+00> : vector<16x16xf32>
    %125 = tpu.matmul %1, %124, %cst_65 {dimension_numbers = #tpu.dot_dimension_numbers<[1], [0], [0], [1], [0, 0, 1, 1], [], []>} : vector<16x16xbf16>, vector<16x16xbf16>, vector<16x16xf32> -> vector<16x16xf32>
    %126 = arith.addf %123, %125 : vector<16x16xf32>
    %127 = arith.truncf %126 : vector<16x16xf32> to vector<16x16xbf16>
    %c0_66 = arith.constant 0 : index
    %c0_67 = arith.constant 0 : index
    %c0_68 = arith.constant 0 : index
    %128 = vector.load %arg9[%c0_66, %c0_67, %c0_68] : memref<1x16x16xbf16, #tpu.memory_space<vmem>>, vector<1x16x16xbf16>
    %129 = vector.shape_cast %128 : vector<1x16x16xbf16> to vector<16x16xbf16>
    %130 = vector.shape_cast %127 : vector<16x16xbf16> to vector<1x16x16xbf16>
    tpu.vector_store %arg9[%c0_66, %c0_67, %c0_68], %130 {strides = array<i32>} : memref<1x16x16xbf16, #tpu.memory_space<vmem>>, vector<1x16x16xbf16>,
    return
  }
  func.func @transform_0(%arg0: i32) -> (i32, i32, i32) {
    %c0_i32 = arith.constant 0 : i32
    %c0_i32_0 = arith.constant 0 : i32
    %c0_i32_1 = arith.constant 0 : i32
    return %arg0, %c0_i32, %c0_i32_0 : i32, i32, i32
  }
  func.func @transform_1(%arg0: i32) -> (i32, i32) {
    %c0_i32 = arith.constant 0 : i32
    %c0_i32_0 = arith.constant 0 : i32
    %c0_i32_1 = arith.constant 0 : i32
    return %c0_i32, %c0_i32_0 : i32, i32
  }
  func.func @transform_2(%arg0: i32) -> (i32, i32) {
    %c0_i32 = arith.constant 0 : i32
    %c0_i32_0 = arith.constant 0 : i32
    %c0_i32_1 = arith.constant 0 : i32
    return %c0_i32, %c0_i32_0 : i32, i32
  }
  func.func @transform_3(%arg0: i32) -> (i32, i32, i32) {
    %c0_i32 = arith.constant 0 : i32
    %c0_i32_0 = arith.constant 0 : i32
    %c0_i32_1 = arith.constant 0 : i32
    %c0_i32_2 = arith.constant 0 : i32
    return %c0_i32, %c0_i32_0, %c0_i32_1 : i32, i32, i32
  }
  func.func @transform_4(%arg0: i32) -> (i32, i32) {
    %c0_i32 = arith.constant 0 : i32
    %c0_i32_0 = arith.constant 0 : i32
    %c0_i32_1 = arith.constant 0 : i32
    return %c0_i32, %c0_i32_0 : i32, i32
  }
  func.func @transform_5(%arg0: i32) -> (i32, i32) {
    %c0_i32 = arith.constant 0 : i32
    %c0_i32_0 = arith.constant 0 : i32
    %c0_i32_1 = arith.constant 0 : i32
    return %c0_i32, %c0_i32_0 : i32, i32
  }
  func.func @transform_6(%arg0: i32) -> (i32, i32) {
    %c0_i32 = arith.constant 0 : i32
    %c0_i32_0 = arith.constant 0 : i32
    %c0_i32_1 = arith.constant 0 : i32
    return %c0_i32, %c0_i32_0 : i32, i32
  }
  func.func @transform_7(%arg0: i32) -> (i32, i32) {
    %c0_i32 = arith.constant 0 : i32
    %c0_i32_0 = arith.constant 0 : i32
    %c0_i32_1 = arith.constant 0 : i32
    return %c0_i32, %c0_i32_0 : i32, i32
  }
  func.func @transform_8(%arg0: i32) -> (i32, i32, i32) {
    %c0_i32 = arith.constant 0 : i32
    %c0_i32_0 = arith.constant 0 : i32
    %c0_i32_1 = arith.constant 0 : i32
    return %arg0, %c0_i32, %c0_i32_0 : i32, i32, i32
  }
}

module attributes {stable_mosaic.version = 11 : i64} {
  func.func @_dual_dw3x3_s2_kernel(%arg0: i32, %arg1: memref<1x4x5x5x8xbf16, #tpu.memory_space<vmem>>, %arg2: memref<1x4x5x5x8xbf16, #tpu.memory_space<vmem>>, %arg3: memref<3x3x8xf32, #tpu.memory_space<vmem>>, %arg4: memref<1x8xf32, #tpu.memory_space<vmem>>, %arg5: memref<3x3x8xf32, #tpu.memory_space<vmem>>, %arg6: memref<1x8xf32, #tpu.memory_space<vmem>>, %arg7: memref<1x4x4x8xbf16, #tpu.memory_space<vmem>>, %arg8: memref<1x4x4x8xbf16, #tpu.memory_space<vmem>>) attributes {dimension_semantics = [#tpu.dimension_semantics<parallel>], iteration_bounds = array<i64: 2>, scalar_prefetch = 0 : i64, scratch_operands = 0 : i64, tpu.core_type = #tpu.core_type<tc>, window_params = [{transform_indices = @transform_0, window_bounds = array<i64: 1, 4, 5, 5, 8>}, {transform_indices = @transform_1, window_bounds = array<i64: 1, 4, 5, 5, 8>}, {pipeline_mode = #tpu.pipeline_mode<synchronous>, transform_indices = @transform_2, window_bounds = array<i64: 3, 3, 8>}, {pipeline_mode = #tpu.pipeline_mode<synchronous>, transform_indices = @transform_3, window_bounds = array<i64: 1, 8>}, {pipeline_mode = #tpu.pipeline_mode<synchronous>, transform_indices = @transform_4, window_bounds = array<i64: 3, 3, 8>}, {pipeline_mode = #tpu.pipeline_mode<synchronous>, transform_indices = @transform_5, window_bounds = array<i64: 1, 8>}, {transform_indices = @transform_6, window_bounds = array<i64: 1, 4, 4, 8>}, {transform_indices = @transform_7, window_bounds = array<i64: 1, 4, 4, 8>}]} {
    %cst = arith.constant 0.000000e+00 : f32
    %0 = vector.broadcast %cst : f32 to vector<4x4x8xf32>
    %c0 = arith.constant 0 : index
    %c0_0 = arith.constant 0 : index
    %c0_1 = arith.constant 0 : index
    %c0_2 = arith.constant 0 : index
    %c0_3 = arith.constant 0 : index
    %1 = vector.load %arg1[%c0, %c0_0, %c0_1, %c0_2, %c0_3] : memref<1x4x5x5x8xbf16, #tpu.memory_space<vmem>>, vector<1x1x4x4x8xbf16>
    %2 = vector.shape_cast %1 : vector<1x1x4x4x8xbf16> to vector<4x4x8xbf16>
    %3 = arith.extf %2 : vector<4x4x8xbf16> to vector<4x4x8xf32>
    %c0_4 = arith.constant 0 : index
    %c0_5 = arith.constant 0 : index
    %c0_6 = arith.constant 0 : index
    %4 = vector.load %arg3[%c0_4, %c0_5, %c0_6] : memref<3x3x8xf32, #tpu.memory_space<vmem>>, vector<1x1x8xf32>
    %5 = vector.shape_cast %4 : vector<1x1x8xf32> to vector<8xf32>
    %6 = vector.shape_cast %5 : vector<8xf32> to vector<1x1x8xf32>
    %7 = vector.broadcast %6 : vector<1x1x8xf32> to vector<4x4x8xf32>
    %8 = arith.mulf %3, %7 : vector<4x4x8xf32>
    %9 = arith.addf %0, %8 : vector<4x4x8xf32>
    %c0_7 = arith.constant 0 : index
    %c1 = arith.constant 1 : index
    %c0_8 = arith.constant 0 : index
    %c0_9 = arith.constant 0 : index
    %c0_10 = arith.constant 0 : index
    %10 = vector.load %arg1[%c0_7, %c1, %c0_8, %c0_9, %c0_10] : memref<1x4x5x5x8xbf16, #tpu.memory_space<vmem>>, vector<1x1x4x4x8xbf16>
    %11 = vector.shape_cast %10 : vector<1x1x4x4x8xbf16> to vector<4x4x8xbf16>
    %12 = arith.extf %11 : vector<4x4x8xbf16> to vector<4x4x8xf32>
    %c0_11 = arith.constant 0 : index
    %c1_12 = arith.constant 1 : index
    %c0_13 = arith.constant 0 : index
    %13 = vector.load %arg3[%c0_11, %c1_12, %c0_13] : memref<3x3x8xf32, #tpu.memory_space<vmem>>, vector<1x1x8xf32>
    %14 = vector.shape_cast %13 : vector<1x1x8xf32> to vector<8xf32>
    %15 = vector.shape_cast %14 : vector<8xf32> to vector<1x1x8xf32>
    %16 = vector.broadcast %15 : vector<1x1x8xf32> to vector<4x4x8xf32>
    %17 = arith.mulf %12, %16 : vector<4x4x8xf32>
    %18 = arith.addf %9, %17 : vector<4x4x8xf32>
    %c0_14 = arith.constant 0 : index
    %c0_15 = arith.constant 0 : index
    %c0_16 = arith.constant 0 : index
    %c1_17 = arith.constant 1 : index
    %c0_18 = arith.constant 0 : index
    %19 = vector.load %arg1[%c0_14, %c0_15, %c0_16, %c1_17, %c0_18] : memref<1x4x5x5x8xbf16, #tpu.memory_space<vmem>>, vector<1x1x4x4x8xbf16>
    %20 = vector.shape_cast %19 : vector<1x1x4x4x8xbf16> to vector<4x4x8xbf16>
    %21 = arith.extf %20 : vector<4x4x8xbf16> to vector<4x4x8xf32>
    %c0_19 = arith.constant 0 : index
    %c2 = arith.constant 2 : index
    %c0_20 = arith.constant 0 : index
    %22 = vector.load %arg3[%c0_19, %c2, %c0_20] : memref<3x3x8xf32, #tpu.memory_space<vmem>>, vector<1x1x8xf32>
    %23 = vector.shape_cast %22 : vector<1x1x8xf32> to vector<8xf32>
    %24 = vector.shape_cast %23 : vector<8xf32> to vector<1x1x8xf32>
    %25 = vector.broadcast %24 : vector<1x1x8xf32> to vector<4x4x8xf32>
    %26 = arith.mulf %21, %25 : vector<4x4x8xf32>
    %27 = arith.addf %18, %26 : vector<4x4x8xf32>
    %c0_21 = arith.constant 0 : index
    %c2_22 = arith.constant 2 : index
    %c0_23 = arith.constant 0 : index
    %c0_24 = arith.constant 0 : index
    %c0_25 = arith.constant 0 : index
    %28 = vector.load %arg1[%c0_21, %c2_22, %c0_23, %c0_24, %c0_25] : memref<1x4x5x5x8xbf16, #tpu.memory_space<vmem>>, vector<1x1x4x4x8xbf16>
    %29 = vector.shape_cast %28 : vector<1x1x4x4x8xbf16> to vector<4x4x8xbf16>
    %30 = arith.extf %29 : vector<4x4x8xbf16> to vector<4x4x8xf32>
    %c1_26 = arith.constant 1 : index
    %c0_27 = arith.constant 0 : index
    %c0_28 = arith.constant 0 : index
    %31 = vector.load %arg3[%c1_26, %c0_27, %c0_28] : memref<3x3x8xf32, #tpu.memory_space<vmem>>, vector<1x1x8xf32>
    %32 = vector.shape_cast %31 : vector<1x1x8xf32> to vector<8xf32>
    %33 = vector.shape_cast %32 : vector<8xf32> to vector<1x1x8xf32>
    %34 = vector.broadcast %33 : vector<1x1x8xf32> to vector<4x4x8xf32>
    %35 = arith.mulf %30, %34 : vector<4x4x8xf32>
    %36 = arith.addf %27, %35 : vector<4x4x8xf32>
    %c0_29 = arith.constant 0 : index
    %c3 = arith.constant 3 : index
    %c0_30 = arith.constant 0 : index
    %c0_31 = arith.constant 0 : index
    %c0_32 = arith.constant 0 : index
    %37 = vector.load %arg1[%c0_29, %c3, %c0_30, %c0_31, %c0_32] : memref<1x4x5x5x8xbf16, #tpu.memory_space<vmem>>, vector<1x1x4x4x8xbf16>
    %38 = vector.shape_cast %37 : vector<1x1x4x4x8xbf16> to vector<4x4x8xbf16>
    %39 = arith.extf %38 : vector<4x4x8xbf16> to vector<4x4x8xf32>
    %c1_33 = arith.constant 1 : index
    %c1_34 = arith.constant 1 : index
    %c0_35 = arith.constant 0 : index
    %40 = vector.load %arg3[%c1_33, %c1_34, %c0_35] : memref<3x3x8xf32, #tpu.memory_space<vmem>>, vector<1x1x8xf32>
    %41 = vector.shape_cast %40 : vector<1x1x8xf32> to vector<8xf32>
    %42 = vector.shape_cast %41 : vector<8xf32> to vector<1x1x8xf32>
    %43 = vector.broadcast %42 : vector<1x1x8xf32> to vector<4x4x8xf32>
    %44 = arith.mulf %39, %43 : vector<4x4x8xf32>
    %45 = arith.addf %36, %44 : vector<4x4x8xf32>
    %c0_36 = arith.constant 0 : index
    %c2_37 = arith.constant 2 : index
    %c0_38 = arith.constant 0 : index
    %c1_39 = arith.constant 1 : index
    %c0_40 = arith.constant 0 : index
    %46 = vector.load %arg1[%c0_36, %c2_37, %c0_38, %c1_39, %c0_40] : memref<1x4x5x5x8xbf16, #tpu.memory_space<vmem>>, vector<1x1x4x4x8xbf16>
    %47 = vector.shape_cast %46 : vector<1x1x4x4x8xbf16> to vector<4x4x8xbf16>
    %48 = arith.extf %47 : vector<4x4x8xbf16> to vector<4x4x8xf32>
    %c1_41 = arith.constant 1 : index
    %c2_42 = arith.constant 2 : index
    %c0_43 = arith.constant 0 : index
    %49 = vector.load %arg3[%c1_41, %c2_42, %c0_43] : memref<3x3x8xf32, #tpu.memory_space<vmem>>, vector<1x1x8xf32>
    %50 = vector.shape_cast %49 : vector<1x1x8xf32> to vector<8xf32>
    %51 = vector.shape_cast %50 : vector<8xf32> to vector<1x1x8xf32>
    %52 = vector.broadcast %51 : vector<1x1x8xf32> to vector<4x4x8xf32>
    %53 = arith.mulf %48, %52 : vector<4x4x8xf32>
    %54 = arith.addf %45, %53 : vector<4x4x8xf32>
    %c0_44 = arith.constant 0 : index
    %c0_45 = arith.constant 0 : index
    %c1_46 = arith.constant 1 : index
    %c0_47 = arith.constant 0 : index
    %c0_48 = arith.constant 0 : index
    %55 = vector.load %arg1[%c0_44, %c0_45, %c1_46, %c0_47, %c0_48] : memref<1x4x5x5x8xbf16, #tpu.memory_space<vmem>>, vector<1x1x4x4x8xbf16>
    %56 = vector.shape_cast %55 : vector<1x1x4x4x8xbf16> to vector<4x4x8xbf16>
    %57 = arith.extf %56 : vector<4x4x8xbf16> to vector<4x4x8xf32>
    %c2_49 = arith.constant 2 : index
    %c0_50 = arith.constant 0 : index
    %c0_51 = arith.constant 0 : index
    %58 = vector.load %arg3[%c2_49, %c0_50, %c0_51] : memref<3x3x8xf32, #tpu.memory_space<vmem>>, vector<1x1x8xf32>
    %59 = vector.shape_cast %58 : vector<1x1x8xf32> to vector<8xf32>
    %60 = vector.shape_cast %59 : vector<8xf32> to vector<1x1x8xf32>
    %61 = vector.broadcast %60 : vector<1x1x8xf32> to vector<4x4x8xf32>
    %62 = arith.mulf %57, %61 : vector<4x4x8xf32>
    %63 = arith.addf %54, %62 : vector<4x4x8xf32>
    %c0_52 = arith.constant 0 : index
    %c1_53 = arith.constant 1 : index
    %c1_54 = arith.constant 1 : index
    %c0_55 = arith.constant 0 : index
    %c0_56 = arith.constant 0 : index
    %64 = vector.load %arg1[%c0_52, %c1_53, %c1_54, %c0_55, %c0_56] : memref<1x4x5x5x8xbf16, #tpu.memory_space<vmem>>, vector<1x1x4x4x8xbf16>
    %65 = vector.shape_cast %64 : vector<1x1x4x4x8xbf16> to vector<4x4x8xbf16>
    %66 = arith.extf %65 : vector<4x4x8xbf16> to vector<4x4x8xf32>
    %c2_57 = arith.constant 2 : index
    %c1_58 = arith.constant 1 : index
    %c0_59 = arith.constant 0 : index
    %67 = vector.load %arg3[%c2_57, %c1_58, %c0_59] : memref<3x3x8xf32, #tpu.memory_space<vmem>>, vector<1x1x8xf32>
    %68 = vector.shape_cast %67 : vector<1x1x8xf32> to vector<8xf32>
    %69 = vector.shape_cast %68 : vector<8xf32> to vector<1x1x8xf32>
    %70 = vector.broadcast %69 : vector<1x1x8xf32> to vector<4x4x8xf32>
    %71 = arith.mulf %66, %70 : vector<4x4x8xf32>
    %72 = arith.addf %63, %71 : vector<4x4x8xf32>
    %c0_60 = arith.constant 0 : index
    %c0_61 = arith.constant 0 : index
    %c1_62 = arith.constant 1 : index
    %c1_63 = arith.constant 1 : index
    %c0_64 = arith.constant 0 : index
    %73 = vector.load %arg1[%c0_60, %c0_61, %c1_62, %c1_63, %c0_64] : memref<1x4x5x5x8xbf16, #tpu.memory_space<vmem>>, vector<1x1x4x4x8xbf16>
    %74 = vector.shape_cast %73 : vector<1x1x4x4x8xbf16> to vector<4x4x8xbf16>
    %75 = arith.extf %74 : vector<4x4x8xbf16> to vector<4x4x8xf32>
    %c2_65 = arith.constant 2 : index
    %c2_66 = arith.constant 2 : index
    %c0_67 = arith.constant 0 : index
    %76 = vector.load %arg3[%c2_65, %c2_66, %c0_67] : memref<3x3x8xf32, #tpu.memory_space<vmem>>, vector<1x1x8xf32>
    %77 = vector.shape_cast %76 : vector<1x1x8xf32> to vector<8xf32>
    %78 = vector.shape_cast %77 : vector<8xf32> to vector<1x1x8xf32>
    %79 = vector.broadcast %78 : vector<1x1x8xf32> to vector<4x4x8xf32>
    %80 = arith.mulf %75, %79 : vector<4x4x8xf32>
    %81 = arith.addf %72, %80 : vector<4x4x8xf32>
    %c0_68 = arith.constant 0 : index
    %c0_69 = arith.constant 0 : index
    %82 = vector.load %arg4[%c0_68, %c0_69] : memref<1x8xf32, #tpu.memory_space<vmem>>, vector<1x8xf32>
    %83 = vector.shape_cast %82 : vector<1x8xf32> to vector<1x1x8xf32>
    %84 = vector.broadcast %83 : vector<1x1x8xf32> to vector<4x4x8xf32>
    %85 = arith.addf %81, %84 : vector<4x4x8xf32>
    %86 = arith.truncf %85 : vector<4x4x8xf32> to vector<4x4x8xbf16>
    %c0_70 = arith.constant 0 : index
    %c0_71 = arith.constant 0 : index
    %c0_72 = arith.constant 0 : index
    %c0_73 = arith.constant 0 : index
    %87 = vector.load %arg7[%c0_70, %c0_71, %c0_72, %c0_73] : memref<1x4x4x8xbf16, #tpu.memory_space<vmem>>, vector<1x4x4x8xbf16>
    %88 = vector.shape_cast %87 : vector<1x4x4x8xbf16> to vector<4x4x8xbf16>
    %89 = vector.shape_cast %86 : vector<4x4x8xbf16> to vector<1x4x4x8xbf16>
    tpu.vector_store %arg7[%c0_70, %c0_71, %c0_72, %c0_73], %89 {strides = array<i32>} : memref<1x4x4x8xbf16, #tpu.memory_space<vmem>>, vector<1x4x4x8xbf16>,
    %cst_74 = arith.constant 0.000000e+00 : f32
    %90 = vector.broadcast %cst_74 : f32 to vector<4x4x8xf32>
    %c0_75 = arith.constant 0 : index
    %c0_76 = arith.constant 0 : index
    %c0_77 = arith.constant 0 : index
    %c0_78 = arith.constant 0 : index
    %c0_79 = arith.constant 0 : index
    %91 = vector.load %arg2[%c0_75, %c0_76, %c0_77, %c0_78, %c0_79] : memref<1x4x5x5x8xbf16, #tpu.memory_space<vmem>>, vector<1x1x4x4x8xbf16>
    %92 = vector.shape_cast %91 : vector<1x1x4x4x8xbf16> to vector<4x4x8xbf16>
    %93 = arith.extf %92 : vector<4x4x8xbf16> to vector<4x4x8xf32>
    %c0_80 = arith.constant 0 : index
    %c0_81 = arith.constant 0 : index
    %c0_82 = arith.constant 0 : index
    %94 = vector.load %arg5[%c0_80, %c0_81, %c0_82] : memref<3x3x8xf32, #tpu.memory_space<vmem>>, vector<1x1x8xf32>
    %95 = vector.shape_cast %94 : vector<1x1x8xf32> to vector<8xf32>
    %96 = vector.shape_cast %95 : vector<8xf32> to vector<1x1x8xf32>
    %97 = vector.broadcast %96 : vector<1x1x8xf32> to vector<4x4x8xf32>
    %98 = arith.mulf %93, %97 : vector<4x4x8xf32>
    %99 = arith.addf %90, %98 : vector<4x4x8xf32>
    %c0_83 = arith.constant 0 : index
    %c1_84 = arith.constant 1 : index
    %c0_85 = arith.constant 0 : index
    %c0_86 = arith.constant 0 : index
    %c0_87 = arith.constant 0 : index
    %100 = vector.load %arg2[%c0_83, %c1_84, %c0_85, %c0_86, %c0_87] : memref<1x4x5x5x8xbf16, #tpu.memory_space<vmem>>, vector<1x1x4x4x8xbf16>
    %101 = vector.shape_cast %100 : vector<1x1x4x4x8xbf16> to vector<4x4x8xbf16>
    %102 = arith.extf %101 : vector<4x4x8xbf16> to vector<4x4x8xf32>
    %c0_88 = arith.constant 0 : index
    %c1_89 = arith.constant 1 : index
    %c0_90 = arith.constant 0 : index
    %103 = vector.load %arg5[%c0_88, %c1_89, %c0_90] : memref<3x3x8xf32, #tpu.memory_space<vmem>>, vector<1x1x8xf32>
    %104 = vector.shape_cast %103 : vector<1x1x8xf32> to vector<8xf32>
    %105 = vector.shape_cast %104 : vector<8xf32> to vector<1x1x8xf32>
    %106 = vector.broadcast %105 : vector<1x1x8xf32> to vector<4x4x8xf32>
    %107 = arith.mulf %102, %106 : vector<4x4x8xf32>
    %108 = arith.addf %99, %107 : vector<4x4x8xf32>
    %c0_91 = arith.constant 0 : index
    %c0_92 = arith.constant 0 : index
    %c0_93 = arith.constant 0 : index
    %c1_94 = arith.constant 1 : index
    %c0_95 = arith.constant 0 : index
    %109 = vector.load %arg2[%c0_91, %c0_92, %c0_93, %c1_94, %c0_95] : memref<1x4x5x5x8xbf16, #tpu.memory_space<vmem>>, vector<1x1x4x4x8xbf16>
    %110 = vector.shape_cast %109 : vector<1x1x4x4x8xbf16> to vector<4x4x8xbf16>
    %111 = arith.extf %110 : vector<4x4x8xbf16> to vector<4x4x8xf32>
    %c0_96 = arith.constant 0 : index
    %c2_97 = arith.constant 2 : index
    %c0_98 = arith.constant 0 : index
    %112 = vector.load %arg5[%c0_96, %c2_97, %c0_98] : memref<3x3x8xf32, #tpu.memory_space<vmem>>, vector<1x1x8xf32>
    %113 = vector.shape_cast %112 : vector<1x1x8xf32> to vector<8xf32>
    %114 = vector.shape_cast %113 : vector<8xf32> to vector<1x1x8xf32>
    %115 = vector.broadcast %114 : vector<1x1x8xf32> to vector<4x4x8xf32>
    %116 = arith.mulf %111, %115 : vector<4x4x8xf32>
    %117 = arith.addf %108, %116 : vector<4x4x8xf32>
    %c0_99 = arith.constant 0 : index
    %c2_100 = arith.constant 2 : index
    %c0_101 = arith.constant 0 : index
    %c0_102 = arith.constant 0 : index
    %c0_103 = arith.constant 0 : index
    %118 = vector.load %arg2[%c0_99, %c2_100, %c0_101, %c0_102, %c0_103] : memref<1x4x5x5x8xbf16, #tpu.memory_space<vmem>>, vector<1x1x4x4x8xbf16>
    %119 = vector.shape_cast %118 : vector<1x1x4x4x8xbf16> to vector<4x4x8xbf16>
    %120 = arith.extf %119 : vector<4x4x8xbf16> to vector<4x4x8xf32>
    %c1_104 = arith.constant 1 : index
    %c0_105 = arith.constant 0 : index
    %c0_106 = arith.constant 0 : index
    %121 = vector.load %arg5[%c1_104, %c0_105, %c0_106] : memref<3x3x8xf32, #tpu.memory_space<vmem>>, vector<1x1x8xf32>
    %122 = vector.shape_cast %121 : vector<1x1x8xf32> to vector<8xf32>
    %123 = vector.shape_cast %122 : vector<8xf32> to vector<1x1x8xf32>
    %124 = vector.broadcast %123 : vector<1x1x8xf32> to vector<4x4x8xf32>
    %125 = arith.mulf %120, %124 : vector<4x4x8xf32>
    %126 = arith.addf %117, %125 : vector<4x4x8xf32>
    %c0_107 = arith.constant 0 : index
    %c3_108 = arith.constant 3 : index
    %c0_109 = arith.constant 0 : index
    %c0_110 = arith.constant 0 : index
    %c0_111 = arith.constant 0 : index
    %127 = vector.load %arg2[%c0_107, %c3_108, %c0_109, %c0_110, %c0_111] : memref<1x4x5x5x8xbf16, #tpu.memory_space<vmem>>, vector<1x1x4x4x8xbf16>
    %128 = vector.shape_cast %127 : vector<1x1x4x4x8xbf16> to vector<4x4x8xbf16>
    %129 = arith.extf %128 : vector<4x4x8xbf16> to vector<4x4x8xf32>
    %c1_112 = arith.constant 1 : index
    %c1_113 = arith.constant 1 : index
    %c0_114 = arith.constant 0 : index
    %130 = vector.load %arg5[%c1_112, %c1_113, %c0_114] : memref<3x3x8xf32, #tpu.memory_space<vmem>>, vector<1x1x8xf32>
    %131 = vector.shape_cast %130 : vector<1x1x8xf32> to vector<8xf32>
    %132 = vector.shape_cast %131 : vector<8xf32> to vector<1x1x8xf32>
    %133 = vector.broadcast %132 : vector<1x1x8xf32> to vector<4x4x8xf32>
    %134 = arith.mulf %129, %133 : vector<4x4x8xf32>
    %135 = arith.addf %126, %134 : vector<4x4x8xf32>
    %c0_115 = arith.constant 0 : index
    %c2_116 = arith.constant 2 : index
    %c0_117 = arith.constant 0 : index
    %c1_118 = arith.constant 1 : index
    %c0_119 = arith.constant 0 : index
    %136 = vector.load %arg2[%c0_115, %c2_116, %c0_117, %c1_118, %c0_119] : memref<1x4x5x5x8xbf16, #tpu.memory_space<vmem>>, vector<1x1x4x4x8xbf16>
    %137 = vector.shape_cast %136 : vector<1x1x4x4x8xbf16> to vector<4x4x8xbf16>
    %138 = arith.extf %137 : vector<4x4x8xbf16> to vector<4x4x8xf32>
    %c1_120 = arith.constant 1 : index
    %c2_121 = arith.constant 2 : index
    %c0_122 = arith.constant 0 : index
    %139 = vector.load %arg5[%c1_120, %c2_121, %c0_122] : memref<3x3x8xf32, #tpu.memory_space<vmem>>, vector<1x1x8xf32>
    %140 = vector.shape_cast %139 : vector<1x1x8xf32> to vector<8xf32>
    %141 = vector.shape_cast %140 : vector<8xf32> to vector<1x1x8xf32>
    %142 = vector.broadcast %141 : vector<1x1x8xf32> to vector<4x4x8xf32>
    %143 = arith.mulf %138, %142 : vector<4x4x8xf32>
    %144 = arith.addf %135, %143 : vector<4x4x8xf32>
    %c0_123 = arith.constant 0 : index
    %c0_124 = arith.constant 0 : index
    %c1_125 = arith.constant 1 : index
    %c0_126 = arith.constant 0 : index
    %c0_127 = arith.constant 0 : index
    %145 = vector.load %arg2[%c0_123, %c0_124, %c1_125, %c0_126, %c0_127] : memref<1x4x5x5x8xbf16, #tpu.memory_space<vmem>>, vector<1x1x4x4x8xbf16>
    %146 = vector.shape_cast %145 : vector<1x1x4x4x8xbf16> to vector<4x4x8xbf16>
    %147 = arith.extf %146 : vector<4x4x8xbf16> to vector<4x4x8xf32>
    %c2_128 = arith.constant 2 : index
    %c0_129 = arith.constant 0 : index
    %c0_130 = arith.constant 0 : index
    %148 = vector.load %arg5[%c2_128, %c0_129, %c0_130] : memref<3x3x8xf32, #tpu.memory_space<vmem>>, vector<1x1x8xf32>
    %149 = vector.shape_cast %148 : vector<1x1x8xf32> to vector<8xf32>
    %150 = vector.shape_cast %149 : vector<8xf32> to vector<1x1x8xf32>
    %151 = vector.broadcast %150 : vector<1x1x8xf32> to vector<4x4x8xf32>
    %152 = arith.mulf %147, %151 : vector<4x4x8xf32>
    %153 = arith.addf %144, %152 : vector<4x4x8xf32>
    %c0_131 = arith.constant 0 : index
    %c1_132 = arith.constant 1 : index
    %c1_133 = arith.constant 1 : index
    %c0_134 = arith.constant 0 : index
    %c0_135 = arith.constant 0 : index
    %154 = vector.load %arg2[%c0_131, %c1_132, %c1_133, %c0_134, %c0_135] : memref<1x4x5x5x8xbf16, #tpu.memory_space<vmem>>, vector<1x1x4x4x8xbf16>
    %155 = vector.shape_cast %154 : vector<1x1x4x4x8xbf16> to vector<4x4x8xbf16>
    %156 = arith.extf %155 : vector<4x4x8xbf16> to vector<4x4x8xf32>
    %c2_136 = arith.constant 2 : index
    %c1_137 = arith.constant 1 : index
    %c0_138 = arith.constant 0 : index
    %157 = vector.load %arg5[%c2_136, %c1_137, %c0_138] : memref<3x3x8xf32, #tpu.memory_space<vmem>>, vector<1x1x8xf32>
    %158 = vector.shape_cast %157 : vector<1x1x8xf32> to vector<8xf32>
    %159 = vector.shape_cast %158 : vector<8xf32> to vector<1x1x8xf32>
    %160 = vector.broadcast %159 : vector<1x1x8xf32> to vector<4x4x8xf32>
    %161 = arith.mulf %156, %160 : vector<4x4x8xf32>
    %162 = arith.addf %153, %161 : vector<4x4x8xf32>
    %c0_139 = arith.constant 0 : index
    %c0_140 = arith.constant 0 : index
    %c1_141 = arith.constant 1 : index
    %c1_142 = arith.constant 1 : index
    %c0_143 = arith.constant 0 : index
    %163 = vector.load %arg2[%c0_139, %c0_140, %c1_141, %c1_142, %c0_143] : memref<1x4x5x5x8xbf16, #tpu.memory_space<vmem>>, vector<1x1x4x4x8xbf16>
    %164 = vector.shape_cast %163 : vector<1x1x4x4x8xbf16> to vector<4x4x8xbf16>
    %165 = arith.extf %164 : vector<4x4x8xbf16> to vector<4x4x8xf32>
    %c2_144 = arith.constant 2 : index
    %c2_145 = arith.constant 2 : index
    %c0_146 = arith.constant 0 : index
    %166 = vector.load %arg5[%c2_144, %c2_145, %c0_146] : memref<3x3x8xf32, #tpu.memory_space<vmem>>, vector<1x1x8xf32>
    %167 = vector.shape_cast %166 : vector<1x1x8xf32> to vector<8xf32>
    %168 = vector.shape_cast %167 : vector<8xf32> to vector<1x1x8xf32>
    %169 = vector.broadcast %168 : vector<1x1x8xf32> to vector<4x4x8xf32>
    %170 = arith.mulf %165, %169 : vector<4x4x8xf32>
    %171 = arith.addf %162, %170 : vector<4x4x8xf32>
    %c0_147 = arith.constant 0 : index
    %c0_148 = arith.constant 0 : index
    %172 = vector.load %arg6[%c0_147, %c0_148] : memref<1x8xf32, #tpu.memory_space<vmem>>, vector<1x8xf32>
    %173 = vector.shape_cast %172 : vector<1x8xf32> to vector<1x1x8xf32>
    %174 = vector.broadcast %173 : vector<1x1x8xf32> to vector<4x4x8xf32>
    %175 = arith.addf %171, %174 : vector<4x4x8xf32>
    %176 = arith.truncf %175 : vector<4x4x8xf32> to vector<4x4x8xbf16>
    %c0_149 = arith.constant 0 : index
    %c0_150 = arith.constant 0 : index
    %c0_151 = arith.constant 0 : index
    %c0_152 = arith.constant 0 : index
    %177 = vector.load %arg8[%c0_149, %c0_150, %c0_151, %c0_152] : memref<1x4x4x8xbf16, #tpu.memory_space<vmem>>, vector<1x4x4x8xbf16>
    %178 = vector.shape_cast %177 : vector<1x4x4x8xbf16> to vector<4x4x8xbf16>
    %179 = vector.shape_cast %176 : vector<4x4x8xbf16> to vector<1x4x4x8xbf16>
    tpu.vector_store %arg8[%c0_149, %c0_150, %c0_151, %c0_152], %179 {strides = array<i32>} : memref<1x4x4x8xbf16, #tpu.memory_space<vmem>>, vector<1x4x4x8xbf16>,
    return
  }
  func.func @transform_0(%arg0: i32) -> (i32, i32, i32, i32, i32) {
    %c0_i32 = arith.constant 0 : i32
    %c0_i32_0 = arith.constant 0 : i32
    %c0_i32_1 = arith.constant 0 : i32
    %c0_i32_2 = arith.constant 0 : i32
    %c0_i32_3 = arith.constant 0 : i32
    return %arg0, %c0_i32, %c0_i32_0, %c0_i32_1, %c0_i32_2 : i32, i32, i32, i32, i32
  }
  func.func @transform_1(%arg0: i32) -> (i32, i32, i32, i32, i32) {
    %c0_i32 = arith.constant 0 : i32
    %c0_i32_0 = arith.constant 0 : i32
    %c0_i32_1 = arith.constant 0 : i32
    %c0_i32_2 = arith.constant 0 : i32
    %c0_i32_3 = arith.constant 0 : i32
    return %arg0, %c0_i32, %c0_i32_0, %c0_i32_1, %c0_i32_2 : i32, i32, i32, i32, i32
  }
  func.func @transform_2(%arg0: i32) -> (i32, i32, i32) {
    %c0_i32 = arith.constant 0 : i32
    %c0_i32_0 = arith.constant 0 : i32
    %c0_i32_1 = arith.constant 0 : i32
    %c0_i32_2 = arith.constant 0 : i32
    return %c0_i32, %c0_i32_0, %c0_i32_1 : i32, i32, i32
  }
  func.func @transform_3(%arg0: i32) -> (i32, i32) {
    %c0_i32 = arith.constant 0 : i32
    %c0_i32_0 = arith.constant 0 : i32
    %c0_i32_1 = arith.constant 0 : i32
    return %c0_i32, %c0_i32_0 : i32, i32
  }
  func.func @transform_4(%arg0: i32) -> (i32, i32, i32) {
    %c0_i32 = arith.constant 0 : i32
    %c0_i32_0 = arith.constant 0 : i32
    %c0_i32_1 = arith.constant 0 : i32
    %c0_i32_2 = arith.constant 0 : i32
    return %c0_i32, %c0_i32_0, %c0_i32_1 : i32, i32, i32
  }
  func.func @transform_5(%arg0: i32) -> (i32, i32) {
    %c0_i32 = arith.constant 0 : i32
    %c0_i32_0 = arith.constant 0 : i32
    %c0_i32_1 = arith.constant 0 : i32
    return %c0_i32, %c0_i32_0 : i32, i32
  }
  func.func @transform_6(%arg0: i32) -> (i32, i32, i32, i32) {
    %c0_i32 = arith.constant 0 : i32
    %c0_i32_0 = arith.constant 0 : i32
    %c0_i32_1 = arith.constant 0 : i32
    %c0_i32_2 = arith.constant 0 : i32
    return %arg0, %c0_i32, %c0_i32_0, %c0_i32_1 : i32, i32, i32, i32
  }
  func.func @transform_7(%arg0: i32) -> (i32, i32, i32, i32) {
    %c0_i32 = arith.constant 0 : i32
    %c0_i32_0 = arith.constant 0 : i32
    %c0_i32_1 = arith.constant 0 : i32
    %c0_i32_2 = arith.constant 0 : i32
    return %arg0, %c0_i32, %c0_i32_0, %c0_i32_1 : i32, i32, i32, i32
  }
}

module attributes {stable_mosaic.version = 11 : i64} {
  func.func @_mm_bias_act_kernel(%arg0: i32, %arg1: memref<32x16xbf16, #tpu.memory_space<vmem>>, %arg2: memref<16x16xbf16, #tpu.memory_space<vmem>>, %arg3: memref<1x16xf32, #tpu.memory_space<vmem>>, %arg4: memref<32x16xbf16, #tpu.memory_space<vmem>>) attributes {dimension_semantics = [#tpu.dimension_semantics<parallel>], iteration_bounds = array<i64: 1>, scalar_prefetch = 0 : i64, scratch_operands = 0 : i64, tpu.core_type = #tpu.core_type<tc>, window_params = [{transform_indices = @transform_0, window_bounds = array<i64: 32, 16>}, {pipeline_mode = #tpu.pipeline_mode<synchronous>, transform_indices = @transform_1, window_bounds = array<i64: 16, 16>}, {pipeline_mode = #tpu.pipeline_mode<synchronous>, transform_indices = @transform_2, window_bounds = array<i64: 1, 16>}, {transform_indices = @transform_3, window_bounds = array<i64: 32, 16>}]} {
    %c0 = arith.constant 0 : index
    %c0_0 = arith.constant 0 : index
    %0 = vector.load %arg1[%c0, %c0_0] : memref<32x16xbf16, #tpu.memory_space<vmem>>, vector<32x16xbf16>
    %c0_1 = arith.constant 0 : index
    %c0_2 = arith.constant 0 : index
    %1 = vector.load %arg2[%c0_1, %c0_2] : memref<16x16xbf16, #tpu.memory_space<vmem>>, vector<16x16xbf16>
    %cst = arith.constant dense<0.000000e+00> : vector<32x16xf32>
    %2 = tpu.matmul %0, %1, %cst {dimension_numbers = #tpu.dot_dimension_numbers<[1], [0], [0], [1], [0, 0, 1, 1], [], []>} : vector<32x16xbf16>, vector<16x16xbf16>, vector<32x16xf32> -> vector<32x16xf32>
    %c0_3 = arith.constant 0 : index
    %c0_4 = arith.constant 0 : index
    %3 = vector.load %arg3[%c0_3, %c0_4] : memref<1x16xf32, #tpu.memory_space<vmem>>, vector<1x16xf32>
    %4 = vector.broadcast %3 : vector<1x16xf32> to vector<32x16xf32>
    %5 = arith.addf %2, %4 : vector<32x16xf32>
    %cst_5 = arith.constant 0.000000e+00 : f32
    %6 = vector.broadcast %cst_5 : f32 to vector<32x16xf32>
    %7 = arith.maximumf %5, %6 : vector<32x16xf32>
    %8 = arith.truncf %7 : vector<32x16xf32> to vector<32x16xbf16>
    %c0_6 = arith.constant 0 : index
    %c0_7 = arith.constant 0 : index
    %9 = vector.load %arg4[%c0_6, %c0_7] : memref<32x16xbf16, #tpu.memory_space<vmem>>, vector<32x16xbf16>
    tpu.vector_store %arg4[%c0_6, %c0_7], %8 {strides = array<i32>} : memref<32x16xbf16, #tpu.memory_space<vmem>>, vector<32x16xbf16>,
    return
  }
  func.func @transform_0(%arg0: i32) -> (i32, i32) {
    %c0_i32 = arith.constant 0 : i32
    %c0_i32_0 = arith.constant 0 : i32
    return %arg0, %c0_i32 : i32, i32
  }
  func.func @transform_1(%arg0: i32) -> (i32, i32) {
    %c0_i32 = arith.constant 0 : i32
    %c0_i32_0 = arith.constant 0 : i32
    %c0_i32_1 = arith.constant 0 : i32
    return %c0_i32, %c0_i32_0 : i32, i32
  }
  func.func @transform_2(%arg0: i32) -> (i32, i32) {
    %c0_i32 = arith.constant 0 : i32
    %c0_i32_0 = arith.constant 0 : i32
    %c0_i32_1 = arith.constant 0 : i32
    return %c0_i32, %c0_i32_0 : i32, i32
  }
  func.func @transform_3(%arg0: i32) -> (i32, i32) {
    %c0_i32 = arith.constant 0 : i32
    %c0_i32_0 = arith.constant 0 : i32
    return %arg0, %c0_i32 : i32, i32
  }
}

module attributes {stable_mosaic.version = 11 : i64} {
  func.func @_dual_mm_shuffle_kernel(%arg0: i32, %arg1: memref<8x16xbf16, #tpu.memory_space<vmem>>, %arg2: memref<8x16xbf16, #tpu.memory_space<vmem>>, %arg3: memref<16x32xbf16, #tpu.memory_space<vmem>>, %arg4: memref<1x32xf32, #tpu.memory_space<vmem>>, %arg5: memref<16x32xbf16, #tpu.memory_space<vmem>>, %arg6: memref<1x32xf32, #tpu.memory_space<vmem>>, %arg7: memref<8x32xbf16, #tpu.memory_space<vmem>>) attributes {dimension_semantics = [#tpu.dimension_semantics<parallel>], iteration_bounds = array<i64: 1>, scalar_prefetch = 0 : i64, scratch_operands = 0 : i64, tpu.core_type = #tpu.core_type<tc>, window_params = [{transform_indices = @transform_0, window_bounds = array<i64: 8, 16>}, {transform_indices = @transform_1, window_bounds = array<i64: 8, 16>}, {pipeline_mode = #tpu.pipeline_mode<synchronous>, transform_indices = @transform_2, window_bounds = array<i64: 16, 32>}, {pipeline_mode = #tpu.pipeline_mode<synchronous>, transform_indices = @transform_3, window_bounds = array<i64: 1, 32>}, {pipeline_mode = #tpu.pipeline_mode<synchronous>, transform_indices = @transform_4, window_bounds = array<i64: 16, 32>}, {pipeline_mode = #tpu.pipeline_mode<synchronous>, transform_indices = @transform_5, window_bounds = array<i64: 1, 32>}, {transform_indices = @transform_6, window_bounds = array<i64: 8, 32>}]} {
    %c0 = arith.constant 0 : index
    %c0_0 = arith.constant 0 : index
    %0 = vector.load %arg1[%c0, %c0_0] : memref<8x16xbf16, #tpu.memory_space<vmem>>, vector<8x16xbf16>
    %c0_1 = arith.constant 0 : index
    %c0_2 = arith.constant 0 : index
    %1 = vector.load %arg3[%c0_1, %c0_2] : memref<16x32xbf16, #tpu.memory_space<vmem>>, vector<16x32xbf16>
    %cst = arith.constant dense<0.000000e+00> : vector<8x32xf32>
    %2 = tpu.matmul %0, %1, %cst {dimension_numbers = #tpu.dot_dimension_numbers<[1], [0], [0], [1], [0, 0, 1, 1], [], []>} : vector<8x16xbf16>, vector<16x32xbf16>, vector<8x32xf32> -> vector<8x32xf32>
    %c0_3 = arith.constant 0 : index
    %c0_4 = arith.constant 0 : index
    %3 = vector.load %arg4[%c0_3, %c0_4] : memref<1x32xf32, #tpu.memory_space<vmem>>, vector<1x32xf32>
    %4 = vector.broadcast %3 : vector<1x32xf32> to vector<8x32xf32>
    %5 = arith.addf %2, %4 : vector<8x32xf32>
    %cst_5 = arith.constant 0.000000e+00 : f32
    %6 = vector.broadcast %cst_5 : f32 to vector<8x32xf32>
    %7 = arith.maximumf %5, %6 : vector<8x32xf32>
    %c0_6 = arith.constant 0 : index
    %c0_7 = arith.constant 0 : index
    %8 = vector.load %arg2[%c0_6, %c0_7] : memref<8x16xbf16, #tpu.memory_space<vmem>>, vector<8x16xbf16>
    %c0_8 = arith.constant 0 : index
    %c0_9 = arith.constant 0 : index
    %9 = vector.load %arg5[%c0_8, %c0_9] : memref<16x32xbf16, #tpu.memory_space<vmem>>, vector<16x32xbf16>
    %cst_10 = arith.constant dense<0.000000e+00> : vector<8x32xf32>
    %10 = tpu.matmul %8, %9, %cst_10 {dimension_numbers = #tpu.dot_dimension_numbers<[1], [0], [0], [1], [0, 0, 1, 1], [], []>} : vector<8x16xbf16>, vector<16x32xbf16>, vector<8x32xf32> -> vector<8x32xf32>
    %c0_11 = arith.constant 0 : index
    %c0_12 = arith.constant 0 : index
    %11 = vector.load %arg6[%c0_11, %c0_12] : memref<1x32xf32, #tpu.memory_space<vmem>>, vector<1x32xf32>
    %12 = vector.broadcast %11 : vector<1x32xf32> to vector<8x32xf32>
    %13 = arith.addf %10, %12 : vector<8x32xf32>
    %cst_13 = arith.constant 0.000000e+00 : f32
    %14 = vector.broadcast %cst_13 : f32 to vector<8x32xf32>
    %15 = arith.maximumf %13, %14 : vector<8x32xf32>
    %16 = arith.addf %7, %15 : vector<8x32xf32>
    %17 = arith.truncf %16 : vector<8x32xf32> to vector<8x32xbf16>
    %c0_14 = arith.constant 0 : index
    %c0_15 = arith.constant 0 : index
    %18 = vector.load %arg7[%c0_14, %c0_15] : memref<8x32xbf16, #tpu.memory_space<vmem>>, vector<8x32xbf16>
    tpu.vector_store %arg7[%c0_14, %c0_15], %17 {strides = array<i32>} : memref<8x32xbf16, #tpu.memory_space<vmem>>, vector<8x32xbf16>,
    return
  }
  func.func @transform_0(%arg0: i32) -> (i32, i32) {
    %c0_i32 = arith.constant 0 : i32
    %c0_i32_0 = arith.constant 0 : i32
    return %arg0, %c0_i32 : i32, i32
  }
  func.func @transform_1(%arg0: i32) -> (i32, i32) {
    %c0_i32 = arith.constant 0 : i32
    %c0_i32_0 = arith.constant 0 : i32
    return %arg0, %c0_i32 : i32, i32
  }
  func.func @transform_2(%arg0: i32) -> (i32, i32) {
    %c0_i32 = arith.constant 0 : i32
    %c0_i32_0 = arith.constant 0 : i32
    %c0_i32_1 = arith.constant 0 : i32
    return %c0_i32, %c0_i32_0 : i32, i32
  }
  func.func @transform_3(%arg0: i32) -> (i32, i32) {
    %c0_i32 = arith.constant 0 : i32
    %c0_i32_0 = arith.constant 0 : i32
    %c0_i32_1 = arith.constant 0 : i32
    return %c0_i32, %c0_i32_0 : i32, i32
  }
  func.func @transform_4(%arg0: i32) -> (i32, i32) {
    %c0_i32 = arith.constant 0 : i32
    %c0_i32_0 = arith.constant 0 : i32
    %c0_i32_1 = arith.constant 0 : i32
    return %c0_i32, %c0_i32_0 : i32, i32
  }
  func.func @transform_5(%arg0: i32) -> (i32, i32) {
    %c0_i32 = arith.constant 0 : i32
    %c0_i32_0 = arith.constant 0 : i32
    %c0_i32_1 = arith.constant 0 : i32
    return %c0_i32, %c0_i32_0 : i32, i32
  }
  func.func @transform_6(%arg0: i32) -> (i32, i32) {
    %c0_i32 = arith.constant 0 : i32
    %c0_i32_0 = arith.constant 0 : i32
    return %arg0, %c0_i32 : i32, i32
  }
}

module attributes {stable_mosaic.version = 11 : i64} {
  func.func @_dual_dw3x3_s2_kernel(%arg0: i32, %arg1: memref<1x4x3x3x16xbf16, #tpu.memory_space<vmem>>, %arg2: memref<1x4x3x3x16xbf16, #tpu.memory_space<vmem>>, %arg3: memref<3x3x16xf32, #tpu.memory_space<vmem>>, %arg4: memref<1x16xf32, #tpu.memory_space<vmem>>, %arg5: memref<3x3x16xf32, #tpu.memory_space<vmem>>, %arg6: memref<1x16xf32, #tpu.memory_space<vmem>>, %arg7: memref<1x2x2x16xbf16, #tpu.memory_space<vmem>>, %arg8: memref<1x2x2x16xbf16, #tpu.memory_space<vmem>>) attributes {dimension_semantics = [#tpu.dimension_semantics<parallel>], iteration_bounds = array<i64: 2>, scalar_prefetch = 0 : i64, scratch_operands = 0 : i64, tpu.core_type = #tpu.core_type<tc>, window_params = [{transform_indices = @transform_0, window_bounds = array<i64: 1, 4, 3, 3, 16>}, {transform_indices = @transform_1, window_bounds = array<i64: 1, 4, 3, 3, 16>}, {pipeline_mode = #tpu.pipeline_mode<synchronous>, transform_indices = @transform_2, window_bounds = array<i64: 3, 3, 16>}, {pipeline_mode = #tpu.pipeline_mode<synchronous>, transform_indices = @transform_3, window_bounds = array<i64: 1, 16>}, {pipeline_mode = #tpu.pipeline_mode<synchronous>, transform_indices = @transform_4, window_bounds = array<i64: 3, 3, 16>}, {pipeline_mode = #tpu.pipeline_mode<synchronous>, transform_indices = @transform_5, window_bounds = array<i64: 1, 16>}, {transform_indices = @transform_6, window_bounds = array<i64: 1, 2, 2, 16>}, {transform_indices = @transform_7, window_bounds = array<i64: 1, 2, 2, 16>}]} {
    %cst = arith.constant 0.000000e+00 : f32
    %0 = vector.broadcast %cst : f32 to vector<2x2x16xf32>
    %c0 = arith.constant 0 : index
    %c0_0 = arith.constant 0 : index
    %c0_1 = arith.constant 0 : index
    %c0_2 = arith.constant 0 : index
    %c0_3 = arith.constant 0 : index
    %1 = vector.load %arg1[%c0, %c0_0, %c0_1, %c0_2, %c0_3] : memref<1x4x3x3x16xbf16, #tpu.memory_space<vmem>>, vector<1x1x2x2x16xbf16>
    %2 = vector.shape_cast %1 : vector<1x1x2x2x16xbf16> to vector<2x2x16xbf16>
    %3 = arith.extf %2 : vector<2x2x16xbf16> to vector<2x2x16xf32>
    %c0_4 = arith.constant 0 : index
    %c0_5 = arith.constant 0 : index
    %c0_6 = arith.constant 0 : index
    %4 = vector.load %arg3[%c0_4, %c0_5, %c0_6] : memref<3x3x16xf32, #tpu.memory_space<vmem>>, vector<1x1x16xf32>
    %5 = vector.shape_cast %4 : vector<1x1x16xf32> to vector<16xf32>
    %6 = vector.shape_cast %5 : vector<16xf32> to vector<1x1x16xf32>
    %7 = vector.broadcast %6 : vector<1x1x16xf32> to vector<2x2x16xf32>
    %8 = arith.mulf %3, %7 : vector<2x2x16xf32>
    %9 = arith.addf %0, %8 : vector<2x2x16xf32>
    %c0_7 = arith.constant 0 : index
    %c1 = arith.constant 1 : index
    %c0_8 = arith.constant 0 : index
    %c0_9 = arith.constant 0 : index
    %c0_10 = arith.constant 0 : index
    %10 = vector.load %arg1[%c0_7, %c1, %c0_8, %c0_9, %c0_10] : memref<1x4x3x3x16xbf16, #tpu.memory_space<vmem>>, vector<1x1x2x2x16xbf16>
    %11 = vector.shape_cast %10 : vector<1x1x2x2x16xbf16> to vector<2x2x16xbf16>
    %12 = arith.extf %11 : vector<2x2x16xbf16> to vector<2x2x16xf32>
    %c0_11 = arith.constant 0 : index
    %c1_12 = arith.constant 1 : index
    %c0_13 = arith.constant 0 : index
    %13 = vector.load %arg3[%c0_11, %c1_12, %c0_13] : memref<3x3x16xf32, #tpu.memory_space<vmem>>, vector<1x1x16xf32>
    %14 = vector.shape_cast %13 : vector<1x1x16xf32> to vector<16xf32>
    %15 = vector.shape_cast %14 : vector<16xf32> to vector<1x1x16xf32>
    %16 = vector.broadcast %15 : vector<1x1x16xf32> to vector<2x2x16xf32>
    %17 = arith.mulf %12, %16 : vector<2x2x16xf32>
    %18 = arith.addf %9, %17 : vector<2x2x16xf32>
    %c0_14 = arith.constant 0 : index
    %c0_15 = arith.constant 0 : index
    %c0_16 = arith.constant 0 : index
    %c1_17 = arith.constant 1 : index
    %c0_18 = arith.constant 0 : index
    %19 = vector.load %arg1[%c0_14, %c0_15, %c0_16, %c1_17, %c0_18] : memref<1x4x3x3x16xbf16, #tpu.memory_space<vmem>>, vector<1x1x2x2x16xbf16>
    %20 = vector.shape_cast %19 : vector<1x1x2x2x16xbf16> to vector<2x2x16xbf16>
    %21 = arith.extf %20 : vector<2x2x16xbf16> to vector<2x2x16xf32>
    %c0_19 = arith.constant 0 : index
    %c2 = arith.constant 2 : index
    %c0_20 = arith.constant 0 : index
    %22 = vector.load %arg3[%c0_19, %c2, %c0_20] : memref<3x3x16xf32, #tpu.memory_space<vmem>>, vector<1x1x16xf32>
    %23 = vector.shape_cast %22 : vector<1x1x16xf32> to vector<16xf32>
    %24 = vector.shape_cast %23 : vector<16xf32> to vector<1x1x16xf32>
    %25 = vector.broadcast %24 : vector<1x1x16xf32> to vector<2x2x16xf32>
    %26 = arith.mulf %21, %25 : vector<2x2x16xf32>
    %27 = arith.addf %18, %26 : vector<2x2x16xf32>
    %c0_21 = arith.constant 0 : index
    %c2_22 = arith.constant 2 : index
    %c0_23 = arith.constant 0 : index
    %c0_24 = arith.constant 0 : index
    %c0_25 = arith.constant 0 : index
    %28 = vector.load %arg1[%c0_21, %c2_22, %c0_23, %c0_24, %c0_25] : memref<1x4x3x3x16xbf16, #tpu.memory_space<vmem>>, vector<1x1x2x2x16xbf16>
    %29 = vector.shape_cast %28 : vector<1x1x2x2x16xbf16> to vector<2x2x16xbf16>
    %30 = arith.extf %29 : vector<2x2x16xbf16> to vector<2x2x16xf32>
    %c1_26 = arith.constant 1 : index
    %c0_27 = arith.constant 0 : index
    %c0_28 = arith.constant 0 : index
    %31 = vector.load %arg3[%c1_26, %c0_27, %c0_28] : memref<3x3x16xf32, #tpu.memory_space<vmem>>, vector<1x1x16xf32>
    %32 = vector.shape_cast %31 : vector<1x1x16xf32> to vector<16xf32>
    %33 = vector.shape_cast %32 : vector<16xf32> to vector<1x1x16xf32>
    %34 = vector.broadcast %33 : vector<1x1x16xf32> to vector<2x2x16xf32>
    %35 = arith.mulf %30, %34 : vector<2x2x16xf32>
    %36 = arith.addf %27, %35 : vector<2x2x16xf32>
    %c0_29 = arith.constant 0 : index
    %c3 = arith.constant 3 : index
    %c0_30 = arith.constant 0 : index
    %c0_31 = arith.constant 0 : index
    %c0_32 = arith.constant 0 : index
    %37 = vector.load %arg1[%c0_29, %c3, %c0_30, %c0_31, %c0_32] : memref<1x4x3x3x16xbf16, #tpu.memory_space<vmem>>, vector<1x1x2x2x16xbf16>
    %38 = vector.shape_cast %37 : vector<1x1x2x2x16xbf16> to vector<2x2x16xbf16>
    %39 = arith.extf %38 : vector<2x2x16xbf16> to vector<2x2x16xf32>
    %c1_33 = arith.constant 1 : index
    %c1_34 = arith.constant 1 : index
    %c0_35 = arith.constant 0 : index
    %40 = vector.load %arg3[%c1_33, %c1_34, %c0_35] : memref<3x3x16xf32, #tpu.memory_space<vmem>>, vector<1x1x16xf32>
    %41 = vector.shape_cast %40 : vector<1x1x16xf32> to vector<16xf32>
    %42 = vector.shape_cast %41 : vector<16xf32> to vector<1x1x16xf32>
    %43 = vector.broadcast %42 : vector<1x1x16xf32> to vector<2x2x16xf32>
    %44 = arith.mulf %39, %43 : vector<2x2x16xf32>
    %45 = arith.addf %36, %44 : vector<2x2x16xf32>
    %c0_36 = arith.constant 0 : index
    %c2_37 = arith.constant 2 : index
    %c0_38 = arith.constant 0 : index
    %c1_39 = arith.constant 1 : index
    %c0_40 = arith.constant 0 : index
    %46 = vector.load %arg1[%c0_36, %c2_37, %c0_38, %c1_39, %c0_40] : memref<1x4x3x3x16xbf16, #tpu.memory_space<vmem>>, vector<1x1x2x2x16xbf16>
    %47 = vector.shape_cast %46 : vector<1x1x2x2x16xbf16> to vector<2x2x16xbf16>
    %48 = arith.extf %47 : vector<2x2x16xbf16> to vector<2x2x16xf32>
    %c1_41 = arith.constant 1 : index
    %c2_42 = arith.constant 2 : index
    %c0_43 = arith.constant 0 : index
    %49 = vector.load %arg3[%c1_41, %c2_42, %c0_43] : memref<3x3x16xf32, #tpu.memory_space<vmem>>, vector<1x1x16xf32>
    %50 = vector.shape_cast %49 : vector<1x1x16xf32> to vector<16xf32>
    %51 = vector.shape_cast %50 : vector<16xf32> to vector<1x1x16xf32>
    %52 = vector.broadcast %51 : vector<1x1x16xf32> to vector<2x2x16xf32>
    %53 = arith.mulf %48, %52 : vector<2x2x16xf32>
    %54 = arith.addf %45, %53 : vector<2x2x16xf32>
    %c0_44 = arith.constant 0 : index
    %c0_45 = arith.constant 0 : index
    %c1_46 = arith.constant 1 : index
    %c0_47 = arith.constant 0 : index
    %c0_48 = arith.constant 0 : index
    %55 = vector.load %arg1[%c0_44, %c0_45, %c1_46, %c0_47, %c0_48] : memref<1x4x3x3x16xbf16, #tpu.memory_space<vmem>>, vector<1x1x2x2x16xbf16>
    %56 = vector.shape_cast %55 : vector<1x1x2x2x16xbf16> to vector<2x2x16xbf16>
    %57 = arith.extf %56 : vector<2x2x16xbf16> to vector<2x2x16xf32>
    %c2_49 = arith.constant 2 : index
    %c0_50 = arith.constant 0 : index
    %c0_51 = arith.constant 0 : index
    %58 = vector.load %arg3[%c2_49, %c0_50, %c0_51] : memref<3x3x16xf32, #tpu.memory_space<vmem>>, vector<1x1x16xf32>
    %59 = vector.shape_cast %58 : vector<1x1x16xf32> to vector<16xf32>
    %60 = vector.shape_cast %59 : vector<16xf32> to vector<1x1x16xf32>
    %61 = vector.broadcast %60 : vector<1x1x16xf32> to vector<2x2x16xf32>
    %62 = arith.mulf %57, %61 : vector<2x2x16xf32>
    %63 = arith.addf %54, %62 : vector<2x2x16xf32>
    %c0_52 = arith.constant 0 : index
    %c1_53 = arith.constant 1 : index
    %c1_54 = arith.constant 1 : index
    %c0_55 = arith.constant 0 : index
    %c0_56 = arith.constant 0 : index
    %64 = vector.load %arg1[%c0_52, %c1_53, %c1_54, %c0_55, %c0_56] : memref<1x4x3x3x16xbf16, #tpu.memory_space<vmem>>, vector<1x1x2x2x16xbf16>
    %65 = vector.shape_cast %64 : vector<1x1x2x2x16xbf16> to vector<2x2x16xbf16>
    %66 = arith.extf %65 : vector<2x2x16xbf16> to vector<2x2x16xf32>
    %c2_57 = arith.constant 2 : index
    %c1_58 = arith.constant 1 : index
    %c0_59 = arith.constant 0 : index
    %67 = vector.load %arg3[%c2_57, %c1_58, %c0_59] : memref<3x3x16xf32, #tpu.memory_space<vmem>>, vector<1x1x16xf32>
    %68 = vector.shape_cast %67 : vector<1x1x16xf32> to vector<16xf32>
    %69 = vector.shape_cast %68 : vector<16xf32> to vector<1x1x16xf32>
    %70 = vector.broadcast %69 : vector<1x1x16xf32> to vector<2x2x16xf32>
    %71 = arith.mulf %66, %70 : vector<2x2x16xf32>
    %72 = arith.addf %63, %71 : vector<2x2x16xf32>
    %c0_60 = arith.constant 0 : index
    %c0_61 = arith.constant 0 : index
    %c1_62 = arith.constant 1 : index
    %c1_63 = arith.constant 1 : index
    %c0_64 = arith.constant 0 : index
    %73 = vector.load %arg1[%c0_60, %c0_61, %c1_62, %c1_63, %c0_64] : memref<1x4x3x3x16xbf16, #tpu.memory_space<vmem>>, vector<1x1x2x2x16xbf16>
    %74 = vector.shape_cast %73 : vector<1x1x2x2x16xbf16> to vector<2x2x16xbf16>
    %75 = arith.extf %74 : vector<2x2x16xbf16> to vector<2x2x16xf32>
    %c2_65 = arith.constant 2 : index
    %c2_66 = arith.constant 2 : index
    %c0_67 = arith.constant 0 : index
    %76 = vector.load %arg3[%c2_65, %c2_66, %c0_67] : memref<3x3x16xf32, #tpu.memory_space<vmem>>, vector<1x1x16xf32>
    %77 = vector.shape_cast %76 : vector<1x1x16xf32> to vector<16xf32>
    %78 = vector.shape_cast %77 : vector<16xf32> to vector<1x1x16xf32>
    %79 = vector.broadcast %78 : vector<1x1x16xf32> to vector<2x2x16xf32>
    %80 = arith.mulf %75, %79 : vector<2x2x16xf32>
    %81 = arith.addf %72, %80 : vector<2x2x16xf32>
    %c0_68 = arith.constant 0 : index
    %c0_69 = arith.constant 0 : index
    %82 = vector.load %arg4[%c0_68, %c0_69] : memref<1x16xf32, #tpu.memory_space<vmem>>, vector<1x16xf32>
    %83 = vector.shape_cast %82 : vector<1x16xf32> to vector<1x1x16xf32>
    %84 = vector.broadcast %83 : vector<1x1x16xf32> to vector<2x2x16xf32>
    %85 = arith.addf %81, %84 : vector<2x2x16xf32>
    %86 = arith.truncf %85 : vector<2x2x16xf32> to vector<2x2x16xbf16>
    %c0_70 = arith.constant 0 : index
    %c0_71 = arith.constant 0 : index
    %c0_72 = arith.constant 0 : index
    %c0_73 = arith.constant 0 : index
    %87 = vector.load %arg7[%c0_70, %c0_71, %c0_72, %c0_73] : memref<1x2x2x16xbf16, #tpu.memory_space<vmem>>, vector<1x2x2x16xbf16>
    %88 = vector.shape_cast %87 : vector<1x2x2x16xbf16> to vector<2x2x16xbf16>
    %89 = vector.shape_cast %86 : vector<2x2x16xbf16> to vector<1x2x2x16xbf16>
    tpu.vector_store %arg7[%c0_70, %c0_71, %c0_72, %c0_73], %89 {strides = array<i32>} : memref<1x2x2x16xbf16, #tpu.memory_space<vmem>>, vector<1x2x2x16xbf16>,
    %cst_74 = arith.constant 0.000000e+00 : f32
    %90 = vector.broadcast %cst_74 : f32 to vector<2x2x16xf32>
    %c0_75 = arith.constant 0 : index
    %c0_76 = arith.constant 0 : index
    %c0_77 = arith.constant 0 : index
    %c0_78 = arith.constant 0 : index
    %c0_79 = arith.constant 0 : index
    %91 = vector.load %arg2[%c0_75, %c0_76, %c0_77, %c0_78, %c0_79] : memref<1x4x3x3x16xbf16, #tpu.memory_space<vmem>>, vector<1x1x2x2x16xbf16>
    %92 = vector.shape_cast %91 : vector<1x1x2x2x16xbf16> to vector<2x2x16xbf16>
    %93 = arith.extf %92 : vector<2x2x16xbf16> to vector<2x2x16xf32>
    %c0_80 = arith.constant 0 : index
    %c0_81 = arith.constant 0 : index
    %c0_82 = arith.constant 0 : index
    %94 = vector.load %arg5[%c0_80, %c0_81, %c0_82] : memref<3x3x16xf32, #tpu.memory_space<vmem>>, vector<1x1x16xf32>
    %95 = vector.shape_cast %94 : vector<1x1x16xf32> to vector<16xf32>
    %96 = vector.shape_cast %95 : vector<16xf32> to vector<1x1x16xf32>
    %97 = vector.broadcast %96 : vector<1x1x16xf32> to vector<2x2x16xf32>
    %98 = arith.mulf %93, %97 : vector<2x2x16xf32>
    %99 = arith.addf %90, %98 : vector<2x2x16xf32>
    %c0_83 = arith.constant 0 : index
    %c1_84 = arith.constant 1 : index
    %c0_85 = arith.constant 0 : index
    %c0_86 = arith.constant 0 : index
    %c0_87 = arith.constant 0 : index
    %100 = vector.load %arg2[%c0_83, %c1_84, %c0_85, %c0_86, %c0_87] : memref<1x4x3x3x16xbf16, #tpu.memory_space<vmem>>, vector<1x1x2x2x16xbf16>
    %101 = vector.shape_cast %100 : vector<1x1x2x2x16xbf16> to vector<2x2x16xbf16>
    %102 = arith.extf %101 : vector<2x2x16xbf16> to vector<2x2x16xf32>
    %c0_88 = arith.constant 0 : index
    %c1_89 = arith.constant 1 : index
    %c0_90 = arith.constant 0 : index
    %103 = vector.load %arg5[%c0_88, %c1_89, %c0_90] : memref<3x3x16xf32, #tpu.memory_space<vmem>>, vector<1x1x16xf32>
    %104 = vector.shape_cast %103 : vector<1x1x16xf32> to vector<16xf32>
    %105 = vector.shape_cast %104 : vector<16xf32> to vector<1x1x16xf32>
    %106 = vector.broadcast %105 : vector<1x1x16xf32> to vector<2x2x16xf32>
    %107 = arith.mulf %102, %106 : vector<2x2x16xf32>
    %108 = arith.addf %99, %107 : vector<2x2x16xf32>
    %c0_91 = arith.constant 0 : index
    %c0_92 = arith.constant 0 : index
    %c0_93 = arith.constant 0 : index
    %c1_94 = arith.constant 1 : index
    %c0_95 = arith.constant 0 : index
    %109 = vector.load %arg2[%c0_91, %c0_92, %c0_93, %c1_94, %c0_95] : memref<1x4x3x3x16xbf16, #tpu.memory_space<vmem>>, vector<1x1x2x2x16xbf16>
    %110 = vector.shape_cast %109 : vector<1x1x2x2x16xbf16> to vector<2x2x16xbf16>
    %111 = arith.extf %110 : vector<2x2x16xbf16> to vector<2x2x16xf32>
    %c0_96 = arith.constant 0 : index
    %c2_97 = arith.constant 2 : index
    %c0_98 = arith.constant 0 : index
    %112 = vector.load %arg5[%c0_96, %c2_97, %c0_98] : memref<3x3x16xf32, #tpu.memory_space<vmem>>, vector<1x1x16xf32>
    %113 = vector.shape_cast %112 : vector<1x1x16xf32> to vector<16xf32>
    %114 = vector.shape_cast %113 : vector<16xf32> to vector<1x1x16xf32>
    %115 = vector.broadcast %114 : vector<1x1x16xf32> to vector<2x2x16xf32>
    %116 = arith.mulf %111, %115 : vector<2x2x16xf32>
    %117 = arith.addf %108, %116 : vector<2x2x16xf32>
    %c0_99 = arith.constant 0 : index
    %c2_100 = arith.constant 2 : index
    %c0_101 = arith.constant 0 : index
    %c0_102 = arith.constant 0 : index
    %c0_103 = arith.constant 0 : index
    %118 = vector.load %arg2[%c0_99, %c2_100, %c0_101, %c0_102, %c0_103] : memref<1x4x3x3x16xbf16, #tpu.memory_space<vmem>>, vector<1x1x2x2x16xbf16>
    %119 = vector.shape_cast %118 : vector<1x1x2x2x16xbf16> to vector<2x2x16xbf16>
    %120 = arith.extf %119 : vector<2x2x16xbf16> to vector<2x2x16xf32>
    %c1_104 = arith.constant 1 : index
    %c0_105 = arith.constant 0 : index
    %c0_106 = arith.constant 0 : index
    %121 = vector.load %arg5[%c1_104, %c0_105, %c0_106] : memref<3x3x16xf32, #tpu.memory_space<vmem>>, vector<1x1x16xf32>
    %122 = vector.shape_cast %121 : vector<1x1x16xf32> to vector<16xf32>
    %123 = vector.shape_cast %122 : vector<16xf32> to vector<1x1x16xf32>
    %124 = vector.broadcast %123 : vector<1x1x16xf32> to vector<2x2x16xf32>
    %125 = arith.mulf %120, %124 : vector<2x2x16xf32>
    %126 = arith.addf %117, %125 : vector<2x2x16xf32>
    %c0_107 = arith.constant 0 : index
    %c3_108 = arith.constant 3 : index
    %c0_109 = arith.constant 0 : index
    %c0_110 = arith.constant 0 : index
    %c0_111 = arith.constant 0 : index
    %127 = vector.load %arg2[%c0_107, %c3_108, %c0_109, %c0_110, %c0_111] : memref<1x4x3x3x16xbf16, #tpu.memory_space<vmem>>, vector<1x1x2x2x16xbf16>
    %128 = vector.shape_cast %127 : vector<1x1x2x2x16xbf16> to vector<2x2x16xbf16>
    %129 = arith.extf %128 : vector<2x2x16xbf16> to vector<2x2x16xf32>
    %c1_112 = arith.constant 1 : index
    %c1_113 = arith.constant 1 : index
    %c0_114 = arith.constant 0 : index
    %130 = vector.load %arg5[%c1_112, %c1_113, %c0_114] : memref<3x3x16xf32, #tpu.memory_space<vmem>>, vector<1x1x16xf32>
    %131 = vector.shape_cast %130 : vector<1x1x16xf32> to vector<16xf32>
    %132 = vector.shape_cast %131 : vector<16xf32> to vector<1x1x16xf32>
    %133 = vector.broadcast %132 : vector<1x1x16xf32> to vector<2x2x16xf32>
    %134 = arith.mulf %129, %133 : vector<2x2x16xf32>
    %135 = arith.addf %126, %134 : vector<2x2x16xf32>
    %c0_115 = arith.constant 0 : index
    %c2_116 = arith.constant 2 : index
    %c0_117 = arith.constant 0 : index
    %c1_118 = arith.constant 1 : index
    %c0_119 = arith.constant 0 : index
    %136 = vector.load %arg2[%c0_115, %c2_116, %c0_117, %c1_118, %c0_119] : memref<1x4x3x3x16xbf16, #tpu.memory_space<vmem>>, vector<1x1x2x2x16xbf16>
    %137 = vector.shape_cast %136 : vector<1x1x2x2x16xbf16> to vector<2x2x16xbf16>
    %138 = arith.extf %137 : vector<2x2x16xbf16> to vector<2x2x16xf32>
    %c1_120 = arith.constant 1 : index
    %c2_121 = arith.constant 2 : index
    %c0_122 = arith.constant 0 : index
    %139 = vector.load %arg5[%c1_120, %c2_121, %c0_122] : memref<3x3x16xf32, #tpu.memory_space<vmem>>, vector<1x1x16xf32>
    %140 = vector.shape_cast %139 : vector<1x1x16xf32> to vector<16xf32>
    %141 = vector.shape_cast %140 : vector<16xf32> to vector<1x1x16xf32>
    %142 = vector.broadcast %141 : vector<1x1x16xf32> to vector<2x2x16xf32>
    %143 = arith.mulf %138, %142 : vector<2x2x16xf32>
    %144 = arith.addf %135, %143 : vector<2x2x16xf32>
    %c0_123 = arith.constant 0 : index
    %c0_124 = arith.constant 0 : index
    %c1_125 = arith.constant 1 : index
    %c0_126 = arith.constant 0 : index
    %c0_127 = arith.constant 0 : index
    %145 = vector.load %arg2[%c0_123, %c0_124, %c1_125, %c0_126, %c0_127] : memref<1x4x3x3x16xbf16, #tpu.memory_space<vmem>>, vector<1x1x2x2x16xbf16>
    %146 = vector.shape_cast %145 : vector<1x1x2x2x16xbf16> to vector<2x2x16xbf16>
    %147 = arith.extf %146 : vector<2x2x16xbf16> to vector<2x2x16xf32>
    %c2_128 = arith.constant 2 : index
    %c0_129 = arith.constant 0 : index
    %c0_130 = arith.constant 0 : index
    %148 = vector.load %arg5[%c2_128, %c0_129, %c0_130] : memref<3x3x16xf32, #tpu.memory_space<vmem>>, vector<1x1x16xf32>
    %149 = vector.shape_cast %148 : vector<1x1x16xf32> to vector<16xf32>
    %150 = vector.shape_cast %149 : vector<16xf32> to vector<1x1x16xf32>
    %151 = vector.broadcast %150 : vector<1x1x16xf32> to vector<2x2x16xf32>
    %152 = arith.mulf %147, %151 : vector<2x2x16xf32>
    %153 = arith.addf %144, %152 : vector<2x2x16xf32>
    %c0_131 = arith.constant 0 : index
    %c1_132 = arith.constant 1 : index
    %c1_133 = arith.constant 1 : index
    %c0_134 = arith.constant 0 : index
    %c0_135 = arith.constant 0 : index
    %154 = vector.load %arg2[%c0_131, %c1_132, %c1_133, %c0_134, %c0_135] : memref<1x4x3x3x16xbf16, #tpu.memory_space<vmem>>, vector<1x1x2x2x16xbf16>
    %155 = vector.shape_cast %154 : vector<1x1x2x2x16xbf16> to vector<2x2x16xbf16>
    %156 = arith.extf %155 : vector<2x2x16xbf16> to vector<2x2x16xf32>
    %c2_136 = arith.constant 2 : index
    %c1_137 = arith.constant 1 : index
    %c0_138 = arith.constant 0 : index
    %157 = vector.load %arg5[%c2_136, %c1_137, %c0_138] : memref<3x3x16xf32, #tpu.memory_space<vmem>>, vector<1x1x16xf32>
    %158 = vector.shape_cast %157 : vector<1x1x16xf32> to vector<16xf32>
    %159 = vector.shape_cast %158 : vector<16xf32> to vector<1x1x16xf32>
    %160 = vector.broadcast %159 : vector<1x1x16xf32> to vector<2x2x16xf32>
    %161 = arith.mulf %156, %160 : vector<2x2x16xf32>
    %162 = arith.addf %153, %161 : vector<2x2x16xf32>
    %c0_139 = arith.constant 0 : index
    %c0_140 = arith.constant 0 : index
    %c1_141 = arith.constant 1 : index
    %c1_142 = arith.constant 1 : index
    %c0_143 = arith.constant 0 : index
    %163 = vector.load %arg2[%c0_139, %c0_140, %c1_141, %c1_142, %c0_143] : memref<1x4x3x3x16xbf16, #tpu.memory_space<vmem>>, vector<1x1x2x2x16xbf16>
    %164 = vector.shape_cast %163 : vector<1x1x2x2x16xbf16> to vector<2x2x16xbf16>
    %165 = arith.extf %164 : vector<2x2x16xbf16> to vector<2x2x16xf32>
    %c2_144 = arith.constant 2 : index
    %c2_145 = arith.constant 2 : index
    %c0_146 = arith.constant 0 : index
    %166 = vector.load %arg5[%c2_144, %c2_145, %c0_146] : memref<3x3x16xf32, #tpu.memory_space<vmem>>, vector<1x1x16xf32>
    %167 = vector.shape_cast %166 : vector<1x1x16xf32> to vector<16xf32>
    %168 = vector.shape_cast %167 : vector<16xf32> to vector<1x1x16xf32>
    %169 = vector.broadcast %168 : vector<1x1x16xf32> to vector<2x2x16xf32>
    %170 = arith.mulf %165, %169 : vector<2x2x16xf32>
    %171 = arith.addf %162, %170 : vector<2x2x16xf32>
    %c0_147 = arith.constant 0 : index
    %c0_148 = arith.constant 0 : index
    %172 = vector.load %arg6[%c0_147, %c0_148] : memref<1x16xf32, #tpu.memory_space<vmem>>, vector<1x16xf32>
    %173 = vector.shape_cast %172 : vector<1x16xf32> to vector<1x1x16xf32>
    %174 = vector.broadcast %173 : vector<1x1x16xf32> to vector<2x2x16xf32>
    %175 = arith.addf %171, %174 : vector<2x2x16xf32>
    %176 = arith.truncf %175 : vector<2x2x16xf32> to vector<2x2x16xbf16>
    %c0_149 = arith.constant 0 : index
    %c0_150 = arith.constant 0 : index
    %c0_151 = arith.constant 0 : index
    %c0_152 = arith.constant 0 : index
    %177 = vector.load %arg8[%c0_149, %c0_150, %c0_151, %c0_152] : memref<1x2x2x16xbf16, #tpu.memory_space<vmem>>, vector<1x2x2x16xbf16>
    %178 = vector.shape_cast %177 : vector<1x2x2x16xbf16> to vector<2x2x16xbf16>
    %179 = vector.shape_cast %176 : vector<2x2x16xbf16> to vector<1x2x2x16xbf16>
    tpu.vector_store %arg8[%c0_149, %c0_150, %c0_151, %c0_152], %179 {strides = array<i32>} : memref<1x2x2x16xbf16, #tpu.memory_space<vmem>>, vector<1x2x2x16xbf16>,
    return
  }
  func.func @transform_0(%arg0: i32) -> (i32, i32, i32, i32, i32) {
    %c0_i32 = arith.constant 0 : i32
    %c0_i32_0 = arith.constant 0 : i32
    %c0_i32_1 = arith.constant 0 : i32
    %c0_i32_2 = arith.constant 0 : i32
    %c0_i32_3 = arith.constant 0 : i32
    return %arg0, %c0_i32, %c0_i32_0, %c0_i32_1, %c0_i32_2 : i32, i32, i32, i32, i32
  }
  func.func @transform_1(%arg0: i32) -> (i32, i32, i32, i32, i32) {
    %c0_i32 = arith.constant 0 : i32
    %c0_i32_0 = arith.constant 0 : i32
    %c0_i32_1 = arith.constant 0 : i32
    %c0_i32_2 = arith.constant 0 : i32
    %c0_i32_3 = arith.constant 0 : i32
    return %arg0, %c0_i32, %c0_i32_0, %c0_i32_1, %c0_i32_2 : i32, i32, i32, i32, i32
  }
  func.func @transform_2(%arg0: i32) -> (i32, i32, i32) {
    %c0_i32 = arith.constant 0 : i32
    %c0_i32_0 = arith.constant 0 : i32
    %c0_i32_1 = arith.constant 0 : i32
    %c0_i32_2 = arith.constant 0 : i32
    return %c0_i32, %c0_i32_0, %c0_i32_1 : i32, i32, i32
  }
  func.func @transform_3(%arg0: i32) -> (i32, i32) {
    %c0_i32 = arith.constant 0 : i32
    %c0_i32_0 = arith.constant 0 : i32
    %c0_i32_1 = arith.constant 0 : i32
    return %c0_i32, %c0_i32_0 : i32, i32
  }
  func.func @transform_4(%arg0: i32) -> (i32, i32, i32) {
    %c0_i32 = arith.constant 0 : i32
    %c0_i32_0 = arith.constant 0 : i32
    %c0_i32_1 = arith.constant 0 : i32
    %c0_i32_2 = arith.constant 0 : i32
    return %c0_i32, %c0_i32_0, %c0_i32_1 : i32, i32, i32
  }
  func.func @transform_5(%arg0: i32) -> (i32, i32) {
    %c0_i32 = arith.constant 0 : i32
    %c0_i32_0 = arith.constant 0 : i32
    %c0_i32_1 = arith.constant 0 : i32
    return %c0_i32, %c0_i32_0 : i32, i32
  }
  func.func @transform_6(%arg0: i32) -> (i32, i32, i32, i32) {
    %c0_i32 = arith.constant 0 : i32
    %c0_i32_0 = arith.constant 0 : i32
    %c0_i32_1 = arith.constant 0 : i32
    %c0_i32_2 = arith.constant 0 : i32
    return %arg0, %c0_i32, %c0_i32_0, %c0_i32_1 : i32, i32, i32, i32
  }
  func.func @transform_7(%arg0: i32) -> (i32, i32, i32, i32) {
    %c0_i32 = arith.constant 0 : i32
    %c0_i32_0 = arith.constant 0 : i32
    %c0_i32_1 = arith.constant 0 : i32
    %c0_i32_2 = arith.constant 0 : i32
    return %arg0, %c0_i32, %c0_i32_0, %c0_i32_1 : i32, i32, i32, i32
  }
}

module attributes {stable_mosaic.version = 11 : i64} {
  func.func @_fused_unit_s1_kernel(%arg0: i32, %arg1: memref<1x4x32xbf16, #tpu.memory_space<vmem>>, %arg2: memref<32x16xbf16, #tpu.memory_space<vmem>>, %arg3: memref<1x16xf32, #tpu.memory_space<vmem>>, %arg4: memref<3x3x16xf32, #tpu.memory_space<vmem>>, %arg5: memref<1x16xf32, #tpu.memory_space<vmem>>, %arg6: memref<16x32xbf16, #tpu.memory_space<vmem>>, %arg7: memref<1x32xf32, #tpu.memory_space<vmem>>, %arg8: memref<32x32xbf16, #tpu.memory_space<vmem>>, %arg9: memref<1x4x32xbf16, #tpu.memory_space<vmem>>, %arg10: memref<20x16xf32, #tpu.memory_space<vmem>>) attributes {dimension_semantics = [#tpu.dimension_semantics<parallel>], iteration_bounds = array<i64: 2>, scalar_prefetch = 0 : i64, scratch_operands = 1 : i64, tpu.core_type = #tpu.core_type<tc>, window_params = [{transform_indices = @transform_0, window_bounds = array<i64: 1, 4, 32>}, {pipeline_mode = #tpu.pipeline_mode<synchronous>, transform_indices = @transform_1, window_bounds = array<i64: 32, 16>}, {pipeline_mode = #tpu.pipeline_mode<synchronous>, transform_indices = @transform_2, window_bounds = array<i64: 1, 16>}, {pipeline_mode = #tpu.pipeline_mode<synchronous>, transform_indices = @transform_3, window_bounds = array<i64: 3, 3, 16>}, {pipeline_mode = #tpu.pipeline_mode<synchronous>, transform_indices = @transform_4, window_bounds = array<i64: 1, 16>}, {pipeline_mode = #tpu.pipeline_mode<synchronous>, transform_indices = @transform_5, window_bounds = array<i64: 16, 32>}, {pipeline_mode = #tpu.pipeline_mode<synchronous>, transform_indices = @transform_6, window_bounds = array<i64: 1, 32>}, {pipeline_mode = #tpu.pipeline_mode<synchronous>, transform_indices = @transform_7, window_bounds = array<i64: 32, 32>}, {transform_indices = @transform_8, window_bounds = array<i64: 1, 4, 32>}]} {
    %c0 = arith.constant 0 : index
    %c0_0 = arith.constant 0 : index
    %c0_1 = arith.constant 0 : index
    %0 = vector.load %arg1[%c0, %c0_0, %c0_1] : memref<1x4x32xbf16, #tpu.memory_space<vmem>>, vector<1x4x32xbf16>
    %1 = vector.shape_cast %0 : vector<1x4x32xbf16> to vector<4x32xbf16>
    %c0_2 = arith.constant 0 : index
    %c0_3 = arith.constant 0 : index
    %2 = vector.load %arg2[%c0_2, %c0_3] : memref<32x16xbf16, #tpu.memory_space<vmem>>, vector<32x16xbf16>
    %cst = arith.constant dense<0.000000e+00> : vector<4x16xf32>
    %3 = tpu.matmul %1, %2, %cst {dimension_numbers = #tpu.dot_dimension_numbers<[1], [0], [0], [1], [0, 0, 1, 1], [], []>} : vector<4x32xbf16>, vector<32x16xbf16>, vector<4x16xf32> -> vector<4x16xf32>
    %c0_4 = arith.constant 0 : index
    %c0_5 = arith.constant 0 : index
    %4 = vector.load %arg3[%c0_4, %c0_5] : memref<1x16xf32, #tpu.memory_space<vmem>>, vector<1x16xf32>
    %5 = vector.broadcast %4 : vector<1x16xf32> to vector<4x16xf32>
    %6 = arith.addf %3, %5 : vector<4x16xf32>
    %cst_6 = arith.constant 0.000000e+00 : f32
    %7 = vector.broadcast %cst_6 : f32 to vector<4x16xf32>
    %8 = arith.maximumf %6, %7 : vector<4x16xf32>
    %cst_7 = arith.constant 0.000000e+00 : f32
    %9 = vector.broadcast %cst_7 : f32 to vector<8x16xf32>
    %c0_8 = arith.constant 0 : index
    %c0_9 = arith.constant 0 : index
    %10 = vector.load %arg10[%c0_8, %c0_9] : memref<20x16xf32, #tpu.memory_space<vmem>>, vector<8x16xf32>
    tpu.vector_store %arg10[%c0_8, %c0_9], %9 {strides = array<i32>} : memref<20x16xf32, #tpu.memory_space<vmem>>, vector<8x16xf32>,
    %cst_10 = arith.constant 0.000000e+00 : f32
    %11 = vector.broadcast %cst_10 : f32 to vector<8x16xf32>
    %c12 = arith.constant 12 : index
    %c0_11 = arith.constant 0 : index
    %12 = vector.load %arg10[%c12, %c0_11] : memref<20x16xf32, #tpu.memory_space<vmem>>, vector<8x16xf32>
    tpu.vector_store %arg10[%c12, %c0_11], %11 {strides = array<i32>} : memref<20x16xf32, #tpu.memory_space<vmem>>, vector<8x16xf32>,
    %c8 = arith.constant 8 : index
    %c0_12 = arith.constant 0 : index
    %13 = vector.load %arg10[%c8, %c0_12] : memref<20x16xf32, #tpu.memory_space<vmem>>, vector<4x16xf32>
    tpu.vector_store %arg10[%c8, %c0_12], %8 {strides = array<i32>} : memref<20x16xf32, #tpu.memory_space<vmem>>, vector<4x16xf32>,
    %14 = tpu.iota {dimensions = array<i32: 0>} : vector<4x1xi32>
    %c2_i32 = arith.constant 2 : i32
    %c0_i32 = arith.constant 0 : i32
    %15 = arith.cmpi eq, %c2_i32, %c0_i32 : i32
    %c1_i32 = arith.constant 1 : i32
    %16 = arith.select %15, %c1_i32, %c2_i32 : i32
    %17 = vector.broadcast %16 : i32 to vector<4x1xi32>
    %18 = arith.remsi %14, %17 : vector<4x1xi32>
    %c0_i32_13 = arith.constant 0 : i32
    %19 = vector.broadcast %c0_i32_13 : i32 to vector<4x1xi32>
    %20 = arith.cmpi ne, %18, %19 : vector<4x1xi32>
    %c0_i32_14 = arith.constant 0 : i32
    %21 = vector.broadcast %c0_i32_14 : i32 to vector<4x1xi32>
    %22 = arith.cmpi slt, %18, %21 : vector<4x1xi32>
    %c0_i32_15 = arith.constant 0 : i32
    %23 = arith.cmpi slt, %16, %c0_i32_15 : i32
    %24 = vector.broadcast %23 : i1 to vector<4x1xi1>
    %25 = vector.broadcast %24 : vector<4x1xi1> to vector<4x1xi1>
    %26 = arith.xori %22, %25 : vector<4x1xi1>
    %27 = arith.andi %26, %20 : vector<4x1xi1>
    %28 = vector.broadcast %16 : i32 to vector<4x1xi32>
    %29 = arith.addi %18, %28 : vector<4x1xi32>
    %30 = arith.select %27, %29, %18 : vector<4x1xi1>, vector<4x1xi32>
    %c0_i32_16 = arith.constant 0 : i32
    %31 = vector.broadcast %c0_i32_16 : i32 to vector<4x1xi32>
    %32 = arith.cmpi ne, %30, %31 : vector<4x1xi32>
    %33 = vector.shape_cast %32 : vector<4x1xi1> to vector<4x1xi1>
    %34 = vector.broadcast %33 : vector<4x1xi1> to vector<4x16xi1>
    %35 = arith.extui %34 : vector<4x16xi1> to vector<4x16xi32>
    %36 = arith.sitofp %35 : vector<4x16xi32> to vector<4x16xf32>
    %c1_i32_17 = arith.constant 1 : i32
    %37 = vector.broadcast %c1_i32_17 : i32 to vector<4x1xi32>
    %38 = arith.cmpi ne, %30, %37 : vector<4x1xi32>
    %39 = vector.shape_cast %38 : vector<4x1xi1> to vector<4x1xi1>
    %40 = vector.broadcast %39 : vector<4x1xi1> to vector<4x16xi1>
    %41 = arith.extui %40 : vector<4x16xi1> to vector<4x16xi32>
    %42 = arith.sitofp %41 : vector<4x16xi32> to vector<4x16xf32>
    %cst_18 = arith.constant 0.000000e+00 : f32
    %43 = vector.broadcast %cst_18 : f32 to vector<4x16xf32>
    %cst_19 = arith.constant 0.000000e+00 : f32
    %44 = vector.broadcast %cst_19 : f32 to vector<4x16xf32>
    %cst_20 = arith.constant 0.000000e+00 : f32
    %45 = vector.broadcast %cst_20 : f32 to vector<4x16xf32>
    %c5 = arith.constant 5 : index
    %c0_21 = arith.constant 0 : index
    %46 = vector.load %arg10[%c5, %c0_21] : memref<20x16xf32, #tpu.memory_space<vmem>>, vector<4x16xf32>
    %c0_22 = arith.constant 0 : index
    %c0_23 = arith.constant 0 : index
    %c0_24 = arith.constant 0 : index
    %47 = vector.load %arg4[%c0_22, %c0_23, %c0_24] : memref<3x3x16xf32, #tpu.memory_space<vmem>>, vector<1x1x16xf32>
    %48 = vector.shape_cast %47 : vector<1x1x16xf32> to vector<16xf32>
    %49 = vector.shape_cast %48 : vector<16xf32> to vector<1x16xf32>
    %50 = vector.broadcast %49 : vector<1x16xf32> to vector<4x16xf32>
    %51 = arith.mulf %46, %50 : vector<4x16xf32>
    %52 = arith.addf %43, %51 : vector<4x16xf32>
    %c6 = arith.constant 6 : index
    %c0_25 = arith.constant 0 : index
    %53 = vector.load %arg10[%c6, %c0_25] : memref<20x16xf32, #tpu.memory_space<vmem>>, vector<4x16xf32>
    %c0_26 = arith.constant 0 : index
    %c1 = arith.constant 1 : index
    %c0_27 = arith.constant 0 : index
    %54 = vector.load %arg4[%c0_26, %c1, %c0_27] : memref<3x3x16xf32, #tpu.memory_space<vmem>>, vector<1x1x16xf32>
    %55 = vector.shape_cast %54 : vector<1x1x16xf32> to vector<16xf32>
    %56 = vector.shape_cast %55 : vector<16xf32> to vector<1x16xf32>
    %57 = vector.broadcast %56 : vector<1x16xf32> to vector<4x16xf32>
    %58 = arith.mulf %53, %57 : vector<4x16xf32>
    %59 = arith.addf %44, %58 : vector<4x16xf32>
    %c7 = arith.constant 7 : index
    %c0_28 = arith.constant 0 : index
    %60 = vector.load %arg10[%c7, %c0_28] : memref<20x16xf32, #tpu.memory_space<vmem>>, vector<4x16xf32>
    %c0_29 = arith.constant 0 : index
    %c2 = arith.constant 2 : index
    %c0_30 = arith.constant 0 : index
    %61 = vector.load %arg4[%c0_29, %c2, %c0_30] : memref<3x3x16xf32, #tpu.memory_space<vmem>>, vector<1x1x16xf32>
    %62 = vector.shape_cast %61 : vector<1x1x16xf32> to vector<16xf32>
    %63 = vector.shape_cast %62 : vector<16xf32> to vector<1x16xf32>
    %64 = vector.broadcast %63 : vector<1x16xf32> to vector<4x16xf32>
    %65 = arith.mulf %60, %64 : vector<4x16xf32>
    %66 = arith.addf %45, %65 : vector<4x16xf32>
    %c7_31 = arith.constant 7 : index
    %c0_32 = arith.constant 0 : index
    %67 = vector.load %arg10[%c7_31, %c0_32] : memref<20x16xf32, #tpu.memory_space<vmem>>, vector<4x16xf32>
    %c1_33 = arith.constant 1 : index
    %c0_34 = arith.constant 0 : index
    %c0_35 = arith.constant 0 : index
    %68 = vector.load %arg4[%c1_33, %c0_34, %c0_35] : memref<3x3x16xf32, #tpu.memory_space<vmem>>, vector<1x1x16xf32>
    %69 = vector.shape_cast %68 : vector<1x1x16xf32> to vector<16xf32>
    %70 = vector.shape_cast %69 : vector<16xf32> to vector<1x16xf32>
    %71 = vector.broadcast %70 : vector<1x16xf32> to vector<4x16xf32>
    %72 = arith.mulf %67, %71 : vector<4x16xf32>
    %73 = arith.addf %52, %72 : vector<4x16xf32>
    %c8_36 = arith.constant 8 : index
    %c0_37 = arith.constant 0 : index
    %74 = vector.load %arg10[%c8_36, %c0_37] : memref<20x16xf32, #tpu.memory_space<vmem>>, vector<4x16xf32>
    %c1_38 = arith.constant 1 : index
    %c1_39 = arith.constant 1 : index
    %c0_40 = arith.constant 0 : index
    %75 = vector.load %arg4[%c1_38, %c1_39, %c0_40] : memref<3x3x16xf32, #tpu.memory_space<vmem>>, vector<1x1x16xf32>
    %76 = vector.shape_cast %75 : vector<1x1x16xf32> to vector<16xf32>
    %77 = vector.shape_cast %76 : vector<16xf32> to vector<1x16xf32>
    %78 = vector.broadcast %77 : vector<1x16xf32> to vector<4x16xf32>
    %79 = arith.mulf %74, %78 : vector<4x16xf32>
    %80 = arith.addf %59, %79 : vector<4x16xf32>
    %c9 = arith.constant 9 : index
    %c0_41 = arith.constant 0 : index
    %81 = vector.load %arg10[%c9, %c0_41] : memref<20x16xf32, #tpu.memory_space<vmem>>, vector<4x16xf32>
    %c1_42 = arith.constant 1 : index
    %c2_43 = arith.constant 2 : index
    %c0_44 = arith.constant 0 : index
    %82 = vector.load %arg4[%c1_42, %c2_43, %c0_44] : memref<3x3x16xf32, #tpu.memory_space<vmem>>, vector<1x1x16xf32>
    %83 = vector.shape_cast %82 : vector<1x1x16xf32> to vector<16xf32>
    %84 = vector.shape_cast %83 : vector<16xf32> to vector<1x16xf32>
    %85 = vector.broadcast %84 : vector<1x16xf32> to vector<4x16xf32>
    %86 = arith.mulf %81, %85 : vector<4x16xf32>
    %87 = arith.addf %66, %86 : vector<4x16xf32>
    %c9_45 = arith.constant 9 : index
    %c0_46 = arith.constant 0 : index
    %88 = vector.load %arg10[%c9_45, %c0_46] : memref<20x16xf32, #tpu.memory_space<vmem>>, vector<4x16xf32>
    %c2_47 = arith.constant 2 : index
    %c0_48 = arith.constant 0 : index
    %c0_49 = arith.constant 0 : index
    %89 = vector.load %arg4[%c2_47, %c0_48, %c0_49] : memref<3x3x16xf32, #tpu.memory_space<vmem>>, vector<1x1x16xf32>
    %90 = vector.shape_cast %89 : vector<1x1x16xf32> to vector<16xf32>
    %91 = vector.shape_cast %90 : vector<16xf32> to vector<1x16xf32>
    %92 = vector.broadcast %91 : vector<1x16xf32> to vector<4x16xf32>
    %93 = arith.mulf %88, %92 : vector<4x16xf32>
    %94 = arith.addf %73, %93 : vector<4x16xf32>
    %c10 = arith.constant 10 : index
    %c0_50 = arith.constant 0 : index
    %95 = vector.load %arg10[%c10, %c0_50] : memref<20x16xf32, #tpu.memory_space<vmem>>, vector<4x16xf32>
    %c2_51 = arith.constant 2 : index
    %c1_52 = arith.constant 1 : index
    %c0_53 = arith.constant 0 : index
    %96 = vector.load %arg4[%c2_51, %c1_52, %c0_53] : memref<3x3x16xf32, #tpu.memory_space<vmem>>, vector<1x1x16xf32>
    %97 = vector.shape_cast %96 : vector<1x1x16xf32> to vector<16xf32>
    %98 = vector.shape_cast %97 : vector<16xf32> to vector<1x16xf32>
    %99 = vector.broadcast %98 : vector<1x16xf32> to vector<4x16xf32>
    %100 = arith.mulf %95, %99 : vector<4x16xf32>
    %101 = arith.addf %80, %100 : vector<4x16xf32>
    %c11 = arith.constant 11 : index
    %c0_54 = arith.constant 0 : index
    %102 = vector.load %arg10[%c11, %c0_54] : memref<20x16xf32, #tpu.memory_space<vmem>>, vector<4x16xf32>
    %c2_55 = arith.constant 2 : index
    %c2_56 = arith.constant 2 : index
    %c0_57 = arith.constant 0 : index
    %103 = vector.load %arg4[%c2_55, %c2_56, %c0_57] : memref<3x3x16xf32, #tpu.memory_space<vmem>>, vector<1x1x16xf32>
    %104 = vector.shape_cast %103 : vector<1x1x16xf32> to vector<16xf32>
    %105 = vector.shape_cast %104 : vector<16xf32> to vector<1x16xf32>
    %106 = vector.broadcast %105 : vector<1x16xf32> to vector<4x16xf32>
    %107 = arith.mulf %102, %106 : vector<4x16xf32>
    %108 = arith.addf %87, %107 : vector<4x16xf32>
    %109 = arith.mulf %94, %36 : vector<4x16xf32>
    %110 = arith.addf %109, %101 : vector<4x16xf32>
    %111 = arith.mulf %108, %42 : vector<4x16xf32>
    %112 = arith.addf %110, %111 : vector<4x16xf32>
    %c0_58 = arith.constant 0 : index
    %c0_59 = arith.constant 0 : index
    %113 = vector.load %arg5[%c0_58, %c0_59] : memref<1x16xf32, #tpu.memory_space<vmem>>, vector<1x16xf32>
    %114 = vector.broadcast %113 : vector<1x16xf32> to vector<4x16xf32>
    %115 = arith.addf %112, %114 : vector<4x16xf32>
    %116 = arith.truncf %115 : vector<4x16xf32> to vector<4x16xbf16>
    %c0_60 = arith.constant 0 : index
    %c0_61 = arith.constant 0 : index
    %117 = vector.load %arg6[%c0_60, %c0_61] : memref<16x32xbf16, #tpu.memory_space<vmem>>, vector<16x32xbf16>
    %cst_62 = arith.constant dense<0.000000e+00> : vector<4x32xf32>
    %118 = tpu.matmul %116, %117, %cst_62 {dimension_numbers = #tpu.dot_dimension_numbers<[1], [0], [0], [1], [0, 0, 1, 1], [], []>} : vector<4x16xbf16>, vector<16x32xbf16>, vector<4x32xf32> -> vector<4x32xf32>
    %c0_63 = arith.constant 0 : index
    %c0_64 = arith.constant 0 : index
    %119 = vector.load %arg7[%c0_63, %c0_64] : memref<1x32xf32, #tpu.memory_space<vmem>>, vector<1x32xf32>
    %120 = vector.broadcast %119 : vector<1x32xf32> to vector<4x32xf32>
    %121 = arith.addf %118, %120 : vector<4x32xf32>
    %cst_65 = arith.constant 0.000000e+00 : f32
    %122 = vector.broadcast %cst_65 : f32 to vector<4x32xf32>
    %123 = arith.maximumf %121, %122 : vector<4x32xf32>
    %c0_66 = arith.constant 0 : index
    %c0_67 = arith.constant 0 : index
    %124 = vector.load %arg8[%c0_66, %c0_67] : memref<32x32xbf16, #tpu.memory_space<vmem>>, vector<32x32xbf16>
    %cst_68 = arith.constant dense<0.000000e+00> : vector<4x32xf32>
    %125 = tpu.matmul %1, %124, %cst_68 {dimension_numbers = #tpu.dot_dimension_numbers<[1], [0], [0], [1], [0, 0, 1, 1], [], []>} : vector<4x32xbf16>, vector<32x32xbf16>, vector<4x32xf32> -> vector<4x32xf32>
    %126 = arith.addf %123, %125 : vector<4x32xf32>
    %127 = arith.truncf %126 : vector<4x32xf32> to vector<4x32xbf16>
    %c0_69 = arith.constant 0 : index
    %c0_70 = arith.constant 0 : index
    %c0_71 = arith.constant 0 : index
    %128 = vector.load %arg9[%c0_69, %c0_70, %c0_71] : memref<1x4x32xbf16, #tpu.memory_space<vmem>>, vector<1x4x32xbf16>
    %129 = vector.shape_cast %128 : vector<1x4x32xbf16> to vector<4x32xbf16>
    %130 = vector.shape_cast %127 : vector<4x32xbf16> to vector<1x4x32xbf16>
    tpu.vector_store %arg9[%c0_69, %c0_70, %c0_71], %130 {strides = array<i32>} : memref<1x4x32xbf16, #tpu.memory_space<vmem>>, vector<1x4x32xbf16>,
    return
  }
  func.func @transform_0(%arg0: i32) -> (i32, i32, i32) {
    %c0_i32 = arith.constant 0 : i32
    %c0_i32_0 = arith.constant 0 : i32
    %c0_i32_1 = arith.constant 0 : i32
    return %arg0, %c0_i32, %c0_i32_0 : i32, i32, i32
  }
  func.func @transform_1(%arg0: i32) -> (i32, i32) {
    %c0_i32 = arith.constant 0 : i32
    %c0_i32_0 = arith.constant 0 : i32
    %c0_i32_1 = arith.constant 0 : i32
    return %c0_i32, %c0_i32_0 : i32, i32
  }
  func.func @transform_2(%arg0: i32) -> (i32, i32) {
    %c0_i32 = arith.constant 0 : i32
    %c0_i32_0 = arith.constant 0 : i32
    %c0_i32_1 = arith.constant 0 : i32
    return %c0_i32, %c0_i32_0 : i32, i32
  }
  func.func @transform_3(%arg0: i32) -> (i32, i32, i32) {
    %c0_i32 = arith.constant 0 : i32
    %c0_i32_0 = arith.constant 0 : i32
    %c0_i32_1 = arith.constant 0 : i32
    %c0_i32_2 = arith.constant 0 : i32
    return %c0_i32, %c0_i32_0, %c0_i32_1 : i32, i32, i32
  }
  func.func @transform_4(%arg0: i32) -> (i32, i32) {
    %c0_i32 = arith.constant 0 : i32
    %c0_i32_0 = arith.constant 0 : i32
    %c0_i32_1 = arith.constant 0 : i32
    return %c0_i32, %c0_i32_0 : i32, i32
  }
  func.func @transform_5(%arg0: i32) -> (i32, i32) {
    %c0_i32 = arith.constant 0 : i32
    %c0_i32_0 = arith.constant 0 : i32
    %c0_i32_1 = arith.constant 0 : i32
    return %c0_i32, %c0_i32_0 : i32, i32
  }
  func.func @transform_6(%arg0: i32) -> (i32, i32) {
    %c0_i32 = arith.constant 0 : i32
    %c0_i32_0 = arith.constant 0 : i32
    %c0_i32_1 = arith.constant 0 : i32
    return %c0_i32, %c0_i32_0 : i32, i32
  }
  func.func @transform_7(%arg0: i32) -> (i32, i32) {
    %c0_i32 = arith.constant 0 : i32
    %c0_i32_0 = arith.constant 0 : i32
    %c0_i32_1 = arith.constant 0 : i32
    return %c0_i32, %c0_i32_0 : i32, i32
  }
  func.func @transform_8(%arg0: i32) -> (i32, i32, i32) {
    %c0_i32 = arith.constant 0 : i32
    %c0_i32_0 = arith.constant 0 : i32
    %c0_i32_1 = arith.constant 0 : i32
    return %arg0, %c0_i32, %c0_i32_0 : i32, i32, i32
  }
}

module attributes {stable_mosaic.version = 11 : i64} {
  func.func @_mm_bias_act_kernel(%arg0: i32, %arg1: memref<8x32xbf16, #tpu.memory_space<vmem>>, %arg2: memref<32x32xbf16, #tpu.memory_space<vmem>>, %arg3: memref<1x32xf32, #tpu.memory_space<vmem>>, %arg4: memref<8x32xbf16, #tpu.memory_space<vmem>>) attributes {dimension_semantics = [#tpu.dimension_semantics<parallel>], iteration_bounds = array<i64: 1>, scalar_prefetch = 0 : i64, scratch_operands = 0 : i64, tpu.core_type = #tpu.core_type<tc>, window_params = [{transform_indices = @transform_0, window_bounds = array<i64: 8, 32>}, {pipeline_mode = #tpu.pipeline_mode<synchronous>, transform_indices = @transform_1, window_bounds = array<i64: 32, 32>}, {pipeline_mode = #tpu.pipeline_mode<synchronous>, transform_indices = @transform_2, window_bounds = array<i64: 1, 32>}, {transform_indices = @transform_3, window_bounds = array<i64: 8, 32>}]} {
    %c0 = arith.constant 0 : index
    %c0_0 = arith.constant 0 : index
    %0 = vector.load %arg1[%c0, %c0_0] : memref<8x32xbf16, #tpu.memory_space<vmem>>, vector<8x32xbf16>
    %c0_1 = arith.constant 0 : index
    %c0_2 = arith.constant 0 : index
    %1 = vector.load %arg2[%c0_1, %c0_2] : memref<32x32xbf16, #tpu.memory_space<vmem>>, vector<32x32xbf16>
    %cst = arith.constant dense<0.000000e+00> : vector<8x32xf32>
    %2 = tpu.matmul %0, %1, %cst {dimension_numbers = #tpu.dot_dimension_numbers<[1], [0], [0], [1], [0, 0, 1, 1], [], []>} : vector<8x32xbf16>, vector<32x32xbf16>, vector<8x32xf32> -> vector<8x32xf32>
    %c0_3 = arith.constant 0 : index
    %c0_4 = arith.constant 0 : index
    %3 = vector.load %arg3[%c0_3, %c0_4] : memref<1x32xf32, #tpu.memory_space<vmem>>, vector<1x32xf32>
    %4 = vector.broadcast %3 : vector<1x32xf32> to vector<8x32xf32>
    %5 = arith.addf %2, %4 : vector<8x32xf32>
    %cst_5 = arith.constant 0.000000e+00 : f32
    %6 = vector.broadcast %cst_5 : f32 to vector<8x32xf32>
    %7 = arith.maximumf %5, %6 : vector<8x32xf32>
    %8 = arith.truncf %7 : vector<8x32xf32> to vector<8x32xbf16>
    %c0_6 = arith.constant 0 : index
    %c0_7 = arith.constant 0 : index
    %9 = vector.load %arg4[%c0_6, %c0_7] : memref<8x32xbf16, #tpu.memory_space<vmem>>, vector<8x32xbf16>
    tpu.vector_store %arg4[%c0_6, %c0_7], %8 {strides = array<i32>} : memref<8x32xbf16, #tpu.memory_space<vmem>>, vector<8x32xbf16>,
    return
  }
  func.func @transform_0(%arg0: i32) -> (i32, i32) {
    %c0_i32 = arith.constant 0 : i32
    %c0_i32_0 = arith.constant 0 : i32
    return %arg0, %c0_i32 : i32, i32
  }
  func.func @transform_1(%arg0: i32) -> (i32, i32) {
    %c0_i32 = arith.constant 0 : i32
    %c0_i32_0 = arith.constant 0 : i32
    %c0_i32_1 = arith.constant 0 : i32
    return %c0_i32, %c0_i32_0 : i32, i32
  }
  func.func @transform_2(%arg0: i32) -> (i32, i32) {
    %c0_i32 = arith.constant 0 : i32
    %c0_i32_0 = arith.constant 0 : i32
    %c0_i32_1 = arith.constant 0 : i32
    return %c0_i32, %c0_i32_0 : i32, i32
  }
  func.func @transform_3(%arg0: i32) -> (i32, i32) {
    %c0_i32 = arith.constant 0 : i32
    %c0_i32_0 = arith.constant 0 : i32
    return %arg0, %c0_i32 : i32, i32
  }
}

module attributes {stable_mosaic.version = 11 : i64} {
  func.func @_dual_dw3x3_s2_kernel(%arg0: i32, %arg1: memref<1x4x2x2x32xbf16, #tpu.memory_space<vmem>>, %arg2: memref<1x4x2x2x32xbf16, #tpu.memory_space<vmem>>, %arg3: memref<3x3x32xf32, #tpu.memory_space<vmem>>, %arg4: memref<1x32xf32, #tpu.memory_space<vmem>>, %arg5: memref<3x3x32xf32, #tpu.memory_space<vmem>>, %arg6: memref<1x32xf32, #tpu.memory_space<vmem>>, %arg7: memref<1x1x1x32xbf16, #tpu.memory_space<vmem>>, %arg8: memref<1x1x1x32xbf16, #tpu.memory_space<vmem>>) attributes {dimension_semantics = [#tpu.dimension_semantics<parallel>], iteration_bounds = array<i64: 2>, scalar_prefetch = 0 : i64, scratch_operands = 0 : i64, tpu.core_type = #tpu.core_type<tc>, window_params = [{transform_indices = @transform_0, window_bounds = array<i64: 1, 4, 2, 2, 32>}, {transform_indices = @transform_1, window_bounds = array<i64: 1, 4, 2, 2, 32>}, {pipeline_mode = #tpu.pipeline_mode<synchronous>, transform_indices = @transform_2, window_bounds = array<i64: 3, 3, 32>}, {pipeline_mode = #tpu.pipeline_mode<synchronous>, transform_indices = @transform_3, window_bounds = array<i64: 1, 32>}, {pipeline_mode = #tpu.pipeline_mode<synchronous>, transform_indices = @transform_4, window_bounds = array<i64: 3, 3, 32>}, {pipeline_mode = #tpu.pipeline_mode<synchronous>, transform_indices = @transform_5, window_bounds = array<i64: 1, 32>}, {transform_indices = @transform_6, window_bounds = array<i64: 1, 1, 1, 32>}, {transform_indices = @transform_7, window_bounds = array<i64: 1, 1, 1, 32>}]} {
    %cst = arith.constant 0.000000e+00 : f32
    %0 = vector.broadcast %cst : f32 to vector<1x1x32xf32>
    %c0 = arith.constant 0 : index
    %c0_0 = arith.constant 0 : index
    %c0_1 = arith.constant 0 : index
    %c0_2 = arith.constant 0 : index
    %c0_3 = arith.constant 0 : index
    %1 = vector.load %arg1[%c0, %c0_0, %c0_1, %c0_2, %c0_3] : memref<1x4x2x2x32xbf16, #tpu.memory_space<vmem>>, vector<1x1x1x1x32xbf16>
    %2 = vector.shape_cast %1 : vector<1x1x1x1x32xbf16> to vector<1x1x32xbf16>
    %3 = arith.extf %2 : vector<1x1x32xbf16> to vector<1x1x32xf32>
    %c0_4 = arith.constant 0 : index
    %c0_5 = arith.constant 0 : index
    %c0_6 = arith.constant 0 : index
    %4 = vector.load %arg3[%c0_4, %c0_5, %c0_6] : memref<3x3x32xf32, #tpu.memory_space<vmem>>, vector<1x1x32xf32>
    %5 = vector.shape_cast %4 : vector<1x1x32xf32> to vector<32xf32>
    %6 = vector.shape_cast %5 : vector<32xf32> to vector<1x1x32xf32>
    %7 = arith.mulf %3, %6 : vector<1x1x32xf32>
    %8 = arith.addf %0, %7 : vector<1x1x32xf32>
    %c0_7 = arith.constant 0 : index
    %c1 = arith.constant 1 : index
    %c0_8 = arith.constant 0 : index
    %c0_9 = arith.constant 0 : index
    %c0_10 = arith.constant 0 : index
    %9 = vector.load %arg1[%c0_7, %c1, %c0_8, %c0_9, %c0_10] : memref<1x4x2x2x32xbf16, #tpu.memory_space<vmem>>, vector<1x1x1x1x32xbf16>
    %10 = vector.shape_cast %9 : vector<1x1x1x1x32xbf16> to vector<1x1x32xbf16>
    %11 = arith.extf %10 : vector<1x1x32xbf16> to vector<1x1x32xf32>
    %c0_11 = arith.constant 0 : index
    %c1_12 = arith.constant 1 : index
    %c0_13 = arith.constant 0 : index
    %12 = vector.load %arg3[%c0_11, %c1_12, %c0_13] : memref<3x3x32xf32, #tpu.memory_space<vmem>>, vector<1x1x32xf32>
    %13 = vector.shape_cast %12 : vector<1x1x32xf32> to vector<32xf32>
    %14 = vector.shape_cast %13 : vector<32xf32> to vector<1x1x32xf32>
    %15 = arith.mulf %11, %14 : vector<1x1x32xf32>
    %16 = arith.addf %8, %15 : vector<1x1x32xf32>
    %c0_14 = arith.constant 0 : index
    %c0_15 = arith.constant 0 : index
    %c0_16 = arith.constant 0 : index
    %c1_17 = arith.constant 1 : index
    %c0_18 = arith.constant 0 : index
    %17 = vector.load %arg1[%c0_14, %c0_15, %c0_16, %c1_17, %c0_18] : memref<1x4x2x2x32xbf16, #tpu.memory_space<vmem>>, vector<1x1x1x1x32xbf16>
    %18 = vector.shape_cast %17 : vector<1x1x1x1x32xbf16> to vector<1x1x32xbf16>
    %19 = arith.extf %18 : vector<1x1x32xbf16> to vector<1x1x32xf32>
    %c0_19 = arith.constant 0 : index
    %c2 = arith.constant 2 : index
    %c0_20 = arith.constant 0 : index
    %20 = vector.load %arg3[%c0_19, %c2, %c0_20] : memref<3x3x32xf32, #tpu.memory_space<vmem>>, vector<1x1x32xf32>
    %21 = vector.shape_cast %20 : vector<1x1x32xf32> to vector<32xf32>
    %22 = vector.shape_cast %21 : vector<32xf32> to vector<1x1x32xf32>
    %23 = arith.mulf %19, %22 : vector<1x1x32xf32>
    %24 = arith.addf %16, %23 : vector<1x1x32xf32>
    %c0_21 = arith.constant 0 : index
    %c2_22 = arith.constant 2 : index
    %c0_23 = arith.constant 0 : index
    %c0_24 = arith.constant 0 : index
    %c0_25 = arith.constant 0 : index
    %25 = vector.load %arg1[%c0_21, %c2_22, %c0_23, %c0_24, %c0_25] : memref<1x4x2x2x32xbf16, #tpu.memory_space<vmem>>, vector<1x1x1x1x32xbf16>
    %26 = vector.shape_cast %25 : vector<1x1x1x1x32xbf16> to vector<1x1x32xbf16>
    %27 = arith.extf %26 : vector<1x1x32xbf16> to vector<1x1x32xf32>
    %c1_26 = arith.constant 1 : index
    %c0_27 = arith.constant 0 : index
    %c0_28 = arith.constant 0 : index
    %28 = vector.load %arg3[%c1_26, %c0_27, %c0_28] : memref<3x3x32xf32, #tpu.memory_space<vmem>>, vector<1x1x32xf32>
    %29 = vector.shape_cast %28 : vector<1x1x32xf32> to vector<32xf32>
    %30 = vector.shape_cast %29 : vector<32xf32> to vector<1x1x32xf32>
    %31 = arith.mulf %27, %30 : vector<1x1x32xf32>
    %32 = arith.addf %24, %31 : vector<1x1x32xf32>
    %c0_29 = arith.constant 0 : index
    %c3 = arith.constant 3 : index
    %c0_30 = arith.constant 0 : index
    %c0_31 = arith.constant 0 : index
    %c0_32 = arith.constant 0 : index
    %33 = vector.load %arg1[%c0_29, %c3, %c0_30, %c0_31, %c0_32] : memref<1x4x2x2x32xbf16, #tpu.memory_space<vmem>>, vector<1x1x1x1x32xbf16>
    %34 = vector.shape_cast %33 : vector<1x1x1x1x32xbf16> to vector<1x1x32xbf16>
    %35 = arith.extf %34 : vector<1x1x32xbf16> to vector<1x1x32xf32>
    %c1_33 = arith.constant 1 : index
    %c1_34 = arith.constant 1 : index
    %c0_35 = arith.constant 0 : index
    %36 = vector.load %arg3[%c1_33, %c1_34, %c0_35] : memref<3x3x32xf32, #tpu.memory_space<vmem>>, vector<1x1x32xf32>
    %37 = vector.shape_cast %36 : vector<1x1x32xf32> to vector<32xf32>
    %38 = vector.shape_cast %37 : vector<32xf32> to vector<1x1x32xf32>
    %39 = arith.mulf %35, %38 : vector<1x1x32xf32>
    %40 = arith.addf %32, %39 : vector<1x1x32xf32>
    %c0_36 = arith.constant 0 : index
    %c2_37 = arith.constant 2 : index
    %c0_38 = arith.constant 0 : index
    %c1_39 = arith.constant 1 : index
    %c0_40 = arith.constant 0 : index
    %41 = vector.load %arg1[%c0_36, %c2_37, %c0_38, %c1_39, %c0_40] : memref<1x4x2x2x32xbf16, #tpu.memory_space<vmem>>, vector<1x1x1x1x32xbf16>
    %42 = vector.shape_cast %41 : vector<1x1x1x1x32xbf16> to vector<1x1x32xbf16>
    %43 = arith.extf %42 : vector<1x1x32xbf16> to vector<1x1x32xf32>
    %c1_41 = arith.constant 1 : index
    %c2_42 = arith.constant 2 : index
    %c0_43 = arith.constant 0 : index
    %44 = vector.load %arg3[%c1_41, %c2_42, %c0_43] : memref<3x3x32xf32, #tpu.memory_space<vmem>>, vector<1x1x32xf32>
    %45 = vector.shape_cast %44 : vector<1x1x32xf32> to vector<32xf32>
    %46 = vector.shape_cast %45 : vector<32xf32> to vector<1x1x32xf32>
    %47 = arith.mulf %43, %46 : vector<1x1x32xf32>
    %48 = arith.addf %40, %47 : vector<1x1x32xf32>
    %c0_44 = arith.constant 0 : index
    %c0_45 = arith.constant 0 : index
    %c1_46 = arith.constant 1 : index
    %c0_47 = arith.constant 0 : index
    %c0_48 = arith.constant 0 : index
    %49 = vector.load %arg1[%c0_44, %c0_45, %c1_46, %c0_47, %c0_48] : memref<1x4x2x2x32xbf16, #tpu.memory_space<vmem>>, vector<1x1x1x1x32xbf16>
    %50 = vector.shape_cast %49 : vector<1x1x1x1x32xbf16> to vector<1x1x32xbf16>
    %51 = arith.extf %50 : vector<1x1x32xbf16> to vector<1x1x32xf32>
    %c2_49 = arith.constant 2 : index
    %c0_50 = arith.constant 0 : index
    %c0_51 = arith.constant 0 : index
    %52 = vector.load %arg3[%c2_49, %c0_50, %c0_51] : memref<3x3x32xf32, #tpu.memory_space<vmem>>, vector<1x1x32xf32>
    %53 = vector.shape_cast %52 : vector<1x1x32xf32> to vector<32xf32>
    %54 = vector.shape_cast %53 : vector<32xf32> to vector<1x1x32xf32>
    %55 = arith.mulf %51, %54 : vector<1x1x32xf32>
    %56 = arith.addf %48, %55 : vector<1x1x32xf32>
    %c0_52 = arith.constant 0 : index
    %c1_53 = arith.constant 1 : index
    %c1_54 = arith.constant 1 : index
    %c0_55 = arith.constant 0 : index
    %c0_56 = arith.constant 0 : index
    %57 = vector.load %arg1[%c0_52, %c1_53, %c1_54, %c0_55, %c0_56] : memref<1x4x2x2x32xbf16, #tpu.memory_space<vmem>>, vector<1x1x1x1x32xbf16>
    %58 = vector.shape_cast %57 : vector<1x1x1x1x32xbf16> to vector<1x1x32xbf16>
    %59 = arith.extf %58 : vector<1x1x32xbf16> to vector<1x1x32xf32>
    %c2_57 = arith.constant 2 : index
    %c1_58 = arith.constant 1 : index
    %c0_59 = arith.constant 0 : index
    %60 = vector.load %arg3[%c2_57, %c1_58, %c0_59] : memref<3x3x32xf32, #tpu.memory_space<vmem>>, vector<1x1x32xf32>
    %61 = vector.shape_cast %60 : vector<1x1x32xf32> to vector<32xf32>
    %62 = vector.shape_cast %61 : vector<32xf32> to vector<1x1x32xf32>
    %63 = arith.mulf %59, %62 : vector<1x1x32xf32>
    %64 = arith.addf %56, %63 : vector<1x1x32xf32>
    %c0_60 = arith.constant 0 : index
    %c0_61 = arith.constant 0 : index
    %c1_62 = arith.constant 1 : index
    %c1_63 = arith.constant 1 : index
    %c0_64 = arith.constant 0 : index
    %65 = vector.load %arg1[%c0_60, %c0_61, %c1_62, %c1_63, %c0_64] : memref<1x4x2x2x32xbf16, #tpu.memory_space<vmem>>, vector<1x1x1x1x32xbf16>
    %66 = vector.shape_cast %65 : vector<1x1x1x1x32xbf16> to vector<1x1x32xbf16>
    %67 = arith.extf %66 : vector<1x1x32xbf16> to vector<1x1x32xf32>
    %c2_65 = arith.constant 2 : index
    %c2_66 = arith.constant 2 : index
    %c0_67 = arith.constant 0 : index
    %68 = vector.load %arg3[%c2_65, %c2_66, %c0_67] : memref<3x3x32xf32, #tpu.memory_space<vmem>>, vector<1x1x32xf32>
    %69 = vector.shape_cast %68 : vector<1x1x32xf32> to vector<32xf32>
    %70 = vector.shape_cast %69 : vector<32xf32> to vector<1x1x32xf32>
    %71 = arith.mulf %67, %70 : vector<1x1x32xf32>
    %72 = arith.addf %64, %71 : vector<1x1x32xf32>
    %c0_68 = arith.constant 0 : index
    %c0_69 = arith.constant 0 : index
    %73 = vector.load %arg4[%c0_68, %c0_69] : memref<1x32xf32, #tpu.memory_space<vmem>>, vector<1x32xf32>
    %74 = vector.shape_cast %73 : vector<1x32xf32> to vector<1x1x32xf32>
    %75 = arith.addf %72, %74 : vector<1x1x32xf32>
    %76 = arith.truncf %75 : vector<1x1x32xf32> to vector<1x1x32xbf16>
    %c0_70 = arith.constant 0 : index
    %c0_71 = arith.constant 0 : index
    %c0_72 = arith.constant 0 : index
    %c0_73 = arith.constant 0 : index
    %77 = vector.load %arg7[%c0_70, %c0_71, %c0_72, %c0_73] : memref<1x1x1x32xbf16, #tpu.memory_space<vmem>>, vector<1x1x1x32xbf16>
    %78 = vector.shape_cast %77 : vector<1x1x1x32xbf16> to vector<1x1x32xbf16>
    %79 = vector.shape_cast %76 : vector<1x1x32xbf16> to vector<1x1x1x32xbf16>
    tpu.vector_store %arg7[%c0_70, %c0_71, %c0_72, %c0_73], %79 {strides = array<i32>} : memref<1x1x1x32xbf16, #tpu.memory_space<vmem>>, vector<1x1x1x32xbf16>,
    %cst_74 = arith.constant 0.000000e+00 : f32
    %80 = vector.broadcast %cst_74 : f32 to vector<1x1x32xf32>
    %c0_75 = arith.constant 0 : index
    %c0_76 = arith.constant 0 : index
    %c0_77 = arith.constant 0 : index
    %c0_78 = arith.constant 0 : index
    %c0_79 = arith.constant 0 : index
    %81 = vector.load %arg2[%c0_75, %c0_76, %c0_77, %c0_78, %c0_79] : memref<1x4x2x2x32xbf16, #tpu.memory_space<vmem>>, vector<1x1x1x1x32xbf16>
    %82 = vector.shape_cast %81 : vector<1x1x1x1x32xbf16> to vector<1x1x32xbf16>
    %83 = arith.extf %82 : vector<1x1x32xbf16> to vector<1x1x32xf32>
    %c0_80 = arith.constant 0 : index
    %c0_81 = arith.constant 0 : index
    %c0_82 = arith.constant 0 : index
    %84 = vector.load %arg5[%c0_80, %c0_81, %c0_82] : memref<3x3x32xf32, #tpu.memory_space<vmem>>, vector<1x1x32xf32>
    %85 = vector.shape_cast %84 : vector<1x1x32xf32> to vector<32xf32>
    %86 = vector.shape_cast %85 : vector<32xf32> to vector<1x1x32xf32>
    %87 = arith.mulf %83, %86 : vector<1x1x32xf32>
    %88 = arith.addf %80, %87 : vector<1x1x32xf32>
    %c0_83 = arith.constant 0 : index
    %c1_84 = arith.constant 1 : index
    %c0_85 = arith.constant 0 : index
    %c0_86 = arith.constant 0 : index
    %c0_87 = arith.constant 0 : index
    %89 = vector.load %arg2[%c0_83, %c1_84, %c0_85, %c0_86, %c0_87] : memref<1x4x2x2x32xbf16, #tpu.memory_space<vmem>>, vector<1x1x1x1x32xbf16>
    %90 = vector.shape_cast %89 : vector<1x1x1x1x32xbf16> to vector<1x1x32xbf16>
    %91 = arith.extf %90 : vector<1x1x32xbf16> to vector<1x1x32xf32>
    %c0_88 = arith.constant 0 : index
    %c1_89 = arith.constant 1 : index
    %c0_90 = arith.constant 0 : index
    %92 = vector.load %arg5[%c0_88, %c1_89, %c0_90] : memref<3x3x32xf32, #tpu.memory_space<vmem>>, vector<1x1x32xf32>
    %93 = vector.shape_cast %92 : vector<1x1x32xf32> to vector<32xf32>
    %94 = vector.shape_cast %93 : vector<32xf32> to vector<1x1x32xf32>
    %95 = arith.mulf %91, %94 : vector<1x1x32xf32>
    %96 = arith.addf %88, %95 : vector<1x1x32xf32>
    %c0_91 = arith.constant 0 : index
    %c0_92 = arith.constant 0 : index
    %c0_93 = arith.constant 0 : index
    %c1_94 = arith.constant 1 : index
    %c0_95 = arith.constant 0 : index
    %97 = vector.load %arg2[%c0_91, %c0_92, %c0_93, %c1_94, %c0_95] : memref<1x4x2x2x32xbf16, #tpu.memory_space<vmem>>, vector<1x1x1x1x32xbf16>
    %98 = vector.shape_cast %97 : vector<1x1x1x1x32xbf16> to vector<1x1x32xbf16>
    %99 = arith.extf %98 : vector<1x1x32xbf16> to vector<1x1x32xf32>
    %c0_96 = arith.constant 0 : index
    %c2_97 = arith.constant 2 : index
    %c0_98 = arith.constant 0 : index
    %100 = vector.load %arg5[%c0_96, %c2_97, %c0_98] : memref<3x3x32xf32, #tpu.memory_space<vmem>>, vector<1x1x32xf32>
    %101 = vector.shape_cast %100 : vector<1x1x32xf32> to vector<32xf32>
    %102 = vector.shape_cast %101 : vector<32xf32> to vector<1x1x32xf32>
    %103 = arith.mulf %99, %102 : vector<1x1x32xf32>
    %104 = arith.addf %96, %103 : vector<1x1x32xf32>
    %c0_99 = arith.constant 0 : index
    %c2_100 = arith.constant 2 : index
    %c0_101 = arith.constant 0 : index
    %c0_102 = arith.constant 0 : index
    %c0_103 = arith.constant 0 : index
    %105 = vector.load %arg2[%c0_99, %c2_100, %c0_101, %c0_102, %c0_103] : memref<1x4x2x2x32xbf16, #tpu.memory_space<vmem>>, vector<1x1x1x1x32xbf16>
    %106 = vector.shape_cast %105 : vector<1x1x1x1x32xbf16> to vector<1x1x32xbf16>
    %107 = arith.extf %106 : vector<1x1x32xbf16> to vector<1x1x32xf32>
    %c1_104 = arith.constant 1 : index
    %c0_105 = arith.constant 0 : index
    %c0_106 = arith.constant 0 : index
    %108 = vector.load %arg5[%c1_104, %c0_105, %c0_106] : memref<3x3x32xf32, #tpu.memory_space<vmem>>, vector<1x1x32xf32>
    %109 = vector.shape_cast %108 : vector<1x1x32xf32> to vector<32xf32>
    %110 = vector.shape_cast %109 : vector<32xf32> to vector<1x1x32xf32>
    %111 = arith.mulf %107, %110 : vector<1x1x32xf32>
    %112 = arith.addf %104, %111 : vector<1x1x32xf32>
    %c0_107 = arith.constant 0 : index
    %c3_108 = arith.constant 3 : index
    %c0_109 = arith.constant 0 : index
    %c0_110 = arith.constant 0 : index
    %c0_111 = arith.constant 0 : index
    %113 = vector.load %arg2[%c0_107, %c3_108, %c0_109, %c0_110, %c0_111] : memref<1x4x2x2x32xbf16, #tpu.memory_space<vmem>>, vector<1x1x1x1x32xbf16>
    %114 = vector.shape_cast %113 : vector<1x1x1x1x32xbf16> to vector<1x1x32xbf16>
    %115 = arith.extf %114 : vector<1x1x32xbf16> to vector<1x1x32xf32>
    %c1_112 = arith.constant 1 : index
    %c1_113 = arith.constant 1 : index
    %c0_114 = arith.constant 0 : index
    %116 = vector.load %arg5[%c1_112, %c1_113, %c0_114] : memref<3x3x32xf32, #tpu.memory_space<vmem>>, vector<1x1x32xf32>
    %117 = vector.shape_cast %116 : vector<1x1x32xf32> to vector<32xf32>
    %118 = vector.shape_cast %117 : vector<32xf32> to vector<1x1x32xf32>
    %119 = arith.mulf %115, %118 : vector<1x1x32xf32>
    %120 = arith.addf %112, %119 : vector<1x1x32xf32>
    %c0_115 = arith.constant 0 : index
    %c2_116 = arith.constant 2 : index
    %c0_117 = arith.constant 0 : index
    %c1_118 = arith.constant 1 : index
    %c0_119 = arith.constant 0 : index
    %121 = vector.load %arg2[%c0_115, %c2_116, %c0_117, %c1_118, %c0_119] : memref<1x4x2x2x32xbf16, #tpu.memory_space<vmem>>, vector<1x1x1x1x32xbf16>
    %122 = vector.shape_cast %121 : vector<1x1x1x1x32xbf16> to vector<1x1x32xbf16>
    %123 = arith.extf %122 : vector<1x1x32xbf16> to vector<1x1x32xf32>
    %c1_120 = arith.constant 1 : index
    %c2_121 = arith.constant 2 : index
    %c0_122 = arith.constant 0 : index
    %124 = vector.load %arg5[%c1_120, %c2_121, %c0_122] : memref<3x3x32xf32, #tpu.memory_space<vmem>>, vector<1x1x32xf32>
    %125 = vector.shape_cast %124 : vector<1x1x32xf32> to vector<32xf32>
    %126 = vector.shape_cast %125 : vector<32xf32> to vector<1x1x32xf32>
    %127 = arith.mulf %123, %126 : vector<1x1x32xf32>
    %128 = arith.addf %120, %127 : vector<1x1x32xf32>
    %c0_123 = arith.constant 0 : index
    %c0_124 = arith.constant 0 : index
    %c1_125 = arith.constant 1 : index
    %c0_126 = arith.constant 0 : index
    %c0_127 = arith.constant 0 : index
    %129 = vector.load %arg2[%c0_123, %c0_124, %c1_125, %c0_126, %c0_127] : memref<1x4x2x2x32xbf16, #tpu.memory_space<vmem>>, vector<1x1x1x1x32xbf16>
    %130 = vector.shape_cast %129 : vector<1x1x1x1x32xbf16> to vector<1x1x32xbf16>
    %131 = arith.extf %130 : vector<1x1x32xbf16> to vector<1x1x32xf32>
    %c2_128 = arith.constant 2 : index
    %c0_129 = arith.constant 0 : index
    %c0_130 = arith.constant 0 : index
    %132 = vector.load %arg5[%c2_128, %c0_129, %c0_130] : memref<3x3x32xf32, #tpu.memory_space<vmem>>, vector<1x1x32xf32>
    %133 = vector.shape_cast %132 : vector<1x1x32xf32> to vector<32xf32>
    %134 = vector.shape_cast %133 : vector<32xf32> to vector<1x1x32xf32>
    %135 = arith.mulf %131, %134 : vector<1x1x32xf32>
    %136 = arith.addf %128, %135 : vector<1x1x32xf32>
    %c0_131 = arith.constant 0 : index
    %c1_132 = arith.constant 1 : index
    %c1_133 = arith.constant 1 : index
    %c0_134 = arith.constant 0 : index
    %c0_135 = arith.constant 0 : index
    %137 = vector.load %arg2[%c0_131, %c1_132, %c1_133, %c0_134, %c0_135] : memref<1x4x2x2x32xbf16, #tpu.memory_space<vmem>>, vector<1x1x1x1x32xbf16>
    %138 = vector.shape_cast %137 : vector<1x1x1x1x32xbf16> to vector<1x1x32xbf16>
    %139 = arith.extf %138 : vector<1x1x32xbf16> to vector<1x1x32xf32>
    %c2_136 = arith.constant 2 : index
    %c1_137 = arith.constant 1 : index
    %c0_138 = arith.constant 0 : index
    %140 = vector.load %arg5[%c2_136, %c1_137, %c0_138] : memref<3x3x32xf32, #tpu.memory_space<vmem>>, vector<1x1x32xf32>
    %141 = vector.shape_cast %140 : vector<1x1x32xf32> to vector<32xf32>
    %142 = vector.shape_cast %141 : vector<32xf32> to vector<1x1x32xf32>
    %143 = arith.mulf %139, %142 : vector<1x1x32xf32>
    %144 = arith.addf %136, %143 : vector<1x1x32xf32>
    %c0_139 = arith.constant 0 : index
    %c0_140 = arith.constant 0 : index
    %c1_141 = arith.constant 1 : index
    %c1_142 = arith.constant 1 : index
    %c0_143 = arith.constant 0 : index
    %145 = vector.load %arg2[%c0_139, %c0_140, %c1_141, %c1_142, %c0_143] : memref<1x4x2x2x32xbf16, #tpu.memory_space<vmem>>, vector<1x1x1x1x32xbf16>
    %146 = vector.shape_cast %145 : vector<1x1x1x1x32xbf16> to vector<1x1x32xbf16>
    %147 = arith.extf %146 : vector<1x1x32xbf16> to vector<1x1x32xf32>
    %c2_144 = arith.constant 2 : index
    %c2_145 = arith.constant 2 : index
    %c0_146 = arith.constant 0 : index
    %148 = vector.load %arg5[%c2_144, %c2_145, %c0_146] : memref<3x3x32xf32, #tpu.memory_space<vmem>>, vector<1x1x32xf32>
    %149 = vector.shape_cast %148 : vector<1x1x32xf32> to vector<32xf32>
    %150 = vector.shape_cast %149 : vector<32xf32> to vector<1x1x32xf32>
    %151 = arith.mulf %147, %150 : vector<1x1x32xf32>
    %152 = arith.addf %144, %151 : vector<1x1x32xf32>
    %c0_147 = arith.constant 0 : index
    %c0_148 = arith.constant 0 : index
    %153 = vector.load %arg6[%c0_147, %c0_148] : memref<1x32xf32, #tpu.memory_space<vmem>>, vector<1x32xf32>
    %154 = vector.shape_cast %153 : vector<1x32xf32> to vector<1x1x32xf32>
    %155 = arith.addf %152, %154 : vector<1x1x32xf32>
    %156 = arith.truncf %155 : vector<1x1x32xf32> to vector<1x1x32xbf16>
    %c0_149 = arith.constant 0 : index
    %c0_150 = arith.constant 0 : index
    %c0_151 = arith.constant 0 : index
    %c0_152 = arith.constant 0 : index
    %157 = vector.load %arg8[%c0_149, %c0_150, %c0_151, %c0_152] : memref<1x1x1x32xbf16, #tpu.memory_space<vmem>>, vector<1x1x1x32xbf16>
    %158 = vector.shape_cast %157 : vector<1x1x1x32xbf16> to vector<1x1x32xbf16>
    %159 = vector.shape_cast %156 : vector<1x1x32xbf16> to vector<1x1x1x32xbf16>
    tpu.vector_store %arg8[%c0_149, %c0_150, %c0_151, %c0_152], %159 {strides = array<i32>} : memref<1x1x1x32xbf16, #tpu.memory_space<vmem>>, vector<1x1x1x32xbf16>,
    return
  }
  func.func @transform_0(%arg0: i32) -> (i32, i32, i32, i32, i32) {
    %c0_i32 = arith.constant 0 : i32
    %c0_i32_0 = arith.constant 0 : i32
    %c0_i32_1 = arith.constant 0 : i32
    %c0_i32_2 = arith.constant 0 : i32
    %c0_i32_3 = arith.constant 0 : i32
    return %arg0, %c0_i32, %c0_i32_0, %c0_i32_1, %c0_i32_2 : i32, i32, i32, i32, i32
  }
  func.func @transform_1(%arg0: i32) -> (i32, i32, i32, i32, i32) {
    %c0_i32 = arith.constant 0 : i32
    %c0_i32_0 = arith.constant 0 : i32
    %c0_i32_1 = arith.constant 0 : i32
    %c0_i32_2 = arith.constant 0 : i32
    %c0_i32_3 = arith.constant 0 : i32
    return %arg0, %c0_i32, %c0_i32_0, %c0_i32_1, %c0_i32_2 : i32, i32, i32, i32, i32
  }
  func.func @transform_2(%arg0: i32) -> (i32, i32, i32) {
    %c0_i32 = arith.constant 0 : i32
    %c0_i32_0 = arith.constant 0 : i32
    %c0_i32_1 = arith.constant 0 : i32
    %c0_i32_2 = arith.constant 0 : i32
    return %c0_i32, %c0_i32_0, %c0_i32_1 : i32, i32, i32
  }
  func.func @transform_3(%arg0: i32) -> (i32, i32) {
    %c0_i32 = arith.constant 0 : i32
    %c0_i32_0 = arith.constant 0 : i32
    %c0_i32_1 = arith.constant 0 : i32
    return %c0_i32, %c0_i32_0 : i32, i32
  }
  func.func @transform_4(%arg0: i32) -> (i32, i32, i32) {
    %c0_i32 = arith.constant 0 : i32
    %c0_i32_0 = arith.constant 0 : i32
    %c0_i32_1 = arith.constant 0 : i32
    %c0_i32_2 = arith.constant 0 : i32
    return %c0_i32, %c0_i32_0, %c0_i32_1 : i32, i32, i32
  }
  func.func @transform_5(%arg0: i32) -> (i32, i32) {
    %c0_i32 = arith.constant 0 : i32
    %c0_i32_0 = arith.constant 0 : i32
    %c0_i32_1 = arith.constant 0 : i32
    return %c0_i32, %c0_i32_0 : i32, i32
  }
  func.func @transform_6(%arg0: i32) -> (i32, i32, i32, i32) {
    %c0_i32 = arith.constant 0 : i32
    %c0_i32_0 = arith.constant 0 : i32
    %c0_i32_1 = arith.constant 0 : i32
    %c0_i32_2 = arith.constant 0 : i32
    return %arg0, %c0_i32, %c0_i32_0, %c0_i32_1 : i32, i32, i32, i32
  }
  func.func @transform_7(%arg0: i32) -> (i32, i32, i32, i32) {
    %c0_i32 = arith.constant 0 : i32
    %c0_i32_0 = arith.constant 0 : i32
    %c0_i32_1 = arith.constant 0 : i32
    %c0_i32_2 = arith.constant 0 : i32
    return %arg0, %c0_i32, %c0_i32_0, %c0_i32_1 : i32, i32, i32, i32
  }
}

module attributes {stable_mosaic.version = 11 : i64} {
  func.func @_dual_mm_shuffle_kernel(%arg0: i32, %arg1: memref<2x32xbf16, #tpu.memory_space<vmem>>, %arg2: memref<2x32xbf16, #tpu.memory_space<vmem>>, %arg3: memref<32x64xbf16, #tpu.memory_space<vmem>>, %arg4: memref<1x64xf32, #tpu.memory_space<vmem>>, %arg5: memref<32x64xbf16, #tpu.memory_space<vmem>>, %arg6: memref<1x64xf32, #tpu.memory_space<vmem>>, %arg7: memref<2x64xbf16, #tpu.memory_space<vmem>>) attributes {dimension_semantics = [#tpu.dimension_semantics<parallel>], iteration_bounds = array<i64: 1>, scalar_prefetch = 0 : i64, scratch_operands = 0 : i64, tpu.core_type = #tpu.core_type<tc>, window_params = [{transform_indices = @transform_0, window_bounds = array<i64: 2, 32>}, {transform_indices = @transform_1, window_bounds = array<i64: 2, 32>}, {pipeline_mode = #tpu.pipeline_mode<synchronous>, transform_indices = @transform_2, window_bounds = array<i64: 32, 64>}, {pipeline_mode = #tpu.pipeline_mode<synchronous>, transform_indices = @transform_3, window_bounds = array<i64: 1, 64>}, {pipeline_mode = #tpu.pipeline_mode<synchronous>, transform_indices = @transform_4, window_bounds = array<i64: 32, 64>}, {pipeline_mode = #tpu.pipeline_mode<synchronous>, transform_indices = @transform_5, window_bounds = array<i64: 1, 64>}, {transform_indices = @transform_6, window_bounds = array<i64: 2, 64>}]} {
    %c0 = arith.constant 0 : index
    %c0_0 = arith.constant 0 : index
    %0 = vector.load %arg1[%c0, %c0_0] : memref<2x32xbf16, #tpu.memory_space<vmem>>, vector<2x32xbf16>
    %c0_1 = arith.constant 0 : index
    %c0_2 = arith.constant 0 : index
    %1 = vector.load %arg3[%c0_1, %c0_2] : memref<32x64xbf16, #tpu.memory_space<vmem>>, vector<32x64xbf16>
    %cst = arith.constant dense<0.000000e+00> : vector<2x64xf32>
    %2 = tpu.matmul %0, %1, %cst {dimension_numbers = #tpu.dot_dimension_numbers<[1], [0], [0], [1], [0, 0, 1, 1], [], []>} : vector<2x32xbf16>, vector<32x64xbf16>, vector<2x64xf32> -> vector<2x64xf32>
    %c0_3 = arith.constant 0 : index
    %c0_4 = arith.constant 0 : index
    %3 = vector.load %arg4[%c0_3, %c0_4] : memref<1x64xf32, #tpu.memory_space<vmem>>, vector<1x64xf32>
    %4 = vector.broadcast %3 : vector<1x64xf32> to vector<2x64xf32>
    %5 = arith.addf %2, %4 : vector<2x64xf32>
    %cst_5 = arith.constant 0.000000e+00 : f32
    %6 = vector.broadcast %cst_5 : f32 to vector<2x64xf32>
    %7 = arith.maximumf %5, %6 : vector<2x64xf32>
    %c0_6 = arith.constant 0 : index
    %c0_7 = arith.constant 0 : index
    %8 = vector.load %arg2[%c0_6, %c0_7] : memref<2x32xbf16, #tpu.memory_space<vmem>>, vector<2x32xbf16>
    %c0_8 = arith.constant 0 : index
    %c0_9 = arith.constant 0 : index
    %9 = vector.load %arg5[%c0_8, %c0_9] : memref<32x64xbf16, #tpu.memory_space<vmem>>, vector<32x64xbf16>
    %cst_10 = arith.constant dense<0.000000e+00> : vector<2x64xf32>
    %10 = tpu.matmul %8, %9, %cst_10 {dimension_numbers = #tpu.dot_dimension_numbers<[1], [0], [0], [1], [0, 0, 1, 1], [], []>} : vector<2x32xbf16>, vector<32x64xbf16>, vector<2x64xf32> -> vector<2x64xf32>
    %c0_11 = arith.constant 0 : index
    %c0_12 = arith.constant 0 : index
    %11 = vector.load %arg6[%c0_11, %c0_12] : memref<1x64xf32, #tpu.memory_space<vmem>>, vector<1x64xf32>
    %12 = vector.broadcast %11 : vector<1x64xf32> to vector<2x64xf32>
    %13 = arith.addf %10, %12 : vector<2x64xf32>
    %cst_13 = arith.constant 0.000000e+00 : f32
    %14 = vector.broadcast %cst_13 : f32 to vector<2x64xf32>
    %15 = arith.maximumf %13, %14 : vector<2x64xf32>
    %16 = arith.addf %7, %15 : vector<2x64xf32>
    %17 = arith.truncf %16 : vector<2x64xf32> to vector<2x64xbf16>
    %c0_14 = arith.constant 0 : index
    %c0_15 = arith.constant 0 : index
    %18 = vector.load %arg7[%c0_14, %c0_15] : memref<2x64xbf16, #tpu.memory_space<vmem>>, vector<2x64xbf16>
    tpu.vector_store %arg7[%c0_14, %c0_15], %17 {strides = array<i32>} : memref<2x64xbf16, #tpu.memory_space<vmem>>, vector<2x64xbf16>,
    return
  }
  func.func @transform_0(%arg0: i32) -> (i32, i32) {
    %c0_i32 = arith.constant 0 : i32
    %c0_i32_0 = arith.constant 0 : i32
    return %arg0, %c0_i32 : i32, i32
  }
  func.func @transform_1(%arg0: i32) -> (i32, i32) {
    %c0_i32 = arith.constant 0 : i32
    %c0_i32_0 = arith.constant 0 : i32
    return %arg0, %c0_i32 : i32, i32
  }
  func.func @transform_2(%arg0: i32) -> (i32, i32) {
    %c0_i32 = arith.constant 0 : i32
    %c0_i32_0 = arith.constant 0 : i32
    %c0_i32_1 = arith.constant 0 : i32
    return %c0_i32, %c0_i32_0 : i32, i32
  }
  func.func @transform_3(%arg0: i32) -> (i32, i32) {
    %c0_i32 = arith.constant 0 : i32
    %c0_i32_0 = arith.constant 0 : i32
    %c0_i32_1 = arith.constant 0 : i32
    return %c0_i32, %c0_i32_0 : i32, i32
  }
  func.func @transform_4(%arg0: i32) -> (i32, i32) {
    %c0_i32 = arith.constant 0 : i32
    %c0_i32_0 = arith.constant 0 : i32
    %c0_i32_1 = arith.constant 0 : i32
    return %c0_i32, %c0_i32_0 : i32, i32
  }
  func.func @transform_5(%arg0: i32) -> (i32, i32) {
    %c0_i32 = arith.constant 0 : i32
    %c0_i32_0 = arith.constant 0 : i32
    %c0_i32_1 = arith.constant 0 : i32
    return %c0_i32, %c0_i32_0 : i32, i32
  }
  func.func @transform_6(%arg0: i32) -> (i32, i32) {
    %c0_i32 = arith.constant 0 : i32
    %c0_i32_0 = arith.constant 0 : i32
    return %arg0, %c0_i32 : i32, i32
  }
}

module attributes {stable_mosaic.version = 11 : i64} {
  func.func @_mm_bias_act_kernel(%arg0: i32, %arg1: memref<2x64xbf16, #tpu.memory_space<vmem>>, %arg2: memref<64x64xbf16, #tpu.memory_space<vmem>>, %arg3: memref<1x64xf32, #tpu.memory_space<vmem>>, %arg4: memref<2x64xbf16, #tpu.memory_space<vmem>>) attributes {dimension_semantics = [#tpu.dimension_semantics<parallel>], iteration_bounds = array<i64: 1>, scalar_prefetch = 0 : i64, scratch_operands = 0 : i64, tpu.core_type = #tpu.core_type<tc>, window_params = [{transform_indices = @transform_0, window_bounds = array<i64: 2, 64>}, {pipeline_mode = #tpu.pipeline_mode<synchronous>, transform_indices = @transform_1, window_bounds = array<i64: 64, 64>}, {pipeline_mode = #tpu.pipeline_mode<synchronous>, transform_indices = @transform_2, window_bounds = array<i64: 1, 64>}, {transform_indices = @transform_3, window_bounds = array<i64: 2, 64>}]} {
    %c0 = arith.constant 0 : index
    %c0_0 = arith.constant 0 : index
    %0 = vector.load %arg1[%c0, %c0_0] : memref<2x64xbf16, #tpu.memory_space<vmem>>, vector<2x64xbf16>
    %c0_1 = arith.constant 0 : index
    %c0_2 = arith.constant 0 : index
    %1 = vector.load %arg2[%c0_1, %c0_2] : memref<64x64xbf16, #tpu.memory_space<vmem>>, vector<64x64xbf16>
    %cst = arith.constant dense<0.000000e+00> : vector<2x64xf32>
    %2 = tpu.matmul %0, %1, %cst {dimension_numbers = #tpu.dot_dimension_numbers<[1], [0], [0], [1], [0, 0, 1, 1], [], []>} : vector<2x64xbf16>, vector<64x64xbf16>, vector<2x64xf32> -> vector<2x64xf32>
    %c0_3 = arith.constant 0 : index
    %c0_4 = arith.constant 0 : index
    %3 = vector.load %arg3[%c0_3, %c0_4] : memref<1x64xf32, #tpu.memory_space<vmem>>, vector<1x64xf32>
    %4 = vector.broadcast %3 : vector<1x64xf32> to vector<2x64xf32>
    %5 = arith.addf %2, %4 : vector<2x64xf32>
    %cst_5 = arith.constant 0.000000e+00 : f32
    %6 = vector.broadcast %cst_5 : f32 to vector<2x64xf32>
    %7 = arith.maximumf %5, %6 : vector<2x64xf32>
    %8 = arith.truncf %7 : vector<2x64xf32> to vector<2x64xbf16>
    %c0_6 = arith.constant 0 : index
    %c0_7 = arith.constant 0 : index
    %9 = vector.load %arg4[%c0_6, %c0_7] : memref<2x64xbf16, #tpu.memory_space<vmem>>, vector<2x64xbf16>
    tpu.vector_store %arg4[%c0_6, %c0_7], %8 {strides = array<i32>} : memref<2x64xbf16, #tpu.memory_space<vmem>>, vector<2x64xbf16>,
    return
  }
  func.func @transform_0(%arg0: i32) -> (i32, i32) {
    %c0_i32 = arith.constant 0 : i32
    %c0_i32_0 = arith.constant 0 : i32
    return %arg0, %c0_i32 : i32, i32
  }
  func.func @transform_1(%arg0: i32) -> (i32, i32) {
    %c0_i32 = arith.constant 0 : i32
    %c0_i32_0 = arith.constant 0 : i32
    %c0_i32_1 = arith.constant 0 : i32
    return %c0_i32, %c0_i32_0 : i32, i32
  }
  func.func @transform_2(%arg0: i32) -> (i32, i32) {
    %c0_i32 = arith.constant 0 : i32
    %c0_i32_0 = arith.constant 0 : i32
    %c0_i32_1 = arith.constant 0 : i32
    return %c0_i32, %c0_i32_0 : i32, i32
  }
  func.func @transform_3(%arg0: i32) -> (i32, i32) {
    %c0_i32 = arith.constant 0 : i32
    %c0_i32_0 = arith.constant 0 : i32
    return %arg0, %c0_i32 : i32, i32
  }
}

module attributes {stable_mosaic.version = 11 : i64} {
  func.func @_fused_unit_s1_kernel(%arg0: i32, %arg1: memref<1x1x64xbf16, #tpu.memory_space<vmem>>, %arg2: memref<64x32xbf16, #tpu.memory_space<vmem>>, %arg3: memref<1x32xf32, #tpu.memory_space<vmem>>, %arg4: memref<3x3x32xf32, #tpu.memory_space<vmem>>, %arg5: memref<1x32xf32, #tpu.memory_space<vmem>>, %arg6: memref<32x64xbf16, #tpu.memory_space<vmem>>, %arg7: memref<1x64xf32, #tpu.memory_space<vmem>>, %arg8: memref<64x64xbf16, #tpu.memory_space<vmem>>, %arg9: memref<1x1x64xbf16, #tpu.memory_space<vmem>>, %arg10: memref<17x32xf32, #tpu.memory_space<vmem>>) attributes {dimension_semantics = [#tpu.dimension_semantics<parallel>], iteration_bounds = array<i64: 2>, scalar_prefetch = 0 : i64, scratch_operands = 1 : i64, tpu.core_type = #tpu.core_type<tc>, window_params = [{transform_indices = @transform_0, window_bounds = array<i64: 1, 1, 64>}, {pipeline_mode = #tpu.pipeline_mode<synchronous>, transform_indices = @transform_1, window_bounds = array<i64: 64, 32>}, {pipeline_mode = #tpu.pipeline_mode<synchronous>, transform_indices = @transform_2, window_bounds = array<i64: 1, 32>}, {pipeline_mode = #tpu.pipeline_mode<synchronous>, transform_indices = @transform_3, window_bounds = array<i64: 3, 3, 32>}, {pipeline_mode = #tpu.pipeline_mode<synchronous>, transform_indices = @transform_4, window_bounds = array<i64: 1, 32>}, {pipeline_mode = #tpu.pipeline_mode<synchronous>, transform_indices = @transform_5, window_bounds = array<i64: 32, 64>}, {pipeline_mode = #tpu.pipeline_mode<synchronous>, transform_indices = @transform_6, window_bounds = array<i64: 1, 64>}, {pipeline_mode = #tpu.pipeline_mode<synchronous>, transform_indices = @transform_7, window_bounds = array<i64: 64, 64>}, {transform_indices = @transform_8, window_bounds = array<i64: 1, 1, 64>}]} {
    %c0 = arith.constant 0 : index
    %c0_0 = arith.constant 0 : index
    %c0_1 = arith.constant 0 : index
    %0 = vector.load %arg1[%c0, %c0_0, %c0_1] : memref<1x1x64xbf16, #tpu.memory_space<vmem>>, vector<1x1x64xbf16>
    %1 = vector.shape_cast %0 : vector<1x1x64xbf16> to vector<1x64xbf16>
    %c0_2 = arith.constant 0 : index
    %c0_3 = arith.constant 0 : index
    %2 = vector.load %arg2[%c0_2, %c0_3] : memref<64x32xbf16, #tpu.memory_space<vmem>>, vector<64x32xbf16>
    %cst = arith.constant dense<0.000000e+00> : vector<1x32xf32>
    %3 = tpu.matmul %1, %2, %cst {dimension_numbers = #tpu.dot_dimension_numbers<[1], [0], [0], [1], [0, 0, 1, 1], [], []>} : vector<1x64xbf16>, vector<64x32xbf16>, vector<1x32xf32> -> vector<1x32xf32>
    %c0_4 = arith.constant 0 : index
    %c0_5 = arith.constant 0 : index
    %4 = vector.load %arg3[%c0_4, %c0_5] : memref<1x32xf32, #tpu.memory_space<vmem>>, vector<1x32xf32>
    %5 = arith.addf %3, %4 : vector<1x32xf32>
    %cst_6 = arith.constant 0.000000e+00 : f32
    %6 = vector.broadcast %cst_6 : f32 to vector<1x32xf32>
    %7 = arith.maximumf %5, %6 : vector<1x32xf32>
    %cst_7 = arith.constant 0.000000e+00 : f32
    %8 = vector.broadcast %cst_7 : f32 to vector<8x32xf32>
    %c0_8 = arith.constant 0 : index
    %c0_9 = arith.constant 0 : index
    %9 = vector.load %arg10[%c0_8, %c0_9] : memref<17x32xf32, #tpu.memory_space<vmem>>, vector<8x32xf32>
    tpu.vector_store %arg10[%c0_8, %c0_9], %8 {strides = array<i32>} : memref<17x32xf32, #tpu.memory_space<vmem>>, vector<8x32xf32>,
    %cst_10 = arith.constant 0.000000e+00 : f32
    %10 = vector.broadcast %cst_10 : f32 to vector<8x32xf32>
    %c9 = arith.constant 9 : index
    %c0_11 = arith.constant 0 : index
    %11 = vector.load %arg10[%c9, %c0_11] : memref<17x32xf32, #tpu.memory_space<vmem>>, vector<8x32xf32>
    tpu.vector_store %arg10[%c9, %c0_11], %10 {strides = array<i32>} : memref<17x32xf32, #tpu.memory_space<vmem>>, vector<8x32xf32>,
    %c8 = arith.constant 8 : index
    %c0_12 = arith.constant 0 : index
    %12 = vector.load %arg10[%c8, %c0_12] : memref<17x32xf32, #tpu.memory_space<vmem>>, vector<1x32xf32>
    tpu.vector_store %arg10[%c8, %c0_12], %7 {strides = array<i32>} : memref<17x32xf32, #tpu.memory_space<vmem>>, vector<1x32xf32>,
    %13 = tpu.iota {dimensions = array<i32: 0>} : vector<1x1xi32>
    %c1_i32 = arith.constant 1 : i32
    %c0_i32 = arith.constant 0 : i32
    %14 = arith.cmpi eq, %c1_i32, %c0_i32 : i32
    %c1_i32_13 = arith.constant 1 : i32
    %15 = arith.select %14, %c1_i32_13, %c1_i32 : i32
    %16 = vector.broadcast %15 : i32 to vector<1x1xi32>
    %17 = arith.remsi %13, %16 : vector<1x1xi32>
    %c0_i32_14 = arith.constant 0 : i32
    %18 = vector.broadcast %c0_i32_14 : i32 to vector<1x1xi32>
    %19 = arith.cmpi ne, %17, %18 : vector<1x1xi32>
    %c0_i32_15 = arith.constant 0 : i32
    %20 = vector.broadcast %c0_i32_15 : i32 to vector<1x1xi32>
    %21 = arith.cmpi slt, %17, %20 : vector<1x1xi32>
    %c0_i32_16 = arith.constant 0 : i32
    %22 = arith.cmpi slt, %15, %c0_i32_16 : i32
    %23 = vector.broadcast %22 : i1 to vector<1x1xi1>
    %24 = vector.broadcast %23 : vector<1x1xi1> to vector<1x1xi1>
    %25 = arith.xori %21, %24 : vector<1x1xi1>
    %26 = arith.andi %25, %19 : vector<1x1xi1>
    %27 = vector.broadcast %15 : i32 to vector<1x1xi32>
    %28 = arith.addi %17, %27 : vector<1x1xi32>
    %29 = arith.select %26, %28, %17 : vector<1x1xi1>, vector<1x1xi32>
    %c0_i32_17 = arith.constant 0 : i32
    %30 = vector.broadcast %c0_i32_17 : i32 to vector<1x1xi32>
    %31 = arith.cmpi ne, %29, %30 : vector<1x1xi32>
    %32 = vector.shape_cast %31 : vector<1x1xi1> to vector<1x1xi1>
    %33 = vector.broadcast %32 : vector<1x1xi1> to vector<1x32xi1>
    %34 = arith.extui %33 : vector<1x32xi1> to vector<1x32xi32>
    %35 = arith.sitofp %34 : vector<1x32xi32> to vector<1x32xf32>
    %c0_i32_18 = arith.constant 0 : i32
    %36 = vector.broadcast %c0_i32_18 : i32 to vector<1x1xi32>
    %37 = arith.cmpi ne, %29, %36 : vector<1x1xi32>
    %38 = vector.shape_cast %37 : vector<1x1xi1> to vector<1x1xi1>
    %39 = vector.broadcast %38 : vector<1x1xi1> to vector<1x32xi1>
    %40 = arith.extui %39 : vector<1x32xi1> to vector<1x32xi32>
    %41 = arith.sitofp %40 : vector<1x32xi32> to vector<1x32xf32>
    %cst_19 = arith.constant 0.000000e+00 : f32
    %42 = vector.broadcast %cst_19 : f32 to vector<1x32xf32>
    %cst_20 = arith.constant 0.000000e+00 : f32
    %43 = vector.broadcast %cst_20 : f32 to vector<1x32xf32>
    %cst_21 = arith.constant 0.000000e+00 : f32
    %44 = vector.broadcast %cst_21 : f32 to vector<1x32xf32>
    %c6 = arith.constant 6 : index
    %c0_22 = arith.constant 0 : index
    %45 = vector.load %arg10[%c6, %c0_22] : memref<17x32xf32, #tpu.memory_space<vmem>>, vector<1x32xf32>
    %c0_23 = arith.constant 0 : index
    %c0_24 = arith.constant 0 : index
    %c0_25 = arith.constant 0 : index
    %46 = vector.load %arg4[%c0_23, %c0_24, %c0_25] : memref<3x3x32xf32, #tpu.memory_space<vmem>>, vector<1x1x32xf32>
    %47 = vector.shape_cast %46 : vector<1x1x32xf32> to vector<32xf32>
    %48 = vector.shape_cast %47 : vector<32xf32> to vector<1x32xf32>
    %49 = arith.mulf %45, %48 : vector<1x32xf32>
    %50 = arith.addf %42, %49 : vector<1x32xf32>
    %c7 = arith.constant 7 : index
    %c0_26 = arith.constant 0 : index
    %51 = vector.load %arg10[%c7, %c0_26] : memref<17x32xf32, #tpu.memory_space<vmem>>, vector<1x32xf32>
    %c0_27 = arith.constant 0 : index
    %c1 = arith.constant 1 : index
    %c0_28 = arith.constant 0 : index
    %52 = vector.load %arg4[%c0_27, %c1, %c0_28] : memref<3x3x32xf32, #tpu.memory_space<vmem>>, vector<1x1x32xf32>
    %53 = vector.shape_cast %52 : vector<1x1x32xf32> to vector<32xf32>
    %54 = vector.shape_cast %53 : vector<32xf32> to vector<1x32xf32>
    %55 = arith.mulf %51, %54 : vector<1x32xf32>
    %56 = arith.addf %43, %55 : vector<1x32xf32>
    %c8_29 = arith.constant 8 : index
    %c0_30 = arith.constant 0 : index
    %57 = vector.load %arg10[%c8_29, %c0_30] : memref<17x32xf32, #tpu.memory_space<vmem>>, vector<1x32xf32>
    %c0_31 = arith.constant 0 : index
    %c2 = arith.constant 2 : index
    %c0_32 = arith.constant 0 : index
    %58 = vector.load %arg4[%c0_31, %c2, %c0_32] : memref<3x3x32xf32, #tpu.memory_space<vmem>>, vector<1x1x32xf32>
    %59 = vector.shape_cast %58 : vector<1x1x32xf32> to vector<32xf32>
    %60 = vector.shape_cast %59 : vector<32xf32> to vector<1x32xf32>
    %61 = arith.mulf %57, %60 : vector<1x32xf32>
    %62 = arith.addf %44, %61 : vector<1x32xf32>
    %c7_33 = arith.constant 7 : index
    %c0_34 = arith.constant 0 : index
    %63 = vector.load %arg10[%c7_33, %c0_34] : memref<17x32xf32, #tpu.memory_space<vmem>>, vector<1x32xf32>
    %c1_35 = arith.constant 1 : index
    %c0_36 = arith.constant 0 : index
    %c0_37 = arith.constant 0 : index
    %64 = vector.load %arg4[%c1_35, %c0_36, %c0_37] : memref<3x3x32xf32, #tpu.memory_space<vmem>>, vector<1x1x32xf32>
    %65 = vector.shape_cast %64 : vector<1x1x32xf32> to vector<32xf32>
    %66 = vector.shape_cast %65 : vector<32xf32> to vector<1x32xf32>
    %67 = arith.mulf %63, %66 : vector<1x32xf32>
    %68 = arith.addf %50, %67 : vector<1x32xf32>
    %c8_38 = arith.constant 8 : index
    %c0_39 = arith.constant 0 : index
    %69 = vector.load %arg10[%c8_38, %c0_39] : memref<17x32xf32, #tpu.memory_space<vmem>>, vector<1x32xf32>
    %c1_40 = arith.constant 1 : index
    %c1_41 = arith.constant 1 : index
    %c0_42 = arith.constant 0 : index
    %70 = vector.load %arg4[%c1_40, %c1_41, %c0_42] : memref<3x3x32xf32, #tpu.memory_space<vmem>>, vector<1x1x32xf32>
    %71 = vector.shape_cast %70 : vector<1x1x32xf32> to vector<32xf32>
    %72 = vector.shape_cast %71 : vector<32xf32> to vector<1x32xf32>
    %73 = arith.mulf %69, %72 : vector<1x32xf32>
    %74 = arith.addf %56, %73 : vector<1x32xf32>
    %c9_43 = arith.constant 9 : index
    %c0_44 = arith.constant 0 : index
    %75 = vector.load %arg10[%c9_43, %c0_44] : memref<17x32xf32, #tpu.memory_space<vmem>>, vector<1x32xf32>
    %c1_45 = arith.constant 1 : index
    %c2_46 = arith.constant 2 : index
    %c0_47 = arith.constant 0 : index
    %76 = vector.load %arg4[%c1_45, %c2_46, %c0_47] : memref<3x3x32xf32, #tpu.memory_space<vmem>>, vector<1x1x32xf32>
    %77 = vector.shape_cast %76 : vector<1x1x32xf32> to vector<32xf32>
    %78 = vector.shape_cast %77 : vector<32xf32> to vector<1x32xf32>
    %79 = arith.mulf %75, %78 : vector<1x32xf32>
    %80 = arith.addf %62, %79 : vector<1x32xf32>
    %c8_48 = arith.constant 8 : index
    %c0_49 = arith.constant 0 : index
    %81 = vector.load %arg10[%c8_48, %c0_49] : memref<17x32xf32, #tpu.memory_space<vmem>>, vector<1x32xf32>
    %c2_50 = arith.constant 2 : index
    %c0_51 = arith.constant 0 : index
    %c0_52 = arith.constant 0 : index
    %82 = vector.load %arg4[%c2_50, %c0_51, %c0_52] : memref<3x3x32xf32, #tpu.memory_space<vmem>>, vector<1x1x32xf32>
    %83 = vector.shape_cast %82 : vector<1x1x32xf32> to vector<32xf32>
    %84 = vector.shape_cast %83 : vector<32xf32> to vector<1x32xf32>
    %85 = arith.mulf %81, %84 : vector<1x32xf32>
    %86 = arith.addf %68, %85 : vector<1x32xf32>
    %c9_53 = arith.constant 9 : index
    %c0_54 = arith.constant 0 : index
    %87 = vector.load %arg10[%c9_53, %c0_54] : memref<17x32xf32, #tpu.memory_space<vmem>>, vector<1x32xf32>
    %c2_55 = arith.constant 2 : index
    %c1_56 = arith.constant 1 : index
    %c0_57 = arith.constant 0 : index
    %88 = vector.load %arg4[%c2_55, %c1_56, %c0_57] : memref<3x3x32xf32, #tpu.memory_space<vmem>>, vector<1x1x32xf32>
    %89 = vector.shape_cast %88 : vector<1x1x32xf32> to vector<32xf32>
    %90 = vector.shape_cast %89 : vector<32xf32> to vector<1x32xf32>
    %91 = arith.mulf %87, %90 : vector<1x32xf32>
    %92 = arith.addf %74, %91 : vector<1x32xf32>
    %c10 = arith.constant 10 : index
    %c0_58 = arith.constant 0 : index
    %93 = vector.load %arg10[%c10, %c0_58] : memref<17x32xf32, #tpu.memory_space<vmem>>, vector<1x32xf32>
    %c2_59 = arith.constant 2 : index
    %c2_60 = arith.constant 2 : index
    %c0_61 = arith.constant 0 : index
    %94 = vector.load %arg4[%c2_59, %c2_60, %c0_61] : memref<3x3x32xf32, #tpu.memory_space<vmem>>, vector<1x1x32xf32>
    %95 = vector.shape_cast %94 : vector<1x1x32xf32> to vector<32xf32>
    %96 = vector.shape_cast %95 : vector<32xf32> to vector<1x32xf32>
    %97 = arith.mulf %93, %96 : vector<1x32xf32>
    %98 = arith.addf %80, %97 : vector<1x32xf32>
    %99 = arith.mulf %86, %35 : vector<1x32xf32>
    %100 = arith.addf %99, %92 : vector<1x32xf32>
    %101 = arith.mulf %98, %41 : vector<1x32xf32>
    %102 = arith.addf %100, %101 : vector<1x32xf32>
    %c0_62 = arith.constant 0 : index
    %c0_63 = arith.constant 0 : index
    %103 = vector.load %arg5[%c0_62, %c0_63] : memref<1x32xf32, #tpu.memory_space<vmem>>, vector<1x32xf32>
    %104 = arith.addf %102, %103 : vector<1x32xf32>
    %105 = arith.truncf %104 : vector<1x32xf32> to vector<1x32xbf16>
    %c0_64 = arith.constant 0 : index
    %c0_65 = arith.constant 0 : index
    %106 = vector.load %arg6[%c0_64, %c0_65] : memref<32x64xbf16, #tpu.memory_space<vmem>>, vector<32x64xbf16>
    %cst_66 = arith.constant dense<0.000000e+00> : vector<1x64xf32>
    %107 = tpu.matmul %105, %106, %cst_66 {dimension_numbers = #tpu.dot_dimension_numbers<[1], [0], [0], [1], [0, 0, 1, 1], [], []>} : vector<1x32xbf16>, vector<32x64xbf16>, vector<1x64xf32> -> vector<1x64xf32>
    %c0_67 = arith.constant 0 : index
    %c0_68 = arith.constant 0 : index
    %108 = vector.load %arg7[%c0_67, %c0_68] : memref<1x64xf32, #tpu.memory_space<vmem>>, vector<1x64xf32>
    %109 = arith.addf %107, %108 : vector<1x64xf32>
    %cst_69 = arith.constant 0.000000e+00 : f32
    %110 = vector.broadcast %cst_69 : f32 to vector<1x64xf32>
    %111 = arith.maximumf %109, %110 : vector<1x64xf32>
    %c0_70 = arith.constant 0 : index
    %c0_71 = arith.constant 0 : index
    %112 = vector.load %arg8[%c0_70, %c0_71] : memref<64x64xbf16, #tpu.memory_space<vmem>>, vector<64x64xbf16>
    %cst_72 = arith.constant dense<0.000000e+00> : vector<1x64xf32>
    %113 = tpu.matmul %1, %112, %cst_72 {dimension_numbers = #tpu.dot_dimension_numbers<[1], [0], [0], [1], [0, 0, 1, 1], [], []>} : vector<1x64xbf16>, vector<64x64xbf16>, vector<1x64xf32> -> vector<1x64xf32>
    %114 = arith.addf %111, %113 : vector<1x64xf32>
    %115 = arith.truncf %114 : vector<1x64xf32> to vector<1x64xbf16>
    %c0_73 = arith.constant 0 : index
    %c0_74 = arith.constant 0 : index
    %c0_75 = arith.constant 0 : index
    %116 = vector.load %arg9[%c0_73, %c0_74, %c0_75] : memref<1x1x64xbf16, #tpu.memory_space<vmem>>, vector<1x1x64xbf16>
    %117 = vector.shape_cast %116 : vector<1x1x64xbf16> to vector<1x64xbf16>
    %118 = vector.shape_cast %115 : vector<1x64xbf16> to vector<1x1x64xbf16>
    tpu.vector_store %arg9[%c0_73, %c0_74, %c0_75], %118 {strides = array<i32>} : memref<1x1x64xbf16, #tpu.memory_space<vmem>>, vector<1x1x64xbf16>,
    return
  }
  func.func @transform_0(%arg0: i32) -> (i32, i32, i32) {
    %c0_i32 = arith.constant 0 : i32
    %c0_i32_0 = arith.constant 0 : i32
    %c0_i32_1 = arith.constant 0 : i32
    return %arg0, %c0_i32, %c0_i32_0 : i32, i32, i32
  }
  func.func @transform_1(%arg0: i32) -> (i32, i32) {
    %c0_i32 = arith.constant 0 : i32
    %c0_i32_0 = arith.constant 0 : i32
    %c0_i32_1 = arith.constant 0 : i32
    return %c0_i32, %c0_i32_0 : i32, i32
  }
  func.func @transform_2(%arg0: i32) -> (i32, i32) {
    %c0_i32 = arith.constant 0 : i32
    %c0_i32_0 = arith.constant 0 : i32
    %c0_i32_1 = arith.constant 0 : i32
    return %c0_i32, %c0_i32_0 : i32, i32
  }
  func.func @transform_3(%arg0: i32) -> (i32, i32, i32) {
    %c0_i32 = arith.constant 0 : i32
    %c0_i32_0 = arith.constant 0 : i32
    %c0_i32_1 = arith.constant 0 : i32
    %c0_i32_2 = arith.constant 0 : i32
    return %c0_i32, %c0_i32_0, %c0_i32_1 : i32, i32, i32
  }
  func.func @transform_4(%arg0: i32) -> (i32, i32) {
    %c0_i32 = arith.constant 0 : i32
    %c0_i32_0 = arith.constant 0 : i32
    %c0_i32_1 = arith.constant 0 : i32
    return %c0_i32, %c0_i32_0 : i32, i32
  }
  func.func @transform_5(%arg0: i32) -> (i32, i32) {
    %c0_i32 = arith.constant 0 : i32
    %c0_i32_0 = arith.constant 0 : i32
    %c0_i32_1 = arith.constant 0 : i32
    return %c0_i32, %c0_i32_0 : i32, i32
  }
  func.func @transform_6(%arg0: i32) -> (i32, i32) {
    %c0_i32 = arith.constant 0 : i32
    %c0_i32_0 = arith.constant 0 : i32
    %c0_i32_1 = arith.constant 0 : i32
    return %c0_i32, %c0_i32_0 : i32, i32
  }
  func.func @transform_7(%arg0: i32) -> (i32, i32) {
    %c0_i32 = arith.constant 0 : i32
    %c0_i32_0 = arith.constant 0 : i32
    %c0_i32_1 = arith.constant 0 : i32
    return %c0_i32, %c0_i32_0 : i32, i32
  }
  func.func @transform_8(%arg0: i32) -> (i32, i32, i32) {
    %c0_i32 = arith.constant 0 : i32
    %c0_i32_0 = arith.constant 0 : i32
    %c0_i32_1 = arith.constant 0 : i32
    return %arg0, %c0_i32, %c0_i32_0 : i32, i32, i32
  }
}

</mosaic_0001>

<llo_original>
// kernel: _lambda_.15
$region0: #{_lambda_.15}
  #allocation0 [shape = 'u32[]', space=smem, size = 0x4, offset = 0x4, fixed_abs, tag = 'smem constant byte address 0x4 - core index']
  #allocation1 [shape = 'u32[144,128]{1,0:T(1,128)}', space=vmem, size = 0x12000, scoped, tag = 'internal scratch']
  %s0 = inlined_call_operand.vmem [shape: bf16[512,27], index: 0, kind: input, shape index: {}]
  %s1 = inlined_call_operand.vmem [shape: bf16[27,8], index: 1, kind: input, shape index: {}]
  %s2 = inlined_call_operand.vmem [shape: f32[1,8], index: 2, kind: input, shape index: {}]
  %s3 = inlined_call_operand.vmem [shape: bf16[512,8], index: 3, kind: output, shape index: {}]
  %s4 = sld [smem:[#allocation0]]
  $region22: #{_lambda_.15} parent=0
    _
  %s6 = ssub.s32 1, %s4
  %s7 = scalar_select 0, %s6, %s4
  // Predicated region
  $region2: #{_lambda_.15} parent=0 // pred_check
    _
  $region3: #{_lambda_.15} parent=0 // pred_check_branch
    %9 = sbr.rel (0) target = $region5
  $region4: #{_lambda_.15} parent=0 // pred_region
    _
  $region5: #{_lambda_.15} parent=0 // pred_fallthru
    _
  // Predicated region
  $region6: #{_lambda_.15} parent=0 // pred_check
    _
  $region7: #{_lambda_.15} parent=0 // pred_check_branch
    %11 = sbr.rel (0) target = $region9
  $region8: #{_lambda_.15} parent=0 // pred_region
    _
  $region9: #{_lambda_.15} parent=0 // pred_fallthru
    _
  // Predicated region
  $region10: #{_lambda_.15} parent=0 // pred_check
    _
  $region11: #{_lambda_.15} parent=0 // pred_check_branch
    %13 = sbr.rel (0) target = $region13
  $region12: #{_lambda_.15} parent=0 // pred_region
    _
  $region13: #{_lambda_.15} parent=0 // pred_fallthru
    _
  %v15 = vld [vmem:[%s0] sm:$0xf]
  %v16 = vld [vmem:[%s0 + $0x4] sm:$0xf]
  %v17 = vld [vmem:[%s0 + $0x8] sm:$0xf]
  %v18 = vld [vmem:[%s0 + $0xc] sm:$0xf]
  %v19 = vld [vmem:[%s0 + $0x10] sm:$0xf]
  %v20 = vld [vmem:[%s0 + $0x14] sm:$0xf]
  %v21 = vld [vmem:[%s0 + $0x18] sm:$0xf]
  %v22 = vld [vmem:[%s0 + $0x1c] sm:$0xf]
  %v23 = vld [vmem:[%s0 + $0x20] sm:$0xf]
  %v24 = vld [vmem:[%s0 + $0x24] sm:$0xf]
  %v25 = vld [vmem:[%s0 + $0x28] sm:$0xf]
  %v26 = vld [vmem:[%s0 + $0x2c] sm:$0xf]
  %v27 = vld [vmem:[%s0 + $0x30] sm:$0xf]
  %v28 = vld [vmem:[%s0 + $0x34] sm:$0xf]
  %v29 = vld [vmem:[%s0 + $0x38] sm:$0xf]
  %v30 = vld [vmem:[%s0 + $0x3c] sm:$0xf]
  %v31 = vld [vmem:[%s0 + $0x40] sm:$0xf]
  %v32 = vld [vmem:[%s0 + $0x44] sm:$0xf]
  %v33 = vld [vmem:[%s0 + $0x48] sm:$0xf]
  %v34 = vld [vmem:[%s0 + $0x4c] sm:$0xf]
  %v35 = vld [vmem:[%s0 + $0x50] sm:$0xf]
  %v36 = vld [vmem:[%s0 + $0x54] sm:$0xf]
  %v37 = vld [vmem:[%s0 + $0x58] sm:$0xf]
  %v38 = vld [vmem:[%s0 + $0x5c] sm:$0xf]
  %v39 = vld [vmem:[%s0 + $0x60] sm:$0xf]
  %v40 = vld [vmem:[%s0 + $0x64] sm:$0xf]
  %v41 = vld [vmem:[%s0 + $0x68] sm:$0xf]
  %v42 = vld [vmem:[%s0 + $0x6c] sm:$0xf]
  %v43 = vld [vmem:[%s0 + $0x70] sm:$0xf]
  %v44 = vld [vmem:[%s0 + $0x74] sm:$0xf]
  %v45 = vld [vmem:[%s0 + $0x78] sm:$0xf]
  %v46 = vld [vmem:[%s0 + $0x7c] sm:$0xf]
  %v47 = vld [vmem:[%s0 + $0x80] sm:$0xf]
  %v48 = vld [vmem:[%s0 + $0x84] sm:$0xf]
  %v49 = vld [vmem:[%s0 + $0x88] sm:$0xf]
  %v50 = vld [vmem:[%s0 + $0x8c] sm:$0xf]
  %v51 = vld [vmem:[%s0 + $0x90] sm:$0xf]
  %v52 = vld [vmem:[%s0 + $0x94] sm:$0xf]
  %v53 = vld [vmem:[%s0 + $0x98] sm:$0xf]
  %v54 = vld [vmem:[%s0 + $0x9c] sm:$0xf]
  %v55 = vld [vmem:[%s0 + $0xa0] sm:$0xf]
  %v56 = vld [vmem:[%s0 + $0xa4] sm:$0xf]
  %v57 = vld [vmem:[%s0 + $0xa8] sm:$0xf]
  %v58 = vld [vmem:[%s0 + $0xac] sm:$0xf]
  %v59 = vld [vmem:[%s0 + $0xb0] sm:$0xf]
  %v60 = vld [vmem:[%s0 + $0xb4] sm:$0xf]
  %v61 = vld [vmem:[%s0 + $0xb8] sm:$0xf]
  %v62 = vld [vmem:[%s0 + $0xbc] sm:$0xf]
  %v63 = vld [vmem:[%s0 + $0xc0] sm:$0xf]
  %v64 = vld [vmem:[%s0 + $0xc4] sm:$0xf]
  %v65 = vld [vmem:[%s0 + $0xc8] sm:$0xf]
  %v66 = vld [vmem:[%s0 + $0xcc] sm:$0xf]
  %v67 = vld [vmem:[%s0 + $0xd0] sm:$0xf]
  %v68 = vld [vmem:[%s0 + $0xd4] sm:$0xf]
  %v69 = vld [vmem:[%s0 + $0xd8] sm:$0xf]
  %v70 = vld [vmem:[%s0 + $0xdc] sm:$0xf]
  %v71 = vld [vmem:[%s0 + $0xe0] sm:$0xf]
  %v72 = vld [vmem:[%s0 + $0xe4] sm:$0xf]
  %v73 = vld [vmem:[%s0 + $0xe8] sm:$0xf]
  %v74 = vld [vmem:[%s0 + $0xec] sm:$0xf]
  %v75 = vld [vmem:[%s0 + $0xf0] sm:$0xf]
  %v76 = vld [vmem:[%s0 + $0xf4] sm:$0xf]
  %v77 = vld [vmem:[%s0 + $0xf8] sm:$0xf]
  %v78 = vld [vmem:[%s0 + $0xfc] sm:$0xf]
  %v79 = vld [vmem:[%s1] sm:$0xf]
  %v80 = vld [vmem:[%s1 + $0x4] sm:$0xf]
  %v81 = vld [vmem:[%s1 + $0x8] sm:$0xf]
  %v82 = vld [vmem:[%s1 + $0xc] sm:$0x3]
  %v83 = vld [vmem:[%s2] sm:$0x1]
  %v85 = vlaneseq
  %v86 = vshrl.u32 %v85, 7
  %v87 = vsub.s32 0, %v86
  %v88 = vrot.slane %v83, %v87
  %v154 = vunpack.c.l.b16 %v15
  %v155 = vunpack.c.l.b16 %v16
  %v156 = vunpack.c.l.b16 %v17
  %v157 = vunpack.c.l.b16 %v18
  %v158 = vunpack.c.l.b16 %v19
  %v159 = vunpack.c.l.b16 %v20
  %v160 = vunpack.c.l.b16 %v21
  %v161 = vunpack.c.l.b16 %v22
  %v162 = vunpack.c.l.b16 %v23
  %v163 = vunpack.c.l.b16 %v24
  %v164 = vunpack.c.l.b16 %v25
  %v165 = vunpack.c.l.b16 %v26
  %v166 = vunpack.c.l.b16 %v27
  %v167 = vunpack.c.l.b16 %v28
  %v168 = vunpack.c.l.b16 %v29
  %v169 = vunpack.c.l.b16 %v30
  %v170 = vunpack.c.l.b16 %v31
  %v171 = vunpack.c.l.b16 %v32
  %v172 = vunpack.c.l.b16 %v33
  %v173 = vunpack.c.l.b16 %v34
  %v174 = vunpack.c.l.b16 %v35
  %v175 = vunpack.c.l.b16 %v36
  %v176 = vunpack.c.l.b16 %v37
  %v177 = vunpack.c.l.b16 %v38
  %v178 = vunpack.c.l.b16 %v39
  %v179 = vunpack.c.l.b16 %v40
  %v180 = vunpack.c.l.b16 %v41
  %v181 = vunpack.c.l.b16 %v42
  %v182 = vunpack.c.l.b16 %v43
  %v183 = vunpack.c.l.b16 %v44
  %v184 = vunpack.c.l.b16 %v45
  %v185 = vunpack.c.l.b16 %v46
  %v186 = vunpack.c.l.b16 %v47
  %v187 = vunpack.c.l.b16 %v48
  %v188 = vunpack.c.l.b16 %v49
  %v189 = vunpack.c.l.b16 %v50
  %v190 = vunpack.c.l.b16 %v51
  %v191 = vunpack.c.l.b16 %v52
  %v192 = vunpack.c.l.b16 %v53
  %v193 = vunpack.c.l.b16 %v54
  %v194 = vunpack.c.l.b16 %v55
  %v195 = vunpack.c.l.b16 %v56
  %v196 = vunpack.c.l.b16 %v57
  %v197 = vunpack.c.l.b16 %v58
  %v198 = vunpack.c.l.b16 %v59
  %v199 = vunpack.c.l.b16 %v60
  %v200 = vunpack.c.l.b16 %v61
  %v201 = vunpack.c.l.b16 %v62
  %v202 = vunpack.c.l.b16 %v63
  %v203 = vunpack.c.l.b16 %v64
  %v204 = vunpack.c.l.b16 %v65
  %v205 = vunpack.c.l.b16 %v66
  %v206 = vunpack.c.l.b16 %v67
  %v207 = vunpack.c.l.b16 %v68
  %v208 = vunpack.c.l.b16 %v69
  %v209 = vunpack.c.l.b16 %v70
  %v210 = vunpack.c.l.b16 %v71
  %v211 = vunpack.c.l.b16 %v72
  %v212 = vunpack.c.l.b16 %v73
  %v213 = vunpack.c.l.b16 %v74
  %v214 = vunpack.c.l.b16 %v75
  %v215 = vunpack.c.l.b16 %v76
  %v216 = vunpack.c.l.b16 %v77
  %v217 = vunpack.c.l.b16 %v78
  %v218 = vpack.c.b16 %v155, %v154
  %v219 = vpack.c.b16 %v157, %v156
  %v220 = vpack.c.b16 %v159, %v158
  %v221 = vpack.c.b16 %v161, %v160
  %v222 = vpack.c.b16 %v163, %v162
  %v223 = vpack.c.b16 %v165, %v164
  %v224 = vpack.c.b16 %v167, %v166
  %v225 = vpack.c.b16 %v169, %v168
  %v226 = vpack.c.b16 %v171, %v170
  %v227 = vpack.c.b16 %v173, %v172
  %v228 = vpack.c.b16 %v175, %v174
  %v229 = vpack.c.b16 %v177, %v176
  %v230 = vpack.c.b16 %v179, %v178
  %v231 = vpack.c.b16 %v181, %v180
  %v232 = vpack.c.b16 %v183, %v182
  %v233 = vpack.c.b16 %v185, %v184
  %v234 = vpack.c.b16 %v187, %v186
  %v235 = vpack.c.b16 %v189, %v188
  %v236 = vpack.c.b16 %v191, %v190
  %v237 = vpack.c.b16 %v193, %v192
  %v238 = vpack.c.b16 %v195, %v194
  %v239 = vpack.c.b16 %v197, %v196
  %v240 = vpack.c.b16 %v199, %v198
  %v241 = vpack.c.b16 %v201, %v200
  %v242 = vpack.c.b16 %v203, %v202
  %v243 = vpack.c.b16 %v205, %v204
  %v244 = vpack.c.b16 %v207, %v206
  %v245 = vpack.c.b16 %v209, %v208
  %v246 = vpack.c.b16 %v211, %v210
  %v247 = vpack.c.b16 %v213, %v212
  %v248 = vpack.c.b16 %v215, %v214
  %v249 = vpack.c.b16 %v217, %v216
  %v254 = vunpack.c.l.b16 %v79
  %v255 = vunpack.c.l.b16 %v80
  %v256 = vunpack.c.l.b16 %v81
  %v257 = vunpack.c.l.b16 %v82
  %v258 = vpack.c.b16 %v255, %v254
  %v259 = vpack.c.b16 %v257, %v256
  %vm261 = vcmask 220160
  %v263 = vsel %vm261, %v218, 0
  %v266 = vsel %vm261, %v219, 0
  %v269 = vsel %vm261, %v220, 0
  %v272 = vsel %vm261, %v221, 0
  %v275 = vsel %vm261, %v222, 0
  %v278 = vsel %vm261, %v223, 0
  %v281 = vsel %vm261, %v224, 0
  %v284 = vsel %vm261, %v225, 0
  %v287 = vsel %vm261, %v226, 0
  %v290 = vsel %vm261, %v227, 0
  %v293 = vsel %vm261, %v228, 0
  %v296 = vsel %vm261, %v229, 0
  %v299 = vsel %vm261, %v230, 0
  %v302 = vsel %vm261, %v231, 0
  %v305 = vsel %vm261, %v232, 0
  %v308 = vsel %vm261, %v233, 0
  %v311 = vsel %vm261, %v234, 0
  %v314 = vsel %vm261, %v235, 0
  %v317 = vsel %vm261, %v236, 0
  %v320 = vsel %vm261, %v237, 0
  %v323 = vsel %vm261, %v238, 0
  %v326 = vsel %vm261, %v239, 0
  %v329 = vsel %vm261, %v240, 0
  %v332 = vsel %vm261, %v241, 0
  %v335 = vsel %vm261, %v242, 0
  %v338 = vsel %vm261, %v243, 0
  %v341 = vsel %vm261, %v244, 0
  %v344 = vsel %vm261, %v245, 0
  %v347 = vsel %vm261, %v246, 0
  %v350 = vsel %vm261, %v247, 0
  %v353 = vsel %vm261, %v248, 0
  %v356 = vsel %vm261, %v249, 0
  %vm358 = vcmask 1044480
  %vm359 = vcmask 1045504
  %v360 = vsel %vm358, 4294967295, 65535
  %v361 = vsel %vm359, %v360, 0
  %v363 = vand.u32 %v259, %v361
  %365 = vmatprep.subr.bf16.mxu0 0
  %366 = vmatpush1.bf16.msra.mxu0 %v258
  %367 = vmatprep.subr.bf16.mxu0 0
  %368 = vmatpush1.bf16.msra.mxu0 %v363
  %369 = vmatprep.subr.bf16.mxu0 0
  %370 = vmatpush1.bf16.msra.mxu0 0
  %371 = vmatprep.subr.bf16.mxu0 0
  %372 = vmatpush1.bf16.msra.mxu0 0
  %373 = vmatprep.subr.bf16.mxu0 0
  %374 = vmatpush1.bf16.msra.mxu0 0
  %375 = vmatprep.subr.bf16.mxu0 0
  %376 = vmatpush1.bf16.msra.mxu0 0
  %377 = vmatprep.subr.bf16.mxu0 0
  %378 = vmatpush1.bf16.msra.mxu0 0
  %379 = vmatprep.subr.bf16.mxu0 0
  %380 = vmatpush1.bf16.msra.mxu0 0
  %381 = vmatprep.subr.bf16.mxu0 0
  %382 = vmatpush1.bf16.msra.mxu0 0
  %383 = vmatprep.subr.bf16.mxu0 0
  %384 = vmatpush1.bf16.msra.mxu0 0
  %385 = vmatprep.subr.bf16.mxu0 0
  %386 = vmatpush1.bf16.msra.mxu0 0
  %387 = vmatprep.subr.bf16.mxu0 0
  %388 = vmatpush1.bf16.msra.mxu0 0
  %389 = vmatprep.subr.bf16.mxu0 0
  %390 = vmatpush1.bf16.msra.mxu0 0
  %391 = vmatprep.subr.bf16.mxu0 0
  %392 = vmatpush1.bf16.msra.mxu0 0
  %393 = vmatprep.subr.bf16.mxu0 0
  %394 = vmatpush1.bf16.msra.mxu0 0
  %395 = vmatprep.subr.bf16.mxu0 0
  %396 = vmatpush1.bf16.msra.mxu0 0
  %397 = vmatprep.mubr.bf16.mxu0 0
  %398 = vmatmul.mubr.bf16.gmra.mrb[0].mxu0 %v263
  %v399 = vpop.f32.mrb[0].mxu0
  %v400 = vadd.f32 %v88, %v399
  %v401 = vpop.f32.mrb[0].mxu0
  %v402 = vpop.f32.mrb[0].mxu0
  %v403 = vadd.f32 %v88, %v402
  %v404 = vpop.f32.mrb[0].mxu0
  %405 = vmatprep.mubr.bf16.mxu0 0
  %406 = vmatmul.mubr.bf16.gmra.mrb[0].mxu0 %v266
  %v407 = vpop.f32.mrb[0].mxu0
  %v408 = vadd.f32 %v88, %v407
  %v409 = vpop.f32.mrb[0].mxu0
  %v410 = vpop.f32.mrb[0].mxu0
  %v411 = vadd.f32 %v88, %v410
  %v412 = vpop.f32.mrb[0].mxu0
  %413 = vmatprep.mubr.bf16.mxu0 0
  %414 = vmatmul.mubr.bf16.gmra.mrb[0].mxu0 %v269
  %v415 = vpop.f32.mrb[0].mxu0
  %v416 = vadd.f32 %v88, %v415
  %v417 = vpop.f32.mrb[0].mxu0
  %v418 = vpop.f32.mrb[0].mxu0
  %v419 = vadd.f32 %v88, %v418
  %v420 = vpop.f32.mrb[0].mxu0
  %421 = vmatprep.mubr.bf16.mxu0 0
  %422 = vmatmul.mubr.bf16.gmra.mrb[0].mxu0 %v272
  %v423 = vpop.f32.mrb[0].mxu0
  %v424 = vadd.f32 %v88, %v423
  %v425 = vpop.f32.mrb[0].mxu0
  %v426 = vpop.f32.mrb[0].mxu0
  %v427 = vadd.f32 %v88, %v426
  %v428 = vpop.f32.mrb[0].mxu0
  %429 = vmatprep.mubr.bf16.mxu0 0
  %430 = vmatmul.mubr.bf16.gmra.mrb[0].mxu0 %v275
  %v431 = vpop.f32.mrb[0].mxu0
  %v432 = vadd.f32 %v88, %v431
  %v433 = vpop.f32.mrb[0].mxu0
  %v434 = vpop.f32.mrb[0].mxu0
  %v435 = vadd.f32 %v88, %v434
  %v436 = vpop.f32.mrb[0].mxu0
  %437 = vmatprep.mubr.bf16.mxu0 0
  %438 = vmatmul.mubr.bf16.gmra.mrb[0].mxu0 %v278
  %v439 = vpop.f32.mrb[0].mxu0
  %v440 = vadd.f32 %v88, %v439
  %v441 = vpop.f32.mrb[0].mxu0
  %v442 = vpop.f32.mrb[0].mxu0
  %v443 = vadd.f32 %v88, %v442
  %v444 = vpop.f32.mrb[0].mxu0
  %445 = vmatprep.mubr.bf16.mxu0 0
  %446 = vmatmul.mubr.bf16.gmra.mrb[0].mxu0 %v281
  %v447 = vpop.f32.mrb[0].mxu0
  %v448 = vadd.f32 %v88, %v447
  %v449 = vpop.f32.mrb[0].mxu0
  %v450 = vpop.f32.mrb[0].mxu0
  %v451 = vadd.f32 %v88, %v450
  %v452 = vpop.f32.mrb[0].mxu0
  %453 = vmatprep.mubr.bf16.mxu0 0
  %454 = vmatmul.mubr.bf16.gmra.mrb[0].mxu0 %v284
  %v455 = vpop.f32.mrb[0].mxu0
  %v456 = vadd.f32 %v88, %v455
  %v457 = vpop.f32.mrb[0].mxu0
  %v458 = vpop.f32.mrb[0].mxu0
  %v459 = vadd.f32 %v88, %v458
  %v460 = vpop.f32.mrb[0].mxu0
  %461 = vmatprep.mubr.bf16.mxu0 0
  %462 = vmatmul.mubr.bf16.gmra.mrb[0].mxu0 %v287
  %v463 = vpop.f32.mrb[0].mxu0
  %v464 = vadd.f32 %v88, %v463
  %v465 = vpop.f32.mrb[0].mxu0
  %v466 = vpop.f32.mrb[0].mxu0
  %v467 = vadd.f32 %v88, %v466
  %v468 = vpop.f32.mrb[0].mxu0
  %469 = vmatprep.mubr.bf16.mxu0 0
  %470 = vmatmul.mubr.bf16.gmra.mrb[0].mxu0 %v290
  %v471 = vpop.f32.mrb[0].mxu0
  %v472 = vadd.f32 %v88, %v471
  %v473 = vpop.f32.mrb[0].mxu0
  %v474 = vpop.f32.mrb[0].mxu0
  %v475 = vadd.f32 %v88, %v474
  %v476 = vpop.f32.mrb[0].mxu0
  %477 = vmatprep.mubr.bf16.mxu0 0
  %478 = vmatmul.mubr.bf16.gmra.mrb[0].mxu0 %v293
  %v479 = vpop.f32.mrb[0].mxu0
  %v480 = vadd.f32 %v88, %v479
  %v481 = vpop.f32.mrb[0].mxu0
  %v482 = vpop.f32.mrb[0].mxu0
  %v483 = vadd.f32 %v88, %v482
  %v484 = vpop.f32.mrb[0].mxu0
  %485 = vmatprep.mubr.bf16.mxu0 0
  %486 = vmatmul.mubr.bf16.gmra.mrb[0].mxu0 %v296
  %v487 = vpop.f32.mrb[0].mxu0
  %v488 = vadd.f32 %v88, %v487
  %v489 = vpop.f32.mrb[0].mxu0
  %v490 = vpop.f32.mrb[0].mxu0
  %v491 = vadd.f32 %v88, %v490
  %v492 = vpop.f32.mrb[0].mxu0
  %493 = vmatprep.mubr.bf16.mxu0 0
  %494 = vmatmul.mubr.bf16.gmra.mrb[0].mxu0 %v299
  %v495 = vpop.f32.mrb[0].mxu0
  %v496 = vadd.f32 %v88, %v495
  %v497 = vpop.f32.mrb[0].mxu0
  %v498 = vpop.f32.mrb[0].mxu0
  %v499 = vadd.f32 %v88, %v498
  %v500 = vpop.f32.mrb[0].mxu0
  %501 = vmatprep.mubr.bf16.mxu0 0
  %502 = vmatmul.mubr.bf16.gmra.mrb[0].mxu0 %v302
  %v503 = vpop.f32.mrb[0].mxu0
  %v504 = vadd.f32 %v88, %v503
  %v505 = vpop.f32.mrb[0].mxu0
  %v506 = vpop.f32.mrb[0].mxu0
  %v507 = vadd.f32 %v88, %v506
  %v508 = vpop.f32.mrb[0].mxu0
  %509 = vmatprep.mubr.bf16.mxu0 0
  %510 = vmatmul.mubr.bf16.gmra.mrb[0].mxu0 %v305
  %v511 = vpop.f32.mrb[0].mxu0
  %v512 = vadd.f32 %v88, %v511
  %v513 = vpop.f32.mrb[0].mxu0
  %v514 = vpop.f32.mrb[0].mxu0
  %v515 = vadd.f32 %v88, %v514
  %v516 = vpop.f32.mrb[0].mxu0
  %517 = vmatprep.mubr.bf16.mxu0 0
  %518 = vmatmul.mubr.bf16.gmra.mrb[0].mxu0 %v308
  %v519 = vpop.f32.mrb[0].mxu0
  %v520 = vadd.f32 %v88, %v519
  %v521 = vpop.f32.mrb[0].mxu0
  %v522 = vpop.f32.mrb[0].mxu0
  %v523 = vadd.f32 %v88, %v522
  %v524 = vpop.f32.mrb[0].mxu0
  %525 = vmatprep.mubr.bf16.mxu0 0
  %526 = vmatmul.mubr.bf16.gmra.mrb[0].mxu0 %v311
  %v527 = vpop.f32.mrb[0].mxu0
  %v528 = vadd.f32 %v88, %v527
  %v529 = vpop.f32.mrb[0].mxu0
  %v530 = vpop.f32.mrb[0].mxu0
  %v531 = vadd.f32 %v88, %v530
  %v532 = vpop.f32.mrb[0].mxu0
  %533 = vmatprep.mubr.bf16.mxu0 0
  %534 = vmatmul.mubr.bf16.gmra.mrb[0].mxu0 %v314
  %v535 = vpop.f32.mrb[0].mxu0
  %v536 = vadd.f32 %v88, %v535
  %v537 = vpop.f32.mrb[0].mxu0
  %v538 = vpop.f32.mrb[0].mxu0
  %v539 = vadd.f32 %v88, %v538
  %v540 = vpop.f32.mrb[0].mxu0
  %541 = vmatprep.mubr.bf16.mxu0 0
  %542 = vmatmul.mubr.bf16.gmra.mrb[0].mxu0 %v317
  %v543 = vpop.f32.mrb[0].mxu0
  %v544 = vadd.f32 %v88, %v543
  %v545 = vpop.f32.mrb[0].mxu0
  %v546 = vpop.f32.mrb[0].mxu0
  %v547 = vadd.f32 %v88, %v546
  %v548 = vpop.f32.mrb[0].mxu0
  %549 = vmatprep.mubr.bf16.mxu0 0
  %550 = vmatmul.mubr.bf16.gmra.mrb[0].mxu0 %v320
  %v551 = vpop.f32.mrb[0].mxu0
  %v552 = vadd.f32 %v88, %v551
  %v553 = vpop.f32.mrb[0].mxu0
  %v554 = vpop.f32.mrb[0].mxu0
  %v555 = vadd.f32 %v88, %v554
  %v556 = vpop.f32.mrb[0].mxu0
  %557 = vmatprep.mubr.bf16.mxu0 0
  %558 = vmatmul.mubr.bf16.gmra.mrb[0].mxu0 %v323
  %v559 = vpop.f32.mrb[0].mxu0
  %v560 = vadd.f32 %v88, %v559
  %v561 = vpop.f32.mrb[0].mxu0
  %v562 = vpop.f32.mrb[0].mxu0
  %v563 = vadd.f32 %v88, %v562
  %v564 = vpop.f32.mrb[0].mxu0
  %565 = vmatprep.mubr.bf16.mxu0 0
  %566 = vmatmul.mubr.bf16.gmra.mrb[0].mxu0 %v326
  %v567 = vpop.f32.mrb[0].mxu0
  %v568 = vadd.f32 %v88, %v567
  %v569 = vpop.f32.mrb[0].mxu0
  %v570 = vpop.f32.mrb[0].mxu0
  %v571 = vadd.f32 %v88, %v570
  %v572 = vpop.f32.mrb[0].mxu0
  %573 = vmatprep.mubr.bf16.mxu0 0
  %574 = vmatmul.mubr.bf16.gmra.mrb[0].mxu0 %v329
  %v575 = vpop.f32.mrb[0].mxu0
  %v576 = vadd.f32 %v88, %v575
  %v577 = vpop.f32.mrb[0].mxu0
  %v578 = vpop.f32.mrb[0].mxu0
  %v579 = vadd.f32 %v88, %v578
  %v580 = vpop.f32.mrb[0].mxu0
  %581 = vmatprep.mubr.bf16.mxu0 0
  %582 = vmatmul.mubr.bf16.gmra.mrb[0].mxu0 %v332
  %v583 = vpop.f32.mrb[0].mxu0
  %v584 = vadd.f32 %v88, %v583
  %v585 = vpop.f32.mrb[0].mxu0
  %v586 = vpop.f32.mrb[0].mxu0
  %v587 = vadd.f32 %v88, %v586
  %v588 = vpop.f32.mrb[0].mxu0
  %589 = vmatprep.mubr.bf16.mxu0 0
  %590 = vmatmul.mubr.bf16.gmra.mrb[0].mxu0 %v335
  %v591 = vpop.f32.mrb[0].mxu0
  %v592 = vadd.f32 %v88, %v591
  %v593 = vpop.f32.mrb[0].mxu0
  %v594 = vpop.f32.mrb[0].mxu0
  %v595 = vadd.f32 %v88, %v594
  %v596 = vpop.f32.mrb[0].mxu0
  %597 = vmatprep.mubr.bf16.mxu0 0
  %598 = vmatmul.mubr.bf16.gmra.mrb[0].mxu0 %v338
  %v599 = vpop.f32.mrb[0].mxu0
  %v600 = vadd.f32 %v88, %v599
  %v601 = vpop.f32.mrb[0].mxu0
  %v602 = vpop.f32.mrb[0].mxu0
  %v603 = vadd.f32 %v88, %v602
  %v604 = vpop.f32.mrb[0].mxu0
  %605 = vmatprep.mubr.bf16.mxu0 0
  %606 = vmatmul.mubr.bf16.gmra.mrb[0].mxu0 %v341
  %v607 = vpop.f32.mrb[0].mxu0
  %v608 = vadd.f32 %v88, %v607
  %v609 = vpop.f32.mrb[0].mxu0
  %v610 = vpop.f32.mrb[0].mxu0
  %v611 = vadd.f32 %v88, %v610
  %v612 = vpop.f32.mrb[0].mxu0
  %613 = vmatprep.mubr.bf16.mxu0 0
  %614 = vmatmul.mubr.bf16.gmra.mrb[0].mxu0 %v344
  %v615 = vpop.f32.mrb[0].mxu0
  %v616 = vadd.f32 %v88, %v615
  %v617 = vpop.f32.mrb[0].mxu0
  %v618 = vpop.f32.mrb[0].mxu0
  %v619 = vadd.f32 %v88, %v618
  %v620 = vpop.f32.mrb[0].mxu0
  %621 = vmatprep.mubr.bf16.mxu0 0
  %622 = vmatmul.mubr.bf16.gmra.mrb[0].mxu0 %v347
  %v623 = vpop.f32.mrb[0].mxu0
  %v624 = vadd.f32 %v88, %v623
  %v625 = vpop.f32.mrb[0].mxu0
  %v626 = vpop.f32.mrb[0].mxu0
  %v627 = vadd.f32 %v88, %v626
  %v628 = vpop.f32.mrb[0].mxu0
  %629 = vmatprep.mubr.bf16.mxu0 0
  %630 = vmatmul.mubr.bf16.gmra.mrb[0].mxu0 %v350
  %v631 = vpop.f32.mrb[0].mxu0
  %v632 = vadd.f32 %v88, %v631
  %v633 = vpop.f32.mrb[0].mxu0
  %v634 = vpop.f32.mrb[0].mxu0
  %v635 = vadd.f32 %v88, %v634
  %v636 = vpop.f32.mrb[0].mxu0
  %637 = vmatprep.mubr.bf16.mxu0 0
  %638 = vmatmul.mubr.bf16.gmra.mrb[0].mxu0 %v353
  %v639 = vpop.f32.mrb[0].mxu0
  %v640 = vadd.f32 %v88, %v639
  %v641 = vpop.f32.mrb[0].mxu0
  %v642 = vpop.f32.mrb[0].mxu0
  %v643 = vadd.f32 %v88, %v642
  %v644 = vpop.f32.mrb[0].mxu0
  %645 = vmatprep.mubr.bf16.mxu0 0
  %646 = vmatmul.mubr.bf16.gmra.mrb[0].mxu0 %v356
  %v647 = vpop.f32.mrb[0].mxu0
  %v648 = vadd.f32 %v88, %v647
  %v649 = vpop.f32.mrb[0].mxu0
  %v650 = vpop.f32.mrb[0].mxu0
  %v651 = vadd.f32 %v88, %v650
  %v652 = vpop.f32.mrb[0].mxu0
  %653 = vdwg.mxu0
  %v654 = vmax.f32 %v400, 0.0
  %v655 = vmax.f32 %v403, 0.0
  %v656 = vmax.f32 %v408, 0.0
  %v657 = vmax.f32 %v411, 0.0
  %v658 = vmax.f32 %v416, 0.0
  %v659 = vmax.f32 %v419, 0.0
  %v660 = vmax.f32 %v424, 0.0
  %v661 = vmax.f32 %v427, 0.0
  %v662 = vmax.f32 %v432, 0.0
  %v663 = vmax.f32 %v435, 0.0
  %v664 = vmax.f32 %v440, 0.0
  %v665 = vmax.f32 %v443, 0.0
  %v666 = vmax.f32 %v448, 0.0
  %v667 = vmax.f32 %v451, 0.0
  %v668 = vmax.f32 %v456, 0.0
  %v669 = vmax.f32 %v459, 0.0
  %v670 = vmax.f32 %v464, 0.0
  %v671 = vmax.f32 %v467, 0.0
  %v672 = vmax.f32 %v472, 0.0
  %v673 = vmax.f32 %v475, 0.0
  %v674 = vmax.f32 %v480, 0.0
  %v675 = vmax.f32 %v483, 0.0
  %v676 = vmax.f32 %v488, 0.0
  %v677 = vmax.f32 %v491, 0.0
  %v678 = vmax.f32 %v496, 0.0
  %v679 = vmax.f32 %v499, 0.0
  %v680 = vmax.f32 %v504, 0.0
  %v681 = vmax.f32 %v507, 0.0
  %v682 = vmax.f32 %v512, 0.0
  %v683 = vmax.f32 %v515, 0.0
  %v684 = vmax.f32 %v520, 0.0
  %v685 = vmax.f32 %v523, 0.0
  %v686 = vmax.f32 %v528, 0.0
  %v687 = vmax.f32 %v531, 0.0
  %v688 = vmax.f32 %v536, 0.0
  %v689 = vmax.f32 %v539, 0.0
  %v690 = vmax.f32 %v544, 0.0
  %v691 = vmax.f32 %v547, 0.0
  %v692 = vmax.f32 %v552, 0.0
  %v693 = vmax.f32 %v555, 0.0
  %v694 = vmax.f32 %v560, 0.0
  %v695 = vmax.f32 %v563, 0.0
  %v696 = vmax.f32 %v568, 0.0
  %v697 = vmax.f32 %v571, 0.0
  %v698 = vmax.f32 %v576, 0.0
  %v699 = vmax.f32 %v579, 0.0
  %v700 = vmax.f32 %v584, 0.0
  %v701 = vmax.f32 %v587, 0.0
  %v702 = vmax.f32 %v592, 0.0
  %v703 = vmax.f32 %v595, 0.0
  %v704 = vmax.f32 %v600, 0.0
  %v705 = vmax.f32 %v603, 0.0
  %v706 = vmax.f32 %v608, 0.0
  %v707 = vmax.f32 %v611, 0.0
  %v708 = vmax.f32 %v616, 0.0
  %v709 = vmax.f32 %v619, 0.0
  %v710 = vmax.f32 %v624, 0.0
  %v711 = vmax.f32 %v627, 0.0
  %v712 = vmax.f32 %v632, 0.0
  %v713 = vmax.f32 %v635, 0.0
  %v714 = vmax.f32 %v640, 0.0
  %v715 = vmax.f32 %v643, 0.0
  %v716 = vmax.f32 %v648, 0.0
  %v717 = vmax.f32 %v651, 0.0
  %v718 = vpack.c.bf16 %v655, %v654
  %v719 = vpack.c.bf16 %v657, %v656
  %v720 = vpack.c.bf16 %v659, %v658
  %v721 = vpack.c.bf16 %v661, %v660
  %v722 = vpack.c.bf16 %v663, %v662
  %v723 = vpack.c.bf16 %v665, %v664
  %v724 = vpack.c.bf16 %v667, %v666
  %v725 = vpack.c.bf16 %v669, %v668
  %v726 = vpack.c.bf16 %v671, %v670
  %v727 = vpack.c.bf16 %v673, %v672
  %v728 = vpack.c.bf16 %v675, %v674
  %v729 = vpack.c.bf16 %v677, %v676
  %v730 = vpack.c.bf16 %v679, %v678
  %v731 = vpack.c.bf16 %v681, %v680
  %v732 = vpack.c.bf16 %v683, %v682
  %v733 = vpack.c.bf16 %v685, %v684
  %v734 = vpack.c.bf16 %v687, %v686
  %v735 = vpack.c.bf16 %v689, %v688
  %v736 = vpack.c.bf16 %v691, %v690
  %v737 = vpack.c.bf16 %v693, %v692
  %v738 = vpack.c.bf16 %v695, %v694
  %v739 = vpack.c.bf16 %v697, %v696
  %v740 = vpack.c.bf16 %v699, %v698
  %v741 = vpack.c.bf16 %v701, %v700
  %v742 = vpack.c.bf16 %v703, %v702
  %v743 = vpack.c.bf16 %v705, %v704
  %v744 = vpack.c.bf16 %v707, %v706
  %v745 = vpack.c.bf16 %v709, %v708
  %v746 = vpack.c.bf16 %v711, %v710
  %v747 = vpack.c.bf16 %v713, %v712
  %v748 = vpack.c.bf16 %v715, %v714
  %v749 = vpack.c.bf16 %v717, %v716
  %v782 = vunpack.c.l.b16 %v718
  %v783 = vunpack.c.h.b16 %v718
  %v784 = vunpack.c.l.b16 %v719
  %v785 = vunpack.c.h.b16 %v719
  %v786 = vunpack.c.l.b16 %v720
  %v787 = vunpack.c.h.b16 %v720
  %v788 = vunpack.c.l.b16 %v721
  %v789 = vunpack.c.h.b16 %v721
  %v790 = vunpack.c.l.b16 %v722
  %v791 = vunpack.c.h.b16 %v722
  %v792 = vunpack.c.l.b16 %v723
  %v793 = vunpack.c.h.b16 %v723
  %v794 = vunpack.c.l.b16 %v724
  %v795 = vunpack.c.h.b16 %v724
  %v796 = vunpack.c.l.b16 %v725
  %v797 = vunpack.c.h.b16 %v725
  %v798 = vunpack.c.l.b16 %v726
  %v799 = vunpack.c.h.b16 %v726
  %v800 = vunpack.c.l.b16 %v727
  %v801 = vunpack.c.h.b16 %v727
  %v802 = vunpack.c.l.b16 %v728
  %v803 = vunpack.c.h.b16 %v728
  %v804 = vunpack.c.l.b16 %v729
  %v805 = vunpack.c.h.b16 %v729
  %v806 = vunpack.c.l.b16 %v730
  %v807 = vunpack.c.h.b16 %v730
  %v808 = vunpack.c.l.b16 %v731
  %v809 = vunpack.c.h.b16 %v731
  %v810 = vunpack.c.l.b16 %v732
  %v811 = vunpack.c.h.b16 %v732
  %v812 = vunpack.c.l.b16 %v733
  %v813 = vunpack.c.h.b16 %v733
  %v814 = vunpack.c.l.b16 %v734
  %v815 = vunpack.c.h.b16 %v734
  %v816 = vunpack.c.l.b16 %v735
  %v817 = vunpack.c.h.b16 %v735
  %v818 = vunpack.c.l.b16 %v736
  %v819 = vunpack.c.h.b16 %v736
  %v820 = vunpack.c.l.b16 %v737
  %v821 = vunpack.c.h.b16 %v737
  %v822 = vunpack.c.l.b16 %v738
  %v823 = vunpack.c.h.b16 %v738
  %v824 = vunpack.c.l.b16 %v739
  %v825 = vunpack.c.h.b16 %v739
  %v826 = vunpack.c.l.b16 %v740
  %v827 = vunpack.c.h.b16 %v740
  %v828 = vunpack.c.l.b16 %v741
  %v829 = vunpack.c.h.b16 %v741
  %v830 = vunpack.c.l.b16 %v742
  %v831 = vunpack.c.h.b16 %v742
  %v832 = vunpack.c.l.b16 %v743
  %v833 = vunpack.c.h.b16 %v743
  %v834 = vunpack.c.l.b16 %v744
  %v835 = vunpack.c.h.b16 %v744
  %v836 = vunpack.c.l.b16 %v745
  %v837 = vunpack.c.h.b16 %v745
  %v838 = vunpack.c.l.b16 %v746
  %v839 = vunpack.c.h.b16 %v746
  %v840 = vunpack.c.l.b16 %v747
  %v841 = vunpack.c.h.b16 %v747
  %v842 = vunpack.c.l.b16 %v748
  %v843 = vunpack.c.h.b16 %v748
  %v844 = vunpack.c.l.b16 %v749
  %v845 = vunpack.c.h.b16 %v749
  %v846 = vpack.c.b16 %v782, %v782
  %v847 = vpack.c.b16 %v783, %v783
  %v848 = vpack.c.b16 %v784, %v784
  %v849 = vpack.c.b16 %v785, %v785
  %v850 = vpack.c.b16 %v786, %v786
  %v851 = vpack.c.b16 %v787, %v787
  %v852 = vpack.c.b16 %v788, %v788
  %v853 = vpack.c.b16 %v789, %v789
  %v854 = vpack.c.b16 %v790, %v790
  %v855 = vpack.c.b16 %v791, %v791
  %v856 = vpack.c.b16 %v792, %v792
  %v857 = vpack.c.b16 %v793, %v793
  %v858 = vpack.c.b16 %v794, %v794
  %v859 = vpack.c.b16 %v795, %v795
  %v860 = vpack.c.b16 %v796, %v796
  %v861 = vpack.c.b16 %v797, %v797
  %v862 = vpack.c.b16 %v798, %v798
  %v863 = vpack.c.b16 %v799, %v799
  %v864 = vpack.c.b16 %v800, %v800
  %v865 = vpack.c.b16 %v801, %v801
  %v866 = vpack.c.b16 %v802, %v802
  %v867 = vpack.c.b16 %v803, %v803
  %v868 = vpack.c.b16 %v804, %v804
  %v869 = vpack.c.b16 %v805, %v805
  %v870 = vpack.c.b16 %v806, %v806
  %v871 = vpack.c.b16 %v807, %v807
  %v872 = vpack.c.b16 %v808, %v808
  %v873 = vpack.c.b16 %v809, %v809
  %v874 = vpack.c.b16 %v810, %v810
  %v875 = vpack.c.b16 %v811, %v811
  %v876 = vpack.c.b16 %v812, %v812
  %v877 = vpack.c.b16 %v813, %v813
  %v878 = vpack.c.b16 %v814, %v814
  %v879 = vpack.c.b16 %v815, %v815
  %v880 = vpack.c.b16 %v816, %v816
  %v881 = vpack.c.b16 %v817, %v817
  %v882 = vpack.c.b16 %v818, %v818
  %v883 = vpack.c.b16 %v819, %v819
  %v884 = vpack.c.b16 %v820, %v820
  %v885 = vpack.c.b16 %v821, %v821
  %v886 = vpack.c.b16 %v822, %v822
  %v887 = vpack.c.b16 %v823, %v823
  %v888 = vpack.c.b16 %v824, %v824
  %v889 = vpack.c.b16 %v825, %v825
  %v890 = vpack.c.b16 %v826, %v826
  %v891 = vpack.c.b16 %v827, %v827
  %v892 = vpack.c.b16 %v828, %v828
  %v893 = vpack.c.b16 %v829, %v829
  %v894 = vpack.c.b16 %v830, %v830
  %v895 = vpack.c.b16 %v831, %v831
  %v896 = vpack.c.b16 %v832, %v832
  %v897 = vpack.c.b16 %v833, %v833
  %v898 = vpack.c.b16 %v834, %v834
  %v899 = vpack.c.b16 %v835, %v835
  %v900 = vpack.c.b16 %v836, %v836
  %v901 = vpack.c.b16 %v837, %v837
  %v902 = vpack.c.b16 %v838, %v838
  %v903 = vpack.c.b16 %v839, %v839
  %v904 = vpack.c.b16 %v840, %v840
  %v905 = vpack.c.b16 %v841, %v841
  %v906 = vpack.c.b16 %v842, %v842
  %v907 = vpack.c.b16 %v843, %v843
  %v908 = vpack.c.b16 %v844, %v844
  %v909 = vpack.c.b16 %v845, %v845
  %vm974 = vcmask 60416
  %975 = vst.msk [vmem:[%s3] sm:$0xf] %vm974, %v846
  %976 = vst.msk [vmem:[%s3 + $0x4] sm:$0xf] %vm974, %v847
  %977 = vst.msk [vmem:[%s3 + $0x8] sm:$0xf] %vm974, %v848
  %978 = vst.msk [vmem:[%s3 + $0xc] sm:$0xf] %vm974, %v849
  %979 = vst.msk [vmem:[%s3 + $0x10] sm:$0xf] %vm974, %v850
  %980 = vst.msk [vmem:[%s3 + $0x14] sm:$0xf] %vm974, %v851
  %981 = vst.msk [vmem:[%s3 + $0x18] sm:$0xf] %vm974, %v852
  %982 = vst.msk [vmem:[%s3 + $0x1c] sm:$0xf] %vm974, %v853
  %983 = vst.msk [vmem:[%s3 + $0x20] sm:$0xf] %vm974, %v854
  %984 = vst.msk [vmem:[%s3 + $0x24] sm:$0xf] %vm974, %v855
  %985 = vst.msk [vmem:[%s3 + $0x28] sm:$0xf] %vm974, %v856
  %986 = vst.msk [vmem:[%s3 + $0x2c] sm:$0xf] %vm974, %v857
  %987 = vst.msk [vmem:[%s3 + $0x30] sm:$0xf] %vm974, %v858
  %988 = vst.msk [vmem:[%s3 + $0x34] sm:$0xf] %vm974, %v859
  %989 = vst.msk [vmem:[%s3 + $0x38] sm:$0xf] %vm974, %v860
  %990 = vst.msk [vmem:[%s3 + $0x3c] sm:$0xf] %vm974, %v861
  %991 = vst.msk [vmem:[%s3 + $0x40] sm:$0xf] %vm974, %v862
  %992 = vst.msk [vmem:[%s3 + $0x44] sm:$0xf] %vm974, %v863
  %993 = vst.msk [vmem:[%s3 + $0x48] sm:$0xf] %vm974, %v864
  %994 = vst.msk [vmem:[%s3 + $0x4c] sm:$0xf] %vm974, %v865
  %995 = vst.msk [vmem:[%s3 + $0x50] sm:$0xf] %vm974, %v866
  %996 = vst.msk [vmem:[%s3 + $0x54] sm:$0xf] %vm974, %v867
  %997 = vst.msk [vmem:[%s3 + $0x58] sm:$0xf] %vm974, %v868
  %998 = vst.msk [vmem:[%s3 + $0x5c] sm:$0xf] %vm974, %v869
  %999 = vst.msk [vmem:[%s3 + $0x60] sm:$0xf] %vm974, %v870
  %1000 = vst.msk [vmem:[%s3 + $0x64] sm:$0xf] %vm974, %v871
  %1001 = vst.msk [vmem:[%s3 + $0x68] sm:$0xf] %vm974, %v872
  %1002 = vst.msk [vmem:[%s3 + $0x6c] sm:$0xf] %vm974, %v873
  %1003 = vst.msk [vmem:[%s3 + $0x70] sm:$0xf] %vm974, %v874
  %1004 = vst.msk [vmem:[%s3 + $0x74] sm:$0xf] %vm974, %v875
  %1005 = vst.msk [vmem:[%s3 + $0x78] sm:$0xf] %vm974, %v876
  %1006 = vst.msk [vmem:[%s3 + $0x7c] sm:$0xf] %vm974, %v877
  %1007 = vst.msk [vmem:[%s3 + $0x80] sm:$0xf] %vm974, %v878
  %1008 = vst.msk [vmem:[%s3 + $0x84] sm:$0xf] %vm974, %v879
  %1009 = vst.msk [vmem:[%s3 + $0x88] sm:$0xf] %vm974, %v880
  %1010 = vst.msk [vmem:[%s3 + $0x8c] sm:$0xf] %vm974, %v881
  %1011 = vst.msk [vmem:[%s3 + $0x90] sm:$0xf] %vm974, %v882
  %1012 = vst.msk [vmem:[%s3 + $0x94] sm:$0xf] %vm974, %v883
  %1013 = vst.msk [vmem:[%s3 + $0x98] sm:$0xf] %vm974, %v884
  %1014 = vst.msk [vmem:[%s3 + $0x9c] sm:$0xf] %vm974, %v885
  %1015 = vst.msk [vmem:[%s3 + $0xa0] sm:$0xf] %vm974, %v886
  %1016 = vst.msk [vmem:[%s3 + $0xa4] sm:$0xf] %vm974, %v887
  %1017 = vst.msk [vmem:[%s3 + $0xa8] sm:$0xf] %vm974, %v888
  %1018 = vst.msk [vmem:[%s3 + $0xac] sm:$0xf] %vm974, %v889
  %1019 = vst.msk [vmem:[%s3 + $0xb0] sm:$0xf] %vm974, %v890
  %1020 = vst.msk [vmem:[%s3 + $0xb4] sm:$0xf] %vm974, %v891
  %1021 = vst.msk [vmem:[%s3 + $0xb8] sm:$0xf] %vm974, %v892
  %1022 = vst.msk [vmem:[%s3 + $0xbc] sm:$0xf] %vm974, %v893
  %1023 = vst.msk [vmem:[%s3 + $0xc0] sm:$0xf] %vm974, %v894
  %1024 = vst.msk [vmem:[%s3 + $0xc4] sm:$0xf] %vm974, %v895
  %1025 = vst.msk [vmem:[%s3 + $0xc8] sm:$0xf] %vm974, %v896
  %1026 = vst.msk [vmem:[%s3 + $0xcc] sm:$0xf] %vm974, %v897
  %1027 = vst.msk [vmem:[%s3 + $0xd0] sm:$0xf] %vm974, %v898
  %1028 = vst.msk [vmem:[%s3 + $0xd4] sm:$0xf] %vm974, %v899
  %1029 = vst.msk [vmem:[%s3 + $0xd8] sm:$0xf] %vm974, %v900
  %1030 = vst.msk [vmem:[%s3 + $0xdc] sm:$0xf] %vm974, %v901
  %1031 = vst.msk [vmem:[%s3 + $0xe0] sm:$0xf] %vm974, %v902
  %1032 = vst.msk [vmem:[%s3 + $0xe4] sm:$0xf] %vm974, %v903
  %1033 = vst.msk [vmem:[%s3 + $0xe8] sm:$0xf] %vm974, %v904
  %1034 = vst.msk [vmem:[%s3 + $0xec] sm:$0xf] %vm974, %v905
  %1035 = vst.msk [vmem:[%s3 + $0xf0] sm:$0xf] %vm974, %v906
  %1036 = vst.msk [vmem:[%s3 + $0xf4] sm:$0xf] %vm974, %v907
  %1037 = vst.msk [vmem:[%s3 + $0xf8] sm:$0xf] %vm974, %v908
  %1038 = vst.msk [vmem:[%s3 + $0xfc] sm:$0xf] %vm974, %v909
  // Predicated region
  $region14: #{_lambda_.15} parent=0 // pred_check
    _
  $region15: #{_lambda_.15} parent=0 // pred_check_branch
    %1040 = sbr.rel (0) target = $region17
  $region16: #{_lambda_.15} parent=0 // pred_region
    _
  $region17: #{_lambda_.15} parent=0 // pred_fallthru
    _
  // Predicated region
  $region18: #{_lambda_.15} parent=0 // pred_check
    _
  $region19: #{_lambda_.15} parent=0 // pred_check_branch
    %1042 = sbr.rel (0) target = $region21
  $region20: #{_lambda_.15} parent=0 // pred_region
    _
  $region21: #{_lambda_.15} parent=0 // pred_fallthru
    _

// kernel: _lambda_.17
$region0: #{_lambda_.17}
  #allocation0 [shape = 'u32[]', space=smem, size = 0x4, offset = 0x4, fixed_abs, tag = 'smem constant byte address 0x4 - core index']
  #allocation1 [shape = 'u32[144,128]{1,0:T(1,128)}', space=vmem, size = 0x12000, scoped, tag = 'internal scratch']
  %s0 = inlined_call_operand.vmem [shape: bf16[128,8], index: 0, kind: input, shape index: {}]
  %s1 = inlined_call_operand.vmem [shape: bf16[8,8], index: 1, kind: input, shape index: {}]
  %s2 = inlined_call_operand.vmem [shape: f32[1,8], index: 2, kind: input, shape index: {}]
  %s3 = inlined_call_operand.vmem [shape: bf16[128,8], index: 3, kind: output, shape index: {}]
  %s4 = sld [smem:[#allocation0]]
  $region22: #{_lambda_.17} parent=0
    _
  %s6 = ssub.s32 1, %s4
  %s7 = scalar_select 0, %s6, %s4
  // Predicated region
  $region2: #{_lambda_.17} parent=0 // pred_check
    _
  $region3: #{_lambda_.17} parent=0 // pred_check_branch
    %9 = sbr.rel (0) target = $region5
  $region4: #{_lambda_.17} parent=0 // pred_region
    _
  $region5: #{_lambda_.17} parent=0 // pred_fallthru
    _
  // Predicated region
  $region6: #{_lambda_.17} parent=0 // pred_check
    _
  $region7: #{_lambda_.17} parent=0 // pred_check_branch
    %11 = sbr.rel (0) target = $region9
  $region8: #{_lambda_.17} parent=0 // pred_region
    _
  $region9: #{_lambda_.17} parent=0 // pred_fallthru
    _
  // Predicated region
  $region10: #{_lambda_.17} parent=0 // pred_check
    _
  $region11: #{_lambda_.17} parent=0 // pred_check_branch
    %13 = sbr.rel (0) target = $region13
  $region12: #{_lambda_.17} parent=0 // pred_region
    _
  $region13: #{_lambda_.17} parent=0 // pred_fallthru
    _
  %v15 = vld [vmem:[%s0] sm:$0xf]
  %v16 = vld [vmem:[%s0 + $0x4] sm:$0xf]
  %v17 = vld [vmem:[%s0 + $0x8] sm:$0xf]
  %v18 = vld [vmem:[%s0 + $0xc] sm:$0xf]
  %v19 = vld [vmem:[%s0 + $0x10] sm:$0xf]
  %v20 = vld [vmem:[%s0 + $0x14] sm:$0xf]
  %v21 = vld [vmem:[%s0 + $0x18] sm:$0xf]
  %v22 = vld [vmem:[%s0 + $0x1c] sm:$0xf]
  %v23 = vld [vmem:[%s0 + $0x20] sm:$0xf]
  %v24 = vld [vmem:[%s0 + $0x24] sm:$0xf]
  %v25 = vld [vmem:[%s0 + $0x28] sm:$0xf]
  %v26 = vld [vmem:[%s0 + $0x2c] sm:$0xf]
  %v27 = vld [vmem:[%s0 + $0x30] sm:$0xf]
  %v28 = vld [vmem:[%s0 + $0x34] sm:$0xf]
  %v29 = vld [vmem:[%s0 + $0x38] sm:$0xf]
  %v30 = vld [vmem:[%s0 + $0x3c] sm:$0xf]
  %v31 = vld [vmem:[%s1] sm:$0xf]
  %v32 = vld [vmem:[%s2] sm:$0x1]
  %v34 = vlaneseq
  %v35 = vshrl.u32 %v34, 7
  %v36 = vsub.s32 0, %v35
  %v37 = vrot.slane %v32, %v36
  %v55 = vunpack.c.l.b16 %v15
  %v56 = vunpack.c.l.b16 %v16
  %v57 = vunpack.c.l.b16 %v17
  %v58 = vunpack.c.l.b16 %v18
  %v59 = vunpack.c.l.b16 %v19
  %v60 = vunpack.c.l.b16 %v20
  %v61 = vunpack.c.l.b16 %v21
  %v62 = vunpack.c.l.b16 %v22
  %v63 = vunpack.c.l.b16 %v23
  %v64 = vunpack.c.l.b16 %v24
  %v65 = vunpack.c.l.b16 %v25
  %v66 = vunpack.c.l.b16 %v26
  %v67 = vunpack.c.l.b16 %v27
  %v68 = vunpack.c.l.b16 %v28
  %v69 = vunpack.c.l.b16 %v29
  %v70 = vunpack.c.l.b16 %v30
  %v71 = vpack.c.b16 %v56, %v55
  %v72 = vpack.c.b16 %v58, %v57
  %v73 = vpack.c.b16 %v60, %v59
  %v74 = vpack.c.b16 %v62, %v61
  %v75 = vpack.c.b16 %v64, %v63
  %v76 = vpack.c.b16 %v66, %v65
  %v77 = vpack.c.b16 %v68, %v67
  %v78 = vpack.c.b16 %v70, %v69
  %vm79 = vcmask 64512
  %v81 = vsel %vm79, %v71, 0
  %v84 = vsel %vm79, %v72, 0
  %v87 = vsel %vm79, %v73, 0
  %v90 = vsel %vm79, %v74, 0
  %v93 = vsel %vm79, %v75, 0
  %v96 = vsel %vm79, %v76, 0
  %v99 = vsel %vm79, %v77, 0
  %v102 = vsel %vm79, %v78, 0
  %vm104 = vcmask 1043456
  %v106 = vsel %vm104, %v31, 0
  %108 = vmatprep.subr.bf16.mxu0 0
  %109 = vmatpush1.bf16.msra.mxu0 %v106
  %110 = vmatprep.subr.bf16.mxu0 0
  %111 = vmatpush1.bf16.msra.mxu0 0
  %112 = vmatprep.subr.bf16.mxu0 0
  %113 = vmatpush1.bf16.msra.mxu0 0
  %114 = vmatprep.subr.bf16.mxu0 0
  %115 = vmatpush1.bf16.msra.mxu0 0
  %116 = vmatprep.subr.bf16.mxu0 0
  %117 = vmatpush1.bf16.msra.mxu0 0
  %118 = vmatprep.subr.bf16.mxu0 0
  %119 = vmatpush1.bf16.msra.mxu0 0
  %120 = vmatprep.subr.bf16.mxu0 0
  %121 = vmatpush1.bf16.msra.mxu0 0
  %122 = vmatprep.subr.bf16.mxu0 0
  %123 = vmatpush1.bf16.msra.mxu0 0
  %124 = vmatprep.subr.bf16.mxu0 0
  %125 = vmatpush1.bf16.msra.mxu0 0
  %126 = vmatprep.subr.bf16.mxu0 0
  %127 = vmatpush1.bf16.msra.mxu0 0
  %128 = vmatprep.subr.bf16.mxu0 0
  %129 = vmatpush1.bf16.msra.mxu0 0
  %130 = vmatprep.subr.bf16.mxu0 0
  %131 = vmatpush1.bf16.msra.mxu0 0
  %132 = vmatprep.subr.bf16.mxu0 0
  %133 = vmatpush1.bf16.msra.mxu0 0
  %134 = vmatprep.subr.bf16.mxu0 0
  %135 = vmatpush1.bf16.msra.mxu0 0
  %136 = vmatprep.subr.bf16.mxu0 0
  %137 = vmatpush1.bf16.msra.mxu0 0
  %138 = vmatprep.subr.bf16.mxu0 0
  %139 = vmatpush1.bf16.msra.mxu0 0
  %140 = vmatprep.mubr.bf16.mxu0 0
  %141 = vmatmul.mubr.bf16.gmra.mrb[0].mxu0 %v81
  %v142 = vpop.f32.mrb[0].mxu0
  %v143 = vadd.f32 %v37, %v142
  %v144 = vpop.f32.mrb[0].mxu0
  %v145 = vpop.f32.mrb[0].mxu0
  %v146 = vadd.f32 %v37, %v145
  %v147 = vpop.f32.mrb[0].mxu0
  %148 = vmatprep.mubr.bf16.mxu0 0
  %149 = vmatmul.mubr.bf16.gmra.mrb[0].mxu0 %v84
  %v150 = vpop.f32.mrb[0].mxu0
  %v151 = vadd.f32 %v37, %v150
  %v152 = vpop.f32.mrb[0].mxu0
  %v153 = vpop.f32.mrb[0].mxu0
  %v154 = vadd.f32 %v37, %v153
  %v155 = vpop.f32.mrb[0].mxu0
  %156 = vmatprep.mubr.bf16.mxu0 0
  %157 = vmatmul.mubr.bf16.gmra.mrb[0].mxu0 %v87
  %v158 = vpop.f32.mrb[0].mxu0
  %v159 = vadd.f32 %v37, %v158
  %v160 = vpop.f32.mrb[0].mxu0
  %v161 = vpop.f32.mrb[0].mxu0
  %v162 = vadd.f32 %v37, %v161
  %v163 = vpop.f32.mrb[0].mxu0
  %164 = vmatprep.mubr.bf16.mxu0 0
  %165 = vmatmul.mubr.bf16.gmra.mrb[0].mxu0 %v90
  %v166 = vpop.f32.mrb[0].mxu0
  %v167 = vadd.f32 %v37, %v166
  %v168 = vpop.f32.mrb[0].mxu0
  %v169 = vpop.f32.mrb[0].mxu0
  %v170 = vadd.f32 %v37, %v169
  %v171 = vpop.f32.mrb[0].mxu0
  %172 = vmatprep.mubr.bf16.mxu0 0
  %173 = vmatmul.mubr.bf16.gmra.mrb[0].mxu0 %v93
  %v174 = vpop.f32.mrb[0].mxu0
  %v175 = vadd.f32 %v37, %v174
  %v176 = vpop.f32.mrb[0].mxu0
  %v177 = vpop.f32.mrb[0].mxu0
  %v178 = vadd.f32 %v37, %v177
  %v179 = vpop.f32.mrb[0].mxu0
  %180 = vmatprep.mubr.bf16.mxu0 0
  %181 = vmatmul.mubr.bf16.gmra.mrb[0].mxu0 %v96
  %v182 = vpop.f32.mrb[0].mxu0
  %v183 = vadd.f32 %v37, %v182
  %v184 = vpop.f32.mrb[0].mxu0
  %v185 = vpop.f32.mrb[0].mxu0
  %v186 = vadd.f32 %v37, %v185
  %v187 = vpop.f32.mrb[0].mxu0
  %188 = vmatprep.mubr.bf16.mxu0 0
  %189 = vmatmul.mubr.bf16.gmra.mrb[0].mxu0 %v99
  %v190 = vpop.f32.mrb[0].mxu0
  %v191 = vadd.f32 %v37, %v190
  %v192 = vpop.f32.mrb[0].mxu0
  %v193 = vpop.f32.mrb[0].mxu0
  %v194 = vadd.f32 %v37, %v193
  %v195 = vpop.f32.mrb[0].mxu0
  %196 = vmatprep.mubr.bf16.mxu0 0
  %197 = vmatmul.mubr.bf16.gmra.mrb[0].mxu0 %v102
  %v198 = vpop.f32.mrb[0].mxu0
  %v199 = vadd.f32 %v37, %v198
  %v200 = vpop.f32.mrb[0].mxu0
  %v201 = vpop.f32.mrb[0].mxu0
  %v202 = vadd.f32 %v37, %v201
  %v203 = vpop.f32.mrb[0].mxu0
  %204 = vdwg.mxu0
  %v205 = vmax.f32 %v143, 0.0
  %v206 = vmax.f32 %v146, 0.0
  %v207 = vmax.f32 %v151, 0.0
  %v208 = vmax.f32 %v154, 0.0
  %v209 = vmax.f32 %v159, 0.0
  %v210 = vmax.f32 %v162, 0.0
  %v211 = vmax.f32 %v167, 0.0
  %v212 = vmax.f32 %v170, 0.0
  %v213 = vmax.f32 %v175, 0.0
  %v214 = vmax.f32 %v178, 0.0
  %v215 = vmax.f32 %v183, 0.0
  %v216 = vmax.f32 %v186, 0.0
  %v217 = vmax.f32 %v191, 0.0
  %v218 = vmax.f32 %v194, 0.0
  %v219 = vmax.f32 %v199, 0.0
  %v220 = vmax.f32 %v202, 0.0
  %v221 = vpack.c.bf16 %v206, %v205
  %v222 = vpack.c.bf16 %v208, %v207
  %v223 = vpack.c.bf16 %v210, %v209
  %v224 = vpack.c.bf16 %v212, %v211
  %v225 = vpack.c.bf16 %v214, %v213
  %v226 = vpack.c.bf16 %v216, %v215
  %v227 = vpack.c.bf16 %v218, %v217
  %v228 = vpack.c.bf16 %v220, %v219
  %v237 = vunpack.c.l.b16 %v221
  %v238 = vunpack.c.h.b16 %v221
  %v239 = vunpack.c.l.b16 %v222
  %v240 = vunpack.c.h.b16 %v222
  %v241 = vunpack.c.l.b16 %v223
  %v242 = vunpack.c.h.b16 %v223
  %v243 = vunpack.c.l.b16 %v224
  %v244 = vunpack.c.h.b16 %v224
  %v245 = vunpack.c.l.b16 %v225
  %v246 = vunpack.c.h.b16 %v225
  %v247 = vunpack.c.l.b16 %v226
  %v248 = vunpack.c.h.b16 %v226
  %v249 = vunpack.c.l.b16 %v227
  %v250 = vunpack.c.h.b16 %v227
  %v251 = vunpack.c.l.b16 %v228
  %v252 = vunpack.c.h.b16 %v228
  %v253 = vpack.c.b16 %v237, %v237
  %v254 = vpack.c.b16 %v238, %v238
  %v255 = vpack.c.b16 %v239, %v239
  %v256 = vpack.c.b16 %v240, %v240
  %v257 = vpack.c.b16 %v241, %v241
  %v258 = vpack.c.b16 %v242, %v242
  %v259 = vpack.c.b16 %v243, %v243
  %v260 = vpack.c.b16 %v244, %v244
  %v261 = vpack.c.b16 %v245, %v245
  %v262 = vpack.c.b16 %v246, %v246
  %v263 = vpack.c.b16 %v247, %v247
  %v264 = vpack.c.b16 %v248, %v248
  %v265 = vpack.c.b16 %v249, %v249
  %v266 = vpack.c.b16 %v250, %v250
  %v267 = vpack.c.b16 %v251, %v251
  %v268 = vpack.c.b16 %v252, %v252
  %vm285 = vcmask 60416
  %286 = vst.msk [vmem:[%s3] sm:$0xf] %vm285, %v253
  %287 = vst.msk [vmem:[%s3 + $0x4] sm:$0xf] %vm285, %v254
  %288 = vst.msk [vmem:[%s3 + $0x8] sm:$0xf] %vm285, %v255
  %289 = vst.msk [vmem:[%s3 + $0xc] sm:$0xf] %vm285, %v256
  %290 = vst.msk [vmem:[%s3 + $0x10] sm:$0xf] %vm285, %v257
  %291 = vst.msk [vmem:[%s3 + $0x14] sm:$0xf] %vm285, %v258
  %292 = vst.msk [vmem:[%s3 + $0x18] sm:$0xf] %vm285, %v259
  %293 = vst.msk [vmem:[%s3 + $0x1c] sm:$0xf] %vm285, %v260
  %294 = vst.msk [vmem:[%s3 + $0x20] sm:$0xf] %vm285, %v261
  %295 = vst.msk [vmem:[%s3 + $0x24] sm:$0xf] %vm285, %v262
  %296 = vst.msk [vmem:[%s3 + $0x28] sm:$0xf] %vm285, %v263
  %297 = vst.msk [vmem:[%s3 + $0x2c] sm:$0xf] %vm285, %v264
  %298 = vst.msk [vmem:[%s3 + $0x30] sm:$0xf] %vm285, %v265
  %299 = vst.msk [vmem:[%s3 + $0x34] sm:$0xf] %vm285, %v266
  %300 = vst.msk [vmem:[%s3 + $0x38] sm:$0xf] %vm285, %v267
  %301 = vst.msk [vmem:[%s3 + $0x3c] sm:$0xf] %vm285, %v268
  // Predicated region
  $region14: #{_lambda_.17} parent=0 // pred_check
    _
  $region15: #{_lambda_.17} parent=0 // pred_check_branch
    %303 = sbr.rel (0) target = $region17
  $region16: #{_lambda_.17} parent=0 // pred_region
    _
  $region17: #{_lambda_.17} parent=0 // pred_fallthru
    _
  // Predicated region
  $region18: #{_lambda_.17} parent=0 // pred_check
    _
  $region19: #{_lambda_.17} parent=0 // pred_check_branch
    %305 = sbr.rel (0) target = $region21
  $region20: #{_lambda_.17} parent=0 // pred_region
    _
  $region21: #{_lambda_.17} parent=0 // pred_fallthru
    _

// kernel: _lambda_.16
$region0: #{_lambda_.16}
  #allocation0 [shape = 'u32[]', space=smem, size = 0x4, offset = 0x4, fixed_abs, tag = 'smem constant byte address 0x4 - core index']
  #allocation1 [shape = 'u32[144,128]{1,0:T(1,128)}', space=vmem, size = 0x12000, scoped, tag = 'internal scratch']
  %s0 = inlined_call_operand.vmem [shape: bf16[2,4,9,9,8], index: 0, kind: input, shape index: {}]
  %s1 = inlined_call_operand.vmem [shape: bf16[2,8,8,8], index: 1, kind: output, shape index: {}]
  %s2 = sld [smem:[#allocation0]]
  $region37: #{_lambda_.16} parent=0
    _
  %s4 = ssub.s32 1, %s2
  %s5 = scalar_select 0, %s4, %s2
  loop: start=0, step=1, limit=4
  $region2: #{_lambda_.16} parent=0 // loop_pre_header
    _
  $region3: #{_lambda_.16} parent=0 // loop_header
    %s7 = sphi 0, %s11
    %p8 = scmp.ge.s32.totalorder %s7, 4
    %s17 = sphi 0, %s19
    %s20 = sphi 0, %s17
    %s21 = sphi 0, %s20
    %s37 = sphi 0, %s21
    %s43 = sphi 0, %s45
    %s46 = sphi 0, %s43
    %s47 = sphi 0, %s46
    %s63 = sphi 0, %s47
  $region4: #{_lambda_.16} parent=0 // loop_header_branch
    %10 = sbr.rel (%p8) target = $region8
  $region5: #{_lambda_.16} parent=0 // loop_body
    %s12 = ssub.s32 %s7, 1
    %s13 = ssub.s32 %s7, 2
    %s14 = sadd.s32 %s7, 1
    %s15 = ssub.s32 %s7, %s14
    %p16 = scmp.eq.s32.totalorder %s15, 0
    %s18 = sadd.s32 %s17, 1
    %s19 = scalar_select %p16, %s17, %s18
    %p22 = pneg %p16
    %p23 = scmp.eq.s32.totalorder %s7, 1
    %p24 = por %p22, %p23
    %p25 = scmp.ne.s32.totalorder %s17, %s20
    %p26 = scmp.eq.s32.totalorder %s7, 0
    %p27 = por %p25, %p26
    %p28 = scmp.ne.s32.totalorder %s17, %s20
    %p29 = scmp.eq.s32.totalorder %s12, 1
    %p30 = por %p28, %p29
    %p31 = scmp.ne.s32.totalorder %s20, %s21
    %p32 = scmp.eq.s32.totalorder %s12, 0
    %p33 = por %p31, %p32
    %p34 = scmp.ne.s32.totalorder %s20, %s21
    %p35 = scmp.eq.s32.totalorder %s13, 1
    %p36 = por %p34, %p35
    %p38 = scmp.ne.s32.totalorder %s21, %s37
    %p39 = scmp.eq.s32.totalorder %s13, 0
    %p40 = por %p38, %p39
    %s41 = ssub.s32 %s7, %s14
    %p42 = scmp.eq.s32.totalorder %s41, 0
    %s44 = sadd.s32 %s43, 1
    %s45 = scalar_select %p42, %s43, %s44
    %p48 = pneg %p42
    %p49 = scmp.eq.s32.totalorder %s7, 1
    %p50 = por %p48, %p49
    %p51 = scmp.ne.s32.totalorder %s43, %s46
    %p52 = scmp.eq.s32.totalorder %s7, 0
    %p53 = por %p51, %p52
    %p54 = scmp.ne.s32.totalorder %s43, %s46
    %p55 = scmp.eq.s32.totalorder %s12, 1
    %p56 = por %p54, %p55
    %p57 = scmp.ne.s32.totalorder %s46, %s47
    %p58 = scmp.eq.s32.totalorder %s12, 0
    %p59 = por %p57, %p58
    %p60 = scmp.ne.s32.totalorder %s46, %s47
    %p61 = scmp.eq.s32.totalorder %s13, 1
    %p62 = por %p60, %p61
    %p64 = scmp.ne.s32.totalorder %s47, %s63
    %p65 = scmp.eq.s32.totalorder %s13, 0
    %p66 = por %p64, %p65
    %p67 = scmp.le.s32.totalorder 1, %s7
    %p68 = scmp.lt.s32.totalorder %s7, 3
    %p69 = pnand %p67, %p68
    %p70 = pneg %p69
    // Predicated region
    $region9: #{_lambda_.16} parent=5 // pred_check
      _
    $region10: #{_lambda_.16} parent=5 // pred_check_branch
      %72 = sbr.rel (%p69) target = $region12
    $region11: #{_lambda_.16} parent=5 // pred_region
      %s73 = ssub.s32 %s7, 1
    $region12: #{_lambda_.16} parent=5 // pred_fallthru
      _
    %p74 = scmp.lt.s32.totalorder %s7, 2
    // Predicated region
    $region13: #{_lambda_.16} parent=5 // pred_check
      %p75 = pneg %p74
    $region14: #{_lambda_.16} parent=5 // pred_check_branch
      %77 = sbr.rel (%p75) target = $region16
    $region15: #{_lambda_.16} parent=5 // pred_region
      // Predicated region
      $region17: #{_lambda_.16} parent=15 // pred_check
        %p78 = pneg %p27
      $region18: #{_lambda_.16} parent=15 // pred_check_branch
        %80 = sbr.rel (%p78) target = $region20
      $region19: #{_lambda_.16} parent=15 // pred_region
        %p81 = scmp.lt.s32.totalorder %s7, 1
        %s82 = scalar_select %p81, %s7, 1
        %s83 = smul.addr %s82, 72
        %s84 = smul.addr %s83, 4
        %s85 = scalar_lea.vmem %s0, %s84
      $region20: #{_lambda_.16} parent=15 // pred_fallthru
        _
    $region16: #{_lambda_.16} parent=5 // pred_fallthru
      _
    %p86 = scmp.le.s32.totalorder 1, %s7
    %p87 = scmp.lt.s32.totalorder %s7, 3
    %p88 = pnand %p86, %p87
    %p89 = pneg %p88
    // Predicated region
    $region21: #{_lambda_.16} parent=5 // pred_check
      _
    $region22: #{_lambda_.16} parent=5 // pred_check_branch
      %91 = sbr.rel (%p88) target = $region24
    $region23: #{_lambda_.16} parent=5 // pred_region
      %s92 = ssub.s32 %s7, 1
      %p93 = scmp.lt.s32.totalorder %s12, 1
      %s94 = scalar_select %p93, %s12, 1
      %s95 = smul.addr %s94, 72
      %s96 = smul.addr %s95, 4
      %s97 = scalar_lea.vmem %s0, %s96
      %p98 = pneg %p33
      %p99 = pneg %p30
      %p100 = pneg %p59
      %p101 = pneg %p56
      %p102 = scmp.lt.s32.totalorder %s12, 1
      %s103 = scalar_select %p102, %s12, 1
      %s104 = smul.addr %s103, 8
      %s105 = smul.addr %s104, 4
      %s106 = scalar_lea.vmem %s1, %s105
      %p107 = scmp.lt.s32.totalorder %s12, 1
      %s108 = scalar_select %p107, %s12, 1
      %s109 = smul.addr %s108, 72
      %s110 = smul.addr %s109, 4
      %s111 = scalar_lea.vmem %s0, %s110
      %p112 = scmp.lt.s32.totalorder %s12, 1
      %s113 = scalar_select %p112, %s12, 1
      %s114 = smul.addr %s113, 8
      %s115 = smul.addr %s114, 4
      %s116 = scalar_lea.vmem %s1, %s115
      %v117 = vld [vmem:[%s111] sm:$0xf]
      %v118 = vld [vmem:[%s111 + $0x8] sm:$0xf]
      %v119 = vld [vmem:[%s111 + $0x10] sm:$0xf]
      %v120 = vld [vmem:[%s111 + $0x18] sm:$0xf]
      %v121 = vld [vmem:[%s111 + $0x20] sm:$0xf]
      %v122 = vld [vmem:[%s111 + $0x28] sm:$0xf]
      %v123 = vld [vmem:[%s111 + $0x30] sm:$0xf]
      %v124 = vld [vmem:[%s111 + $0x38] sm:$0xf]
      %s125 = scalar_lea.vmem %s111, 72
      %v126 = vld [vmem:[%s125] sm:$0xf]
      %v127 = vld [vmem:[%s125 + $0x8] sm:$0xf]
      %v128 = vld [vmem:[%s125 + $0x10] sm:$0xf]
      %v129 = vld [vmem:[%s125 + $0x18] sm:$0xf]
      %v130 = vld [vmem:[%s125 + $0x20] sm:$0xf]
      %v131 = vld [vmem:[%s125 + $0x28] sm:$0xf]
      %v132 = vld [vmem:[%s125 + $0x30] sm:$0xf]
      %v133 = vld [vmem:[%s125 + $0x38] sm:$0xf]
      %v134 = vmax.bf16 %v117, %v126
      %v135 = vmax.bf16 %v118, %v127
      %v136 = vmax.bf16 %v119, %v128
      %v137 = vmax.bf16 %v120, %v129
      %v138 = vmax.bf16 %v121, %v130
      %v139 = vmax.bf16 %v122, %v131
      %v140 = vmax.bf16 %v123, %v132
      %v141 = vmax.bf16 %v124, %v133
      %v142 = vld [vmem:[%s111 + $0x4] sm:$0x1]
      %v143 = vld [vmem:[%s111 + $0xc] sm:$0x1]
      %v144 = vld [vmem:[%s111 + $0x14] sm:$0x1]
      %v145 = vld [vmem:[%s111 + $0x1c] sm:$0x1]
      %v146 = vld [vmem:[%s111 + $0x24] sm:$0x1]
      %v147 = vld [vmem:[%s111 + $0x2c] sm:$0x1]
      %v148 = vld [vmem:[%s111 + $0x34] sm:$0x1]
      %v149 = vld [vmem:[%s111 + $0x3c] sm:$0x1]
      %vm150 = vsmask.f32 3328
      %vm151 = vsmask.f32 7440
      %vm152 = vmor %vm150, %vm151
      %v154 = vshrl.u32 %v117, 16
      %v156 = vrot.slane %v154, 4
      %v157 = vshll.u32 %v117, 16
      %v159 = vrot.slane %v157, 5
      %v160 = vor.u32 %v156, %v159
      %v161 = vrot.slane %v160, 4
      %v163 = vshll.u32 %v142, 16
      %v165 = vrot.slane %v163, 5
      %v166 = vsel %vm152, %v161, %v165
      %v168 = vshrl.u32 %v118, 16
      %v170 = vrot.slane %v168, 4
      %v171 = vshll.u32 %v118, 16
      %v173 = vrot.slane %v171, 5
      %v174 = vor.u32 %v170, %v173
      %v175 = vrot.slane %v174, 4
      %v177 = vshll.u32 %v143, 16
      %v179 = vrot.slane %v177, 5
      %v180 = vsel %vm152, %v175, %v179
      %v182 = vshrl.u32 %v119, 16
      %v184 = vrot.slane %v182, 4
      %v185 = vshll.u32 %v119, 16
      %v187 = vrot.slane %v185, 5
      %v188 = vor.u32 %v184, %v187
      %v189 = vrot.slane %v188, 4
      %v191 = vshll.u32 %v144, 16
      %v193 = vrot.slane %v191, 5
      %v194 = vsel %vm152, %v189, %v193
      %v196 = vshrl.u32 %v120, 16
      %v198 = vrot.slane %v196, 4
      %v199 = vshll.u32 %v120, 16
      %v201 = vrot.slane %v199, 5
      %v202 = vor.u32 %v198, %v201
      %v203 = vrot.slane %v202, 4
      %v205 = vshll.u32 %v145, 16
      %v207 = vrot.slane %v205, 5
      %v208 = vsel %vm152, %v203, %v207
      %v210 = vshrl.u32 %v121, 16
      %v212 = vrot.slane %v210, 4
      %v213 = vshll.u32 %v121, 16
      %v215 = vrot.slane %v213, 5
      %v216 = vor.u32 %v212, %v215
      %v217 = vrot.slane %v216, 4
      %v219 = vshll.u32 %v146, 16
      %v221 = vrot.slane %v219, 5
      %v222 = vsel %vm152, %v217, %v221
      %v224 = vshrl.u32 %v122, 16
      %v226 = vrot.slane %v224, 4
      %v227 = vshll.u32 %v122, 16
      %v229 = vrot.slane %v227, 5
      %v230 = vor.u32 %v226, %v229
      %v231 = vrot.slane %v230, 4
      %v233 = vshll.u32 %v147, 16
      %v235 = vrot.slane %v233, 5
      %v236 = vsel %vm152, %v231, %v235
      %v238 = vshrl.u32 %v123, 16
      %v240 = vrot.slane %v238, 4
      %v241 = vshll.u32 %v123, 16
      %v243 = vrot.slane %v241, 5
      %v244 = vor.u32 %v240, %v243
      %v245 = vrot.slane %v244, 4
      %v247 = vshll.u32 %v148, 16
      %v249 = vrot.slane %v247, 5
      %v250 = vsel %vm152, %v245, %v249
      %v252 = vshrl.u32 %v124, 16
      %v254 = vrot.slane %v252, 4
      %v255 = vshll.u32 %v124, 16
      %v257 = vrot.slane %v255, 5
      %v258 = vor.u32 %v254, %v257
      %v259 = vrot.slane %v258, 4
      %v261 = vshll.u32 %v149, 16
      %v263 = vrot.slane %v261, 5
      %v264 = vsel %vm152, %v259, %v263
      %v273 = vmax.bf16 %v134, %v166
      %v274 = vmax.bf16 %v135, %v180
      %v275 = vmax.bf16 %v136, %v194
      %v276 = vmax.bf16 %v137, %v208
      %v277 = vmax.bf16 %v138, %v222
      %v278 = vmax.bf16 %v139, %v236
      %v279 = vmax.bf16 %v140, %v250
      %v280 = vmax.bf16 %v141, %v264
      %s281 = scalar_lea.vmem %s111, 144
      %v282 = vld [vmem:[%s281] sm:$0xf]
      %v283 = vld [vmem:[%s281 + $0x8] sm:$0xf]
      %v284 = vld [vmem:[%s281 + $0x10] sm:$0xf]
      %v285 = vld [vmem:[%s281 + $0x18] sm:$0xf]
      %v286 = vld [vmem:[%s281 + $0x20] sm:$0xf]
      %v287 = vld [vmem:[%s281 + $0x28] sm:$0xf]
      %v288 = vld [vmem:[%s281 + $0x30] sm:$0xf]
      %v289 = vld [vmem:[%s281 + $0x38] sm:$0xf]
      %v290 = vmax.bf16 %v273, %v282
      %v291 = vmax.bf16 %v274, %v283
      %v292 = vmax.bf16 %v275, %v284
      %v293 = vmax.bf16 %v276, %v285
      %v294 = vmax.bf16 %v277, %v286
      %v295 = vmax.bf16 %v278, %v287
      %v296 = vmax.bf16 %v279, %v288
      %v297 = vmax.bf16 %v280, %v289
      %s298 = scalar_lea.vmem %s111, 216
      %v299 = vld [vmem:[%s298] sm:$0xf]
      %v300 = vld [vmem:[%s298 + $0x8] sm:$0xf]
      %v301 = vld [vmem:[%s298 + $0x10] sm:$0xf]
      %v302 = vld [vmem:[%s298 + $0x18] sm:$0xf]
      %v303 = vld [vmem:[%s298 + $0x20] sm:$0xf]
      %v304 = vld [vmem:[%s298 + $0x28] sm:$0xf]
      %v305 = vld [vmem:[%s298 + $0x30] sm:$0xf]
      %v306 = vld [vmem:[%s298 + $0x38] sm:$0xf]
      %v307 = vmax.bf16 %v290, %v299
      %v308 = vmax.bf16 %v291, %v300
      %v309 = vmax.bf16 %v292, %v301
      %v310 = vmax.bf16 %v293, %v302
      %v311 = vmax.bf16 %v294, %v303
      %v312 = vmax.bf16 %v295, %v304
      %v313 = vmax.bf16 %v296, %v305
      %v314 = vmax.bf16 %v297, %v306
      %v315 = vld [vmem:[%s281 + $0x4] sm:$0x1]
      %v316 = vld [vmem:[%s281 + $0xc] sm:$0x1]
      %v317 = vld [vmem:[%s281 + $0x14] sm:$0x1]
      %v318 = vld [vmem:[%s281 + $0x1c] sm:$0x1]
      %v319 = vld [vmem:[%s281 + $0x24] sm:$0x1]
      %v320 = vld [vmem:[%s281 + $0x2c] sm:$0x1]
      %v321 = vld [vmem:[%s281 + $0x34] sm:$0x1]
      %v322 = vld [vmem:[%s281 + $0x3c] sm:$0x1]
      %v324 = vshrl.u32 %v282, 16
      %v326 = vrot.slane %v324, 4
      %v327 = vshll.u32 %v282, 16
      %v329 = vrot.slane %v327, 5
      %v330 = vor.u32 %v326, %v329
      %v331 = vrot.slane %v330, 4
      %v333 = vshll.u32 %v315, 16
      %v335 = vrot.slane %v333, 5
      %v336 = vsel %vm152, %v331, %v335
      %v338 = vshrl.u32 %v283, 16
      %v340 = vrot.slane %v338, 4
      %v341 = vshll.u32 %v283, 16
      %v343 = vrot.slane %v341, 5
      %v344 = vor.u32 %v340, %v343
      %v345 = vrot.slane %v344, 4
      %v347 = vshll.u32 %v316, 16
      %v349 = vrot.slane %v347, 5
      %v350 = vsel %vm152, %v345, %v349
      %v352 = vshrl.u32 %v284, 16
      %v354 = vrot.slane %v352, 4
      %v355 = vshll.u32 %v284, 16
      %v357 = vrot.slane %v355, 5
      %v358 = vor.u32 %v354, %v357
      %v359 = vrot.slane %v358, 4
      %v361 = vshll.u32 %v317, 16
      %v363 = vrot.slane %v361, 5
      %v364 = vsel %vm152, %v359, %v363
      %v366 = vshrl.u32 %v285, 16
      %v368 = vrot.slane %v366, 4
      %v369 = vshll.u32 %v285, 16
      %v371 = vrot.slane %v369, 5
      %v372 = vor.u32 %v368, %v371
      %v373 = vrot.slane %v372, 4
      %v375 = vshll.u32 %v318, 16
      %v377 = vrot.slane %v375, 5
      %v378 = vsel %vm152, %v373, %v377
      %v380 = vshrl.u32 %v286, 16
      %v382 = vrot.slane %v380, 4
      %v383 = vshll.u32 %v286, 16
      %v385 = vrot.slane %v383, 5
      %v386 = vor.u32 %v382, %v385
      %v387 = vrot.slane %v386, 4
      %v389 = vshll.u32 %v319, 16
      %v391 = vrot.slane %v389, 5
      %v392 = vsel %vm152, %v387, %v391
      %v394 = vshrl.u32 %v287, 16
      %v396 = vrot.slane %v394, 4
      %v397 = vshll.u32 %v287, 16
      %v399 = vrot.slane %v397, 5
      %v400 = vor.u32 %v396, %v399
      %v401 = vrot.slane %v400, 4
      %v403 = vshll.u32 %v320, 16
      %v405 = vrot.slane %v403, 5
      %v406 = vsel %vm152, %v401, %v405
      %v408 = vshrl.u32 %v288, 16
      %v410 = vrot.slane %v408, 4
      %v411 = vshll.u32 %v288, 16
      %v413 = vrot.slane %v411, 5
      %v414 = vor.u32 %v410, %v413
      %v415 = vrot.slane %v414, 4
      %v417 = vshll.u32 %v321, 16
      %v419 = vrot.slane %v417, 5
      %v420 = vsel %vm152, %v415, %v419
      %v422 = vshrl.u32 %v289, 16
      %v424 = vrot.slane %v422, 4
      %v425 = vshll.u32 %v289, 16
      %v427 = vrot.slane %v425, 5
      %v428 = vor.u32 %v424, %v427
      %v429 = vrot.slane %v428, 4
      %v431 = vshll.u32 %v322, 16
      %v433 = vrot.slane %v431, 5
      %v434 = vsel %vm152, %v429, %v433
      %v443 = vmax.bf16 %v307, %v336
      %v444 = vmax.bf16 %v308, %v350
      %v445 = vmax.bf16 %v309, %v364
      %v446 = vmax.bf16 %v310, %v378
      %v447 = vmax.bf16 %v311, %v392
      %v448 = vmax.bf16 %v312, %v406
      %v449 = vmax.bf16 %v313, %v420
      %v450 = vmax.bf16 %v314, %v434
      %s451 = scalar_lea.vmem %s111, 8
      %v452 = vld [vmem:[%s451] sm:$0xf]
      %v453 = vld [vmem:[%s451 + $0x8] sm:$0xf]
      %v454 = vld [vmem:[%s451 + $0x10] sm:$0xf]
      %v455 = vld [vmem:[%s451 + $0x18] sm:$0xf]
      %v456 = vld [vmem:[%s451 + $0x20] sm:$0xf]
      %v457 = vld [vmem:[%s451 + $0x28] sm:$0xf]
      %v458 = vld [vmem:[%s451 + $0x30] sm:$0xf]
      %v459 = vld [vmem:[%s451 + $0x38] sm:$0xf]
      %v460 = vmax.bf16 %v443, %v452
      %v461 = vmax.bf16 %v444, %v453
      %v462 = vmax.bf16 %v445, %v454
      %v463 = vmax.bf16 %v446, %v455
      %v464 = vmax.bf16 %v447, %v456
      %v465 = vmax.bf16 %v448, %v457
      %v466 = vmax.bf16 %v449, %v458
      %v467 = vmax.bf16 %v450, %v459
      %s468 = scalar_lea.vmem %s111, 80
      %v469 = vld [vmem:[%s468] sm:$0xf]
      %v470 = vld [vmem:[%s468 + $0x8] sm:$0xf]
      %v471 = vld [vmem:[%s468 + $0x10] sm:$0xf]
      %v472 = vld [vmem:[%s468 + $0x18] sm:$0xf]
      %v473 = vld [vmem:[%s468 + $0x20] sm:$0xf]
      %v474 = vld [vmem:[%s468 + $0x28] sm:$0xf]
      %v475 = vld [vmem:[%s468 + $0x30] sm:$0xf]
      %v476 = vld [vmem:[%s468 + $0x38] sm:$0xf]
      %v477 = vmax.bf16 %v460, %v469
      %v478 = vmax.bf16 %v461, %v470
      %v479 = vmax.bf16 %v462, %v471
      %v480 = vmax.bf16 %v463, %v472
      %v481 = vmax.bf16 %v464, %v473
      %v482 = vmax.bf16 %v465, %v474
      %v483 = vmax.bf16 %v466, %v475
      %v484 = vmax.bf16 %v467, %v476
      %v485 = vld [vmem:[%s451 + $0x4] sm:$0x1]
      %v486 = vld [vmem:[%s451 + $0xc] sm:$0x1]
      %v487 = vld [vmem:[%s451 + $0x14] sm:$0x1]
      %v488 = vld [vmem:[%s451 + $0x1c] sm:$0x1]
      %v489 = vld [vmem:[%s451 + $0x24] sm:$0x1]
      %v490 = vld [vmem:[%s451 + $0x2c] sm:$0x1]
      %v491 = vld [vmem:[%s451 + $0x34] sm:$0x1]
      %v492 = vld [vmem:[%s451 + $0x3c] sm:$0x1]
      %v494 = vshrl.u32 %v452, 16
      %v496 = vrot.slane %v494, 4
      %v497 = vshll.u32 %v452, 16
      %v499 = vrot.slane %v497, 5
      %v500 = vor.u32 %v496, %v499
      %v501 = vrot.slane %v500, 4
      %v503 = vshll.u32 %v485, 16
      %v505 = vrot.slane %v503, 5
      %v506 = vsel %vm152, %v501, %v505
      %v508 = vshrl.u32 %v453, 16
      %v510 = vrot.slane %v508, 4
      %v511 = vshll.u32 %v453, 16
      %v513 = vrot.slane %v511, 5
      %v514 = vor.u32 %v510, %v513
      %v515 = vrot.slane %v514, 4
      %v517 = vshll.u32 %v486, 16
      %v519 = vrot.slane %v517, 5
      %v520 = vsel %vm152, %v515, %v519
      %v522 = vshrl.u32 %v454, 16
      %v524 = vrot.slane %v522, 4
      %v525 = vshll.u32 %v454, 16
      %v527 = vrot.slane %v525, 5
      %v528 = vor.u32 %v524, %v527
      %v529 = vrot.slane %v528, 4
      %v531 = vshll.u32 %v487, 16
      %v533 = vrot.slane %v531, 5
      %v534 = vsel %vm152, %v529, %v533
      %v536 = vshrl.u32 %v455, 16
      %v538 = vrot.slane %v536, 4
      %v539 = vshll.u32 %v455, 16
      %v541 = vrot.slane %v539, 5
      %v542 = vor.u32 %v538, %v541
      %v543 = vrot.slane %v542, 4
      %v545 = vshll.u32 %v488, 16
      %v547 = vrot.slane %v545, 5
      %v548 = vsel %vm152, %v543, %v547
      %v550 = vshrl.u32 %v456, 16
      %v552 = vrot.slane %v550, 4
      %v553 = vshll.u32 %v456, 16
      %v555 = vrot.slane %v553, 5
      %v556 = vor.u32 %v552, %v555
      %v557 = vrot.slane %v556, 4
      %v559 = vshll.u32 %v489, 16
      %v561 = vrot.slane %v559, 5
      %v562 = vsel %vm152, %v557, %v561
      %v564 = vshrl.u32 %v457, 16
      %v566 = vrot.slane %v564, 4
      %v567 = vshll.u32 %v457, 16
      %v569 = vrot.slane %v567, 5
      %v570 = vor.u32 %v566, %v569
      %v571 = vrot.slane %v570, 4
      %v573 = vshll.u32 %v490, 16
      %v575 = vrot.slane %v573, 5
      %v576 = vsel %vm152, %v571, %v575
      %v578 = vshrl.u32 %v458, 16
      %v580 = vrot.slane %v578, 4
      %v581 = vshll.u32 %v458, 16
      %v583 = vrot.slane %v581, 5
      %v584 = vor.u32 %v580, %v583
      %v585 = vrot.slane %v584, 4
      %v587 = vshll.u32 %v491, 16
      %v589 = vrot.slane %v587, 5
      %v590 = vsel %vm152, %v585, %v589
      %v592 = vshrl.u32 %v459, 16
      %v594 = vrot.slane %v592, 4
      %v595 = vshll.u32 %v459, 16
      %v597 = vrot.slane %v595, 5
      %v598 = vor.u32 %v594, %v597
      %v599 = vrot.slane %v598, 4
      %v601 = vshll.u32 %v492, 16
      %v603 = vrot.slane %v601, 5
      %v604 = vsel %vm152, %v599, %v603
      %v613 = vmax.bf16 %v477, %v506
      %v614 = vmax.bf16 %v478, %v520
      %v615 = vmax.bf16 %v479, %v534
      %v616 = vmax.bf16 %v480, %v548
      %v617 = vmax.bf16 %v481, %v562
      %v618 = vmax.bf16 %v482, %v576
      %v619 = vmax.bf16 %v483, %v590
      %v620 = vmax.bf16 %v484, %v604
      %vm621 = vcmask 60416
      %622 = vst.msk [vmem:[%s116] sm:$0xf] %vm621, %v613
      %623 = vst.msk [vmem:[%s116 + $0x4] sm:$0xf] %vm621, %v614
      %624 = vst.msk [vmem:[%s116 + $0x8] sm:$0xf] %vm621, %v615
      %625 = vst.msk [vmem:[%s116 + $0xc] sm:$0xf] %vm621, %v616
      %626 = vst.msk [vmem:[%s116 + $0x10] sm:$0xf] %vm621, %v617
      %627 = vst.msk [vmem:[%s116 + $0x14] sm:$0xf] %vm621, %v618
      %628 = vst.msk [vmem:[%s116 + $0x18] sm:$0xf] %vm621, %v619
      %629 = vst.msk [vmem:[%s116 + $0x1c] sm:$0xf] %vm621, %v620
      %p630 = scmp.lt.s32.totalorder %s12, 1
      %s631 = scalar_select %p630, %s12, 1
      %s632 = smul.addr %s631, 8
      %s633 = smul.addr %s632, 4
      %s634 = scalar_lea.vmem %s1, %s633
      // Predicated region
      $region25: #{_lambda_.16} parent=23 // pred_check
        %p635 = pneg %p56
      $region26: #{_lambda_.16} parent=23 // pred_check_branch
        %637 = sbr.rel (%p635) target = $region28
      $region27: #{_lambda_.16} parent=23 // pred_region
        _
      $region28: #{_lambda_.16} parent=23 // pred_fallthru
        _
    $region24: #{_lambda_.16} parent=5 // pred_fallthru
      _
    %p638 = scmp.le.s32.totalorder 2, %s7
    // Predicated region
    $region29: #{_lambda_.16} parent=5 // pred_check
      %p639 = pneg %p638
    $region30: #{_lambda_.16} parent=5 // pred_check_branch
      %641 = sbr.rel (%p639) target = $region32
    $region31: #{_lambda_.16} parent=5 // pred_region
      %s642 = ssub.s32 %s7, 2
      // Predicated region
      $region33: #{_lambda_.16} parent=31 // pred_check
        %p643 = pneg %p62
      $region34: #{_lambda_.16} parent=31 // pred_check_branch
        %645 = sbr.rel (%p643) target = $region36
      $region35: #{_lambda_.16} parent=31 // pred_region
        %p646 = scmp.lt.s32.totalorder %s13, 1
        %s647 = scalar_select %p646, %s13, 1
        %s648 = smul.addr %s647, 8
        %s649 = smul.addr %s648, 4
        %s650 = scalar_lea.vmem %s1, %s649
      $region36: #{_lambda_.16} parent=31 // pred_fallthru
        _
    $region32: #{_lambda_.16} parent=5 // pred_fallthru
      _
  $region6: #{_lambda_.16} parent=0 // loop_footer
    %s11 = sadd.s32 1, %s7
  $region7: #{_lambda_.16} parent=0 // loop_footer_branch
    %6 = sbr.rel target = $region3
  $region8: #{_lambda_.16} parent=0 // loop_exit
    _

// kernel: _lambda_.19
$region0: #{_lambda_.19}
  #allocation0 [shape = 'u32[]', space=smem, size = 0x4, offset = 0x4, fixed_abs, tag = 'smem constant byte address 0x4 - core index']
  #allocation1 [shape = 'u32[144,128]{1,0:T(1,128)}', space=vmem, size = 0x12000, scoped, tag = 'internal scratch']
  %s0 = inlined_call_operand.vmem [shape: bf16[32,8], index: 0, kind: input, shape index: {}]
  %s1 = inlined_call_operand.vmem [shape: bf16[32,8], index: 1, kind: input, shape index: {}]
  %s2 = inlined_call_operand.vmem [shape: bf16[8,16], index: 2, kind: input, shape index: {}]
  %s3 = inlined_call_operand.vmem [shape: f32[1,16], index: 3, kind: input, shape index: {}]
  %s4 = inlined_call_operand.vmem [shape: bf16[8,16], index: 4, kind: input, shape index: {}]
  %s5 = inlined_call_operand.vmem [shape: f32[1,16], index: 5, kind: input, shape index: {}]
  %s6 = inlined_call_operand.vmem [shape: bf16[32,16], index: 6, kind: output, shape index: {}]
  %s7 = sld [smem:[#allocation0]]
  $region34: #{_lambda_.19} parent=0
    _
  %s9 = ssub.s32 1, %s7
  %s10 = scalar_select 0, %s9, %s7
  // Predicated region
  $region2: #{_lambda_.19} parent=0 // pred_check
    _
  $region3: #{_lambda_.19} parent=0 // pred_check_branch
    %12 = sbr.rel (0) target = $region5
  $region4: #{_lambda_.19} parent=0 // pred_region
    _
  $region5: #{_lambda_.19} parent=0 // pred_fallthru
    _
  // Predicated region
  $region6: #{_lambda_.19} parent=0 // pred_check
    _
  $region7: #{_lambda_.19} parent=0 // pred_check_branch
    %14 = sbr.rel (0) target = $region9
  $region8: #{_lambda_.19} parent=0 // pred_region
    _
  $region9: #{_lambda_.19} parent=0 // pred_fallthru
    _
  // Predicated region
  $region10: #{_lambda_.19} parent=0 // pred_check
    _
  $region11: #{_lambda_.19} parent=0 // pred_check_branch
    %16 = sbr.rel (0) target = $region13
  $region12: #{_lambda_.19} parent=0 // pred_region
    _
  $region13: #{_lambda_.19} parent=0 // pred_fallthru
    _
  // Predicated region
  $region14: #{_lambda_.19} parent=0 // pred_check
    _
  $region15: #{_lambda_.19} parent=0 // pred_check_branch
    %18 = sbr.rel (0) target = $region17
  $region16: #{_lambda_.19} parent=0 // pred_region
    _
  $region17: #{_lambda_.19} parent=0 // pred_fallthru
    _
  // Predicated region
  $region18: #{_lambda_.19} parent=0 // pred_check
    _
  $region19: #{_lambda_.19} parent=0 // pred_check_branch
    %20 = sbr.rel (0) target = $region21
  $region20: #{_lambda_.19} parent=0 // pred_region
    _
  $region21: #{_lambda_.19} parent=0 // pred_fallthru
    _
  // Predicated region
  $region22: #{_lambda_.19} parent=0 // pred_check
    _
  $region23: #{_lambda_.19} parent=0 // pred_check_branch
    %22 = sbr.rel (0) target = $region25
  $region24: #{_lambda_.19} parent=0 // pred_region
    _
  $region25: #{_lambda_.19} parent=0 // pred_fallthru
    _
  %v24 = vld [vmem:[%s0] sm:$0xf]
  %v25 = vld [vmem:[%s0 + $0x4] sm:$0xf]
  %v26 = vld [vmem:[%s0 + $0x8] sm:$0xf]
  %v27 = vld [vmem:[%s0 + $0xc] sm:$0xf]
  %v28 = vld [vmem:[%s2] sm:$0xf]
  %v29 = vld [vmem:[%s3] sm:$0x1]
  %v31 = vlaneseq
  %v32 = vshrl.u32 %v31, 7
  %v33 = vsub.s32 0, %v32
  %v34 = vrot.slane %v29, %v33
  %v40 = vunpack.c.l.b16 %v24
  %v41 = vunpack.c.l.b16 %v25
  %v42 = vunpack.c.l.b16 %v26
  %v43 = vunpack.c.l.b16 %v27
  %v44 = vpack.c.b16 %v41, %v40
  %v45 = vpack.c.b16 %v43, %v42
  %vm46 = vcmask 64512
  %v48 = vsel %vm46, %v44, 0
  %v51 = vsel %vm46, %v45, 0
  %vm53 = vcmask 1043456
  %v55 = vsel %vm53, %v28, 0
  %57 = vmatprep.subr.bf16.mxu0 0
  %58 = vmatpush1.bf16.msra.mxu0 %v55
  %59 = vmatprep.subr.bf16.mxu0 0
  %60 = vmatpush1.bf16.msra.mxu0 0
  %61 = vmatprep.subr.bf16.mxu0 0
  %62 = vmatpush1.bf16.msra.mxu0 0
  %63 = vmatprep.subr.bf16.mxu0 0
  %64 = vmatpush1.bf16.msra.mxu0 0
  %65 = vmatprep.subr.bf16.mxu0 0
  %66 = vmatpush1.bf16.msra.mxu0 0
  %67 = vmatprep.subr.bf16.mxu0 0
  %68 = vmatpush1.bf16.msra.mxu0 0
  %69 = vmatprep.subr.bf16.mxu0 0
  %70 = vmatpush1.bf16.msra.mxu0 0
  %71 = vmatprep.subr.bf16.mxu0 0
  %72 = vmatpush1.bf16.msra.mxu0 0
  %73 = vmatprep.subr.bf16.mxu0 0
  %74 = vmatpush1.bf16.msra.mxu0 0
  %75 = vmatprep.subr.bf16.mxu0 0
  %76 = vmatpush1.bf16.msra.mxu0 0
  %77 = vmatprep.subr.bf16.mxu0 0
  %78 = vmatpush1.bf16.msra.mxu0 0
  %79 = vmatprep.subr.bf16.mxu0 0
  %80 = vmatpush1.bf16.msra.mxu0 0
  %81 = vmatprep.subr.bf16.mxu0 0
  %82 = vmatpush1.bf16.msra.mxu0 0
  %83 = vmatprep.subr.bf16.mxu0 0
  %84 = vmatpush1.bf16.msra.mxu0 0
  %85 = vmatprep.subr.bf16.mxu0 0
  %86 = vmatpush1.bf16.msra.mxu0 0
  %87 = vmatprep.subr.bf16.mxu0 0
  %88 = vmatpush1.bf16.msra.mxu0 0
  %89 = vmatprep.mubr.bf16.mxu0 0
  %90 = vmatmul.mubr.bf16.gmra.mrb[0].mxu0 %v48
  %v91 = vpop.f32.mrb[0].mxu0
  %v92 = vadd.f32 %v34, %v91
  %v93 = vpop.f32.mrb[0].mxu0
  %v94 = vpop.f32.mrb[0].mxu0
  %v95 = vadd.f32 %v34, %v94
  %v96 = vpop.f32.mrb[0].mxu0
  %97 = vmatprep.mubr.bf16.mxu0 0
  %98 = vmatmul.mubr.bf16.gmra.mrb[0].mxu0 %v51
  %v99 = vpop.f32.mrb[0].mxu0
  %v100 = vadd.f32 %v34, %v99
  %v101 = vpop.f32.mrb[0].mxu0
  %v102 = vpop.f32.mrb[0].mxu0
  %v103 = vadd.f32 %v34, %v102
  %v104 = vpop.f32.mrb[0].mxu0
  %105 = vdwg.mxu0
  %v106 = vmax.f32 %v92, 0.0
  %v107 = vmax.f32 %v95, 0.0
  %v108 = vmax.f32 %v100, 0.0
  %v109 = vmax.f32 %v103, 0.0
  %v110 = vld [vmem:[%s1] sm:$0xf]
  %v111 = vld [vmem:[%s1 + $0x4] sm:$0xf]
  %v112 = vld [vmem:[%s1 + $0x8] sm:$0xf]
  %v113 = vld [vmem:[%s1 + $0xc] sm:$0xf]
  %v114 = vld [vmem:[%s4] sm:$0xf]
  %v115 = vld [vmem:[%s5] sm:$0x1]
  %v117 = vlaneseq
  %v118 = vshrl.u32 %v117, 7
  %v119 = vsub.s32 0, %v118
  %v120 = vrot.slane %v115, %v119
  %v126 = vunpack.c.l.b16 %v110
  %v127 = vunpack.c.l.b16 %v111
  %v128 = vunpack.c.l.b16 %v112
  %v129 = vunpack.c.l.b16 %v113
  %v130 = vpack.c.b16 %v127, %v126
  %v131 = vpack.c.b16 %v129, %v128
  %v133 = vsel %vm46, %v130, 0
  %v136 = vsel %vm46, %v131, 0
  %v139 = vsel %vm53, %v114, 0
  %141 = vmatprep.subr.bf16.mxu0 0
  %142 = vmatpush1.bf16.msra.mxu0 %v139
  %143 = vmatprep.subr.bf16.mxu0 0
  %144 = vmatpush1.bf16.msra.mxu0 0
  %145 = vmatprep.subr.bf16.mxu0 0
  %146 = vmatpush1.bf16.msra.mxu0 0
  %147 = vmatprep.subr.bf16.mxu0 0
  %148 = vmatpush1.bf16.msra.mxu0 0
  %149 = vmatprep.subr.bf16.mxu0 0
  %150 = vmatpush1.bf16.msra.mxu0 0
  %151 = vmatprep.subr.bf16.mxu0 0
  %152 = vmatpush1.bf16.msra.mxu0 0
  %153 = vmatprep.subr.bf16.mxu0 0
  %154 = vmatpush1.bf16.msra.mxu0 0
  %155 = vmatprep.subr.bf16.mxu0 0
  %156 = vmatpush1.bf16.msra.mxu0 0
  %157 = vmatprep.subr.bf16.mxu0 0
  %158 = vmatpush1.bf16.msra.mxu0 0
  %159 = vmatprep.subr.bf16.mxu0 0
  %160 = vmatpush1.bf16.msra.mxu0 0
  %161 = vmatprep.subr.bf16.mxu0 0
  %162 = vmatpush1.bf16.msra.mxu0 0
  %163 = vmatprep.subr.bf16.mxu0 0
  %164 = vmatpush1.bf16.msra.mxu0 0
  %165 = vmatprep.subr.bf16.mxu0 0
  %166 = vmatpush1.bf16.msra.mxu0 0
  %167 = vmatprep.subr.bf16.mxu0 0
  %168 = vmatpush1.bf16.msra.mxu0 0
  %169 = vmatprep.subr.bf16.mxu0 0
  %170 = vmatpush1.bf16.msra.mxu0 0
  %171 = vmatprep.subr.bf16.mxu0 0
  %172 = vmatpush1.bf16.msra.mxu0 0
  %173 = vmatprep.mubr.bf16.mxu0 0
  %174 = vmatmul.mubr.bf16.gmra.mrb[0].mxu0 %v133
  %v175 = vpop.f32.mrb[0].mxu0
  %v176 = vadd.f32 %v120, %v175
  %v177 = vpop.f32.mrb[0].mxu0
  %v178 = vpop.f32.mrb[0].mxu0
  %v179 = vadd.f32 %v120, %v178
  %v180 = vpop.f32.mrb[0].mxu0
  %181 = vmatprep.mubr.bf16.mxu0 0
  %182 = vmatmul.mubr.bf16.gmra.mrb[0].mxu0 %v136
  %v183 = vpop.f32.mrb[0].mxu0
  %v184 = vadd.f32 %v120, %v183
  %v185 = vpop.f32.mrb[0].mxu0
  %v186 = vpop.f32.mrb[0].mxu0
  %v187 = vadd.f32 %v120, %v186
  %v188 = vpop.f32.mrb[0].mxu0
  %189 = vdwg.mxu0
  %v190 = vmax.f32 %v176, 0.0
  %v191 = vmax.f32 %v179, 0.0
  %v192 = vmax.f32 %v184, 0.0
  %v193 = vmax.f32 %v187, 0.0
  %v194 = vadd.f32 %v106, %v190
  %v195 = vadd.f32 %v107, %v191
  %v196 = vadd.f32 %v108, %v192
  %v197 = vadd.f32 %v109, %v193
  %v198 = vpack.c.bf16 %v195, %v194
  %v199 = vpack.c.bf16 %v197, %v196
  %v202 = vunpack.c.l.b16 %v198
  %v203 = vunpack.c.h.b16 %v198
  %v204 = vunpack.c.l.b16 %v199
  %v205 = vunpack.c.h.b16 %v199
  %v206 = vpack.c.b16 %v202, %v202
  %v207 = vpack.c.b16 %v203, %v203
  %v208 = vpack.c.b16 %v204, %v204
  %v209 = vpack.c.b16 %v205, %v205
  %vm214 = vcmask 125952
  %215 = vst.msk [vmem:[%s6] sm:$0xf] %vm214, %v206
  %216 = vst.msk [vmem:[%s6 + $0x4] sm:$0xf] %vm214, %v207
  %217 = vst.msk [vmem:[%s6 + $0x8] sm:$0xf] %vm214, %v208
  %218 = vst.msk [vmem:[%s6 + $0xc] sm:$0xf] %vm214, %v209
  // Predicated region
  $region26: #{_lambda_.19} parent=0 // pred_check
    _
  $region27: #{_lambda_.19} parent=0 // pred_check_branch
    %220 = sbr.rel (0) target = $region29
  $region28: #{_lambda_.19} parent=0 // pred_region
    _
  $region29: #{_lambda_.19} parent=0 // pred_fallthru
    _
  // Predicated region
  $region30: #{_lambda_.19} parent=0 // pred_check
    _
  $region31: #{_lambda_.19} parent=0 // pred_check_branch
    %222 = sbr.rel (0) target = $region33
  $region32: #{_lambda_.19} parent=0 // pred_region
    _
  $region33: #{_lambda_.19} parent=0 // pred_fallthru
    _

// kernel: _lambda_.21
$region0: #{_lambda_.21}
  #allocation0 [shape = 'u32[]', space=smem, size = 0x4, offset = 0x4, fixed_abs, tag = 'smem constant byte address 0x4 - core index']
  #allocation1 [shape = 'u32[144,128]{1,0:T(1,128)}', space=vmem, size = 0x12000, scoped, tag = 'internal scratch']
  %s0 = inlined_call_operand.vmem [shape: bf16[32,16], index: 0, kind: input, shape index: {}]
  %s1 = inlined_call_operand.vmem [shape: bf16[16,16], index: 1, kind: input, shape index: {}]
  %s2 = inlined_call_operand.vmem [shape: f32[1,16], index: 2, kind: input, shape index: {}]
  %s3 = inlined_call_operand.vmem [shape: bf16[32,16], index: 3, kind: output, shape index: {}]
  %s4 = sld [smem:[#allocation0]]
  $region22: #{_lambda_.21} parent=0
    _
  %s6 = ssub.s32 1, %s4
  %s7 = scalar_select 0, %s6, %s4
  // Predicated region
  $region2: #{_lambda_.21} parent=0 // pred_check
    _
  $region3: #{_lambda_.21} parent=0 // pred_check_branch
    %9 = sbr.rel (0) target = $region5
  $region4: #{_lambda_.21} parent=0 // pred_region
    _
  $region5: #{_lambda_.21} parent=0 // pred_fallthru
    _
  // Predicated region
  $region6: #{_lambda_.21} parent=0 // pred_check
    _
  $region7: #{_lambda_.21} parent=0 // pred_check_branch
    %11 = sbr.rel (0) target = $region9
  $region8: #{_lambda_.21} parent=0 // pred_region
    _
  $region9: #{_lambda_.21} parent=0 // pred_fallthru
    _
  // Predicated region
  $region10: #{_lambda_.21} parent=0 // pred_check
    _
  $region11: #{_lambda_.21} parent=0 // pred_check_branch
    %13 = sbr.rel (0) target = $region13
  $region12: #{_lambda_.21} parent=0 // pred_region
    _
  $region13: #{_lambda_.21} parent=0 // pred_fallthru
    _
  %v15 = vld [vmem:[%s0] sm:$0xf]
  %v16 = vld [vmem:[%s0 + $0x4] sm:$0xf]
  %v17 = vld [vmem:[%s0 + $0x8] sm:$0xf]
  %v18 = vld [vmem:[%s0 + $0xc] sm:$0xf]
  %v19 = vld [vmem:[%s1] sm:$0xf]
  %v20 = vld [vmem:[%s1 + $0x4] sm:$0xf]
  %v21 = vld [vmem:[%s2] sm:$0x1]
  %v23 = vlaneseq
  %v24 = vshrl.u32 %v23, 7
  %v25 = vsub.s32 0, %v24
  %v26 = vrot.slane %v21, %v25
  %v32 = vunpack.c.l.b16 %v15
  %v33 = vunpack.c.l.b16 %v16
  %v34 = vunpack.c.l.b16 %v17
  %v35 = vunpack.c.l.b16 %v18
  %v36 = vpack.c.b16 %v33, %v32
  %v37 = vpack.c.b16 %v35, %v34
  %v40 = vunpack.c.l.b16 %v19
  %v41 = vunpack.c.l.b16 %v20
  %v42 = vpack.c.b16 %v41, %v40
  %vm44 = vcmask 130048
  %v46 = vsel %vm44, %v36, 0
  %v49 = vsel %vm44, %v37, 0
  %51 = vmatprep.subr.bf16.mxu0 0
  %52 = vmatpush1.bf16.msra.mxu0 %v42
  %53 = vmatprep.subr.bf16.mxu0 0
  %54 = vmatpush1.bf16.msra.mxu0 0
  %55 = vmatprep.subr.bf16.mxu0 0
  %56 = vmatpush1.bf16.msra.mxu0 0
  %57 = vmatprep.subr.bf16.mxu0 0
  %58 = vmatpush1.bf16.msra.mxu0 0
  %59 = vmatprep.subr.bf16.mxu0 0
  %60 = vmatpush1.bf16.msra.mxu0 0
  %61 = vmatprep.subr.bf16.mxu0 0
  %62 = vmatpush1.bf16.msra.mxu0 0
  %63 = vmatprep.subr.bf16.mxu0 0
  %64 = vmatpush1.bf16.msra.mxu0 0
  %65 = vmatprep.subr.bf16.mxu0 0
  %66 = vmatpush1.bf16.msra.mxu0 0
  %67 = vmatprep.subr.bf16.mxu0 0
  %68 = vmatpush1.bf16.msra.mxu0 0
  %69 = vmatprep.subr.bf16.mxu0 0
  %70 = vmatpush1.bf16.msra.mxu0 0
  %71 = vmatprep.subr.bf16.mxu0 0
  %72 = vmatpush1.bf16.msra.mxu0 0
  %73 = vmatprep.subr.bf16.mxu0 0
  %74 = vmatpush1.bf16.msra.mxu0 0
  %75 = vmatprep.subr.bf16.mxu0 0
  %76 = vmatpush1.bf16.msra.mxu0 0
  %77 = vmatprep.subr.bf16.mxu0 0
  %78 = vmatpush1.bf16.msra.mxu0 0
  %79 = vmatprep.subr.bf16.mxu0 0
  %80 = vmatpush1.bf16.msra.mxu0 0
  %81 = vmatprep.subr.bf16.mxu0 0
  %82 = vmatpush1.bf16.msra.mxu0 0
  %83 = vmatprep.mubr.bf16.mxu0 0
  %84 = vmatmul.mubr.bf16.gmra.mrb[0].mxu0 %v46
  %v85 = vpop.f32.mrb[0].mxu0
  %v86 = vadd.f32 %v26, %v85
  %v87 = vpop.f32.mrb[0].mxu0
  %v88 = vpop.f32.mrb[0].mxu0
  %v89 = vadd.f32 %v26, %v88
  %v90 = vpop.f32.mrb[0].mxu0
  %91 = vmatprep.mubr.bf16.mxu0 0
  %92 = vmatmul.mubr.bf16.gmra.mrb[0].mxu0 %v49
  %v93 = vpop.f32.mrb[0].mxu0
  %v94 = vadd.f32 %v26, %v93
  %v95 = vpop.f32.mrb[0].mxu0
  %v96 = vpop.f32.mrb[0].mxu0
  %v97 = vadd.f32 %v26, %v96
  %v98 = vpop.f32.mrb[0].mxu0
  %99 = vdwg.mxu0
  %v100 = vmax.f32 %v86, 0.0
  %v101 = vmax.f32 %v89, 0.0
  %v102 = vmax.f32 %v94, 0.0
  %v103 = vmax.f32 %v97, 0.0
  %v104 = vpack.c.bf16 %v101, %v100
  %v105 = vpack.c.bf16 %v103, %v102
  %v108 = vunpack.c.l.b16 %v104
  %v109 = vunpack.c.h.b16 %v104
  %v110 = vunpack.c.l.b16 %v105
  %v111 = vunpack.c.h.b16 %v105
  %v112 = vpack.c.b16 %v108, %v108
  %v113 = vpack.c.b16 %v109, %v109
  %v114 = vpack.c.b16 %v110, %v110
  %v115 = vpack.c.b16 %v111, %v111
  %vm120 = vcmask 125952
  %121 = vst.msk [vmem:[%s3] sm:$0xf] %vm120, %v112
  %122 = vst.msk [vmem:[%s3 + $0x4] sm:$0xf] %vm120, %v113
  %123 = vst.msk [vmem:[%s3 + $0x8] sm:$0xf] %vm120, %v114
  %124 = vst.msk [vmem:[%s3 + $0xc] sm:$0xf] %vm120, %v115
  // Predicated region
  $region14: #{_lambda_.21} parent=0 // pred_check
    _
  $region15: #{_lambda_.21} parent=0 // pred_check_branch
    %126 = sbr.rel (0) target = $region17
  $region16: #{_lambda_.21} parent=0 // pred_region
    _
  $region17: #{_lambda_.21} parent=0 // pred_fallthru
    _
  // Predicated region
  $region18: #{_lambda_.21} parent=0 // pred_check
    _
  $region19: #{_lambda_.21} parent=0 // pred_check_branch
    %128 = sbr.rel (0) target = $region21
  $region20: #{_lambda_.21} parent=0 // pred_region
    _
  $region21: #{_lambda_.21} parent=0 // pred_fallthru
    _

// kernel: _lambda_.20
$region0: #{_lambda_.20}
  #allocation0 [shape = 'u32[]', space=smem, size = 0x4, offset = 0x4, fixed_abs, tag = 'smem constant byte address 0x4 - core index']
  #allocation1 [shape = 'u32[144,128]{1,0:T(1,128)}', space=vmem, size = 0x12000, scoped, tag = 'internal scratch']
  #allocation2 [shape = 'f32[32,8]{1,0:T(8,128)}', space=vmem, size = 0x4000, scoped, tag = 'scratch operand']
  %s0 = inlined_call_operand.vmem [shape: bf16[2,16,16], index: 0, kind: input, shape index: {}]
  %s1 = inlined_call_operand.vmem [shape: bf16[16,8], index: 1, kind: input, shape index: {}]
  %s2 = inlined_call_operand.vmem [shape: f32[1,8], index: 2, kind: input, shape index: {}]
  %s3 = inlined_call_operand.vmem [shape: f32[3,3,8], index: 3, kind: input, shape index: {}]
  %s4 = inlined_call_operand.vmem [shape: f32[1,8], index: 4, kind: input, shape index: {}]
  %s5 = inlined_call_operand.vmem [shape: bf16[8,16], index: 5, kind: input, shape index: {}]
  %s6 = inlined_call_operand.vmem [shape: f32[1,16], index: 6, kind: input, shape index: {}]
  %s7 = inlined_call_operand.vmem [shape: bf16[16,16], index: 7, kind: input, shape index: {}]
  %s8 = inlined_call_operand.vmem [shape: bf16[2,16,16], index: 8, kind: output, shape index: {}]
  %s9 = sld [smem:[#allocation0]]
  $region65: #{_lambda_.20} parent=0
    _
  %s11 = ssub.s32 1, %s9
  %s12 = scalar_select 0, %s11, %s9
  loop: start=0, step=1, limit=4
  $region2: #{_lambda_.20} parent=0 // loop_pre_header
    _
  $region3: #{_lambda_.20} parent=0 // loop_header
    %s14 = sphi 0, %s18
    %p15 = scmp.ge.s32.totalorder %s14, 4
    %s24 = sphi 0, %s26
    %s27 = sphi 0, %s24
    %s28 = sphi 0, %s27
    %s44 = sphi 0, %s28
    %s48 = sphi 0, %s48
    %s50 = sphi 0, %s48
    %s51 = sphi 0, %s50
    %s65 = sphi 0, %s51
    %s69 = sphi 0, %s69
    %s71 = sphi 0, %s69
    %s72 = sphi 0, %s71
    %s86 = sphi 0, %s72
    %s90 = sphi 0, %s90
    %s92 = sphi 0, %s90
    %s93 = sphi 0, %s92
    %s107 = sphi 0, %s93
    %s111 = sphi 0, %s111
    %s113 = sphi 0, %s111
    %s114 = sphi 0, %s113
    %s128 = sphi 0, %s114
    %s132 = sphi 0, %s132
    %s134 = sphi 0, %s132
    %s135 = sphi 0, %s134
    %s149 = sphi 0, %s135
    %s153 = sphi 0, %s153
    %s155 = sphi 0, %s153
    %s156 = sphi 0, %s155
    %s170 = sphi 0, %s156
    %s174 = sphi 0, %s174
    %s176 = sphi 0, %s174
    %s177 = sphi 0, %s176
    %s191 = sphi 0, %s177
    %s197 = sphi 0, %s199
    %s200 = sphi 0, %s197
    %s201 = sphi 0, %s200
    %s217 = sphi 0, %s201
  $region4: #{_lambda_.20} parent=0 // loop_header_branch
    %17 = sbr.rel (%p15) target = $region8
  $region5: #{_lambda_.20} parent=0 // loop_body
    %s19 = ssub.s32 %s14, 1
    %s20 = ssub.s32 %s14, 2
    %s21 = sadd.s32 %s14, 1
    %s22 = ssub.s32 %s14, %s21
    %p23 = scmp.eq.s32.totalorder %s22, 0
    %s25 = sadd.s32 %s24, 1
    %s26 = scalar_select %p23, %s24, %s25
    %p29 = pneg %p23
    %p30 = scmp.eq.s32.totalorder %s14, 1
    %p31 = por %p29, %p30
    %p32 = scmp.ne.s32.totalorder %s24, %s27
    %p33 = scmp.eq.s32.totalorder %s14, 0
    %p34 = por %p32, %p33
    %p35 = scmp.ne.s32.totalorder %s24, %s27
    %p36 = scmp.eq.s32.totalorder %s19, 1
    %p37 = por %p35, %p36
    %p38 = scmp.ne.s32.totalorder %s27, %s28
    %p39 = scmp.eq.s32.totalorder %s19, 0
    %p40 = por %p38, %p39
    %p41 = scmp.ne.s32.totalorder %s27, %s28
    %p42 = scmp.eq.s32.totalorder %s20, 1
    %p43 = por %p41, %p42
    %p45 = scmp.ne.s32.totalorder %s28, %s44
    %p46 = scmp.eq.s32.totalorder %s20, 0
    %p47 = por %p45, %p46
    %s49 = sadd.s32 %s48, 1
    %p52 = scmp.eq.s32.totalorder %s14, 1
    %p53 = scmp.ne.s32.totalorder %s48, %s50
    %p54 = scmp.eq.s32.totalorder %s14, 0
    %p55 = por %p53, %p54
    %p56 = scmp.ne.s32.totalorder %s48, %s50
    %p57 = scmp.eq.s32.totalorder %s19, 1
    %p58 = por %p56, %p57
    %p59 = scmp.ne.s32.totalorder %s50, %s51
    %p60 = scmp.eq.s32.totalorder %s19, 0
    %p61 = por %p59, %p60
    %p62 = scmp.ne.s32.totalorder %s50, %s51
    %p63 = scmp.eq.s32.totalorder %s20, 1
    %p64 = por %p62, %p63
    %p66 = scmp.ne.s32.totalorder %s51, %s65
    %p67 = scmp.eq.s32.totalorder %s20, 0
    %p68 = por %p66, %p67
    %s70 = sadd.s32 %s69, 1
    %p73 = scmp.eq.s32.totalorder %s14, 1
    %p74 = scmp.ne.s32.totalorder %s69, %s71
    %p75 = scmp.eq.s32.totalorder %s14, 0
    %p76 = por %p74, %p75
    %p77 = scmp.ne.s32.totalorder %s69, %s71
    %p78 = scmp.eq.s32.totalorder %s19, 1
    %p79 = por %p77, %p78
    %p80 = scmp.ne.s32.totalorder %s71, %s72
    %p81 = scmp.eq.s32.totalorder %s19, 0
    %p82 = por %p80, %p81
    %p83 = scmp.ne.s32.totalorder %s71, %s72
    %p84 = scmp.eq.s32.totalorder %s20, 1
    %p85 = por %p83, %p84
    %p87 = scmp.ne.s32.totalorder %s72, %s86
    %p88 = scmp.eq.s32.totalorder %s20, 0
    %p89 = por %p87, %p88
    %s91 = sadd.s32 %s90, 1
    %p94 = scmp.eq.s32.totalorder %s14, 1
    %p95 = scmp.ne.s32.totalorder %s90, %s92
    %p96 = scmp.eq.s32.totalorder %s14, 0
    %p97 = por %p95, %p96
    %p98 = scmp.ne.s32.totalorder %s90, %s92
    %p99 = scmp.eq.s32.totalorder %s19, 1
    %p100 = por %p98, %p99
    %p101 = scmp.ne.s32.totalorder %s92, %s93
    %p102 = scmp.eq.s32.totalorder %s19, 0
    %p103 = por %p101, %p102
    %p104 = scmp.ne.s32.totalorder %s92, %s93
    %p105 = scmp.eq.s32.totalorder %s20, 1
    %p106 = por %p104, %p105
    %p108 = scmp.ne.s32.totalorder %s93, %s107
    %p109 = scmp.eq.s32.totalorder %s20, 0
    %p110 = por %p108, %p109
    %s112 = sadd.s32 %s111, 1
    %p115 = scmp.eq.s32.totalorder %s14, 1
    %p116 = scmp.ne.s32.totalorder %s111, %s113
    %p117 = scmp.eq.s32.totalorder %s14, 0
    %p118 = por %p116, %p117
    %p119 = scmp.ne.s32.totalorder %s111, %s113
    %p120 = scmp.eq.s32.totalorder %s19, 1
    %p121 = por %p119, %p120
    %p122 = scmp.ne.s32.totalorder %s113, %s114
    %p123 = scmp.eq.s32.totalorder %s19, 0
    %p124 = por %p122, %p123
    %p125 = scmp.ne.s32.totalorder %s113, %s114
    %p126 = scmp.eq.s32.totalorder %s20, 1
    %p127 = por %p125, %p126
    %p129 = scmp.ne.s32.totalorder %s114, %s128
    %p130 = scmp.eq.s32.totalorder %s20, 0
    %p131 = por %p129, %p130
    %s133 = sadd.s32 %s132, 1
    %p136 = scmp.eq.s32.totalorder %s14, 1
    %p137 = scmp.ne.s32.totalorder %s132, %s134
    %p138 = scmp.eq.s32.totalorder %s14, 0
    %p139 = por %p137, %p138
    %p140 = scmp.ne.s32.totalorder %s132, %s134
    %p141 = scmp.eq.s32.totalorder %s19, 1
    %p142 = por %p140, %p141
    %p143 = scmp.ne.s32.totalorder %s134, %s135
    %p144 = scmp.eq.s32.totalorder %s19, 0
    %p145 = por %p143, %p144
    %p146 = scmp.ne.s32.totalorder %s134, %s135
    %p147 = scmp.eq.s32.totalorder %s20, 1
    %p148 = por %p146, %p147
    %p150 = scmp.ne.s32.totalorder %s135, %s149
    %p151 = scmp.eq.s32.totalorder %s20, 0
    %p152 = por %p150, %p151
    %s154 = sadd.s32 %s153, 1
    %p157 = scmp.eq.s32.totalorder %s14, 1
    %p158 = scmp.ne.s32.totalorder %s153, %s155
    %p159 = scmp.eq.s32.totalorder %s14, 0
    %p160 = por %p158, %p159
    %p161 = scmp.ne.s32.totalorder %s153, %s155
    %p162 = scmp.eq.s32.totalorder %s19, 1
    %p163 = por %p161, %p162
    %p164 = scmp.ne.s32.totalorder %s155, %s156
    %p165 = scmp.eq.s32.totalorder %s19, 0
    %p166 = por %p164, %p165
    %p167 = scmp.ne.s32.totalorder %s155, %s156
    %p168 = scmp.eq.s32.totalorder %s20, 1
    %p169 = por %p167, %p168
    %p171 = scmp.ne.s32.totalorder %s156, %s170
    %p172 = scmp.eq.s32.totalorder %s20, 0
    %p173 = por %p171, %p172
    %s175 = sadd.s32 %s174, 1
    %p178 = scmp.eq.s32.totalorder %s14, 1
    %p179 = scmp.ne.s32.totalorder %s174, %s176
    %p180 = scmp.eq.s32.totalorder %s14, 0
    %p181 = por %p179, %p180
    %p182 = scmp.ne.s32.totalorder %s174, %s176
    %p183 = scmp.eq.s32.totalorder %s19, 1
    %p184 = por %p182, %p183
    %p185 = scmp.ne.s32.totalorder %s176, %s177
    %p186 = scmp.eq.s32.totalorder %s19, 0
    %p187 = por %p185, %p186
    %p188 = scmp.ne.s32.totalorder %s176, %s177
    %p189 = scmp.eq.s32.totalorder %s20, 1
    %p190 = por %p188, %p189
    %p192 = scmp.ne.s32.totalorder %s177, %s191
    %p193 = scmp.eq.s32.totalorder %s20, 0
    %p194 = por %p192, %p193
    %s195 = ssub.s32 %s14, %s21
    %p196 = scmp.eq.s32.totalorder %s195, 0
    %s198 = sadd.s32 %s197, 1
    %s199 = scalar_select %p196, %s197, %s198
    %p202 = pneg %p196
    %p203 = scmp.eq.s32.totalorder %s14, 1
    %p204 = por %p202, %p203
    %p205 = scmp.ne.s32.totalorder %s197, %s200
    %p206 = scmp.eq.s32.totalorder %s14, 0
    %p207 = por %p205, %p206
    %p208 = scmp.ne.s32.totalorder %s197, %s200
    %p209 = scmp.eq.s32.totalorder %s19, 1
    %p210 = por %p208, %p209
    %p211 = scmp.ne.s32.totalorder %s200, %s201
    %p212 = scmp.eq.s32.totalorder %s19, 0
    %p213 = por %p211, %p212
    %p214 = scmp.ne.s32.totalorder %s200, %s201
    %p215 = scmp.eq.s32.totalorder %s20, 1
    %p216 = por %p214, %p215
    %p218 = scmp.ne.s32.totalorder %s201, %s217
    %p219 = scmp.eq.s32.totalorder %s20, 0
    %p220 = por %p218, %p219
    %p221 = scmp.le.s32.totalorder 1, %s14
    %p222 = scmp.lt.s32.totalorder %s14, 3
    %p223 = pnand %p221, %p222
    %p224 = pneg %p223
    // Predicated region
    $region9: #{_lambda_.20} parent=5 // pred_check
      _
    $region10: #{_lambda_.20} parent=5 // pred_check_branch
      %226 = sbr.rel (%p223) target = $region12
    $region11: #{_lambda_.20} parent=5 // pred_region
      %s227 = ssub.s32 %s14, 1
      // Predicated region
      $region13: #{_lambda_.20} parent=11 // pred_check
        %p228 = pneg %p61
      $region14: #{_lambda_.20} parent=11 // pred_check_branch
        %230 = sbr.rel (%p228) target = $region16
      $region15: #{_lambda_.20} parent=11 // pred_region
        _
      $region16: #{_lambda_.20} parent=11 // pred_fallthru
        _
      // Predicated region
      $region17: #{_lambda_.20} parent=11 // pred_check
        %p231 = pneg %p82
      $region18: #{_lambda_.20} parent=11 // pred_check_branch
        %233 = sbr.rel (%p231) target = $region20
      $region19: #{_lambda_.20} parent=11 // pred_region
        _
      $region20: #{_lambda_.20} parent=11 // pred_fallthru
        _
      // Predicated region
      $region21: #{_lambda_.20} parent=11 // pred_check
        %p234 = pneg %p103
      $region22: #{_lambda_.20} parent=11 // pred_check_branch
        %236 = sbr.rel (%p234) target = $region24
      $region23: #{_lambda_.20} parent=11 // pred_region
        _
      $region24: #{_lambda_.20} parent=11 // pred_fallthru
        _
      // Predicated region
      $region25: #{_lambda_.20} parent=11 // pred_check
        %p237 = pneg %p124
      $region26: #{_lambda_.20} parent=11 // pred_check_branch
        %239 = sbr.rel (%p237) target = $region28
      $region27: #{_lambda_.20} parent=11 // pred_region
        _
      $region28: #{_lambda_.20} parent=11 // pred_fallthru
        _
      // Predicated region
      $region29: #{_lambda_.20} parent=11 // pred_check
        %p240 = pneg %p145
      $region30: #{_lambda_.20} parent=11 // pred_check_branch
        %242 = sbr.rel (%p240) target = $region32
      $region31: #{_lambda_.20} parent=11 // pred_region
        _
      $region32: #{_lambda_.20} parent=11 // pred_fallthru
        _
      // Predicated region
      $region33: #{_lambda_.20} parent=11 // pred_check
        %p243 = pneg %p166
      $region34: #{_lambda_.20} parent=11 // pred_check_branch
        %245 = sbr.rel (%p243) target = $region36
      $region35: #{_lambda_.20} parent=11 // pred_region
        _
      $region36: #{_lambda_.20} parent=11 // pred_fallthru
        _
      // Predicated region
      $region37: #{_lambda_.20} parent=11 // pred_check
        %p246 = pneg %p187
      $region38: #{_lambda_.20} parent=11 // pred_check_branch
        %248 = sbr.rel (%p246) target = $region40
      $region39: #{_lambda_.20} parent=11 // pred_region
        _
      $region40: #{_lambda_.20} parent=11 // pred_fallthru
        _
    $region12: #{_lambda_.20} parent=5 // pred_fallthru
      _
    %p249 = scmp.lt.s32.totalorder %s14, 2
    // Predicated region
    $region41: #{_lambda_.20} parent=5 // pred_check
      %p250 = pneg %p249
    $region42: #{_lambda_.20} parent=5 // pred_check_branch
      %252 = sbr.rel (%p250) target = $region44
    $region43: #{_lambda_.20} parent=5 // pred_region
      // Predicated region
      $region45: #{_lambda_.20} parent=43 // pred_check
        %p253 = pneg %p34
      $region46: #{_lambda_.20} parent=43 // pred_check_branch
        %255 = sbr.rel (%p253) target = $region48
      $region47: #{_lambda_.20} parent=43 // pred_region
        %p256 = scmp.lt.s32.totalorder %s14, 1
        %s257 = scalar_select %p256, %s14, 1
        %s258 = smul.addr %s257, 2
        %s259 = smul.addr %s258, 4
        %s260 = scalar_lea.vmem %s0, %s259
      $region48: #{_lambda_.20} parent=43 // pred_fallthru
        _
    $region44: #{_lambda_.20} parent=5 // pred_fallthru
      _
    %p261 = scmp.le.s32.totalorder 1, %s14
    %p262 = scmp.lt.s32.totalorder %s14, 3
    %p263 = pnand %p261, %p262
    %p264 = pneg %p263
    // Predicated region
    $region49: #{_lambda_.20} parent=5 // pred_check
      _
    $region50: #{_lambda_.20} parent=5 // pred_check_branch
      %266 = sbr.rel (%p263) target = $region52
    $region51: #{_lambda_.20} parent=5 // pred_region
      %s267 = ssub.s32 %s14, 1
      %p268 = scmp.lt.s32.totalorder %s19, 1
      %s269 = scalar_select %p268, %s19, 1
      %s270 = smul.addr %s269, 2
      %s271 = smul.addr %s270, 4
      %s272 = scalar_lea.vmem %s0, %s271
      %p273 = pneg %p40
      %p274 = pneg %p37
      %p275 = pneg %p61
      %p276 = pneg %p58
      %p277 = pneg %p82
      %p278 = pneg %p79
      %p279 = pneg %p103
      %p280 = pneg %p100
      %p281 = pneg %p124
      %p282 = pneg %p121
      %p283 = pneg %p145
      %p284 = pneg %p142
      %p285 = pneg %p166
      %p286 = pneg %p163
      %p287 = pneg %p187
      %p288 = pneg %p184
      %p289 = pneg %p213
      %p290 = pneg %p210
      %p291 = scmp.lt.s32.totalorder %s19, 1
      %s292 = scalar_select %p291, %s19, 1
      %s293 = smul.addr %s292, 2
      %s294 = smul.addr %s293, 4
      %s295 = scalar_lea.vmem %s8, %s294
      %p296 = scmp.lt.s32.totalorder %s19, 1
      %s297 = scalar_select %p296, %s19, 1
      %s298 = smul.addr %s297, 2
      %s299 = smul.addr %s298, 4
      %s300 = scalar_lea.vmem %s0, %s299
      %p301 = scmp.lt.s32.totalorder %s19, 1
      %s302 = scalar_select %p301, %s19, 1
      %s303 = smul.addr %s302, 2
      %s304 = smul.addr %s303, 4
      %s305 = scalar_lea.vmem %s8, %s304
      %v307 = vld [vmem:[%s300] sm:$0xf]
      %v308 = vld [vmem:[%s300 + $0x4] sm:$0xf]
      %v309 = vld [vmem:[%s1] sm:$0xf]
      %v310 = vld [vmem:[%s1 + $0x4] sm:$0xf]
      %v311 = vld [vmem:[%s2] sm:$0x1]
      %v313 = vlaneseq
      %v314 = vshrl.u32 %v313, 7
      %v315 = vsub.s32 0, %v314
      %v316 = vrot.slane %v311, %v315
      %v320 = vunpack.c.l.b16 %v307
      %v321 = vunpack.c.l.b16 %v308
      %v322 = vpack.c.b16 %v321, %v320
      %v325 = vunpack.c.l.b16 %v309
      %v326 = vunpack.c.l.b16 %v310
      %v327 = vpack.c.b16 %v326, %v325
      %vm329 = vcmask 130048
      %v331 = vsel %vm329, %v322, 0
      %333 = vmatprep.subr.bf16.mxu0 0
      %334 = vmatpush1.bf16.msra.mxu0 %v327
      %335 = vmatprep.subr.bf16.mxu0 0
      %336 = vmatpush1.bf16.msra.mxu0 0
      %337 = vmatprep.subr.bf16.mxu0 0
      %338 = vmatpush1.bf16.msra.mxu0 0
      %339 = vmatprep.subr.bf16.mxu0 0
      %340 = vmatpush1.bf16.msra.mxu0 0
      %341 = vmatprep.subr.bf16.mxu0 0
      %342 = vmatpush1.bf16.msra.mxu0 0
      %343 = vmatprep.subr.bf16.mxu0 0
      %344 = vmatpush1.bf16.msra.mxu0 0
      %345 = vmatprep.subr.bf16.mxu0 0
      %346 = vmatpush1.bf16.msra.mxu0 0
      %347 = vmatprep.subr.bf16.mxu0 0
      %348 = vmatpush1.bf16.msra.mxu0 0
      %349 = vmatprep.subr.bf16.mxu0 0
      %350 = vmatpush1.bf16.msra.mxu0 0
      %351 = vmatprep.subr.bf16.mxu0 0
      %352 = vmatpush1.bf16.msra.mxu0 0
      %353 = vmatprep.subr.bf16.mxu0 0
      %354 = vmatpush1.bf16.msra.mxu0 0
      %355 = vmatprep.subr.bf16.mxu0 0
      %356 = vmatpush1.bf16.msra.mxu0 0
      %357 = vmatprep.subr.bf16.mxu0 0
      %358 = vmatpush1.bf16.msra.mxu0 0
      %359 = vmatprep.subr.bf16.mxu0 0
      %360 = vmatpush1.bf16.msra.mxu0 0
      %361 = vmatprep.subr.bf16.mxu0 0
      %362 = vmatpush1.bf16.msra.mxu0 0
      %363 = vmatprep.subr.bf16.mxu0 0
      %364 = vmatpush1.bf16.msra.mxu0 0
      %365 = vmatprep.mubr.bf16.mxu0 0
      %366 = vmatmul.mubr.bf16.gmra.mrb[0].mxu0 %v331
      %v367 = vpop.f32.mrb[0].mxu0
      %v368 = vadd.f32 %v316, %v367
      %v369 = vpop.f32.mrb[0].mxu0
      %v370 = vpop.f32.mrb[0].mxu0
      %v371 = vadd.f32 %v316, %v370
      %v372 = vpop.f32.mrb[0].mxu0
      %373 = vdwg.mxu0
      %v374 = vmax.f32 %v368, 0.0
      %v375 = vmax.f32 %v371, 0.0
      %vm376 = vcmask 64512
      %377 = vst.msk [vmem:[#allocation2] sm:$0xff] %vm376, 0.0
      %378 = vst.msk [vmem:[#allocation2 + $0x18] sm:$0xff] %vm376, 0.0
      %379 = vst.msk [vmem:[#allocation2 + $0x8] sm:$0xff] %vm376, %v374
      %380 = vst.msk [vmem:[#allocation2 + $0x10] sm:$0xff] %vm376, %v375
      %v381 = vlaneseq
      %v382 = vshrl.u32 %v381, 7
      %v383 = vadd.s32 %v382, 8
      %vm384 = vcmp.lt.s32.totalorder %v382, 0
      %v385 = vsub.s32 0, %v382
      %v386 = vsel %vm384, %v385, %v382
      %v387 = vshrl.u32 %v386, 2
      %v388 = vand.u32 %v386, 3
      %v389 = vsub.s32 0, %v388
      %v390 = vsel %vm384, %v389, %v388
      %vm391 = vcmp.lt.s32.totalorder %v383, 0
      %v392 = vsub.s32 0, %v383
      %v393 = vsel %vm391, %v392, %v383
      %v394 = vshrl.u32 %v393, 2
      %v395 = vand.u32 %v393, 3
      %v396 = vsub.s32 0, %v395
      %v397 = vsel %vm391, %v396, %v395
      %vm398 = vcmp.ne.s32.totalorder %v390, 0
      %vm399 = vcmp.ne.s32.totalorder %v397, 0
      %vm400 = vcmp.lt.s32.totalorder %v390, 0
      %vm401 = vcmp.lt.s32.totalorder %v397, 0
      %vm402 = vmand %vm400, %vm398
      %vm403 = vmand %vm401, %vm399
      %v404 = vadd.s32 %v390, 4
      %v405 = vadd.s32 %v397, 4
      %v406 = vsel %vm402, %v404, %v390
      %v407 = vsel %vm403, %v405, %v397
      %vm408 = vcmp.ne.s32.totalorder %v406, 0
      %vm409 = vcmp.ne.s32.totalorder %v407, 0
      %v410 = vsel %vm408, 1, 0
      %v411 = vsel %vm409, 1, 0
      %vm412 = vcmp.eq.s32.totalorder %v410, 1
      %vm413 = vcmp.eq.s32.totalorder %v411, 1
      %v414 = vsel %vm412, 1, 0
      %v415 = vsel %vm413, 1, 0
      %v416 = vcvt.s32.f32 %v414
      %v417 = vcvt.s32.f32 %v415
      %vm418 = vcmp.ne.s32.totalorder %v406, 3
      %vm419 = vcmp.ne.s32.totalorder %v407, 3
      %v420 = vsel %vm418, 1, 0
      %v421 = vsel %vm419, 1, 0
      %vm422 = vcmp.eq.s32.totalorder %v420, 1
      %vm423 = vcmp.eq.s32.totalorder %v421, 1
      %v424 = vsel %vm422, 1, 0
      %v425 = vsel %vm423, 1, 0
      %v426 = vcvt.s32.f32 %v424
      %v427 = vcvt.s32.f32 %v425
      %v428 = vld [vmem:[#allocation2 + $0x3] sm:$0xff]
      %v429 = vld [vmem:[#allocation2 + $0xb] sm:$0xff]
      %v430 = vld [vmem:[%s3] sm:$0x1]
      %v431 = vlaneseq
      %v432 = vshrl.u32 %v431, 7
      %v433 = vsub.s32 0, %v432
      %v434 = vrot.slane %v430, %v433
      %v435 = vmul.f32 %v428, %v434
      %v436 = vmul.f32 %v429, %v434
      %v437 = vadd.f32 %v435, 0.0
      %v438 = vadd.f32 %v436, 0.0
      %v439 = vld [vmem:[#allocation2 + $0x4] sm:$0xff]
      %v440 = vld [vmem:[#allocation2 + $0xc] sm:$0xff]
      %v441 = vld [vmem:[%s3 + $0x1] sm:$0x1]
      %v442 = vlaneseq
      %v443 = vshrl.u32 %v442, 7
      %v444 = vsub.s32 0, %v443
      %v445 = vrot.slane %v441, %v444
      %v446 = vmul.f32 %v439, %v445
      %v447 = vmul.f32 %v440, %v445
      %v448 = vadd.f32 %v446, 0.0
      %v449 = vadd.f32 %v447, 0.0
      %v450 = vld [vmem:[#allocation2 + $0x5] sm:$0xff]
      %v451 = vld [vmem:[#allocation2 + $0xd] sm:$0xff]
      %v452 = vld [vmem:[%s3 + $0x2] sm:$0x1]
      %v453 = vlaneseq
      %v454 = vshrl.u32 %v453, 7
      %v455 = vsub.s32 0, %v454
      %v456 = vrot.slane %v452, %v455
      %v457 = vmul.f32 %v450, %v456
      %v458 = vmul.f32 %v451, %v456
      %v459 = vadd.f32 %v457, 0.0
      %v460 = vadd.f32 %v458, 0.0
      %v461 = vld [vmem:[#allocation2 + $0x7] sm:$0xff]
      %v462 = vld [vmem:[#allocation2 + $0xf] sm:$0xff]
      %s463 = scalar_lea.vmem %s3, 4
      %v464 = vld [vmem:[%s463] sm:$0x1]
      %v465 = vlaneseq
      %v466 = vshrl.u32 %v465, 7
      %v467 = vsub.s32 0, %v466
      %v468 = vrot.slane %v464, %v467
      %v469 = vmul.f32 %v461, %v468
      %v470 = vmul.f32 %v462, %v468
      %v471 = vadd.f32 %v437, %v469
      %v472 = vadd.f32 %v438, %v470
      %v473 = vld [vmem:[#allocation2 + $0x8] sm:$0xff]
      %v474 = vld [vmem:[#allocation2 + $0x10] sm:$0xff]
      %v475 = vld [vmem:[%s463 + $0x1] sm:$0x1]
      %v476 = vlaneseq
      %v477 = vshrl.u32 %v476, 7
      %v478 = vsub.s32 0, %v477
      %v479 = vrot.slane %v475, %v478
      %v480 = vmul.f32 %v473, %v479
      %v481 = vmul.f32 %v474, %v479
      %v482 = vadd.f32 %v448, %v480
      %v483 = vadd.f32 %v449, %v481
      %v484 = vld [vmem:[#allocation2 + $0x9] sm:$0xff]
      %v485 = vld [vmem:[#allocation2 + $0x11] sm:$0xff]
      %v486 = vld [vmem:[%s463 + $0x2] sm:$0x1]
      %v487 = vlaneseq
      %v488 = vshrl.u32 %v487, 7
      %v489 = vsub.s32 0, %v488
      %v490 = vrot.slane %v486, %v489
      %v491 = vmul.f32 %v484, %v490
      %v492 = vmul.f32 %v485, %v490
      %v493 = vadd.f32 %v459, %v491
      %v494 = vadd.f32 %v460, %v492
      %v495 = vld [vmem:[#allocation2 + $0x13] sm:$0xff]
      %s496 = scalar_lea.vmem %s3, 8
      %v497 = vld [vmem:[%s496] sm:$0x1]
      %v498 = vlaneseq
      %v499 = vshrl.u32 %v498, 7
      %v500 = vsub.s32 0, %v499
      %v501 = vrot.slane %v497, %v500
      %v502 = vmul.f32 %v429, %v501
      %v503 = vmul.f32 %v495, %v501
      %v504 = vadd.f32 %v471, %v502
      %v505 = vadd.f32 %v472, %v503
      %v506 = vld [vmem:[#allocation2 + $0x14] sm:$0xff]
      %v507 = vld [vmem:[%s496 + $0x1] sm:$0x1]
      %v508 = vlaneseq
      %v509 = vshrl.u32 %v508, 7
      %v510 = vsub.s32 0, %v509
      %v511 = vrot.slane %v507, %v510
      %v512 = vmul.f32 %v440, %v511
      %v513 = vmul.f32 %v506, %v511
      %v514 = vadd.f32 %v482, %v512
      %v515 = vadd.f32 %v483, %v513
      %v516 = vld [vmem:[#allocation2 + $0x15] sm:$0xff]
      %v517 = vld [vmem:[%s496 + $0x2] sm:$0x1]
      %v518 = vlaneseq
      %v519 = vshrl.u32 %v518, 7
      %v520 = vsub.s32 0, %v519
      %v521 = vrot.slane %v517, %v520
      %v522 = vmul.f32 %v451, %v521
      %v523 = vmul.f32 %v516, %v521
      %v524 = vadd.f32 %v493, %v522
      %v525 = vadd.f32 %v494, %v523
      %v526 = vmul.f32 %v504, %v416
      %v527 = vmul.f32 %v505, %v417
      %v528 = vadd.f32 %v526, %v514
      %v529 = vadd.f32 %v527, %v515
      %v530 = vmul.f32 %v524, %v426
      %v531 = vmul.f32 %v525, %v427
      %v532 = vadd.f32 %v528, %v530
      %v533 = vadd.f32 %v529, %v531
      %v534 = vld [vmem:[%s4] sm:$0x1]
      %v536 = vlaneseq
      %v537 = vshrl.u32 %v536, 7
      %v538 = vsub.s32 0, %v537
      %v539 = vrot.slane %v534, %v538
      %v541 = vadd.f32 %v532, %v539
      %v542 = vadd.f32 %v533, %v539
      %v543 = vpack.c.bf16 %v542, %v541
      %v544 = vld [vmem:[%s5] sm:$0xf]
      %v545 = vld [vmem:[%s6] sm:$0x1]
      %v547 = vlaneseq
      %v548 = vshrl.u32 %v547, 7
      %v549 = vsub.s32 0, %v548
      %v550 = vrot.slane %v545, %v549
      %v553 = vsel %vm376, %v543, 0
      %vm555 = vcmask 1043456
      %v557 = vsel %vm555, %v544, 0
      %559 = vmatprep.subr.bf16.mxu0 0
      %560 = vmatpush1.bf16.msra.mxu0 %v557
      %561 = vmatprep.subr.bf16.mxu0 0
      %562 = vmatpush1.bf16.msra.mxu0 0
      %563 = vmatprep.subr.bf16.mxu0 0
      %564 = vmatpush1.bf16.msra.mxu0 0
      %565 = vmatprep.subr.bf16.mxu0 0
      %566 = vmatpush1.bf16.msra.mxu0 0
      %567 = vmatprep.subr.bf16.mxu0 0
      %568 = vmatpush1.bf16.msra.mxu0 0
      %569 = vmatprep.subr.bf16.mxu0 0
      %570 = vmatpush1.bf16.msra.mxu0 0
      %571 = vmatprep.subr.bf16.mxu0 0
      %572 = vmatpush1.bf16.msra.mxu0 0
      %573 = vmatprep.subr.bf16.mxu0 0
      %574 = vmatpush1.bf16.msra.mxu0 0
      %575 = vmatprep.subr.bf16.mxu0 0
      %576 = vmatpush1.bf16.msra.mxu0 0
      %577 = vmatprep.subr.bf16.mxu0 0
      %578 = vmatpush1.bf16.msra.mxu0 0
      %579 = vmatprep.subr.bf16.mxu0 0
      %580 = vmatpush1.bf16.msra.mxu0 0
      %581 = vmatprep.subr.bf16.mxu0 0
      %582 = vmatpush1.bf16.msra.mxu0 0
      %583 = vmatprep.subr.bf16.mxu0 0
      %584 = vmatpush1.bf16.msra.mxu0 0
      %585 = vmatprep.subr.bf16.mxu0 0
      %586 = vmatpush1.bf16.msra.mxu0 0
      %587 = vmatprep.subr.bf16.mxu0 0
      %588 = vmatpush1.bf16.msra.mxu0 0
      %589 = vmatprep.subr.bf16.mxu0 0
      %590 = vmatpush1.bf16.msra.mxu0 0
      %591 = vmatprep.mubr.bf16.mxu0 0
      %592 = vmatmul.mubr.bf16.gmra.mrb[0].mxu0 %v553
      %v593 = vpop.f32.mrb[0].mxu0
      %v594 = vadd.f32 %v550, %v593
      %v595 = vpop.f32.mrb[0].mxu0
      %v596 = vpop.f32.mrb[0].mxu0
      %v597 = vadd.f32 %v550, %v596
      %v598 = vpop.f32.mrb[0].mxu0
      %599 = vdwg.mxu0
      %v600 = vmax.f32 %v594, 0.0
      %v601 = vmax.f32 %v597, 0.0
      %v602 = vld [vmem:[%s7] sm:$0xf]
      %v603 = vld [vmem:[%s7 + $0x4] sm:$0xf]
      %v606 = vunpack.c.l.b16 %v602
      %v607 = vunpack.c.l.b16 %v603
      %v608 = vpack.c.b16 %v607, %v606
      %610 = vmatprep.subr.bf16.mxu0 0
      %611 = vmatpush1.bf16.msra.mxu0 %v608
      %612 = vmatprep.subr.bf16.mxu0 0
      %613 = vmatpush1.bf16.msra.mxu0 0
      %614 = vmatprep.subr.bf16.mxu0 0
      %615 = vmatpush1.bf16.msra.mxu0 0
      %616 = vmatprep.subr.bf16.mxu0 0
      %617 = vmatpush1.bf16.msra.mxu0 0
      %618 = vmatprep.subr.bf16.mxu0 0
      %619 = vmatpush1.bf16.msra.mxu0 0
      %620 = vmatprep.subr.bf16.mxu0 0
      %621 = vmatpush1.bf16.msra.mxu0 0
      %622 = vmatprep.subr.bf16.mxu0 0
      %623 = vmatpush1.bf16.msra.mxu0 0
      %624 = vmatprep.subr.bf16.mxu0 0
      %625 = vmatpush1.bf16.msra.mxu0 0
      %626 = vmatprep.subr.bf16.mxu0 0
      %627 = vmatpush1.bf16.msra.mxu0 0
      %628 = vmatprep.subr.bf16.mxu0 0
      %629 = vmatpush1.bf16.msra.mxu0 0
      %630 = vmatprep.subr.bf16.mxu0 0
      %631 = vmatpush1.bf16.msra.mxu0 0
      %632 = vmatprep.subr.bf16.mxu0 0
      %633 = vmatpush1.bf16.msra.mxu0 0
      %634 = vmatprep.subr.bf16.mxu0 0
      %635 = vmatpush1.bf16.msra.mxu0 0
      %636 = vmatprep.subr.bf16.mxu0 0
      %637 = vmatpush1.bf16.msra.mxu0 0
      %638 = vmatprep.subr.bf16.mxu0 0
      %639 = vmatpush1.bf16.msra.mxu0 0
      %640 = vmatprep.subr.bf16.mxu0 0
      %641 = vmatpush1.bf16.msra.mxu0 0
      %642 = vmatprep.mubr.bf16.mxu0 0
      %643 = vmatmul.mubr.bf16.gmra.mrb[0].mxu0 %v331
      %v644 = vpop.f32.mrb[0].mxu0
      %v645 = vadd.f32 0.0, %v644
      %v646 = vpop.f32.mrb[0].mxu0
      %v647 = vpop.f32.mrb[0].mxu0
      %v648 = vadd.f32 0.0, %v647
      %v649 = vpop.f32.mrb[0].mxu0
      %650 = vdwg.mxu0
      %v651 = vadd.f32 %v600, %v645
      %v652 = vadd.f32 %v601, %v648
      %v653 = vpack.c.bf16 %v652, %v651
      %v655 = vunpack.c.l.b16 %v653
      %v656 = vunpack.c.h.b16 %v653
      %v657 = vpack.c.b16 %v655, %v655
      %v658 = vpack.c.b16 %v656, %v656
      %vm661 = vcmask 125952
      %662 = vst.msk [vmem:[%s305] sm:$0xf] %vm661, %v657
      %663 = vst.msk [vmem:[%s305 + $0x4] sm:$0xf] %vm661, %v658
      %p664 = scmp.lt.s32.totalorder %s19, 1
      %s665 = scalar_select %p664, %s19, 1
      %s666 = smul.addr %s665, 2
      %s667 = smul.addr %s666, 4
      %s668 = scalar_lea.vmem %s8, %s667
      // Predicated region
      $region53: #{_lambda_.20} parent=51 // pred_check
        %p669 = pneg %p210
      $region54: #{_lambda_.20} parent=51 // pred_check_branch
        %671 = sbr.rel (%p669) target = $region56
      $region55: #{_lambda_.20} parent=51 // pred_region
        _
      $region56: #{_lambda_.20} parent=51 // pred_fallthru
        _
    $region52: #{_lambda_.20} parent=5 // pred_fallthru
      _
    %p672 = scmp.le.s32.totalorder 2, %s14
    // Predicated region
    $region57: #{_lambda_.20} parent=5 // pred_check
      %p673 = pneg %p672
    $region58: #{_lambda_.20} parent=5 // pred_check_branch
      %675 = sbr.rel (%p673) target = $region60
    $region59: #{_lambda_.20} parent=5 // pred_region
      %s676 = ssub.s32 %s14, 2
      // Predicated region
      $region61: #{_lambda_.20} parent=59 // pred_check
        %p677 = pneg %p216
      $region62: #{_lambda_.20} parent=59 // pred_check_branch
        %679 = sbr.rel (%p677) target = $region64
      $region63: #{_lambda_.20} parent=59 // pred_region
        %p680 = scmp.lt.s32.totalorder %s20, 1
        %s681 = scalar_select %p680, %s20, 1
        %s682 = smul.addr %s681, 2
        %s683 = smul.addr %s682, 4
        %s684 = scalar_lea.vmem %s8, %s683
      $region64: #{_lambda_.20} parent=59 // pred_fallthru
        _
    $region60: #{_lambda_.20} parent=5 // pred_fallthru
      _
  $region6: #{_lambda_.20} parent=0 // loop_footer
    %s18 = sadd.s32 1, %s14
  $region7: #{_lambda_.20} parent=0 // loop_footer_branch
    %13 = sbr.rel target = $region3
  $region8: #{_lambda_.20} parent=0 // loop_exit
    _

// kernel: _lambda_.18
$region0: #{_lambda_.18}
  #allocation0 [shape = 'u32[]', space=smem, size = 0x4, offset = 0x4, fixed_abs, tag = 'smem constant byte address 0x4 - core index']
  #allocation1 [shape = 'u32[144,128]{1,0:T(1,128)}', space=vmem, size = 0x12000, scoped, tag = 'internal scratch']
  %s0 = inlined_call_operand.vmem [shape: bf16[2,4,5,5,8], index: 0, kind: input, shape index: {}]
  %s1 = inlined_call_operand.vmem [shape: bf16[2,4,5,5,8], index: 1, kind: input, shape index: {}]
  %s2 = inlined_call_operand.vmem [shape: f32[3,3,8], index: 2, kind: input, shape index: {}]
  %s3 = inlined_call_operand.vmem [shape: f32[1,8], index: 3, kind: input, shape index: {}]
  %s4 = inlined_call_operand.vmem [shape: f32[3,3,8], index: 4, kind: input, shape index: {}]
  %s5 = inlined_call_operand.vmem [shape: f32[1,8], index: 5, kind: input, shape index: {}]
  %s6 = inlined_call_operand.vmem [shape: bf16[2,4,4,8], index: 6, kind: output, shape index: {0}]
  %s7 = inlined_call_operand.vmem [shape: bf16[2,4,4,8], index: 7, kind: output, shape index: {1}]
  %8 = xla_tuple %s6, %s7
  %s9 = sld [smem:[#allocation0]]
  $region65: #{_lambda_.18} parent=0
    _
  %s11 = ssub.s32 1, %s9
  %s12 = scalar_select 0, %s11, %s9
  loop: start=0, step=1, limit=4
  $region2: #{_lambda_.18} parent=0 // loop_pre_header
    _
  $region3: #{_lambda_.18} parent=0 // loop_header
    %s14 = sphi 0, %s18
    %p15 = scmp.ge.s32.totalorder %s14, 4
    %s24 = sphi 0, %s26
    %s27 = sphi 0, %s24
    %s28 = sphi 0, %s27
    %s44 = sphi 0, %s28
    %s50 = sphi 0, %s52
    %s53 = sphi 0, %s50
    %s54 = sphi 0, %s53
    %s70 = sphi 0, %s54
    %s74 = sphi 0, %s74
    %s76 = sphi 0, %s74
    %s77 = sphi 0, %s76
    %s91 = sphi 0, %s77
    %s95 = sphi 0, %s95
    %s97 = sphi 0, %s95
    %s98 = sphi 0, %s97
    %s112 = sphi 0, %s98
    %s116 = sphi 0, %s116
    %s118 = sphi 0, %s116
    %s119 = sphi 0, %s118
    %s133 = sphi 0, %s119
    %s137 = sphi 0, %s137
    %s139 = sphi 0, %s137
    %s140 = sphi 0, %s139
    %s154 = sphi 0, %s140
    %s160 = sphi 0, %s162
    %s163 = sphi 0, %s160
    %s164 = sphi 0, %s163
    %s180 = sphi 0, %s164
    %s186 = sphi 0, %s188
    %s189 = sphi 0, %s186
    %s190 = sphi 0, %s189
    %s206 = sphi 0, %s190
  $region4: #{_lambda_.18} parent=0 // loop_header_branch
    %17 = sbr.rel (%p15) target = $region8
  $region5: #{_lambda_.18} parent=0 // loop_body
    %s19 = ssub.s32 %s14, 1
    %s20 = ssub.s32 %s14, 2
    %s21 = sadd.s32 %s14, 1
    %s22 = ssub.s32 %s14, %s21
    %p23 = scmp.eq.s32.totalorder %s22, 0
    %s25 = sadd.s32 %s24, 1
    %s26 = scalar_select %p23, %s24, %s25
    %p29 = pneg %p23
    %p30 = scmp.eq.s32.totalorder %s14, 1
    %p31 = por %p29, %p30
    %p32 = scmp.ne.s32.totalorder %s24, %s27
    %p33 = scmp.eq.s32.totalorder %s14, 0
    %p34 = por %p32, %p33
    %p35 = scmp.ne.s32.totalorder %s24, %s27
    %p36 = scmp.eq.s32.totalorder %s19, 1
    %p37 = por %p35, %p36
    %p38 = scmp.ne.s32.totalorder %s27, %s28
    %p39 = scmp.eq.s32.totalorder %s19, 0
    %p40 = por %p38, %p39
    %p41 = scmp.ne.s32.totalorder %s27, %s28
    %p42 = scmp.eq.s32.totalorder %s20, 1
    %p43 = por %p41, %p42
    %p45 = scmp.ne.s32.totalorder %s28, %s44
    %p46 = scmp.eq.s32.totalorder %s20, 0
    %p47 = por %p45, %p46
    %s48 = ssub.s32 %s14, %s21
    %p49 = scmp.eq.s32.totalorder %s48, 0
    %s51 = sadd.s32 %s50, 1
    %s52 = scalar_select %p49, %s50, %s51
    %p55 = pneg %p49
    %p56 = scmp.eq.s32.totalorder %s14, 1
    %p57 = por %p55, %p56
    %p58 = scmp.ne.s32.totalorder %s50, %s53
    %p59 = scmp.eq.s32.totalorder %s14, 0
    %p60 = por %p58, %p59
    %p61 = scmp.ne.s32.totalorder %s50, %s53
    %p62 = scmp.eq.s32.totalorder %s19, 1
    %p63 = por %p61, %p62
    %p64 = scmp.ne.s32.totalorder %s53, %s54
    %p65 = scmp.eq.s32.totalorder %s19, 0
    %p66 = por %p64, %p65
    %p67 = scmp.ne.s32.totalorder %s53, %s54
    %p68 = scmp.eq.s32.totalorder %s20, 1
    %p69 = por %p67, %p68
    %p71 = scmp.ne.s32.totalorder %s54, %s70
    %p72 = scmp.eq.s32.totalorder %s20, 0
    %p73 = por %p71, %p72
    %s75 = sadd.s32 %s74, 1
    %p78 = scmp.eq.s32.totalorder %s14, 1
    %p79 = scmp.ne.s32.totalorder %s74, %s76
    %p80 = scmp.eq.s32.totalorder %s14, 0
    %p81 = por %p79, %p80
    %p82 = scmp.ne.s32.totalorder %s74, %s76
    %p83 = scmp.eq.s32.totalorder %s19, 1
    %p84 = por %p82, %p83
    %p85 = scmp.ne.s32.totalorder %s76, %s77
    %p86 = scmp.eq.s32.totalorder %s19, 0
    %p87 = por %p85, %p86
    %p88 = scmp.ne.s32.totalorder %s76, %s77
    %p89 = scmp.eq.s32.totalorder %s20, 1
    %p90 = por %p88, %p89
    %p92 = scmp.ne.s32.totalorder %s77, %s91
    %p93 = scmp.eq.s32.totalorder %s20, 0
    %p94 = por %p92, %p93
    %s96 = sadd.s32 %s95, 1
    %p99 = scmp.eq.s32.totalorder %s14, 1
    %p100 = scmp.ne.s32.totalorder %s95, %s97
    %p101 = scmp.eq.s32.totalorder %s14, 0
    %p102 = por %p100, %p101
    %p103 = scmp.ne.s32.totalorder %s95, %s97
    %p104 = scmp.eq.s32.totalorder %s19, 1
    %p105 = por %p103, %p104
    %p106 = scmp.ne.s32.totalorder %s97, %s98
    %p107 = scmp.eq.s32.totalorder %s19, 0
    %p108 = por %p106, %p107
    %p109 = scmp.ne.s32.totalorder %s97, %s98
    %p110 = scmp.eq.s32.totalorder %s20, 1
    %p111 = por %p109, %p110
    %p113 = scmp.ne.s32.totalorder %s98, %s112
    %p114 = scmp.eq.s32.totalorder %s20, 0
    %p115 = por %p113, %p114
    %s117 = sadd.s32 %s116, 1
    %p120 = scmp.eq.s32.totalorder %s14, 1
    %p121 = scmp.ne.s32.totalorder %s116, %s118
    %p122 = scmp.eq.s32.totalorder %s14, 0
    %p123 = por %p121, %p122
    %p124 = scmp.ne.s32.totalorder %s116, %s118
    %p125 = scmp.eq.s32.totalorder %s19, 1
    %p126 = por %p124, %p125
    %p127 = scmp.ne.s32.totalorder %s118, %s119
    %p128 = scmp.eq.s32.totalorder %s19, 0
    %p129 = por %p127, %p128
    %p130 = scmp.ne.s32.totalorder %s118, %s119
    %p131 = scmp.eq.s32.totalorder %s20, 1
    %p132 = por %p130, %p131
    %p134 = scmp.ne.s32.totalorder %s119, %s133
    %p135 = scmp.eq.s32.totalorder %s20, 0
    %p136 = por %p134, %p135
    %s138 = sadd.s32 %s137, 1
    %p141 = scmp.eq.s32.totalorder %s14, 1
    %p142 = scmp.ne.s32.totalorder %s137, %s139
    %p143 = scmp.eq.s32.totalorder %s14, 0
    %p144 = por %p142, %p143
    %p145 = scmp.ne.s32.totalorder %s137, %s139
    %p146 = scmp.eq.s32.totalorder %s19, 1
    %p147 = por %p145, %p146
    %p148 = scmp.ne.s32.totalorder %s139, %s140
    %p149 = scmp.eq.s32.totalorder %s19, 0
    %p150 = por %p148, %p149
    %p151 = scmp.ne.s32.totalorder %s139, %s140
    %p152 = scmp.eq.s32.totalorder %s20, 1
    %p153 = por %p151, %p152
    %p155 = scmp.ne.s32.totalorder %s140, %s154
    %p156 = scmp.eq.s32.totalorder %s20, 0
    %p157 = por %p155, %p156
    %s158 = ssub.s32 %s14, %s21
    %p159 = scmp.eq.s32.totalorder %s158, 0
    %s161 = sadd.s32 %s160, 1
    %s162 = scalar_select %p159, %s160, %s161
    %p165 = pneg %p159
    %p166 = scmp.eq.s32.totalorder %s14, 1
    %p167 = por %p165, %p166
    %p168 = scmp.ne.s32.totalorder %s160, %s163
    %p169 = scmp.eq.s32.totalorder %s14, 0
    %p170 = por %p168, %p169
    %p171 = scmp.ne.s32.totalorder %s160, %s163
    %p172 = scmp.eq.s32.totalorder %s19, 1
    %p173 = por %p171, %p172
    %p174 = scmp.ne.s32.totalorder %s163, %s164
    %p175 = scmp.eq.s32.totalorder %s19, 0
    %p176 = por %p174, %p175
    %p177 = scmp.ne.s32.totalorder %s163, %s164
    %p178 = scmp.eq.s32.totalorder %s20, 1
    %p179 = por %p177, %p178
    %p181 = scmp.ne.s32.totalorder %s164, %s180
    %p182 = scmp.eq.s32.totalorder %s20, 0
    %p183 = por %p181, %p182
    %s184 = ssub.s32 %s14, %s21
    %p185 = scmp.eq.s32.totalorder %s184, 0
    %s187 = sadd.s32 %s186, 1
    %s188 = scalar_select %p185, %s186, %s187
    %p191 = pneg %p185
    %p192 = scmp.eq.s32.totalorder %s14, 1
    %p193 = por %p191, %p192
    %p194 = scmp.ne.s32.totalorder %s186, %s189
    %p195 = scmp.eq.s32.totalorder %s14, 0
    %p196 = por %p194, %p195
    %p197 = scmp.ne.s32.totalorder %s186, %s189
    %p198 = scmp.eq.s32.totalorder %s19, 1
    %p199 = por %p197, %p198
    %p200 = scmp.ne.s32.totalorder %s189, %s190
    %p201 = scmp.eq.s32.totalorder %s19, 0
    %p202 = por %p200, %p201
    %p203 = scmp.ne.s32.totalorder %s189, %s190
    %p204 = scmp.eq.s32.totalorder %s20, 1
    %p205 = por %p203, %p204
    %p207 = scmp.ne.s32.totalorder %s190, %s206
    %p208 = scmp.eq.s32.totalorder %s20, 0
    %p209 = por %p207, %p208
    %p210 = scmp.le.s32.totalorder 1, %s14
    %p211 = scmp.lt.s32.totalorder %s14, 3
    %p212 = pnand %p210, %p211
    %p213 = pneg %p212
    // Predicated region
    $region9: #{_lambda_.18} parent=5 // pred_check
      _
    $region10: #{_lambda_.18} parent=5 // pred_check_branch
      %215 = sbr.rel (%p212) target = $region12
    $region11: #{_lambda_.18} parent=5 // pred_region
      %s216 = ssub.s32 %s14, 1
      // Predicated region
      $region13: #{_lambda_.18} parent=11 // pred_check
        %p217 = pneg %p87
      $region14: #{_lambda_.18} parent=11 // pred_check_branch
        %219 = sbr.rel (%p217) target = $region16
      $region15: #{_lambda_.18} parent=11 // pred_region
        _
      $region16: #{_lambda_.18} parent=11 // pred_fallthru
        _
      // Predicated region
      $region17: #{_lambda_.18} parent=11 // pred_check
        %p220 = pneg %p108
      $region18: #{_lambda_.18} parent=11 // pred_check_branch
        %222 = sbr.rel (%p220) target = $region20
      $region19: #{_lambda_.18} parent=11 // pred_region
        _
      $region20: #{_lambda_.18} parent=11 // pred_fallthru
        _
      // Predicated region
      $region21: #{_lambda_.18} parent=11 // pred_check
        %p223 = pneg %p129
      $region22: #{_lambda_.18} parent=11 // pred_check_branch
        %225 = sbr.rel (%p223) target = $region24
      $region23: #{_lambda_.18} parent=11 // pred_region
        _
      $region24: #{_lambda_.18} parent=11 // pred_fallthru
        _
      // Predicated region
      $region25: #{_lambda_.18} parent=11 // pred_check
        %p226 = pneg %p150
      $region26: #{_lambda_.18} parent=11 // pred_check_branch
        %228 = sbr.rel (%p226) target = $region28
      $region27: #{_lambda_.18} parent=11 // pred_region
        _
      $region28: #{_lambda_.18} parent=11 // pred_fallthru
        _
    $region12: #{_lambda_.18} parent=5 // pred_fallthru
      _
    %p229 = scmp.lt.s32.totalorder %s14, 2
    // Predicated region
    $region29: #{_lambda_.18} parent=5 // pred_check
      %p230 = pneg %p229
    $region30: #{_lambda_.18} parent=5 // pred_check_branch
      %232 = sbr.rel (%p230) target = $region32
    $region31: #{_lambda_.18} parent=5 // pred_region
      // Predicated region
      $region33: #{_lambda_.18} parent=31 // pred_check
        %p233 = pneg %p34
      $region34: #{_lambda_.18} parent=31 // pred_check_branch
        %235 = sbr.rel (%p233) target = $region36
      $region35: #{_lambda_.18} parent=31 // pred_region
        %p236 = scmp.lt.s32.totalorder %s14, 1
        %s237 = scalar_select %p236, %s14, 1
        %s238 = smul.addr %s237, 20
        %s239 = smul.addr %s238, 4
        %s240 = scalar_lea.vmem %s0, %s239
      $region36: #{_lambda_.18} parent=31 // pred_fallthru
        _
      // Predicated region
      $region37: #{_lambda_.18} parent=31 // pred_check
        %p241 = pneg %p60
      $region38: #{_lambda_.18} parent=31 // pred_check_branch
        %243 = sbr.rel (%p241) target = $region40
      $region39: #{_lambda_.18} parent=31 // pred_region
        %p244 = scmp.lt.s32.totalorder %s14, 1
        %s245 = scalar_select %p244, %s14, 1
        %s246 = smul.addr %s245, 20
        %s247 = smul.addr %s246, 4
        %s248 = scalar_lea.vmem %s1, %s247
      $region40: #{_lambda_.18} parent=31 // pred_fallthru
        _
    $region32: #{_lambda_.18} parent=5 // pred_fallthru
      _
    %p249 = scmp.le.s32.totalorder 1, %s14
    %p250 = scmp.lt.s32.totalorder %s14, 3
    %p251 = pnand %p249, %p250
    %p252 = pneg %p251
    // Predicated region
    $region41: #{_lambda_.18} parent=5 // pred_check
      _
    $region42: #{_lambda_.18} parent=5 // pred_check_branch
      %254 = sbr.rel (%p251) target = $region44
    $region43: #{_lambda_.18} parent=5 // pred_region
      %s255 = ssub.s32 %s14, 1
      %p256 = scmp.lt.s32.totalorder %s19, 1
      %s257 = scalar_select %p256, %s19, 1
      %s258 = smul.addr %s257, 20
      %s259 = smul.addr %s258, 4
      %s260 = scalar_lea.vmem %s0, %s259
      %p261 = pneg %p40
      %p262 = pneg %p37
      %p263 = scmp.lt.s32.totalorder %s19, 1
      %s264 = scalar_select %p263, %s19, 1
      %s265 = smul.addr %s264, 20
      %s266 = smul.addr %s265, 4
      %s267 = scalar_lea.vmem %s1, %s266
      %p268 = pneg %p66
      %p269 = pneg %p63
      %p270 = pneg %p87
      %p271 = pneg %p84
      %p272 = pneg %p108
      %p273 = pneg %p105
      %p274 = pneg %p129
      %p275 = pneg %p126
      %p276 = pneg %p150
      %p277 = pneg %p147
      %p278 = pneg %p176
      %p279 = pneg %p173
      %p280 = scmp.lt.s32.totalorder %s19, 1
      %s281 = scalar_select %p280, %s19, 1
      %s282 = smul.addr %s281, 4
      %s283 = smul.addr %s282, 2
      %s284 = scalar_lea.vmem %s6, %s283
      %p285 = pneg %p202
      %p286 = pneg %p199
      %p287 = scmp.lt.s32.totalorder %s19, 1
      %s288 = scalar_select %p287, %s19, 1
      %s289 = smul.addr %s288, 4
      %s290 = smul.addr %s289, 2
      %s291 = scalar_lea.vmem %s7, %s290
      %p292 = scmp.lt.s32.totalorder %s19, 1
      %s293 = scalar_select %p292, %s19, 1
      %s294 = smul.addr %s293, 20
      %s295 = smul.addr %s294, 4
      %s296 = scalar_lea.vmem %s0, %s295
      %p297 = scmp.lt.s32.totalorder %s19, 1
      %s298 = scalar_select %p297, %s19, 1
      %s299 = smul.addr %s298, 20
      %s300 = smul.addr %s299, 4
      %s301 = scalar_lea.vmem %s1, %s300
      %p302 = scmp.lt.s32.totalorder %s19, 1
      %s303 = scalar_select %p302, %s19, 1
      %s304 = smul.addr %s303, 4
      %s305 = smul.addr %s304, 2
      %s306 = scalar_lea.vmem %s6, %s305
      %p307 = scmp.lt.s32.totalorder %s19, 1
      %s308 = scalar_select %p307, %s19, 1
      %s309 = smul.addr %s308, 4
      %s310 = smul.addr %s309, 2
      %s311 = scalar_lea.vmem %s7, %s310
      %v312 = vld [vmem:[%s296] sm:$0x3]
      %v313 = vld [vmem:[%s296 + $0x4] sm:$0x3]
      %v314 = vld [vmem:[%s296 + $0x8] sm:$0x3]
      %v315 = vld [vmem:[%s296 + $0xc] sm:$0x3]
      %v316 = vunpack.c.l.bf16 %v312
      %v317 = vunpack.c.l.bf16 %v313
      %v318 = vunpack.c.l.bf16 %v314
      %v319 = vunpack.c.l.bf16 %v315
      %v320 = vld [vmem:[%s2] sm:$0x1]
      %v321 = vlaneseq
      %v322 = vshrl.u32 %v321, 7
      %v323 = vsub.s32 0, %v322
      %v324 = vrot.slane %v320, %v323
      %v325 = vmul.f32 %v316, %v324
      %v326 = vmul.f32 %v317, %v324
      %v327 = vmul.f32 %v318, %v324
      %v328 = vmul.f32 %v319, %v324
      %v329 = vadd.f32 %v325, 0.0
      %v330 = vadd.f32 %v326, 0.0
      %v331 = vadd.f32 %v327, 0.0
      %v332 = vadd.f32 %v328, 0.0
      %s333 = scalar_lea.vmem %s296, 20
      %v334 = vld [vmem:[%s333] sm:$0x3]
      %v335 = vld [vmem:[%s333 + $0x4] sm:$0x3]
      %v336 = vld [vmem:[%s333 + $0x8] sm:$0x3]
      %v337 = vld [vmem:[%s333 + $0xc] sm:$0x3]
      %v338 = vunpack.c.l.bf16 %v334
      %v339 = vunpack.c.l.bf16 %v335
      %v340 = vunpack.c.l.bf16 %v336
      %v341 = vunpack.c.l.bf16 %v337
      %v342 = vld [vmem:[%s2 + $0x1] sm:$0x1]
      %v343 = vlaneseq
      %v344 = vshrl.u32 %v343, 7
      %v345 = vsub.s32 0, %v344
      %v346 = vrot.slane %v342, %v345
      %v347 = vmul.f32 %v338, %v346
      %v348 = vmul.f32 %v339, %v346
      %v349 = vmul.f32 %v340, %v346
      %v350 = vmul.f32 %v341, %v346
      %v351 = vadd.f32 %v329, %v347
      %v352 = vadd.f32 %v330, %v348
      %v353 = vadd.f32 %v331, %v349
      %v354 = vadd.f32 %v332, %v350
      %v355 = vld [vmem:[%s296] sm:$0x7]
      %v356 = vld [vmem:[%s296 + $0x4] sm:$0x7]
      %v357 = vld [vmem:[%s296 + $0x8] sm:$0x7]
      %v358 = vld [vmem:[%s296 + $0xc] sm:$0x7]
      %v359 = vunpack.c.l.bf16 %v355
      %v360 = vunpack.c.l.bf16 %v356
      %v361 = vunpack.c.l.bf16 %v357
      %v362 = vunpack.c.l.bf16 %v358
      %v363 = vld [vmem:[%s2 + $0x2] sm:$0x1]
      %v364 = vlaneseq
      %v365 = vshrl.u32 %v364, 7
      %v366 = vsub.s32 0, %v365
      %v367 = vrot.slane %v363, %v366
      %v368 = vmul.f32 %v359, %v367
      %v369 = vmul.f32 %v360, %v367
      %v370 = vmul.f32 %v361, %v367
      %v371 = vmul.f32 %v362, %v367
      %v376 = vrot.slane %v368, 1
      %v377 = vrot.slane %v369, 1
      %v378 = vrot.slane %v370, 1
      %v379 = vrot.slane %v371, 1
      %v384 = vadd.f32 %v351, %v376
      %v385 = vadd.f32 %v352, %v377
      %v386 = vadd.f32 %v353, %v378
      %v387 = vadd.f32 %v354, %v379
      %s388 = scalar_lea.vmem %s296, 40
      %v389 = vld [vmem:[%s388] sm:$0x3]
      %v390 = vld [vmem:[%s388 + $0x4] sm:$0x3]
      %v391 = vld [vmem:[%s388 + $0x8] sm:$0x3]
      %v392 = vld [vmem:[%s388 + $0xc] sm:$0x3]
      %v393 = vunpack.c.l.bf16 %v389
      %v394 = vunpack.c.l.bf16 %v390
      %v395 = vunpack.c.l.bf16 %v391
      %v396 = vunpack.c.l.bf16 %v392
      %s397 = scalar_lea.vmem %s2, 4
      %v398 = vld [vmem:[%s397] sm:$0x1]
      %v399 = vlaneseq
      %v400 = vshrl.u32 %v399, 7
      %v401 = vsub.s32 0, %v400
      %v402 = vrot.slane %v398, %v401
      %v403 = vmul.f32 %v393, %v402
      %v404 = vmul.f32 %v394, %v402
      %v405 = vmul.f32 %v395, %v402
      %v406 = vmul.f32 %v396, %v402
      %v407 = vadd.f32 %v384, %v403
      %v408 = vadd.f32 %v385, %v404
      %v409 = vadd.f32 %v386, %v405
      %v410 = vadd.f32 %v387, %v406
      %s411 = scalar_lea.vmem %s296, 60
      %v412 = vld [vmem:[%s411] sm:$0x3]
      %v413 = vld [vmem:[%s411 + $0x4] sm:$0x3]
      %v414 = vld [vmem:[%s411 + $0x8] sm:$0x3]
      %v415 = vld [vmem:[%s411 + $0xc] sm:$0x3]
      %v416 = vunpack.c.l.bf16 %v412
      %v417 = vunpack.c.l.bf16 %v413
      %v418 = vunpack.c.l.bf16 %v414
      %v419 = vunpack.c.l.bf16 %v415
      %v420 = vld [vmem:[%s397 + $0x1] sm:$0x1]
      %v421 = vlaneseq
      %v422 = vshrl.u32 %v421, 7
      %v423 = vsub.s32 0, %v422
      %v424 = vrot.slane %v420, %v423
      %v425 = vmul.f32 %v416, %v424
      %v426 = vmul.f32 %v417, %v424
      %v427 = vmul.f32 %v418, %v424
      %v428 = vmul.f32 %v419, %v424
      %v429 = vadd.f32 %v407, %v425
      %v430 = vadd.f32 %v408, %v426
      %v431 = vadd.f32 %v409, %v427
      %v432 = vadd.f32 %v410, %v428
      %v433 = vld [vmem:[%s388] sm:$0x7]
      %v434 = vld [vmem:[%s388 + $0x4] sm:$0x7]
      %v435 = vld [vmem:[%s388 + $0x8] sm:$0x7]
      %v436 = vld [vmem:[%s388 + $0xc] sm:$0x7]
      %v437 = vunpack.c.l.bf16 %v433
      %v438 = vunpack.c.l.bf16 %v434
      %v439 = vunpack.c.l.bf16 %v435
      %v440 = vunpack.c.l.bf16 %v436
      %v441 = vld [vmem:[%s397 + $0x2] sm:$0x1]
      %v442 = vlaneseq
      %v443 = vshrl.u32 %v442, 7
      %v444 = vsub.s32 0, %v443
      %v445 = vrot.slane %v441, %v444
      %v446 = vmul.f32 %v437, %v445
      %v447 = vmul.f32 %v438, %v445
      %v448 = vmul.f32 %v439, %v445
      %v449 = vmul.f32 %v440, %v445
      %v454 = vrot.slane %v446, 1
      %v455 = vrot.slane %v447, 1
      %v456 = vrot.slane %v448, 1
      %v457 = vrot.slane %v449, 1
      %v462 = vadd.f32 %v429, %v454
      %v463 = vadd.f32 %v430, %v455
      %v464 = vadd.f32 %v431, %v456
      %v465 = vadd.f32 %v432, %v457
      %s466 = scalar_lea.vmem %s296, 4
      %v467 = vld [vmem:[%s466] sm:$0x3]
      %v468 = vld [vmem:[%s466 + $0x4] sm:$0x3]
      %v469 = vld [vmem:[%s466 + $0x8] sm:$0x3]
      %v470 = vld [vmem:[%s466 + $0xc] sm:$0x3]
      %v471 = vunpack.c.l.bf16 %v467
      %v472 = vunpack.c.l.bf16 %v468
      %v473 = vunpack.c.l.bf16 %v469
      %v474 = vunpack.c.l.bf16 %v470
      %s475 = scalar_lea.vmem %s2, 8
      %v476 = vld [vmem:[%s475] sm:$0x1]
      %v477 = vlaneseq
      %v478 = vshrl.u32 %v477, 7
      %v479 = vsub.s32 0, %v478
      %v480 = vrot.slane %v476, %v479
      %v481 = vmul.f32 %v471, %v480
      %v482 = vmul.f32 %v472, %v480
      %v483 = vmul.f32 %v473, %v480
      %v484 = vmul.f32 %v474, %v480
      %v485 = vadd.f32 %v462, %v481
      %v486 = vadd.f32 %v463, %v482
      %v487 = vadd.f32 %v464, %v483
      %v488 = vadd.f32 %v465, %v484
      %s489 = scalar_lea.vmem %s296, 24
      %v490 = vld [vmem:[%s489] sm:$0x3]
      %v491 = vld [vmem:[%s489 + $0x4] sm:$0x3]
      %v492 = vld [vmem:[%s489 + $0x8] sm:$0x3]
      %v493 = vld [vmem:[%s489 + $0xc] sm:$0x3]
      %v494 = vunpack.c.l.bf16 %v490
      %v495 = vunpack.c.l.bf16 %v491
      %v496 = vunpack.c.l.bf16 %v492
      %v497 = vunpack.c.l.bf16 %v493
      %v498 = vld [vmem:[%s475 + $0x1] sm:$0x1]
      %v499 = vlaneseq
      %v500 = vshrl.u32 %v499, 7
      %v501 = vsub.s32 0, %v500
      %v502 = vrot.slane %v498, %v501
      %v503 = vmul.f32 %v494, %v502
      %v504 = vmul.f32 %v495, %v502
      %v505 = vmul.f32 %v496, %v502
      %v506 = vmul.f32 %v497, %v502
      %v507 = vadd.f32 %v485, %v503
      %v508 = vadd.f32 %v486, %v504
      %v509 = vadd.f32 %v487, %v505
      %v510 = vadd.f32 %v488, %v506
      %v511 = vld [vmem:[%s466] sm:$0x7]
      %v512 = vld [vmem:[%s466 + $0x4] sm:$0x7]
      %v513 = vld [vmem:[%s466 + $0x8] sm:$0x7]
      %v514 = vld [vmem:[%s466 + $0xc] sm:$0x7]
      %v515 = vunpack.c.l.bf16 %v511
      %v516 = vunpack.c.l.bf16 %v512
      %v517 = vunpack.c.l.bf16 %v513
      %v518 = vunpack.c.l.bf16 %v514
      %v519 = vld [vmem:[%s475 + $0x2] sm:$0x1]
      %v520 = vlaneseq
      %v521 = vshrl.u32 %v520, 7
      %v522 = vsub.s32 0, %v521
      %v523 = vrot.slane %v519, %v522
      %v524 = vmul.f32 %v515, %v523
      %v525 = vmul.f32 %v516, %v523
      %v526 = vmul.f32 %v517, %v523
      %v527 = vmul.f32 %v518, %v523
      %v532 = vrot.slane %v524, 1
      %v533 = vrot.slane %v525, 1
      %v534 = vrot.slane %v526, 1
      %v535 = vrot.slane %v527, 1
      %v540 = vadd.f32 %v507, %v532
      %v541 = vadd.f32 %v508, %v533
      %v542 = vadd.f32 %v509, %v534
      %v543 = vadd.f32 %v510, %v535
      %v544 = vld [vmem:[%s3] sm:$0x1]
      %v546 = vlaneseq
      %v547 = vshrl.u32 %v546, 7
      %v548 = vsub.s32 0, %v547
      %v549 = vrot.slane %v544, %v548
      %v551 = vadd.f32 %v540, %v549
      %v552 = vadd.f32 %v541, %v549
      %v553 = vadd.f32 %v542, %v549
      %v554 = vadd.f32 %v543, %v549
      %v555 = vpack.c.bf16 %v551, %v551
      %v556 = vpack.c.bf16 %v552, %v552
      %v557 = vpack.c.bf16 %v553, %v553
      %v558 = vpack.c.bf16 %v554, %v554
      %vm559 = vcmask 58368
      %560 = vst.msk [vmem:[%s306] sm:$0x3] %vm559, %v555
      %561 = vst.msk [vmem:[%s306 + $0x2] sm:$0x3] %vm559, %v556
      %562 = vst.msk [vmem:[%s306 + $0x4] sm:$0x3] %vm559, %v557
      %563 = vst.msk [vmem:[%s306 + $0x6] sm:$0x3] %vm559, %v558
      %v564 = vld [vmem:[%s301] sm:$0x3]
      %v565 = vld [vmem:[%s301 + $0x4] sm:$0x3]
      %v566 = vld [vmem:[%s301 + $0x8] sm:$0x3]
      %v567 = vld [vmem:[%s301 + $0xc] sm:$0x3]
      %v568 = vunpack.c.l.bf16 %v564
      %v569 = vunpack.c.l.bf16 %v565
      %v570 = vunpack.c.l.bf16 %v566
      %v571 = vunpack.c.l.bf16 %v567
      %v572 = vld [vmem:[%s4] sm:$0x1]
      %v573 = vlaneseq
      %v574 = vshrl.u32 %v573, 7
      %v575 = vsub.s32 0, %v574
      %v576 = vrot.slane %v572, %v575
      %v577 = vmul.f32 %v568, %v576
      %v578 = vmul.f32 %v569, %v576
      %v579 = vmul.f32 %v570, %v576
      %v580 = vmul.f32 %v571, %v576
      %v581 = vadd.f32 %v577, 0.0
      %v582 = vadd.f32 %v578, 0.0
      %v583 = vadd.f32 %v579, 0.0
      %v584 = vadd.f32 %v580, 0.0
      %s585 = scalar_lea.vmem %s301, 20
      %v586 = vld [vmem:[%s585] sm:$0x3]
      %v587 = vld [vmem:[%s585 + $0x4] sm:$0x3]
      %v588 = vld [vmem:[%s585 + $0x8] sm:$0x3]
      %v589 = vld [vmem:[%s585 + $0xc] sm:$0x3]
      %v590 = vunpack.c.l.bf16 %v586
      %v591 = vunpack.c.l.bf16 %v587
      %v592 = vunpack.c.l.bf16 %v588
      %v593 = vunpack.c.l.bf16 %v589
      %v594 = vld [vmem:[%s4 + $0x1] sm:$0x1]
      %v595 = vlaneseq
      %v596 = vshrl.u32 %v595, 7
      %v597 = vsub.s32 0, %v596
      %v598 = vrot.slane %v594, %v597
      %v599 = vmul.f32 %v590, %v598
      %v600 = vmul.f32 %v591, %v598
      %v601 = vmul.f32 %v592, %v598
      %v602 = vmul.f32 %v593, %v598
      %v603 = vadd.f32 %v581, %v599
      %v604 = vadd.f32 %v582, %v600
      %v605 = vadd.f32 %v583, %v601
      %v606 = vadd.f32 %v584, %v602
      %v607 = vld [vmem:[%s301] sm:$0x7]
      %v608 = vld [vmem:[%s301 + $0x4] sm:$0x7]
      %v609 = vld [vmem:[%s301 + $0x8] sm:$0x7]
      %v610 = vld [vmem:[%s301 + $0xc] sm:$0x7]
      %v611 = vunpack.c.l.bf16 %v607
      %v612 = vunpack.c.l.bf16 %v608
      %v613 = vunpack.c.l.bf16 %v609
      %v614 = vunpack.c.l.bf16 %v610
      %v615 = vld [vmem:[%s4 + $0x2] sm:$0x1]
      %v616 = vlaneseq
      %v617 = vshrl.u32 %v616, 7
      %v618 = vsub.s32 0, %v617
      %v619 = vrot.slane %v615, %v618
      %v620 = vmul.f32 %v611, %v619
      %v621 = vmul.f32 %v612, %v619
      %v622 = vmul.f32 %v613, %v619
      %v623 = vmul.f32 %v614, %v619
      %v628 = vrot.slane %v620, 1
      %v629 = vrot.slane %v621, 1
      %v630 = vrot.slane %v622, 1
      %v631 = vrot.slane %v623, 1
      %v636 = vadd.f32 %v603, %v628
      %v637 = vadd.f32 %v604, %v629
      %v638 = vadd.f32 %v605, %v630
      %v639 = vadd.f32 %v606, %v631
      %s640 = scalar_lea.vmem %s301, 40
      %v641 = vld [vmem:[%s640] sm:$0x3]
      %v642 = vld [vmem:[%s640 + $0x4] sm:$0x3]
      %v643 = vld [vmem:[%s640 + $0x8] sm:$0x3]
      %v644 = vld [vmem:[%s640 + $0xc] sm:$0x3]
      %v645 = vunpack.c.l.bf16 %v641
      %v646 = vunpack.c.l.bf16 %v642
      %v647 = vunpack.c.l.bf16 %v643
      %v648 = vunpack.c.l.bf16 %v644
      %s649 = scalar_lea.vmem %s4, 4
      %v650 = vld [vmem:[%s649] sm:$0x1]
      %v651 = vlaneseq
      %v652 = vshrl.u32 %v651, 7
      %v653 = vsub.s32 0, %v652
      %v654 = vrot.slane %v650, %v653
      %v655 = vmul.f32 %v645, %v654
      %v656 = vmul.f32 %v646, %v654
      %v657 = vmul.f32 %v647, %v654
      %v658 = vmul.f32 %v648, %v654
      %v659 = vadd.f32 %v636, %v655
      %v660 = vadd.f32 %v637, %v656
      %v661 = vadd.f32 %v638, %v657
      %v662 = vadd.f32 %v639, %v658
      %s663 = scalar_lea.vmem %s301, 60
      %v664 = vld [vmem:[%s663] sm:$0x3]
      %v665 = vld [vmem:[%s663 + $0x4] sm:$0x3]
      %v666 = vld [vmem:[%s663 + $0x8] sm:$0x3]
      %v667 = vld [vmem:[%s663 + $0xc] sm:$0x3]
      %v668 = vunpack.c.l.bf16 %v664
      %v669 = vunpack.c.l.bf16 %v665
      %v670 = vunpack.c.l.bf16 %v666
      %v671 = vunpack.c.l.bf16 %v667
      %v672 = vld [vmem:[%s649 + $0x1] sm:$0x1]
      %v673 = vlaneseq
      %v674 = vshrl.u32 %v673, 7
      %v675 = vsub.s32 0, %v674
      %v676 = vrot.slane %v672, %v675
      %v677 = vmul.f32 %v668, %v676
      %v678 = vmul.f32 %v669, %v676
      %v679 = vmul.f32 %v670, %v676
      %v680 = vmul.f32 %v671, %v676
      %v681 = vadd.f32 %v659, %v677
      %v682 = vadd.f32 %v660, %v678
      %v683 = vadd.f32 %v661, %v679
      %v684 = vadd.f32 %v662, %v680
      %v685 = vld [vmem:[%s640] sm:$0x7]
      %v686 = vld [vmem:[%s640 + $0x4] sm:$0x7]
      %v687 = vld [vmem:[%s640 + $0x8] sm:$0x7]
      %v688 = vld [vmem:[%s640 + $0xc] sm:$0x7]
      %v689 = vunpack.c.l.bf16 %v685
      %v690 = vunpack.c.l.bf16 %v686
      %v691 = vunpack.c.l.bf16 %v687
      %v692 = vunpack.c.l.bf16 %v688
      %v693 = vld [vmem:[%s649 + $0x2] sm:$0x1]
      %v694 = vlaneseq
      %v695 = vshrl.u32 %v694, 7
      %v696 = vsub.s32 0, %v695
      %v697 = vrot.slane %v693, %v696
      %v698 = vmul.f32 %v689, %v697
      %v699 = vmul.f32 %v690, %v697
      %v700 = vmul.f32 %v691, %v697
      %v701 = vmul.f32 %v692, %v697
      %v706 = vrot.slane %v698, 1
      %v707 = vrot.slane %v699, 1
      %v708 = vrot.slane %v700, 1
      %v709 = vrot.slane %v701, 1
      %v714 = vadd.f32 %v681, %v706
      %v715 = vadd.f32 %v682, %v707
      %v716 = vadd.f32 %v683, %v708
      %v717 = vadd.f32 %v684, %v709
      %s718 = scalar_lea.vmem %s301, 4
      %v719 = vld [vmem:[%s718] sm:$0x3]
      %v720 = vld [vmem:[%s718 + $0x4] sm:$0x3]
      %v721 = vld [vmem:[%s718 + $0x8] sm:$0x3]
      %v722 = vld [vmem:[%s718 + $0xc] sm:$0x3]
      %v723 = vunpack.c.l.bf16 %v719
      %v724 = vunpack.c.l.bf16 %v720
      %v725 = vunpack.c.l.bf16 %v721
      %v726 = vunpack.c.l.bf16 %v722
      %s727 = scalar_lea.vmem %s4, 8
      %v728 = vld [vmem:[%s727] sm:$0x1]
      %v729 = vlaneseq
      %v730 = vshrl.u32 %v729, 7
      %v731 = vsub.s32 0, %v730
      %v732 = vrot.slane %v728, %v731
      %v733 = vmul.f32 %v723, %v732
      %v734 = vmul.f32 %v724, %v732
      %v735 = vmul.f32 %v725, %v732
      %v736 = vmul.f32 %v726, %v732
      %v737 = vadd.f32 %v714, %v733
      %v738 = vadd.f32 %v715, %v734
      %v739 = vadd.f32 %v716, %v735
      %v740 = vadd.f32 %v717, %v736
      %s741 = scalar_lea.vmem %s301, 24
      %v742 = vld [vmem:[%s741] sm:$0x3]
      %v743 = vld [vmem:[%s741 + $0x4] sm:$0x3]
      %v744 = vld [vmem:[%s741 + $0x8] sm:$0x3]
      %v745 = vld [vmem:[%s741 + $0xc] sm:$0x3]
      %v746 = vunpack.c.l.bf16 %v742
      %v747 = vunpack.c.l.bf16 %v743
      %v748 = vunpack.c.l.bf16 %v744
      %v749 = vunpack.c.l.bf16 %v745
      %v750 = vld [vmem:[%s727 + $0x1] sm:$0x1]
      %v751 = vlaneseq
      %v752 = vshrl.u32 %v751, 7
      %v753 = vsub.s32 0, %v752
      %v754 = vrot.slane %v750, %v753
      %v755 = vmul.f32 %v746, %v754
      %v756 = vmul.f32 %v747, %v754
      %v757 = vmul.f32 %v748, %v754
      %v758 = vmul.f32 %v749, %v754
      %v759 = vadd.f32 %v737, %v755
      %v760 = vadd.f32 %v738, %v756
      %v761 = vadd.f32 %v739, %v757
      %v762 = vadd.f32 %v740, %v758
      %v763 = vld [vmem:[%s718] sm:$0x7]
      %v764 = vld [vmem:[%s718 + $0x4] sm:$0x7]
      %v765 = vld [vmem:[%s718 + $0x8] sm:$0x7]
      %v766 = vld [vmem:[%s718 + $0xc] sm:$0x7]
      %v767 = vunpack.c.l.bf16 %v763
      %v768 = vunpack.c.l.bf16 %v764
      %v769 = vunpack.c.l.bf16 %v765
      %v770 = vunpack.c.l.bf16 %v766
      %v771 = vld [vmem:[%s727 + $0x2] sm:$0x1]
      %v772 = vlaneseq
      %v773 = vshrl.u32 %v772, 7
      %v774 = vsub.s32 0, %v773
      %v775 = vrot.slane %v771, %v774
      %v776 = vmul.f32 %v767, %v775
      %v777 = vmul.f32 %v768, %v775
      %v778 = vmul.f32 %v769, %v775
      %v779 = vmul.f32 %v770, %v775
      %v784 = vrot.slane %v776, 1
      %v785 = vrot.slane %v777, 1
      %v786 = vrot.slane %v778, 1
      %v787 = vrot.slane %v779, 1
      %v792 = vadd.f32 %v759, %v784
      %v793 = vadd.f32 %v760, %v785
      %v794 = vadd.f32 %v761, %v786
      %v795 = vadd.f32 %v762, %v787
      %v796 = vld [vmem:[%s5] sm:$0x1]
      %v798 = vlaneseq
      %v799 = vshrl.u32 %v798, 7
      %v800 = vsub.s32 0, %v799
      %v801 = vrot.slane %v796, %v800
      %v803 = vadd.f32 %v792, %v801
      %v804 = vadd.f32 %v793, %v801
      %v805 = vadd.f32 %v794, %v801
      %v806 = vadd.f32 %v795, %v801
      %v807 = vpack.c.bf16 %v803, %v803
      %v808 = vpack.c.bf16 %v804, %v804
      %v809 = vpack.c.bf16 %v805, %v805
      %v810 = vpack.c.bf16 %v806, %v806
      %811 = vst.msk [vmem:[%s311] sm:$0x3] %vm559, %v807
      %812 = vst.msk [vmem:[%s311 + $0x2] sm:$0x3] %vm559, %v808
      %813 = vst.msk [vmem:[%s311 + $0x4] sm:$0x3] %vm559, %v809
      %814 = vst.msk [vmem:[%s311 + $0x6] sm:$0x3] %vm559, %v810
      %p815 = scmp.lt.s32.totalorder %s19, 1
      %s816 = scalar_select %p815, %s19, 1
      %s817 = smul.addr %s816, 4
      %s818 = smul.addr %s817, 2
      %s819 = scalar_lea.vmem %s6, %s818
      %p820 = scmp.lt.s32.totalorder %s19, 1
      %s821 = scalar_select %p820, %s19, 1
      %s822 = smul.addr %s821, 4
      %s823 = smul.addr %s822, 2
      %s824 = scalar_lea.vmem %s7, %s823
      // Predicated region
      $region45: #{_lambda_.18} parent=43 // pred_check
        %p825 = pneg %p173
      $region46: #{_lambda_.18} parent=43 // pred_check_branch
        %827 = sbr.rel (%p825) target = $region48
      $region47: #{_lambda_.18} parent=43 // pred_region
        _
      $region48: #{_lambda_.18} parent=43 // pred_fallthru
        _
      // Predicated region
      $region49: #{_lambda_.18} parent=43 // pred_check
        %p828 = pneg %p199
      $region50: #{_lambda_.18} parent=43 // pred_check_branch
        %830 = sbr.rel (%p828) target = $region52
      $region51: #{_lambda_.18} parent=43 // pred_region
        _
      $region52: #{_lambda_.18} parent=43 // pred_fallthru
        _
    $region44: #{_lambda_.18} parent=5 // pred_fallthru
      _
    %p831 = scmp.le.s32.totalorder 2, %s14
    // Predicated region
    $region53: #{_lambda_.18} parent=5 // pred_check
      %p832 = pneg %p831
    $region54: #{_lambda_.18} parent=5 // pred_check_branch
      %834 = sbr.rel (%p832) target = $region56
    $region55: #{_lambda_.18} parent=5 // pred_region
      %s835 = ssub.s32 %s14, 2
      // Predicated region
      $region57: #{_lambda_.18} parent=55 // pred_check
        %p836 = pneg %p179
      $region58: #{_lambda_.18} parent=55 // pred_check_branch
        %838 = sbr.rel (%p836) target = $region60
      $region59: #{_lambda_.18} parent=55 // pred_region
        %p839 = scmp.lt.s32.totalorder %s20, 1
        %s840 = scalar_select %p839, %s20, 1
        %s841 = smul.addr %s840, 4
        %s842 = smul.addr %s841, 2
        %s843 = scalar_lea.vmem %s6, %s842
      $region60: #{_lambda_.18} parent=55 // pred_fallthru
        _
      // Predicated region
      $region61: #{_lambda_.18} parent=55 // pred_check
        %p844 = pneg %p205
      $region62: #{_lambda_.18} parent=55 // pred_check_branch
        %846 = sbr.rel (%p844) target = $region64
      $region63: #{_lambda_.18} parent=55 // pred_region
        %p847 = scmp.lt.s32.totalorder %s20, 1
        %s848 = scalar_select %p847, %s20, 1
        %s849 = smul.addr %s848, 4
        %s850 = smul.addr %s849, 2
        %s851 = scalar_lea.vmem %s7, %s850
      $region64: #{_lambda_.18} parent=55 // pred_fallthru
        _
    $region56: #{_lambda_.18} parent=5 // pred_fallthru
      _
  $region6: #{_lambda_.18} parent=0 // loop_footer
    %s18 = sadd.s32 1, %s14
  $region7: #{_lambda_.18} parent=0 // loop_footer_branch
    %13 = sbr.rel target = $region3
  $region8: #{_lambda_.18} parent=0 // loop_exit
    _

// kernel: _lambda_.23
$region0: #{_lambda_.23}
  #allocation0 [shape = 'u32[]', space=smem, size = 0x4, offset = 0x4, fixed_abs, tag = 'smem constant byte address 0x4 - core index']
  #allocation1 [shape = 'u32[144,128]{1,0:T(1,128)}', space=vmem, size = 0x12000, scoped, tag = 'internal scratch']
  %s0 = inlined_call_operand.vmem [shape: bf16[8,16], index: 0, kind: input, shape index: {}]
  %s1 = inlined_call_operand.vmem [shape: bf16[8,16], index: 1, kind: input, shape index: {}]
  %s2 = inlined_call_operand.vmem [shape: bf16[16,32], index: 2, kind: input, shape index: {}]
  %s3 = inlined_call_operand.vmem [shape: f32[1,32], index: 3, kind: input, shape index: {}]
  %s4 = inlined_call_operand.vmem [shape: bf16[16,32], index: 4, kind: input, shape index: {}]
  %s5 = inlined_call_operand.vmem [shape: f32[1,32], index: 5, kind: input, shape index: {}]
  %s6 = inlined_call_operand.vmem [shape: bf16[8,32], index: 6, kind: output, shape index: {}]
  %s7 = sld [smem:[#allocation0]]
  $region34: #{_lambda_.23} parent=0
    _
  %s9 = ssub.s32 1, %s7
  %s10 = scalar_select 0, %s9, %s7
  // Predicated region
  $region2: #{_lambda_.23} parent=0 // pred_check
    _
  $region3: #{_lambda_.23} parent=0 // pred_check_branch
    %12 = sbr.rel (0) target = $region5
  $region4: #{_lambda_.23} parent=0 // pred_region
    _
  $region5: #{_lambda_.23} parent=0 // pred_fallthru
    _
  // Predicated region
  $region6: #{_lambda_.23} parent=0 // pred_check
    _
  $region7: #{_lambda_.23} parent=0 // pred_check_branch
    %14 = sbr.rel (0) target = $region9
  $region8: #{_lambda_.23} parent=0 // pred_region
    _
  $region9: #{_lambda_.23} parent=0 // pred_fallthru
    _
  // Predicated region
  $region10: #{_lambda_.23} parent=0 // pred_check
    _
  $region11: #{_lambda_.23} parent=0 // pred_check_branch
    %16 = sbr.rel (0) target = $region13
  $region12: #{_lambda_.23} parent=0 // pred_region
    _
  $region13: #{_lambda_.23} parent=0 // pred_fallthru
    _
  // Predicated region
  $region14: #{_lambda_.23} parent=0 // pred_check
    _
  $region15: #{_lambda_.23} parent=0 // pred_check_branch
    %18 = sbr.rel (0) target = $region17
  $region16: #{_lambda_.23} parent=0 // pred_region
    _
  $region17: #{_lambda_.23} parent=0 // pred_fallthru
    _
  // Predicated region
  $region18: #{_lambda_.23} parent=0 // pred_check
    _
  $region19: #{_lambda_.23} parent=0 // pred_check_branch
    %20 = sbr.rel (0) target = $region21
  $region20: #{_lambda_.23} parent=0 // pred_region
    _
  $region21: #{_lambda_.23} parent=0 // pred_fallthru
    _
  // Predicated region
  $region22: #{_lambda_.23} parent=0 // pred_check
    _
  $region23: #{_lambda_.23} parent=0 // pred_check_branch
    %22 = sbr.rel (0) target = $region25
  $region24: #{_lambda_.23} parent=0 // pred_region
    _
  $region25: #{_lambda_.23} parent=0 // pred_fallthru
    _
  %v24 = vld [vmem:[%s0] sm:$0xf]
  %v25 = vld [vmem:[%s2] sm:$0xf]
  %v26 = vld [vmem:[%s2 + $0x4] sm:$0xf]
  %v27 = vld [vmem:[%s3] sm:$0x1]
  %v29 = vlaneseq
  %v30 = vshrl.u32 %v29, 7
  %v31 = vsub.s32 0, %v30
  %v32 = vrot.slane %v27, %v31
  %v36 = vunpack.c.l.b16 %v25
  %v37 = vunpack.c.l.b16 %v26
  %v38 = vpack.c.b16 %v37, %v36
  %vm40 = vcmask 130048
  %v42 = vsel %vm40, %v24, 0
  %44 = vmatprep.subr.bf16.mxu0 0
  %45 = vmatpush1.bf16.msra.mxu0 %v38
  %46 = vmatprep.subr.bf16.mxu0 0
  %47 = vmatpush1.bf16.msra.mxu0 0
  %48 = vmatprep.subr.bf16.mxu0 0
  %49 = vmatpush1.bf16.msra.mxu0 0
  %50 = vmatprep.subr.bf16.mxu0 0
  %51 = vmatpush1.bf16.msra.mxu0 0
  %52 = vmatprep.subr.bf16.mxu0 0
  %53 = vmatpush1.bf16.msra.mxu0 0
  %54 = vmatprep.subr.bf16.mxu0 0
  %55 = vmatpush1.bf16.msra.mxu0 0
  %56 = vmatprep.subr.bf16.mxu0 0
  %57 = vmatpush1.bf16.msra.mxu0 0
  %58 = vmatprep.subr.bf16.mxu0 0
  %59 = vmatpush1.bf16.msra.mxu0 0
  %60 = vmatprep.subr.bf16.mxu0 0
  %61 = vmatpush1.bf16.msra.mxu0 0
  %62 = vmatprep.subr.bf16.mxu0 0
  %63 = vmatpush1.bf16.msra.mxu0 0
  %64 = vmatprep.subr.bf16.mxu0 0
  %65 = vmatpush1.bf16.msra.mxu0 0
  %66 = vmatprep.subr.bf16.mxu0 0
  %67 = vmatpush1.bf16.msra.mxu0 0
  %68 = vmatprep.subr.bf16.mxu0 0
  %69 = vmatpush1.bf16.msra.mxu0 0
  %70 = vmatprep.subr.bf16.mxu0 0
  %71 = vmatpush1.bf16.msra.mxu0 0
  %72 = vmatprep.subr.bf16.mxu0 0
  %73 = vmatpush1.bf16.msra.mxu0 0
  %74 = vmatprep.subr.bf16.mxu0 0
  %75 = vmatpush1.bf16.msra.mxu0 0
  %76 = vmatprep.mubr.bf16.mxu0 0
  %77 = vmatmul.mubr.bf16.gmra.mrb[0].mxu0 %v42
  %v78 = vpop.f32.mrb[0].mxu0
  %v79 = vadd.f32 %v32, %v78
  %v80 = vpop.f32.mrb[0].mxu0
  %v81 = vpop.f32.mrb[0].mxu0
  %v82 = vpop.f32.mrb[0].mxu0
  %83 = vdwg.mxu0
  %v84 = vmax.f32 %v79, 0.0
  %v85 = vld [vmem:[%s1] sm:$0xf]
  %v86 = vld [vmem:[%s4] sm:$0xf]
  %v87 = vld [vmem:[%s4 + $0x4] sm:$0xf]
  %v88 = vld [vmem:[%s5] sm:$0x1]
  %v90 = vlaneseq
  %v91 = vshrl.u32 %v90, 7
  %v92 = vsub.s32 0, %v91
  %v93 = vrot.slane %v88, %v92
  %v97 = vunpack.c.l.b16 %v86
  %v98 = vunpack.c.l.b16 %v87
  %v99 = vpack.c.b16 %v98, %v97
  %v102 = vsel %vm40, %v85, 0
  %104 = vmatprep.subr.bf16.mxu0 0
  %105 = vmatpush1.bf16.msra.mxu0 %v99
  %106 = vmatprep.subr.bf16.mxu0 0
  %107 = vmatpush1.bf16.msra.mxu0 0
  %108 = vmatprep.subr.bf16.mxu0 0
  %109 = vmatpush1.bf16.msra.mxu0 0
  %110 = vmatprep.subr.bf16.mxu0 0
  %111 = vmatpush1.bf16.msra.mxu0 0
  %112 = vmatprep.subr.bf16.mxu0 0
  %113 = vmatpush1.bf16.msra.mxu0 0
  %114 = vmatprep.subr.bf16.mxu0 0
  %115 = vmatpush1.bf16.msra.mxu0 0
  %116 = vmatprep.subr.bf16.mxu0 0
  %117 = vmatpush1.bf16.msra.mxu0 0
  %118 = vmatprep.subr.bf16.mxu0 0
  %119 = vmatpush1.bf16.msra.mxu0 0
  %120 = vmatprep.subr.bf16.mxu0 0
  %121 = vmatpush1.bf16.msra.mxu0 0
  %122 = vmatprep.subr.bf16.mxu0 0
  %123 = vmatpush1.bf16.msra.mxu0 0
  %124 = vmatprep.subr.bf16.mxu0 0
  %125 = vmatpush1.bf16.msra.mxu0 0
  %126 = vmatprep.subr.bf16.mxu0 0
  %127 = vmatpush1.bf16.msra.mxu0 0
  %128 = vmatprep.subr.bf16.mxu0 0
  %129 = vmatpush1.bf16.msra.mxu0 0
  %130 = vmatprep.subr.bf16.mxu0 0
  %131 = vmatpush1.bf16.msra.mxu0 0
  %132 = vmatprep.subr.bf16.mxu0 0
  %133 = vmatpush1.bf16.msra.mxu0 0
  %134 = vmatprep.subr.bf16.mxu0 0
  %135 = vmatpush1.bf16.msra.mxu0 0
  %136 = vmatprep.mubr.bf16.mxu0 0
  %137 = vmatmul.mubr.bf16.gmra.mrb[0].mxu0 %v102
  %v138 = vpop.f32.mrb[0].mxu0
  %v139 = vadd.f32 %v93, %v138
  %v140 = vpop.f32.mrb[0].mxu0
  %v141 = vpop.f32.mrb[0].mxu0
  %v142 = vpop.f32.mrb[0].mxu0
  %143 = vdwg.mxu0
  %v144 = vmax.f32 %v139, 0.0
  %v145 = vadd.f32 %v84, %v144
  %v146 = vpack.c.bf16 %v145, %v145
  %vm147 = vcmask 257024
  %148 = vst.msk [vmem:[%s6] sm:$0xf] %vm147, %v146
  // Predicated region
  $region26: #{_lambda_.23} parent=0 // pred_check
    _
  $region27: #{_lambda_.23} parent=0 // pred_check_branch
    %150 = sbr.rel (0) target = $region29
  $region28: #{_lambda_.23} parent=0 // pred_region
    _
  $region29: #{_lambda_.23} parent=0 // pred_fallthru
    _
  // Predicated region
  $region30: #{_lambda_.23} parent=0 // pred_check
    _
  $region31: #{_lambda_.23} parent=0 // pred_check_branch
    %152 = sbr.rel (0) target = $region33
  $region32: #{_lambda_.23} parent=0 // pred_region
    _
  $region33: #{_lambda_.23} parent=0 // pred_fallthru
    _

// kernel: _lambda_.22
$region0: #{_lambda_.22}
  #allocation0 [shape = 'u32[]', space=smem, size = 0x4, offset = 0x4, fixed_abs, tag = 'smem constant byte address 0x4 - core index']
  #allocation1 [shape = 'u32[144,128]{1,0:T(1,128)}', space=vmem, size = 0x12000, scoped, tag = 'internal scratch']
  %s0 = inlined_call_operand.vmem [shape: bf16[2,4,3,3,16], index: 0, kind: input, shape index: {}]
  %s1 = inlined_call_operand.vmem [shape: bf16[2,4,3,3,16], index: 1, kind: input, shape index: {}]
  %s2 = inlined_call_operand.vmem [shape: f32[3,3,16], index: 2, kind: input, shape index: {}]
  %s3 = inlined_call_operand.vmem [shape: f32[1,16], index: 3, kind: input, shape index: {}]
  %s4 = inlined_call_operand.vmem [shape: f32[3,3,16], index: 4, kind: input, shape index: {}]
  %s5 = inlined_call_operand.vmem [shape: f32[1,16], index: 5, kind: input, shape index: {}]
  %s6 = inlined_call_operand.vmem [shape: bf16[2,2,2,16], index: 6, kind: output, shape index: {0}]
  %s7 = inlined_call_operand.vmem [shape: bf16[2,2,2,16], index: 7, kind: output, shape index: {1}]
  %8 = xla_tuple %s6, %s7
  %s9 = sld [smem:[#allocation0]]
  $region65: #{_lambda_.22} parent=0
    _
  %s11 = ssub.s32 1, %s9
  %s12 = scalar_select 0, %s11, %s9
  loop: start=0, step=1, limit=4
  $region2: #{_lambda_.22} parent=0 // loop_pre_header
    _
  $region3: #{_lambda_.22} parent=0 // loop_header
    %s14 = sphi 0, %s18
    %p15 = scmp.ge.s32.totalorder %s14, 4
    %s24 = sphi 0, %s26
    %s27 = sphi 0, %s24
    %s28 = sphi 0, %s27
    %s44 = sphi 0, %s28
    %s50 = sphi 0, %s52
    %s53 = sphi 0, %s50
    %s54 = sphi 0, %s53
    %s70 = sphi 0, %s54
    %s74 = sphi 0, %s74
    %s76 = sphi 0, %s74
    %s77 = sphi 0, %s76
    %s91 = sphi 0, %s77
    %s95 = sphi 0, %s95
    %s97 = sphi 0, %s95
    %s98 = sphi 0, %s97
    %s112 = sphi 0, %s98
    %s116 = sphi 0, %s116
    %s118 = sphi 0, %s116
    %s119 = sphi 0, %s118
    %s133 = sphi 0, %s119
    %s137 = sphi 0, %s137
    %s139 = sphi 0, %s137
    %s140 = sphi 0, %s139
    %s154 = sphi 0, %s140
    %s160 = sphi 0, %s162
    %s163 = sphi 0, %s160
    %s164 = sphi 0, %s163
    %s180 = sphi 0, %s164
    %s186 = sphi 0, %s188
    %s189 = sphi 0, %s186
    %s190 = sphi 0, %s189
    %s206 = sphi 0, %s190
  $region4: #{_lambda_.22} parent=0 // loop_header_branch
    %17 = sbr.rel (%p15) target = $region8
  $region5: #{_lambda_.22} parent=0 // loop_body
    %s19 = ssub.s32 %s14, 1
    %s20 = ssub.s32 %s14, 2
    %s21 = sadd.s32 %s14, 1
    %s22 = ssub.s32 %s14, %s21
    %p23 = scmp.eq.s32.totalorder %s22, 0
    %s25 = sadd.s32 %s24, 1
    %s26 = scalar_select %p23, %s24, %s25
    %p29 = pneg %p23
    %p30 = scmp.eq.s32.totalorder %s14, 1
    %p31 = por %p29, %p30
    %p32 = scmp.ne.s32.totalorder %s24, %s27
    %p33 = scmp.eq.s32.totalorder %s14, 0
    %p34 = por %p32, %p33
    %p35 = scmp.ne.s32.totalorder %s24, %s27
    %p36 = scmp.eq.s32.totalorder %s19, 1
    %p37 = por %p35, %p36
    %p38 = scmp.ne.s32.totalorder %s27, %s28
    %p39 = scmp.eq.s32.totalorder %s19, 0
    %p40 = por %p38, %p39
    %p41 = scmp.ne.s32.totalorder %s27, %s28
    %p42 = scmp.eq.s32.totalorder %s20, 1
    %p43 = por %p41, %p42
    %p45 = scmp.ne.s32.totalorder %s28, %s44
    %p46 = scmp.eq.s32.totalorder %s20, 0
    %p47 = por %p45, %p46
    %s48 = ssub.s32 %s14, %s21
    %p49 = scmp.eq.s32.totalorder %s48, 0
    %s51 = sadd.s32 %s50, 1
    %s52 = scalar_select %p49, %s50, %s51
    %p55 = pneg %p49
    %p56 = scmp.eq.s32.totalorder %s14, 1
    %p57 = por %p55, %p56
    %p58 = scmp.ne.s32.totalorder %s50, %s53
    %p59 = scmp.eq.s32.totalorder %s14, 0
    %p60 = por %p58, %p59
    %p61 = scmp.ne.s32.totalorder %s50, %s53
    %p62 = scmp.eq.s32.totalorder %s19, 1
    %p63 = por %p61, %p62
    %p64 = scmp.ne.s32.totalorder %s53, %s54
    %p65 = scmp.eq.s32.totalorder %s19, 0
    %p66 = por %p64, %p65
    %p67 = scmp.ne.s32.totalorder %s53, %s54
    %p68 = scmp.eq.s32.totalorder %s20, 1
    %p69 = por %p67, %p68
    %p71 = scmp.ne.s32.totalorder %s54, %s70
    %p72 = scmp.eq.s32.totalorder %s20, 0
    %p73 = por %p71, %p72
    %s75 = sadd.s32 %s74, 1
    %p78 = scmp.eq.s32.totalorder %s14, 1
    %p79 = scmp.ne.s32.totalorder %s74, %s76
    %p80 = scmp.eq.s32.totalorder %s14, 0
    %p81 = por %p79, %p80
    %p82 = scmp.ne.s32.totalorder %s74, %s76
    %p83 = scmp.eq.s32.totalorder %s19, 1
    %p84 = por %p82, %p83
    %p85 = scmp.ne.s32.totalorder %s76, %s77
    %p86 = scmp.eq.s32.totalorder %s19, 0
    %p87 = por %p85, %p86
    %p88 = scmp.ne.s32.totalorder %s76, %s77
    %p89 = scmp.eq.s32.totalorder %s20, 1
    %p90 = por %p88, %p89
    %p92 = scmp.ne.s32.totalorder %s77, %s91
    %p93 = scmp.eq.s32.totalorder %s20, 0
    %p94 = por %p92, %p93
    %s96 = sadd.s32 %s95, 1
    %p99 = scmp.eq.s32.totalorder %s14, 1
    %p100 = scmp.ne.s32.totalorder %s95, %s97
    %p101 = scmp.eq.s32.totalorder %s14, 0
    %p102 = por %p100, %p101
    %p103 = scmp.ne.s32.totalorder %s95, %s97
    %p104 = scmp.eq.s32.totalorder %s19, 1
    %p105 = por %p103, %p104
    %p106 = scmp.ne.s32.totalorder %s97, %s98
    %p107 = scmp.eq.s32.totalorder %s19, 0
    %p108 = por %p106, %p107
    %p109 = scmp.ne.s32.totalorder %s97, %s98
    %p110 = scmp.eq.s32.totalorder %s20, 1
    %p111 = por %p109, %p110
    %p113 = scmp.ne.s32.totalorder %s98, %s112
    %p114 = scmp.eq.s32.totalorder %s20, 0
    %p115 = por %p113, %p114
    %s117 = sadd.s32 %s116, 1
    %p120 = scmp.eq.s32.totalorder %s14, 1
    %p121 = scmp.ne.s32.totalorder %s116, %s118
    %p122 = scmp.eq.s32.totalorder %s14, 0
    %p123 = por %p121, %p122
    %p124 = scmp.ne.s32.totalorder %s116, %s118
    %p125 = scmp.eq.s32.totalorder %s19, 1
    %p126 = por %p124, %p125
    %p127 = scmp.ne.s32.totalorder %s118, %s119
    %p128 = scmp.eq.s32.totalorder %s19, 0
    %p129 = por %p127, %p128
    %p130 = scmp.ne.s32.totalorder %s118, %s119
    %p131 = scmp.eq.s32.totalorder %s20, 1
    %p132 = por %p130, %p131
    %p134 = scmp.ne.s32.totalorder %s119, %s133
    %p135 = scmp.eq.s32.totalorder %s20, 0
    %p136 = por %p134, %p135
    %s138 = sadd.s32 %s137, 1
    %p141 = scmp.eq.s32.totalorder %s14, 1
    %p142 = scmp.ne.s32.totalorder %s137, %s139
    %p143 = scmp.eq.s32.totalorder %s14, 0
    %p144 = por %p142, %p143
    %p145 = scmp.ne.s32.totalorder %s137, %s139
    %p146 = scmp.eq.s32.totalorder %s19, 1
    %p147 = por %p145, %p146
    %p148 = scmp.ne.s32.totalorder %s139, %s140
    %p149 = scmp.eq.s32.totalorder %s19, 0
    %p150 = por %p148, %p149
    %p151 = scmp.ne.s32.totalorder %s139, %s140
    %p152 = scmp.eq.s32.totalorder %s20, 1
    %p153 = por %p151, %p152
    %p155 = scmp.ne.s32.totalorder %s140, %s154
    %p156 = scmp.eq.s32.totalorder %s20, 0
    %p157 = por %p155, %p156
    %s158 = ssub.s32 %s14, %s21
    %p159 = scmp.eq.s32.totalorder %s158, 0
    %s161 = sadd.s32 %s160, 1
    %s162 = scalar_select %p159, %s160, %s161
    %p165 = pneg %p159
    %p166 = scmp.eq.s32.totalorder %s14, 1
    %p167 = por %p165, %p166
    %p168 = scmp.ne.s32.totalorder %s160, %s163
    %p169 = scmp.eq.s32.totalorder %s14, 0
    %p170 = por %p168, %p169
    %p171 = scmp.ne.s32.totalorder %s160, %s163
    %p172 = scmp.eq.s32.totalorder %s19, 1
    %p173 = por %p171, %p172
    %p174 = scmp.ne.s32.totalorder %s163, %s164
    %p175 = scmp.eq.s32.totalorder %s19, 0
    %p176 = por %p174, %p175
    %p177 = scmp.ne.s32.totalorder %s163, %s164
    %p178 = scmp.eq.s32.totalorder %s20, 1
    %p179 = por %p177, %p178
    %p181 = scmp.ne.s32.totalorder %s164, %s180
    %p182 = scmp.eq.s32.totalorder %s20, 0
    %p183 = por %p181, %p182
    %s184 = ssub.s32 %s14, %s21
    %p185 = scmp.eq.s32.totalorder %s184, 0
    %s187 = sadd.s32 %s186, 1
    %s188 = scalar_select %p185, %s186, %s187
    %p191 = pneg %p185
    %p192 = scmp.eq.s32.totalorder %s14, 1
    %p193 = por %p191, %p192
    %p194 = scmp.ne.s32.totalorder %s186, %s189
    %p195 = scmp.eq.s32.totalorder %s14, 0
    %p196 = por %p194, %p195
    %p197 = scmp.ne.s32.totalorder %s186, %s189
    %p198 = scmp.eq.s32.totalorder %s19, 1
    %p199 = por %p197, %p198
    %p200 = scmp.ne.s32.totalorder %s189, %s190
    %p201 = scmp.eq.s32.totalorder %s19, 0
    %p202 = por %p200, %p201
    %p203 = scmp.ne.s32.totalorder %s189, %s190
    %p204 = scmp.eq.s32.totalorder %s20, 1
    %p205 = por %p203, %p204
    %p207 = scmp.ne.s32.totalorder %s190, %s206
    %p208 = scmp.eq.s32.totalorder %s20, 0
    %p209 = por %p207, %p208
    %p210 = scmp.le.s32.totalorder 1, %s14
    %p211 = scmp.lt.s32.totalorder %s14, 3
    %p212 = pnand %p210, %p211
    %p213 = pneg %p212
    // Predicated region
    $region9: #{_lambda_.22} parent=5 // pred_check
      _
    $region10: #{_lambda_.22} parent=5 // pred_check_branch
      %215 = sbr.rel (%p212) target = $region12
    $region11: #{_lambda_.22} parent=5 // pred_region
      %s216 = ssub.s32 %s14, 1
      // Predicated region
      $region13: #{_lambda_.22} parent=11 // pred_check
        %p217 = pneg %p87
      $region14: #{_lambda_.22} parent=11 // pred_check_branch
        %219 = sbr.rel (%p217) target = $region16
      $region15: #{_lambda_.22} parent=11 // pred_region
        _
      $region16: #{_lambda_.22} parent=11 // pred_fallthru
        _
      // Predicated region
      $region17: #{_lambda_.22} parent=11 // pred_check
        %p220 = pneg %p108
      $region18: #{_lambda_.22} parent=11 // pred_check_branch
        %222 = sbr.rel (%p220) target = $region20
      $region19: #{_lambda_.22} parent=11 // pred_region
        _
      $region20: #{_lambda_.22} parent=11 // pred_fallthru
        _
      // Predicated region
      $region21: #{_lambda_.22} parent=11 // pred_check
        %p223 = pneg %p129
      $region22: #{_lambda_.22} parent=11 // pred_check_branch
        %225 = sbr.rel (%p223) target = $region24
      $region23: #{_lambda_.22} parent=11 // pred_region
        _
      $region24: #{_lambda_.22} parent=11 // pred_fallthru
        _
      // Predicated region
      $region25: #{_lambda_.22} parent=11 // pred_check
        %p226 = pneg %p150
      $region26: #{_lambda_.22} parent=11 // pred_check_branch
        %228 = sbr.rel (%p226) target = $region28
      $region27: #{_lambda_.22} parent=11 // pred_region
        _
      $region28: #{_lambda_.22} parent=11 // pred_fallthru
        _
    $region12: #{_lambda_.22} parent=5 // pred_fallthru
      _
    %p229 = scmp.lt.s32.totalorder %s14, 2
    // Predicated region
    $region29: #{_lambda_.22} parent=5 // pred_check
      %p230 = pneg %p229
    $region30: #{_lambda_.22} parent=5 // pred_check_branch
      %232 = sbr.rel (%p230) target = $region32
    $region31: #{_lambda_.22} parent=5 // pred_region
      // Predicated region
      $region33: #{_lambda_.22} parent=31 // pred_check
        %p233 = pneg %p34
      $region34: #{_lambda_.22} parent=31 // pred_check_branch
        %235 = sbr.rel (%p233) target = $region36
      $region35: #{_lambda_.22} parent=31 // pred_region
        %p236 = scmp.lt.s32.totalorder %s14, 1
        %s237 = scalar_select %p236, %s14, 1
        %s238 = smul.addr %s237, 12
        %s239 = smul.addr %s238, 2
        %s240 = scalar_lea.vmem %s0, %s239
      $region36: #{_lambda_.22} parent=31 // pred_fallthru
        _
      // Predicated region
      $region37: #{_lambda_.22} parent=31 // pred_check
        %p241 = pneg %p60
      $region38: #{_lambda_.22} parent=31 // pred_check_branch
        %243 = sbr.rel (%p241) target = $region40
      $region39: #{_lambda_.22} parent=31 // pred_region
        %p244 = scmp.lt.s32.totalorder %s14, 1
        %s245 = scalar_select %p244, %s14, 1
        %s246 = smul.addr %s245, 12
        %s247 = smul.addr %s246, 2
        %s248 = scalar_lea.vmem %s1, %s247
      $region40: #{_lambda_.22} parent=31 // pred_fallthru
        _
    $region32: #{_lambda_.22} parent=5 // pred_fallthru
      _
    %p249 = scmp.le.s32.totalorder 1, %s14
    %p250 = scmp.lt.s32.totalorder %s14, 3
    %p251 = pnand %p249, %p250
    %p252 = pneg %p251
    // Predicated region
    $region41: #{_lambda_.22} parent=5 // pred_check
      _
    $region42: #{_lambda_.22} parent=5 // pred_check_branch
      %254 = sbr.rel (%p251) target = $region44
    $region43: #{_lambda_.22} parent=5 // pred_region
      %s255 = ssub.s32 %s14, 1
      %p256 = scmp.lt.s32.totalorder %s19, 1
      %s257 = scalar_select %p256, %s19, 1
      %s258 = smul.addr %s257, 12
      %s259 = smul.addr %s258, 2
      %s260 = scalar_lea.vmem %s0, %s259
      %p261 = pneg %p40
      %p262 = pneg %p37
      %p263 = scmp.lt.s32.totalorder %s19, 1
      %s264 = scalar_select %p263, %s19, 1
      %s265 = smul.addr %s264, 12
      %s266 = smul.addr %s265, 2
      %s267 = scalar_lea.vmem %s1, %s266
      %p268 = pneg %p66
      %p269 = pneg %p63
      %p270 = pneg %p87
      %p271 = pneg %p84
      %p272 = pneg %p108
      %p273 = pneg %p105
      %p274 = pneg %p129
      %p275 = pneg %p126
      %p276 = pneg %p150
      %p277 = pneg %p147
      %p278 = pneg %p176
      %p279 = pneg %p173
      %p280 = scmp.lt.s32.totalorder %s19, 1
      %s281 = scalar_select %p280, %s19, 1
      %s282 = smul.addr %s281, 2
      %s283 = scalar_lea.vmem %s6, %s282
      %p284 = pneg %p202
      %p285 = pneg %p199
      %p286 = scmp.lt.s32.totalorder %s19, 1
      %s287 = scalar_select %p286, %s19, 1
      %s288 = smul.addr %s287, 2
      %s289 = scalar_lea.vmem %s7, %s288
      %p290 = scmp.lt.s32.totalorder %s19, 1
      %s291 = scalar_select %p290, %s19, 1
      %s292 = smul.addr %s291, 12
      %s293 = smul.addr %s292, 2
      %s294 = scalar_lea.vmem %s0, %s293
      %p295 = scmp.lt.s32.totalorder %s19, 1
      %s296 = scalar_select %p295, %s19, 1
      %s297 = smul.addr %s296, 12
      %s298 = smul.addr %s297, 2
      %s299 = scalar_lea.vmem %s1, %s298
      %p300 = scmp.lt.s32.totalorder %s19, 1
      %s301 = scalar_select %p300, %s19, 1
      %s302 = smul.addr %s301, 2
      %s303 = scalar_lea.vmem %s6, %s302
      %p304 = scmp.lt.s32.totalorder %s19, 1
      %s305 = scalar_select %p304, %s19, 1
      %s306 = smul.addr %s305, 2
      %s307 = scalar_lea.vmem %s7, %s306
      %v308 = vld [vmem:[%s294] sm:$0x1]
      %v309 = vld [vmem:[%s294 + $0x2] sm:$0x1]
      %v310 = vunpack.c.l.bf16 %v308
      %v311 = vunpack.c.l.bf16 %v309
      %v312 = vld [vmem:[%s2] sm:$0x1]
      %v313 = vlaneseq
      %v314 = vshrl.u32 %v313, 7
      %v315 = vsub.s32 0, %v314
      %v316 = vrot.slane %v312, %v315
      %v317 = vmul.f32 %v310, %v316
      %v318 = vmul.f32 %v311, %v316
      %v319 = vadd.f32 %v317, 0.0
      %v320 = vadd.f32 %v318, 0.0
      %s321 = scalar_lea.vmem %s294, 6
      %v322 = vld [vmem:[%s321] sm:$0x1]
      %v323 = vld [vmem:[%s321 + $0x2] sm:$0x1]
      %v324 = vunpack.c.l.bf16 %v322
      %v325 = vunpack.c.l.bf16 %v323
      %v326 = vld [vmem:[%s2 + $0x1] sm:$0x1]
      %v327 = vlaneseq
      %v328 = vshrl.u32 %v327, 7
      %v329 = vsub.s32 0, %v328
      %v330 = vrot.slane %v326, %v329
      %v331 = vmul.f32 %v324, %v330
      %v332 = vmul.f32 %v325, %v330
      %v333 = vadd.f32 %v319, %v331
      %v334 = vadd.f32 %v320, %v332
      %v335 = vld [vmem:[%s294] sm:$0x3]
      %v336 = vld [vmem:[%s294 + $0x2] sm:$0x3]
      %v337 = vunpack.c.l.bf16 %v335
      %v338 = vunpack.c.l.bf16 %v336
      %v339 = vld [vmem:[%s2 + $0x2] sm:$0x1]
      %v340 = vlaneseq
      %v341 = vshrl.u32 %v340, 7
      %v342 = vsub.s32 0, %v341
      %v343 = vrot.slane %v339, %v342
      %v344 = vmul.f32 %v337, %v343
      %v345 = vmul.f32 %v338, %v343
      %v348 = vrot.slane %v344, 5
      %v349 = vrot.slane %v348, 4
      %v350 = vrot.slane %v345, 5
      %v351 = vrot.slane %v350, 4
      %v354 = vadd.f32 %v333, %v349
      %v355 = vadd.f32 %v334, %v351
      %s356 = scalar_lea.vmem %s294, 12
      %v357 = vld [vmem:[%s356] sm:$0x1]
      %v358 = vld [vmem:[%s356 + $0x2] sm:$0x1]
      %v359 = vunpack.c.l.bf16 %v357
      %v360 = vunpack.c.l.bf16 %v358
      %s361 = scalar_lea.vmem %s2, 4
      %v362 = vld [vmem:[%s361] sm:$0x1]
      %v363 = vlaneseq
      %v364 = vshrl.u32 %v363, 7
      %v365 = vsub.s32 0, %v364
      %v366 = vrot.slane %v362, %v365
      %v367 = vmul.f32 %v359, %v366
      %v368 = vmul.f32 %v360, %v366
      %v369 = vadd.f32 %v354, %v367
      %v370 = vadd.f32 %v355, %v368
      %s371 = scalar_lea.vmem %s294, 18
      %v372 = vld [vmem:[%s371] sm:$0x1]
      %v373 = vld [vmem:[%s371 + $0x2] sm:$0x1]
      %v374 = vunpack.c.l.bf16 %v372
      %v375 = vunpack.c.l.bf16 %v373
      %v376 = vld [vmem:[%s361 + $0x1] sm:$0x1]
      %v377 = vlaneseq
      %v378 = vshrl.u32 %v377, 7
      %v379 = vsub.s32 0, %v378
      %v380 = vrot.slane %v376, %v379
      %v381 = vmul.f32 %v374, %v380
      %v382 = vmul.f32 %v375, %v380
      %v383 = vadd.f32 %v369, %v381
      %v384 = vadd.f32 %v370, %v382
      %v385 = vld [vmem:[%s356] sm:$0x3]
      %v386 = vld [vmem:[%s356 + $0x2] sm:$0x3]
      %v387 = vunpack.c.l.bf16 %v385
      %v388 = vunpack.c.l.bf16 %v386
      %v389 = vld [vmem:[%s361 + $0x2] sm:$0x1]
      %v390 = vlaneseq
      %v391 = vshrl.u32 %v390, 7
      %v392 = vsub.s32 0, %v391
      %v393 = vrot.slane %v389, %v392
      %v394 = vmul.f32 %v387, %v393
      %v395 = vmul.f32 %v388, %v393
      %v398 = vrot.slane %v394, 5
      %v399 = vrot.slane %v398, 4
      %v400 = vrot.slane %v395, 5
      %v401 = vrot.slane %v400, 4
      %v404 = vadd.f32 %v383, %v399
      %v405 = vadd.f32 %v384, %v401
      %s406 = scalar_lea.vmem %s294, 2
      %v407 = vld [vmem:[%s406] sm:$0x1]
      %v408 = vld [vmem:[%s406 + $0x2] sm:$0x1]
      %v409 = vunpack.c.l.bf16 %v407
      %v410 = vunpack.c.l.bf16 %v408
      %s411 = scalar_lea.vmem %s2, 8
      %v412 = vld [vmem:[%s411] sm:$0x1]
      %v413 = vlaneseq
      %v414 = vshrl.u32 %v413, 7
      %v415 = vsub.s32 0, %v414
      %v416 = vrot.slane %v412, %v415
      %v417 = vmul.f32 %v409, %v416
      %v418 = vmul.f32 %v410, %v416
      %v419 = vadd.f32 %v404, %v417
      %v420 = vadd.f32 %v405, %v418
      %s421 = scalar_lea.vmem %s294, 8
      %v422 = vld [vmem:[%s421] sm:$0x1]
      %v423 = vld [vmem:[%s421 + $0x2] sm:$0x1]
      %v424 = vunpack.c.l.bf16 %v422
      %v425 = vunpack.c.l.bf16 %v423
      %v426 = vld [vmem:[%s411 + $0x1] sm:$0x1]
      %v427 = vlaneseq
      %v428 = vshrl.u32 %v427, 7
      %v429 = vsub.s32 0, %v428
      %v430 = vrot.slane %v426, %v429
      %v431 = vmul.f32 %v424, %v430
      %v432 = vmul.f32 %v425, %v430
      %v433 = vadd.f32 %v419, %v431
      %v434 = vadd.f32 %v420, %v432
      %v435 = vld [vmem:[%s406] sm:$0x3]
      %v436 = vld [vmem:[%s406 + $0x2] sm:$0x3]
      %v437 = vunpack.c.l.bf16 %v435
      %v438 = vunpack.c.l.bf16 %v436
      %v439 = vld [vmem:[%s411 + $0x2] sm:$0x1]
      %v440 = vlaneseq
      %v441 = vshrl.u32 %v440, 7
      %v442 = vsub.s32 0, %v441
      %v443 = vrot.slane %v439, %v442
      %v444 = vmul.f32 %v437, %v443
      %v445 = vmul.f32 %v438, %v443
      %v448 = vrot.slane %v444, 5
      %v449 = vrot.slane %v448, 4
      %v450 = vrot.slane %v445, 5
      %v451 = vrot.slane %v450, 4
      %v454 = vadd.f32 %v433, %v449
      %v455 = vadd.f32 %v434, %v451
      %v456 = vld [vmem:[%s3] sm:$0x1]
      %v458 = vlaneseq
      %v459 = vshrl.u32 %v458, 7
      %v460 = vsub.s32 0, %v459
      %v461 = vrot.slane %v456, %v460
      %v463 = vadd.f32 %v454, %v461
      %v464 = vadd.f32 %v455, %v461
      %v465 = vpack.c.bf16 %v463, %v463
      %v466 = vpack.c.bf16 %v464, %v464
      %vm467 = vcmask 122880
      %468 = vst.msk [vmem:[%s303] sm:$0x1] %vm467, %v465
      %469 = vst.msk [vmem:[%s303 + $0x1] sm:$0x1] %vm467, %v466
      %v470 = vld [vmem:[%s299] sm:$0x1]
      %v471 = vld [vmem:[%s299 + $0x2] sm:$0x1]
      %v472 = vunpack.c.l.bf16 %v470
      %v473 = vunpack.c.l.bf16 %v471
      %v474 = vld [vmem:[%s4] sm:$0x1]
      %v475 = vlaneseq
      %v476 = vshrl.u32 %v475, 7
      %v477 = vsub.s32 0, %v476
      %v478 = vrot.slane %v474, %v477
      %v479 = vmul.f32 %v472, %v478
      %v480 = vmul.f32 %v473, %v478
      %v481 = vadd.f32 %v479, 0.0
      %v482 = vadd.f32 %v480, 0.0
      %s483 = scalar_lea.vmem %s299, 6
      %v484 = vld [vmem:[%s483] sm:$0x1]
      %v485 = vld [vmem:[%s483 + $0x2] sm:$0x1]
      %v486 = vunpack.c.l.bf16 %v484
      %v487 = vunpack.c.l.bf16 %v485
      %v488 = vld [vmem:[%s4 + $0x1] sm:$0x1]
      %v489 = vlaneseq
      %v490 = vshrl.u32 %v489, 7
      %v491 = vsub.s32 0, %v490
      %v492 = vrot.slane %v488, %v491
      %v493 = vmul.f32 %v486, %v492
      %v494 = vmul.f32 %v487, %v492
      %v495 = vadd.f32 %v481, %v493
      %v496 = vadd.f32 %v482, %v494
      %v497 = vld [vmem:[%s299] sm:$0x3]
      %v498 = vld [vmem:[%s299 + $0x2] sm:$0x3]
      %v499 = vunpack.c.l.bf16 %v497
      %v500 = vunpack.c.l.bf16 %v498
      %v501 = vld [vmem:[%s4 + $0x2] sm:$0x1]
      %v502 = vlaneseq
      %v503 = vshrl.u32 %v502, 7
      %v504 = vsub.s32 0, %v503
      %v505 = vrot.slane %v501, %v504
      %v506 = vmul.f32 %v499, %v505
      %v507 = vmul.f32 %v500, %v505
      %v510 = vrot.slane %v506, 5
      %v511 = vrot.slane %v510, 4
      %v512 = vrot.slane %v507, 5
      %v513 = vrot.slane %v512, 4
      %v516 = vadd.f32 %v495, %v511
      %v517 = vadd.f32 %v496, %v513
      %s518 = scalar_lea.vmem %s299, 12
      %v519 = vld [vmem:[%s518] sm:$0x1]
      %v520 = vld [vmem:[%s518 + $0x2] sm:$0x1]
      %v521 = vunpack.c.l.bf16 %v519
      %v522 = vunpack.c.l.bf16 %v520
      %s523 = scalar_lea.vmem %s4, 4
      %v524 = vld [vmem:[%s523] sm:$0x1]
      %v525 = vlaneseq
      %v526 = vshrl.u32 %v525, 7
      %v527 = vsub.s32 0, %v526
      %v528 = vrot.slane %v524, %v527
      %v529 = vmul.f32 %v521, %v528
      %v530 = vmul.f32 %v522, %v528
      %v531 = vadd.f32 %v516, %v529
      %v532 = vadd.f32 %v517, %v530
      %s533 = scalar_lea.vmem %s299, 18
      %v534 = vld [vmem:[%s533] sm:$0x1]
      %v535 = vld [vmem:[%s533 + $0x2] sm:$0x1]
      %v536 = vunpack.c.l.bf16 %v534
      %v537 = vunpack.c.l.bf16 %v535
      %v538 = vld [vmem:[%s523 + $0x1] sm:$0x1]
      %v539 = vlaneseq
      %v540 = vshrl.u32 %v539, 7
      %v541 = vsub.s32 0, %v540
      %v542 = vrot.slane %v538, %v541
      %v543 = vmul.f32 %v536, %v542
      %v544 = vmul.f32 %v537, %v542
      %v545 = vadd.f32 %v531, %v543
      %v546 = vadd.f32 %v532, %v544
      %v547 = vld [vmem:[%s518] sm:$0x3]
      %v548 = vld [vmem:[%s518 + $0x2] sm:$0x3]
      %v549 = vunpack.c.l.bf16 %v547
      %v550 = vunpack.c.l.bf16 %v548
      %v551 = vld [vmem:[%s523 + $0x2] sm:$0x1]
      %v552 = vlaneseq
      %v553 = vshrl.u32 %v552, 7
      %v554 = vsub.s32 0, %v553
      %v555 = vrot.slane %v551, %v554
      %v556 = vmul.f32 %v549, %v555
      %v557 = vmul.f32 %v550, %v555
      %v560 = vrot.slane %v556, 5
      %v561 = vrot.slane %v560, 4
      %v562 = vrot.slane %v557, 5
      %v563 = vrot.slane %v562, 4
      %v566 = vadd.f32 %v545, %v561
      %v567 = vadd.f32 %v546, %v563
      %s568 = scalar_lea.vmem %s299, 2
      %v569 = vld [vmem:[%s568] sm:$0x1]
      %v570 = vld [vmem:[%s568 + $0x2] sm:$0x1]
      %v571 = vunpack.c.l.bf16 %v569
      %v572 = vunpack.c.l.bf16 %v570
      %s573 = scalar_lea.vmem %s4, 8
      %v574 = vld [vmem:[%s573] sm:$0x1]
      %v575 = vlaneseq
      %v576 = vshrl.u32 %v575, 7
      %v577 = vsub.s32 0, %v576
      %v578 = vrot.slane %v574, %v577
      %v579 = vmul.f32 %v571, %v578
      %v580 = vmul.f32 %v572, %v578
      %v581 = vadd.f32 %v566, %v579
      %v582 = vadd.f32 %v567, %v580
      %s583 = scalar_lea.vmem %s299, 8
      %v584 = vld [vmem:[%s583] sm:$0x1]
      %v585 = vld [vmem:[%s583 + $0x2] sm:$0x1]
      %v586 = vunpack.c.l.bf16 %v584
      %v587 = vunpack.c.l.bf16 %v585
      %v588 = vld [vmem:[%s573 + $0x1] sm:$0x1]
      %v589 = vlaneseq
      %v590 = vshrl.u32 %v589, 7
      %v591 = vsub.s32 0, %v590
      %v592 = vrot.slane %v588, %v591
      %v593 = vmul.f32 %v586, %v592
      %v594 = vmul.f32 %v587, %v592
      %v595 = vadd.f32 %v581, %v593
      %v596 = vadd.f32 %v582, %v594
      %v597 = vld [vmem:[%s568] sm:$0x3]
      %v598 = vld [vmem:[%s568 + $0x2] sm:$0x3]
      %v599 = vunpack.c.l.bf16 %v597
      %v600 = vunpack.c.l.bf16 %v598
      %v601 = vld [vmem:[%s573 + $0x2] sm:$0x1]
      %v602 = vlaneseq
      %v603 = vshrl.u32 %v602, 7
      %v604 = vsub.s32 0, %v603
      %v605 = vrot.slane %v601, %v604
      %v606 = vmul.f32 %v599, %v605
      %v607 = vmul.f32 %v600, %v605
      %v610 = vrot.slane %v606, 5
      %v611 = vrot.slane %v610, 4
      %v612 = vrot.slane %v607, 5
      %v613 = vrot.slane %v612, 4
      %v616 = vadd.f32 %v595, %v611
      %v617 = vadd.f32 %v596, %v613
      %v618 = vld [vmem:[%s5] sm:$0x1]
      %v620 = vlaneseq
      %v621 = vshrl.u32 %v620, 7
      %v622 = vsub.s32 0, %v621
      %v623 = vrot.slane %v618, %v622
      %v625 = vadd.f32 %v616, %v623
      %v626 = vadd.f32 %v617, %v623
      %v627 = vpack.c.bf16 %v625, %v625
      %v628 = vpack.c.bf16 %v626, %v626
      %629 = vst.msk [vmem:[%s307] sm:$0x1] %vm467, %v627
      %630 = vst.msk [vmem:[%s307 + $0x1] sm:$0x1] %vm467, %v628
      %p631 = scmp.lt.s32.totalorder %s19, 1
      %s632 = scalar_select %p631, %s19, 1
      %s633 = smul.addr %s632, 2
      %s634 = scalar_lea.vmem %s6, %s633
      %p635 = scmp.lt.s32.totalorder %s19, 1
      %s636 = scalar_select %p635, %s19, 1
      %s637 = smul.addr %s636, 2
      %s638 = scalar_lea.vmem %s7, %s637
      // Predicated region
      $region45: #{_lambda_.22} parent=43 // pred_check
        %p639 = pneg %p173
      $region46: #{_lambda_.22} parent=43 // pred_check_branch
        %641 = sbr.rel (%p639) target = $region48
      $region47: #{_lambda_.22} parent=43 // pred_region
        _
      $region48: #{_lambda_.22} parent=43 // pred_fallthru
        _
      // Predicated region
      $region49: #{_lambda_.22} parent=43 // pred_check
        %p642 = pneg %p199
      $region50: #{_lambda_.22} parent=43 // pred_check_branch
        %644 = sbr.rel (%p642) target = $region52
      $region51: #{_lambda_.22} parent=43 // pred_region
        _
      $region52: #{_lambda_.22} parent=43 // pred_fallthru
        _
    $region44: #{_lambda_.22} parent=5 // pred_fallthru
      _
    %p645 = scmp.le.s32.totalorder 2, %s14
    // Predicated region
    $region53: #{_lambda_.22} parent=5 // pred_check
      %p646 = pneg %p645
    $region54: #{_lambda_.22} parent=5 // pred_check_branch
      %648 = sbr.rel (%p646) target = $region56
    $region55: #{_lambda_.22} parent=5 // pred_region
      %s649 = ssub.s32 %s14, 2
      // Predicated region
      $region57: #{_lambda_.22} parent=55 // pred_check
        %p650 = pneg %p179
      $region58: #{_lambda_.22} parent=55 // pred_check_branch
        %652 = sbr.rel (%p650) target = $region60
      $region59: #{_lambda_.22} parent=55 // pred_region
        %p653 = scmp.lt.s32.totalorder %s20, 1
        %s654 = scalar_select %p653, %s20, 1
        %s655 = smul.addr %s654, 2
        %s656 = scalar_lea.vmem %s6, %s655
      $region60: #{_lambda_.22} parent=55 // pred_fallthru
        _
      // Predicated region
      $region61: #{_lambda_.22} parent=55 // pred_check
        %p657 = pneg %p205
      $region62: #{_lambda_.22} parent=55 // pred_check_branch
        %659 = sbr.rel (%p657) target = $region64
      $region63: #{_lambda_.22} parent=55 // pred_region
        %p660 = scmp.lt.s32.totalorder %s20, 1
        %s661 = scalar_select %p660, %s20, 1
        %s662 = smul.addr %s661, 2
        %s663 = scalar_lea.vmem %s7, %s662
      $region64: #{_lambda_.22} parent=55 // pred_fallthru
        _
    $region56: #{_lambda_.22} parent=5 // pred_fallthru
      _
  $region6: #{_lambda_.22} parent=0 // loop_footer
    %s18 = sadd.s32 1, %s14
  $region7: #{_lambda_.22} parent=0 // loop_footer_branch
    %13 = sbr.rel target = $region3
  $region8: #{_lambda_.22} parent=0 // loop_exit
    _

// kernel: _lambda_.24
$region0: #{_lambda_.24}
  #allocation0 [shape = 'u32[]', space=smem, size = 0x4, offset = 0x4, fixed_abs, tag = 'smem constant byte address 0x4 - core index']
  #allocation1 [shape = 'u32[144,128]{1,0:T(1,128)}', space=vmem, size = 0x12000, scoped, tag = 'internal scratch']
  #allocation2 [shape = 'f32[20,16]{1,0:T(8,128)}', space=vmem, size = 0x3000, scoped, tag = 'scratch operand']
  %s0 = inlined_call_operand.vmem [shape: bf16[2,4,32], index: 0, kind: input, shape index: {}]
  %s1 = inlined_call_operand.vmem [shape: bf16[32,16], index: 1, kind: input, shape index: {}]
  %s2 = inlined_call_operand.vmem [shape: f32[1,16], index: 2, kind: input, shape index: {}]
  %s3 = inlined_call_operand.vmem [shape: f32[3,3,16], index: 3, kind: input, shape index: {}]
  %s4 = inlined_call_operand.vmem [shape: f32[1,16], index: 4, kind: input, shape index: {}]
  %s5 = inlined_call_operand.vmem [shape: bf16[16,32], index: 5, kind: input, shape index: {}]
  %s6 = inlined_call_operand.vmem [shape: f32[1,32], index: 6, kind: input, shape index: {}]
  %s7 = inlined_call_operand.vmem [shape: bf16[32,32], index: 7, kind: input, shape index: {}]
  %s8 = inlined_call_operand.vmem [shape: bf16[2,4,32], index: 8, kind: output, shape index: {}]
  %s9 = sld [smem:[#allocation0]]
  $region65: #{_lambda_.24} parent=0
    _
  %s11 = ssub.s32 1, %s9
  %s12 = scalar_select 0, %s11, %s9
  loop: start=0, step=1, limit=4
  $region2: #{_lambda_.24} parent=0 // loop_pre_header
    _
  $region3: #{_lambda_.24} parent=0 // loop_header
    %s14 = sphi 0, %s18
    %p15 = scmp.ge.s32.totalorder %s14, 4
    %s24 = sphi 0, %s26
    %s27 = sphi 0, %s24
    %s28 = sphi 0, %s27
    %s44 = sphi 0, %s28
    %s48 = sphi 0, %s48
    %s50 = sphi 0, %s48
    %s51 = sphi 0, %s50
    %s65 = sphi 0, %s51
    %s69 = sphi 0, %s69
    %s71 = sphi 0, %s69
    %s72 = sphi 0, %s71
    %s86 = sphi 0, %s72
    %s90 = sphi 0, %s90
    %s92 = sphi 0, %s90
    %s93 = sphi 0, %s92
    %s107 = sphi 0, %s93
    %s111 = sphi 0, %s111
    %s113 = sphi 0, %s111
    %s114 = sphi 0, %s113
    %s128 = sphi 0, %s114
    %s132 = sphi 0, %s132
    %s134 = sphi 0, %s132
    %s135 = sphi 0, %s134
    %s149 = sphi 0, %s135
    %s153 = sphi 0, %s153
    %s155 = sphi 0, %s153
    %s156 = sphi 0, %s155
    %s170 = sphi 0, %s156
    %s174 = sphi 0, %s174
    %s176 = sphi 0, %s174
    %s177 = sphi 0, %s176
    %s191 = sphi 0, %s177
    %s197 = sphi 0, %s199
    %s200 = sphi 0, %s197
    %s201 = sphi 0, %s200
    %s217 = sphi 0, %s201
  $region4: #{_lambda_.24} parent=0 // loop_header_branch
    %17 = sbr.rel (%p15) target = $region8
  $region5: #{_lambda_.24} parent=0 // loop_body
    %s19 = ssub.s32 %s14, 1
    %s20 = ssub.s32 %s14, 2
    %s21 = sadd.s32 %s14, 1
    %s22 = ssub.s32 %s14, %s21
    %p23 = scmp.eq.s32.totalorder %s22, 0
    %s25 = sadd.s32 %s24, 1
    %s26 = scalar_select %p23, %s24, %s25
    %p29 = pneg %p23
    %p30 = scmp.eq.s32.totalorder %s14, 1
    %p31 = por %p29, %p30
    %p32 = scmp.ne.s32.totalorder %s24, %s27
    %p33 = scmp.eq.s32.totalorder %s14, 0
    %p34 = por %p32, %p33
    %p35 = scmp.ne.s32.totalorder %s24, %s27
    %p36 = scmp.eq.s32.totalorder %s19, 1
    %p37 = por %p35, %p36
    %p38 = scmp.ne.s32.totalorder %s27, %s28
    %p39 = scmp.eq.s32.totalorder %s19, 0
    %p40 = por %p38, %p39
    %p41 = scmp.ne.s32.totalorder %s27, %s28
    %p42 = scmp.eq.s32.totalorder %s20, 1
    %p43 = por %p41, %p42
    %p45 = scmp.ne.s32.totalorder %s28, %s44
    %p46 = scmp.eq.s32.totalorder %s20, 0
    %p47 = por %p45, %p46
    %s49 = sadd.s32 %s48, 1
    %p52 = scmp.eq.s32.totalorder %s14, 1
    %p53 = scmp.ne.s32.totalorder %s48, %s50
    %p54 = scmp.eq.s32.totalorder %s14, 0
    %p55 = por %p53, %p54
    %p56 = scmp.ne.s32.totalorder %s48, %s50
    %p57 = scmp.eq.s32.totalorder %s19, 1
    %p58 = por %p56, %p57
    %p59 = scmp.ne.s32.totalorder %s50, %s51
    %p60 = scmp.eq.s32.totalorder %s19, 0
    %p61 = por %p59, %p60
    %p62 = scmp.ne.s32.totalorder %s50, %s51
    %p63 = scmp.eq.s32.totalorder %s20, 1
    %p64 = por %p62, %p63
    %p66 = scmp.ne.s32.totalorder %s51, %s65
    %p67 = scmp.eq.s32.totalorder %s20, 0
    %p68 = por %p66, %p67
    %s70 = sadd.s32 %s69, 1
    %p73 = scmp.eq.s32.totalorder %s14, 1
    %p74 = scmp.ne.s32.totalorder %s69, %s71
    %p75 = scmp.eq.s32.totalorder %s14, 0
    %p76 = por %p74, %p75
    %p77 = scmp.ne.s32.totalorder %s69, %s71
    %p78 = scmp.eq.s32.totalorder %s19, 1
    %p79 = por %p77, %p78
    %p80 = scmp.ne.s32.totalorder %s71, %s72
    %p81 = scmp.eq.s32.totalorder %s19, 0
    %p82 = por %p80, %p81
    %p83 = scmp.ne.s32.totalorder %s71, %s72
    %p84 = scmp.eq.s32.totalorder %s20, 1
    %p85 = por %p83, %p84
    %p87 = scmp.ne.s32.totalorder %s72, %s86
    %p88 = scmp.eq.s32.totalorder %s20, 0
    %p89 = por %p87, %p88
    %s91 = sadd.s32 %s90, 1
    %p94 = scmp.eq.s32.totalorder %s14, 1
    %p95 = scmp.ne.s32.totalorder %s90, %s92
    %p96 = scmp.eq.s32.totalorder %s14, 0
    %p97 = por %p95, %p96
    %p98 = scmp.ne.s32.totalorder %s90, %s92
    %p99 = scmp.eq.s32.totalorder %s19, 1
    %p100 = por %p98, %p99
    %p101 = scmp.ne.s32.totalorder %s92, %s93
    %p102 = scmp.eq.s32.totalorder %s19, 0
    %p103 = por %p101, %p102
    %p104 = scmp.ne.s32.totalorder %s92, %s93
    %p105 = scmp.eq.s32.totalorder %s20, 1
    %p106 = por %p104, %p105
    %p108 = scmp.ne.s32.totalorder %s93, %s107
    %p109 = scmp.eq.s32.totalorder %s20, 0
    %p110 = por %p108, %p109
    %s112 = sadd.s32 %s111, 1
    %p115 = scmp.eq.s32.totalorder %s14, 1
    %p116 = scmp.ne.s32.totalorder %s111, %s113
    %p117 = scmp.eq.s32.totalorder %s14, 0
    %p118 = por %p116, %p117
    %p119 = scmp.ne.s32.totalorder %s111, %s113
    %p120 = scmp.eq.s32.totalorder %s19, 1
    %p121 = por %p119, %p120
    %p122 = scmp.ne.s32.totalorder %s113, %s114
    %p123 = scmp.eq.s32.totalorder %s19, 0
    %p124 = por %p122, %p123
    %p125 = scmp.ne.s32.totalorder %s113, %s114
    %p126 = scmp.eq.s32.totalorder %s20, 1
    %p127 = por %p125, %p126
    %p129 = scmp.ne.s32.totalorder %s114, %s128
    %p130 = scmp.eq.s32.totalorder %s20, 0
    %p131 = por %p129, %p130
    %s133 = sadd.s32 %s132, 1
    %p136 = scmp.eq.s32.totalorder %s14, 1
    %p137 = scmp.ne.s32.totalorder %s132, %s134
    %p138 = scmp.eq.s32.totalorder %s14, 0
    %p139 = por %p137, %p138
    %p140 = scmp.ne.s32.totalorder %s132, %s134
    %p141 = scmp.eq.s32.totalorder %s19, 1
    %p142 = por %p140, %p141
    %p143 = scmp.ne.s32.totalorder %s134, %s135
    %p144 = scmp.eq.s32.totalorder %s19, 0
    %p145 = por %p143, %p144
    %p146 = scmp.ne.s32.totalorder %s134, %s135
    %p147 = scmp.eq.s32.totalorder %s20, 1
    %p148 = por %p146, %p147
    %p150 = scmp.ne.s32.totalorder %s135, %s149
    %p151 = scmp.eq.s32.totalorder %s20, 0
    %p152 = por %p150, %p151
    %s154 = sadd.s32 %s153, 1
    %p157 = scmp.eq.s32.totalorder %s14, 1
    %p158 = scmp.ne.s32.totalorder %s153, %s155
    %p159 = scmp.eq.s32.totalorder %s14, 0
    %p160 = por %p158, %p159
    %p161 = scmp.ne.s32.totalorder %s153, %s155
    %p162 = scmp.eq.s32.totalorder %s19, 1
    %p163 = por %p161, %p162
    %p164 = scmp.ne.s32.totalorder %s155, %s156
    %p165 = scmp.eq.s32.totalorder %s19, 0
    %p166 = por %p164, %p165
    %p167 = scmp.ne.s32.totalorder %s155, %s156
    %p168 = scmp.eq.s32.totalorder %s20, 1
    %p169 = por %p167, %p168
    %p171 = scmp.ne.s32.totalorder %s156, %s170
    %p172 = scmp.eq.s32.totalorder %s20, 0
    %p173 = por %p171, %p172
    %s175 = sadd.s32 %s174, 1
    %p178 = scmp.eq.s32.totalorder %s14, 1
    %p179 = scmp.ne.s32.totalorder %s174, %s176
    %p180 = scmp.eq.s32.totalorder %s14, 0
    %p181 = por %p179, %p180
    %p182 = scmp.ne.s32.totalorder %s174, %s176
    %p183 = scmp.eq.s32.totalorder %s19, 1
    %p184 = por %p182, %p183
    %p185 = scmp.ne.s32.totalorder %s176, %s177
    %p186 = scmp.eq.s32.totalorder %s19, 0
    %p187 = por %p185, %p186
    %p188 = scmp.ne.s32.totalorder %s176, %s177
    %p189 = scmp.eq.s32.totalorder %s20, 1
    %p190 = por %p188, %p189
    %p192 = scmp.ne.s32.totalorder %s177, %s191
    %p193 = scmp.eq.s32.totalorder %s20, 0
    %p194 = por %p192, %p193
    %s195 = ssub.s32 %s14, %s21
    %p196 = scmp.eq.s32.totalorder %s195, 0
    %s198 = sadd.s32 %s197, 1
    %s199 = scalar_select %p196, %s197, %s198
    %p202 = pneg %p196
    %p203 = scmp.eq.s32.totalorder %s14, 1
    %p204 = por %p202, %p203
    %p205 = scmp.ne.s32.totalorder %s197, %s200
    %p206 = scmp.eq.s32.totalorder %s14, 0
    %p207 = por %p205, %p206
    %p208 = scmp.ne.s32.totalorder %s197, %s200
    %p209 = scmp.eq.s32.totalorder %s19, 1
    %p210 = por %p208, %p209
    %p211 = scmp.ne.s32.totalorder %s200, %s201
    %p212 = scmp.eq.s32.totalorder %s19, 0
    %p213 = por %p211, %p212
    %p214 = scmp.ne.s32.totalorder %s200, %s201
    %p215 = scmp.eq.s32.totalorder %s20, 1
    %p216 = por %p214, %p215
    %p218 = scmp.ne.s32.totalorder %s201, %s217
    %p219 = scmp.eq.s32.totalorder %s20, 0
    %p220 = por %p218, %p219
    %p221 = scmp.le.s32.totalorder 1, %s14
    %p222 = scmp.lt.s32.totalorder %s14, 3
    %p223 = pnand %p221, %p222
    %p224 = pneg %p223
    // Predicated region
    $region9: #{_lambda_.24} parent=5 // pred_check
      _
    $region10: #{_lambda_.24} parent=5 // pred_check_branch
      %226 = sbr.rel (%p223) target = $region12
    $region11: #{_lambda_.24} parent=5 // pred_region
      %s227 = ssub.s32 %s14, 1
      // Predicated region
      $region13: #{_lambda_.24} parent=11 // pred_check
        %p228 = pneg %p61
      $region14: #{_lambda_.24} parent=11 // pred_check_branch
        %230 = sbr.rel (%p228) target = $region16
      $region15: #{_lambda_.24} parent=11 // pred_region
        _
      $region16: #{_lambda_.24} parent=11 // pred_fallthru
        _
      // Predicated region
      $region17: #{_lambda_.24} parent=11 // pred_check
        %p231 = pneg %p82
      $region18: #{_lambda_.24} parent=11 // pred_check_branch
        %233 = sbr.rel (%p231) target = $region20
      $region19: #{_lambda_.24} parent=11 // pred_region
        _
      $region20: #{_lambda_.24} parent=11 // pred_fallthru
        _
      // Predicated region
      $region21: #{_lambda_.24} parent=11 // pred_check
        %p234 = pneg %p103
      $region22: #{_lambda_.24} parent=11 // pred_check_branch
        %236 = sbr.rel (%p234) target = $region24
      $region23: #{_lambda_.24} parent=11 // pred_region
        _
      $region24: #{_lambda_.24} parent=11 // pred_fallthru
        _
      // Predicated region
      $region25: #{_lambda_.24} parent=11 // pred_check
        %p237 = pneg %p124
      $region26: #{_lambda_.24} parent=11 // pred_check_branch
        %239 = sbr.rel (%p237) target = $region28
      $region27: #{_lambda_.24} parent=11 // pred_region
        _
      $region28: #{_lambda_.24} parent=11 // pred_fallthru
        _
      // Predicated region
      $region29: #{_lambda_.24} parent=11 // pred_check
        %p240 = pneg %p145
      $region30: #{_lambda_.24} parent=11 // pred_check_branch
        %242 = sbr.rel (%p240) target = $region32
      $region31: #{_lambda_.24} parent=11 // pred_region
        _
      $region32: #{_lambda_.24} parent=11 // pred_fallthru
        _
      // Predicated region
      $region33: #{_lambda_.24} parent=11 // pred_check
        %p243 = pneg %p166
      $region34: #{_lambda_.24} parent=11 // pred_check_branch
        %245 = sbr.rel (%p243) target = $region36
      $region35: #{_lambda_.24} parent=11 // pred_region
        _
      $region36: #{_lambda_.24} parent=11 // pred_fallthru
        _
      // Predicated region
      $region37: #{_lambda_.24} parent=11 // pred_check
        %p246 = pneg %p187
      $region38: #{_lambda_.24} parent=11 // pred_check_branch
        %248 = sbr.rel (%p246) target = $region40
      $region39: #{_lambda_.24} parent=11 // pred_region
        _
      $region40: #{_lambda_.24} parent=11 // pred_fallthru
        _
    $region12: #{_lambda_.24} parent=5 // pred_fallthru
      _
    %p249 = scmp.lt.s32.totalorder %s14, 2
    // Predicated region
    $region41: #{_lambda_.24} parent=5 // pred_check
      %p250 = pneg %p249
    $region42: #{_lambda_.24} parent=5 // pred_check_branch
      %252 = sbr.rel (%p250) target = $region44
    $region43: #{_lambda_.24} parent=5 // pred_region
      // Predicated region
      $region45: #{_lambda_.24} parent=43 // pred_check
        %p253 = pneg %p34
      $region46: #{_lambda_.24} parent=43 // pred_check_branch
        %255 = sbr.rel (%p253) target = $region48
      $region47: #{_lambda_.24} parent=43 // pred_region
        %p256 = scmp.lt.s32.totalorder %s14, 1
        %s257 = scalar_select %p256, %s14, 1
        %s258 = smul.addr %s257, 2
        %s259 = scalar_lea.vmem %s0, %s258
      $region48: #{_lambda_.24} parent=43 // pred_fallthru
        _
    $region44: #{_lambda_.24} parent=5 // pred_fallthru
      _
    %p260 = scmp.le.s32.totalorder 1, %s14
    %p261 = scmp.lt.s32.totalorder %s14, 3
    %p262 = pnand %p260, %p261
    %p263 = pneg %p262
    // Predicated region
    $region49: #{_lambda_.24} parent=5 // pred_check
      _
    $region50: #{_lambda_.24} parent=5 // pred_check_branch
      %265 = sbr.rel (%p262) target = $region52
    $region51: #{_lambda_.24} parent=5 // pred_region
      %s266 = ssub.s32 %s14, 1
      %p267 = scmp.lt.s32.totalorder %s19, 1
      %s268 = scalar_select %p267, %s19, 1
      %s269 = smul.addr %s268, 2
      %s270 = scalar_lea.vmem %s0, %s269
      %p271 = pneg %p40
      %p272 = pneg %p37
      %p273 = pneg %p61
      %p274 = pneg %p58
      %p275 = pneg %p82
      %p276 = pneg %p79
      %p277 = pneg %p103
      %p278 = pneg %p100
      %p279 = pneg %p124
      %p280 = pneg %p121
      %p281 = pneg %p145
      %p282 = pneg %p142
      %p283 = pneg %p166
      %p284 = pneg %p163
      %p285 = pneg %p187
      %p286 = pneg %p184
      %p287 = pneg %p213
      %p288 = pneg %p210
      %p289 = scmp.lt.s32.totalorder %s19, 1
      %s290 = scalar_select %p289, %s19, 1
      %s291 = smul.addr %s290, 2
      %s292 = scalar_lea.vmem %s8, %s291
      %p293 = scmp.lt.s32.totalorder %s19, 1
      %s294 = scalar_select %p293, %s19, 1
      %s295 = smul.addr %s294, 2
      %s296 = scalar_lea.vmem %s0, %s295
      %p297 = scmp.lt.s32.totalorder %s19, 1
      %s298 = scalar_select %p297, %s19, 1
      %s299 = smul.addr %s298, 2
      %s300 = scalar_lea.vmem %s8, %s299
      %v302 = vld [vmem:[%s296] sm:$0x3]
      %v303 = vld [vmem:[%s1] sm:$0xf]
      %v304 = vld [vmem:[%s1 + $0x4] sm:$0xf]
      %v305 = vld [vmem:[%s1 + $0x8] sm:$0xf]
      %v306 = vld [vmem:[%s1 + $0xc] sm:$0xf]
      %v307 = vld [vmem:[%s2] sm:$0x1]
      %v309 = vlaneseq
      %v310 = vshrl.u32 %v309, 7
      %v311 = vsub.s32 0, %v310
      %v312 = vrot.slane %v307, %v311
      %v318 = vunpack.c.l.b16 %v303
      %v319 = vunpack.c.l.b16 %v304
      %v320 = vunpack.c.l.b16 %v305
      %v321 = vunpack.c.l.b16 %v306
      %v322 = vpack.c.b16 %v319, %v318
      %v323 = vpack.c.b16 %v321, %v320
      %vm326 = vcmask 261120
      %v328 = vsel %vm326, %v302, 0
      %330 = vmatprep.subr.bf16.mxu0 0
      %331 = vmatpush1.bf16.msra.mxu0 %v322
      %332 = vmatprep.subr.bf16.mxu0 0
      %333 = vmatpush1.bf16.msra.mxu0 %v323
      %334 = vmatprep.subr.bf16.mxu0 0
      %335 = vmatpush1.bf16.msra.mxu0 0
      %336 = vmatprep.subr.bf16.mxu0 0
      %337 = vmatpush1.bf16.msra.mxu0 0
      %338 = vmatprep.subr.bf16.mxu0 0
      %339 = vmatpush1.bf16.msra.mxu0 0
      %340 = vmatprep.subr.bf16.mxu0 0
      %341 = vmatpush1.bf16.msra.mxu0 0
      %342 = vmatprep.subr.bf16.mxu0 0
      %343 = vmatpush1.bf16.msra.mxu0 0
      %344 = vmatprep.subr.bf16.mxu0 0
      %345 = vmatpush1.bf16.msra.mxu0 0
      %346 = vmatprep.subr.bf16.mxu0 0
      %347 = vmatpush1.bf16.msra.mxu0 0
      %348 = vmatprep.subr.bf16.mxu0 0
      %349 = vmatpush1.bf16.msra.mxu0 0
      %350 = vmatprep.subr.bf16.mxu0 0
      %351 = vmatpush1.bf16.msra.mxu0 0
      %352 = vmatprep.subr.bf16.mxu0 0
      %353 = vmatpush1.bf16.msra.mxu0 0
      %354 = vmatprep.subr.bf16.mxu0 0
      %355 = vmatpush1.bf16.msra.mxu0 0
      %356 = vmatprep.subr.bf16.mxu0 0
      %357 = vmatpush1.bf16.msra.mxu0 0
      %358 = vmatprep.subr.bf16.mxu0 0
      %359 = vmatpush1.bf16.msra.mxu0 0
      %360 = vmatprep.subr.bf16.mxu0 0
      %361 = vmatpush1.bf16.msra.mxu0 0
      %362 = vmatprep.mubr.bf16.mxu0 0
      %363 = vmatmul.mubr.bf16.gmra.mrb[0].mxu0 %v328
      %v364 = vpop.f32.mrb[0].mxu0
      %v365 = vadd.f32 %v312, %v364
      %v366 = vpop.f32.mrb[0].mxu0
      %v367 = vpop.f32.mrb[0].mxu0
      %v368 = vpop.f32.mrb[0].mxu0
      %369 = vdwg.mxu0
      %v370 = vmax.f32 %v365, 0.0
      %vm371 = vcmask 130048
      %372 = vst.msk [vmem:[#allocation2] sm:$0xff] %vm371, 0.0
      %373 = vst.msk [vmem:[#allocation2 + $0xc] sm:$0xff] %vm371, 0.0
      %vm374 = vcmask 125952
      %375 = vst.msk [vmem:[#allocation2 + $0x8] sm:$0xf] %vm374, %v370
      %v376 = vlaneseq
      %v377 = vshrl.u32 %v376, 7
      %vm378 = vcmp.lt.s32.totalorder %v377, 0
      %v379 = vsub.s32 0, %v377
      %v380 = vsel %vm378, %v379, %v377
      %v381 = vshrl.u32 %v380, 1
      %v382 = vand.u32 %v380, 1
      %v383 = vsub.s32 0, %v382
      %v384 = vsel %vm378, %v383, %v382
      %vm385 = vcmp.ne.s32.totalorder %v384, 0
      %vm386 = vcmp.lt.s32.totalorder %v384, 0
      %vm387 = vmand %vm386, %vm385
      %v388 = vadd.s32 %v384, 2
      %v389 = vsel %vm387, %v388, %v384
      %vm390 = vcmp.ne.s32.totalorder %v389, 0
      %v391 = vsel %vm390, 1, 0
      %vm392 = vcmp.eq.s32.totalorder %v391, 1
      %v393 = vsel %vm392, 1, 0
      %v394 = vcvt.s32.f32 %v393
      %vm395 = vcmp.ne.s32.totalorder %v389, 1
      %v396 = vsel %vm395, 1, 0
      %vm397 = vcmp.eq.s32.totalorder %v396, 1
      %v398 = vsel %vm397, 1, 0
      %v399 = vcvt.s32.f32 %v398
      %v400 = vld [vmem:[#allocation2 + $0x5] sm:$0xf]
      %v401 = vld [vmem:[%s3] sm:$0x1]
      %v402 = vlaneseq
      %v403 = vshrl.u32 %v402, 7
      %v404 = vsub.s32 0, %v403
      %v405 = vrot.slane %v401, %v404
      %v406 = vmul.f32 %v400, %v405
      %v407 = vadd.f32 %v406, 0.0
      %v408 = vld [vmem:[#allocation2 + $0x6] sm:$0xf]
      %v409 = vld [vmem:[%s3 + $0x1] sm:$0x1]
      %v410 = vlaneseq
      %v411 = vshrl.u32 %v410, 7
      %v412 = vsub.s32 0, %v411
      %v413 = vrot.slane %v409, %v412
      %v414 = vmul.f32 %v408, %v413
      %v415 = vadd.f32 %v414, 0.0
      %v416 = vld [vmem:[#allocation2 + $0x7] sm:$0xf]
      %v417 = vld [vmem:[%s3 + $0x2] sm:$0x1]
      %v418 = vlaneseq
      %v419 = vshrl.u32 %v418, 7
      %v420 = vsub.s32 0, %v419
      %v421 = vrot.slane %v417, %v420
      %v422 = vmul.f32 %v416, %v421
      %v423 = vadd.f32 %v422, 0.0
      %s424 = scalar_lea.vmem %s3, 4
      %v425 = vld [vmem:[%s424] sm:$0x1]
      %v426 = vlaneseq
      %v427 = vshrl.u32 %v426, 7
      %v428 = vsub.s32 0, %v427
      %v429 = vrot.slane %v425, %v428
      %v430 = vmul.f32 %v416, %v429
      %v431 = vadd.f32 %v407, %v430
      %v432 = vld [vmem:[#allocation2 + $0x8] sm:$0xf]
      %v433 = vld [vmem:[%s424 + $0x1] sm:$0x1]
      %v434 = vlaneseq
      %v435 = vshrl.u32 %v434, 7
      %v436 = vsub.s32 0, %v435
      %v437 = vrot.slane %v433, %v436
      %v438 = vmul.f32 %v432, %v437
      %v439 = vadd.f32 %v415, %v438
      %v440 = vld [vmem:[#allocation2 + $0x9] sm:$0xf]
      %v441 = vld [vmem:[%s424 + $0x2] sm:$0x1]
      %v442 = vlaneseq
      %v443 = vshrl.u32 %v442, 7
      %v444 = vsub.s32 0, %v443
      %v445 = vrot.slane %v441, %v444
      %v446 = vmul.f32 %v440, %v445
      %v447 = vadd.f32 %v423, %v446
      %s448 = scalar_lea.vmem %s3, 8
      %v449 = vld [vmem:[%s448] sm:$0x1]
      %v450 = vlaneseq
      %v451 = vshrl.u32 %v450, 7
      %v452 = vsub.s32 0, %v451
      %v453 = vrot.slane %v449, %v452
      %v454 = vmul.f32 %v440, %v453
      %v455 = vadd.f32 %v431, %v454
      %v456 = vld [vmem:[#allocation2 + $0xa] sm:$0xf]
      %v457 = vld [vmem:[%s448 + $0x1] sm:$0x1]
      %v458 = vlaneseq
      %v459 = vshrl.u32 %v458, 7
      %v460 = vsub.s32 0, %v459
      %v461 = vrot.slane %v457, %v460
      %v462 = vmul.f32 %v456, %v461
      %v463 = vadd.f32 %v439, %v462
      %v464 = vld [vmem:[#allocation2 + $0xb] sm:$0xf]
      %v465 = vld [vmem:[%s448 + $0x2] sm:$0x1]
      %v466 = vlaneseq
      %v467 = vshrl.u32 %v466, 7
      %v468 = vsub.s32 0, %v467
      %v469 = vrot.slane %v465, %v468
      %v470 = vmul.f32 %v464, %v469
      %v471 = vadd.f32 %v447, %v470
      %v472 = vmul.f32 %v455, %v394
      %v473 = vadd.f32 %v472, %v463
      %v474 = vmul.f32 %v471, %v399
      %v475 = vadd.f32 %v473, %v474
      %v476 = vld [vmem:[%s4] sm:$0x1]
      %v478 = vlaneseq
      %v479 = vshrl.u32 %v478, 7
      %v480 = vsub.s32 0, %v479
      %v481 = vrot.slane %v476, %v480
      %v483 = vadd.f32 %v475, %v481
      %v484 = vpack.c.bf16 %v483, %v483
      %v485 = vld [vmem:[%s5] sm:$0xf]
      %v486 = vld [vmem:[%s5 + $0x4] sm:$0xf]
      %v487 = vld [vmem:[%s6] sm:$0x1]
      %v489 = vlaneseq
      %v490 = vshrl.u32 %v489, 7
      %v491 = vsub.s32 0, %v490
      %v492 = vrot.slane %v487, %v491
      %v496 = vunpack.c.l.b16 %v485
      %v497 = vunpack.c.l.b16 %v486
      %v498 = vpack.c.b16 %v497, %v496
      %v501 = vsel %vm371, %v484, 0
      %503 = vmatprep.subr.bf16.mxu0 0
      %504 = vmatpush1.bf16.msra.mxu0 %v498
      %505 = vmatprep.subr.bf16.mxu0 0
      %506 = vmatpush1.bf16.msra.mxu0 0
      %507 = vmatprep.subr.bf16.mxu0 0
      %508 = vmatpush1.bf16.msra.mxu0 0
      %509 = vmatprep.subr.bf16.mxu0 0
      %510 = vmatpush1.bf16.msra.mxu0 0
      %511 = vmatprep.subr.bf16.mxu0 0
      %512 = vmatpush1.bf16.msra.mxu0 0
      %513 = vmatprep.subr.bf16.mxu0 0
      %514 = vmatpush1.bf16.msra.mxu0 0
      %515 = vmatprep.subr.bf16.mxu0 0
      %516 = vmatpush1.bf16.msra.mxu0 0
      %517 = vmatprep.subr.bf16.mxu0 0
      %518 = vmatpush1.bf16.msra.mxu0 0
      %519 = vmatprep.subr.bf16.mxu0 0
      %520 = vmatpush1.bf16.msra.mxu0 0
      %521 = vmatprep.subr.bf16.mxu0 0
      %522 = vmatpush1.bf16.msra.mxu0 0
      %523 = vmatprep.subr.bf16.mxu0 0
      %524 = vmatpush1.bf16.msra.mxu0 0
      %525 = vmatprep.subr.bf16.mxu0 0
      %526 = vmatpush1.bf16.msra.mxu0 0
      %527 = vmatprep.subr.bf16.mxu0 0
      %528 = vmatpush1.bf16.msra.mxu0 0
      %529 = vmatprep.subr.bf16.mxu0 0
      %530 = vmatpush1.bf16.msra.mxu0 0
      %531 = vmatprep.subr.bf16.mxu0 0
      %532 = vmatpush1.bf16.msra.mxu0 0
      %533 = vmatprep.subr.bf16.mxu0 0
      %534 = vmatpush1.bf16.msra.mxu0 0
      %535 = vmatprep.mubr.bf16.mxu0 0
      %536 = vmatmul.mubr.bf16.gmra.mrb[0].mxu0 %v501
      %v537 = vpop.f32.mrb[0].mxu0
      %v538 = vadd.f32 %v492, %v537
      %v539 = vpop.f32.mrb[0].mxu0
      %v540 = vpop.f32.mrb[0].mxu0
      %v541 = vpop.f32.mrb[0].mxu0
      %542 = vdwg.mxu0
      %v543 = vmax.f32 %v538, 0.0
      %v544 = vld [vmem:[%s7] sm:$0xf]
      %v545 = vld [vmem:[%s7 + $0x4] sm:$0xf]
      %v546 = vld [vmem:[%s7 + $0x8] sm:$0xf]
      %v547 = vld [vmem:[%s7 + $0xc] sm:$0xf]
      %v552 = vunpack.c.l.b16 %v544
      %v553 = vunpack.c.l.b16 %v545
      %v554 = vunpack.c.l.b16 %v546
      %v555 = vunpack.c.l.b16 %v547
      %v556 = vpack.c.b16 %v553, %v552
      %v557 = vpack.c.b16 %v555, %v554
      %560 = vmatprep.subr.bf16.mxu0 0
      %561 = vmatpush1.bf16.msra.mxu0 %v556
      %562 = vmatprep.subr.bf16.mxu0 0
      %563 = vmatpush1.bf16.msra.mxu0 %v557
      %564 = vmatprep.subr.bf16.mxu0 0
      %565 = vmatpush1.bf16.msra.mxu0 0
      %566 = vmatprep.subr.bf16.mxu0 0
      %567 = vmatpush1.bf16.msra.mxu0 0
      %568 = vmatprep.subr.bf16.mxu0 0
      %569 = vmatpush1.bf16.msra.mxu0 0
      %570 = vmatprep.subr.bf16.mxu0 0
      %571 = vmatpush1.bf16.msra.mxu0 0
      %572 = vmatprep.subr.bf16.mxu0 0
      %573 = vmatpush1.bf16.msra.mxu0 0
      %574 = vmatprep.subr.bf16.mxu0 0
      %575 = vmatpush1.bf16.msra.mxu0 0
      %576 = vmatprep.subr.bf16.mxu0 0
      %577 = vmatpush1.bf16.msra.mxu0 0
      %578 = vmatprep.subr.bf16.mxu0 0
      %579 = vmatpush1.bf16.msra.mxu0 0
      %580 = vmatprep.subr.bf16.mxu0 0
      %581 = vmatpush1.bf16.msra.mxu0 0
      %582 = vmatprep.subr.bf16.mxu0 0
      %583 = vmatpush1.bf16.msra.mxu0 0
      %584 = vmatprep.subr.bf16.mxu0 0
      %585 = vmatpush1.bf16.msra.mxu0 0
      %586 = vmatprep.subr.bf16.mxu0 0
      %587 = vmatpush1.bf16.msra.mxu0 0
      %588 = vmatprep.subr.bf16.mxu0 0
      %589 = vmatpush1.bf16.msra.mxu0 0
      %590 = vmatprep.subr.bf16.mxu0 0
      %591 = vmatpush1.bf16.msra.mxu0 0
      %592 = vmatprep.mubr.bf16.mxu0 0
      %593 = vmatmul.mubr.bf16.gmra.mrb[0].mxu0 %v328
      %v594 = vpop.f32.mrb[0].mxu0
      %v595 = vadd.f32 0.0, %v594
      %v596 = vpop.f32.mrb[0].mxu0
      %v597 = vpop.f32.mrb[0].mxu0
      %v598 = vpop.f32.mrb[0].mxu0
      %599 = vdwg.mxu0
      %v600 = vadd.f32 %v543, %v595
      %v601 = vpack.c.bf16 %v600, %v600
      %vm602 = vcmask 254976
      %603 = vst.msk [vmem:[%s300] sm:$0x3] %vm602, %v601
      %p604 = scmp.lt.s32.totalorder %s19, 1
      %s605 = scalar_select %p604, %s19, 1
      %s606 = smul.addr %s605, 2
      %s607 = scalar_lea.vmem %s8, %s606
      // Predicated region
      $region53: #{_lambda_.24} parent=51 // pred_check
        %p608 = pneg %p210
      $region54: #{_lambda_.24} parent=51 // pred_check_branch
        %610 = sbr.rel (%p608) target = $region56
      $region55: #{_lambda_.24} parent=51 // pred_region
        _
      $region56: #{_lambda_.24} parent=51 // pred_fallthru
        _
    $region52: #{_lambda_.24} parent=5 // pred_fallthru
      _
    %p611 = scmp.le.s32.totalorder 2, %s14
    // Predicated region
    $region57: #{_lambda_.24} parent=5 // pred_check
      %p612 = pneg %p611
    $region58: #{_lambda_.24} parent=5 // pred_check_branch
      %614 = sbr.rel (%p612) target = $region60
    $region59: #{_lambda_.24} parent=5 // pred_region
      %s615 = ssub.s32 %s14, 2
      // Predicated region
      $region61: #{_lambda_.24} parent=59 // pred_check
        %p616 = pneg %p216
      $region62: #{_lambda_.24} parent=59 // pred_check_branch
        %618 = sbr.rel (%p616) target = $region64
      $region63: #{_lambda_.24} parent=59 // pred_region
        %p619 = scmp.lt.s32.totalorder %s20, 1
        %s620 = scalar_select %p619, %s20, 1
        %s621 = smul.addr %s620, 2
        %s622 = scalar_lea.vmem %s8, %s621
      $region64: #{_lambda_.24} parent=59 // pred_fallthru
        _
    $region60: #{_lambda_.24} parent=5 // pred_fallthru
      _
  $region6: #{_lambda_.24} parent=0 // loop_footer
    %s18 = sadd.s32 1, %s14
  $region7: #{_lambda_.24} parent=0 // loop_footer_branch
    %13 = sbr.rel target = $region3
  $region8: #{_lambda_.24} parent=0 // loop_exit
    _

// kernel: _lambda_.25
$region0: #{_lambda_.25}
  #allocation0 [shape = 'u32[]', space=smem, size = 0x4, offset = 0x4, fixed_abs, tag = 'smem constant byte address 0x4 - core index']
  #allocation1 [shape = 'u32[144,128]{1,0:T(1,128)}', space=vmem, size = 0x12000, scoped, tag = 'internal scratch']
  %s0 = inlined_call_operand.vmem [shape: bf16[8,32], index: 0, kind: input, shape index: {}]
  %s1 = inlined_call_operand.vmem [shape: bf16[32,32], index: 1, kind: input, shape index: {}]
  %s2 = inlined_call_operand.vmem [shape: f32[1,32], index: 2, kind: input, shape index: {}]
  %s3 = inlined_call_operand.vmem [shape: bf16[8,32], index: 3, kind: output, shape index: {}]
  %s4 = sld [smem:[#allocation0]]
  $region22: #{_lambda_.25} parent=0
    _
  %s6 = ssub.s32 1, %s4
  %s7 = scalar_select 0, %s6, %s4
  // Predicated region
  $region2: #{_lambda_.25} parent=0 // pred_check
    _
  $region3: #{_lambda_.25} parent=0 // pred_check_branch
    %9 = sbr.rel (0) target = $region5
  $region4: #{_lambda_.25} parent=0 // pred_region
    _
  $region5: #{_lambda_.25} parent=0 // pred_fallthru
    _
  // Predicated region
  $region6: #{_lambda_.25} parent=0 // pred_check
    _
  $region7: #{_lambda_.25} parent=0 // pred_check_branch
    %11 = sbr.rel (0) target = $region9
  $region8: #{_lambda_.25} parent=0 // pred_region
    _
  $region9: #{_lambda_.25} parent=0 // pred_fallthru
    _
  // Predicated region
  $region10: #{_lambda_.25} parent=0 // pred_check
    _
  $region11: #{_lambda_.25} parent=0 // pred_check_branch
    %13 = sbr.rel (0) target = $region13
  $region12: #{_lambda_.25} parent=0 // pred_region
    _
  $region13: #{_lambda_.25} parent=0 // pred_fallthru
    _
  %v15 = vld [vmem:[%s0] sm:$0xf]
  %v16 = vld [vmem:[%s1] sm:$0xf]
  %v17 = vld [vmem:[%s1 + $0x4] sm:$0xf]
  %v18 = vld [vmem:[%s1 + $0x8] sm:$0xf]
  %v19 = vld [vmem:[%s1 + $0xc] sm:$0xf]
  %v20 = vld [vmem:[%s2] sm:$0x1]
  %v22 = vlaneseq
  %v23 = vshrl.u32 %v22, 7
  %v24 = vsub.s32 0, %v23
  %v25 = vrot.slane %v20, %v24
  %v31 = vunpack.c.l.b16 %v16
  %v32 = vunpack.c.l.b16 %v17
  %v33 = vunpack.c.l.b16 %v18
  %v34 = vunpack.c.l.b16 %v19
  %v35 = vpack.c.b16 %v32, %v31
  %v36 = vpack.c.b16 %v34, %v33
  %vm39 = vcmask 261120
  %v41 = vsel %vm39, %v15, 0
  %43 = vmatprep.subr.bf16.mxu0 0
  %44 = vmatpush1.bf16.msra.mxu0 %v35
  %45 = vmatprep.subr.bf16.mxu0 0
  %46 = vmatpush1.bf16.msra.mxu0 %v36
  %47 = vmatprep.subr.bf16.mxu0 0
  %48 = vmatpush1.bf16.msra.mxu0 0
  %49 = vmatprep.subr.bf16.mxu0 0
  %50 = vmatpush1.bf16.msra.mxu0 0
  %51 = vmatprep.subr.bf16.mxu0 0
  %52 = vmatpush1.bf16.msra.mxu0 0
  %53 = vmatprep.subr.bf16.mxu0 0
  %54 = vmatpush1.bf16.msra.mxu0 0
  %55 = vmatprep.subr.bf16.mxu0 0
  %56 = vmatpush1.bf16.msra.mxu0 0
  %57 = vmatprep.subr.bf16.mxu0 0
  %58 = vmatpush1.bf16.msra.mxu0 0
  %59 = vmatprep.subr.bf16.mxu0 0
  %60 = vmatpush1.bf16.msra.mxu0 0
  %61 = vmatprep.subr.bf16.mxu0 0
  %62 = vmatpush1.bf16.msra.mxu0 0
  %63 = vmatprep.subr.bf16.mxu0 0
  %64 = vmatpush1.bf16.msra.mxu0 0
  %65 = vmatprep.subr.bf16.mxu0 0
  %66 = vmatpush1.bf16.msra.mxu0 0
  %67 = vmatprep.subr.bf16.mxu0 0
  %68 = vmatpush1.bf16.msra.mxu0 0
  %69 = vmatprep.subr.bf16.mxu0 0
  %70 = vmatpush1.bf16.msra.mxu0 0
  %71 = vmatprep.subr.bf16.mxu0 0
  %72 = vmatpush1.bf16.msra.mxu0 0
  %73 = vmatprep.subr.bf16.mxu0 0
  %74 = vmatpush1.bf16.msra.mxu0 0
  %75 = vmatprep.mubr.bf16.mxu0 0
  %76 = vmatmul.mubr.bf16.gmra.mrb[0].mxu0 %v41
  %v77 = vpop.f32.mrb[0].mxu0
  %v78 = vadd.f32 %v25, %v77
  %v79 = vpop.f32.mrb[0].mxu0
  %v80 = vpop.f32.mrb[0].mxu0
  %v81 = vpop.f32.mrb[0].mxu0
  %82 = vdwg.mxu0
  %v83 = vmax.f32 %v78, 0.0
  %v84 = vpack.c.bf16 %v83, %v83
  %vm85 = vcmask 257024
  %86 = vst.msk [vmem:[%s3] sm:$0xf] %vm85, %v84
  // Predicated region
  $region14: #{_lambda_.25} parent=0 // pred_check
    _
  $region15: #{_lambda_.25} parent=0 // pred_check_branch
    %88 = sbr.rel (0) target = $region17
  $region16: #{_lambda_.25} parent=0 // pred_region
    _
  $region17: #{_lambda_.25} parent=0 // pred_fallthru
    _
  // Predicated region
  $region18: #{_lambda_.25} parent=0 // pred_check
    _
  $region19: #{_lambda_.25} parent=0 // pred_check_branch
    %90 = sbr.rel (0) target = $region21
  $region20: #{_lambda_.25} parent=0 // pred_region
    _
  $region21: #{_lambda_.25} parent=0 // pred_fallthru
    _

// kernel: _lambda_.26
$region0: #{_lambda_.26}
  #allocation0 [shape = 'u32[]', space=smem, size = 0x4, offset = 0x4, fixed_abs, tag = 'smem constant byte address 0x4 - core index']
  #allocation1 [shape = 'u32[144,128]{1,0:T(1,128)}', space=vmem, size = 0x12000, scoped, tag = 'internal scratch']
  %s0 = inlined_call_operand.vmem [shape: bf16[2,4,2,2,32], index: 0, kind: input, shape index: {}]
  %s1 = inlined_call_operand.vmem [shape: bf16[2,4,2,2,32], index: 1, kind: input, shape index: {}]
  %s2 = inlined_call_operand.vmem [shape: f32[3,3,32], index: 2, kind: input, shape index: {}]
  %s3 = inlined_call_operand.vmem [shape: f32[1,32], index: 3, kind: input, shape index: {}]
  %s4 = inlined_call_operand.vmem [shape: f32[3,3,32], index: 4, kind: input, shape index: {}]
  %s5 = inlined_call_operand.vmem [shape: f32[1,32], index: 5, kind: input, shape index: {}]
  %s6 = inlined_call_operand.vmem [shape: bf16[2,1,1,32], index: 6, kind: output, shape index: {0}]
  %s7 = inlined_call_operand.vmem [shape: bf16[2,1,1,32], index: 7, kind: output, shape index: {1}]
  %8 = xla_tuple %s6, %s7
  %s9 = sld [smem:[#allocation0]]
  $region65: #{_lambda_.26} parent=0
    _
  %s11 = ssub.s32 1, %s9
  %s12 = scalar_select 0, %s11, %s9
  loop: start=0, step=1, limit=4
  $region2: #{_lambda_.26} parent=0 // loop_pre_header
    _
  $region3: #{_lambda_.26} parent=0 // loop_header
    %s14 = sphi 0, %s18
    %p15 = scmp.ge.s32.totalorder %s14, 4
    %s24 = sphi 0, %s26
    %s27 = sphi 0, %s24
    %s28 = sphi 0, %s27
    %s44 = sphi 0, %s28
    %s50 = sphi 0, %s52
    %s53 = sphi 0, %s50
    %s54 = sphi 0, %s53
    %s70 = sphi 0, %s54
    %s74 = sphi 0, %s74
    %s76 = sphi 0, %s74
    %s77 = sphi 0, %s76
    %s91 = sphi 0, %s77
    %s95 = sphi 0, %s95
    %s97 = sphi 0, %s95
    %s98 = sphi 0, %s97
    %s112 = sphi 0, %s98
    %s116 = sphi 0, %s116
    %s118 = sphi 0, %s116
    %s119 = sphi 0, %s118
    %s133 = sphi 0, %s119
    %s137 = sphi 0, %s137
    %s139 = sphi 0, %s137
    %s140 = sphi 0, %s139
    %s154 = sphi 0, %s140
    %s160 = sphi 0, %s162
    %s163 = sphi 0, %s160
    %s164 = sphi 0, %s163
    %s180 = sphi 0, %s164
    %s186 = sphi 0, %s188
    %s189 = sphi 0, %s186
    %s190 = sphi 0, %s189
    %s206 = sphi 0, %s190
  $region4: #{_lambda_.26} parent=0 // loop_header_branch
    %17 = sbr.rel (%p15) target = $region8
  $region5: #{_lambda_.26} parent=0 // loop_body
    %s19 = ssub.s32 %s14, 1
    %s20 = ssub.s32 %s14, 2
    %s21 = sadd.s32 %s14, 1
    %s22 = ssub.s32 %s14, %s21
    %p23 = scmp.eq.s32.totalorder %s22, 0
    %s25 = sadd.s32 %s24, 1
    %s26 = scalar_select %p23, %s24, %s25
    %p29 = pneg %p23
    %p30 = scmp.eq.s32.totalorder %s14, 1
    %p31 = por %p29, %p30
    %p32 = scmp.ne.s32.totalorder %s24, %s27
    %p33 = scmp.eq.s32.totalorder %s14, 0
    %p34 = por %p32, %p33
    %p35 = scmp.ne.s32.totalorder %s24, %s27
    %p36 = scmp.eq.s32.totalorder %s19, 1
    %p37 = por %p35, %p36
    %p38 = scmp.ne.s32.totalorder %s27, %s28
    %p39 = scmp.eq.s32.totalorder %s19, 0
    %p40 = por %p38, %p39
    %p41 = scmp.ne.s32.totalorder %s27, %s28
    %p42 = scmp.eq.s32.totalorder %s20, 1
    %p43 = por %p41, %p42
    %p45 = scmp.ne.s32.totalorder %s28, %s44
    %p46 = scmp.eq.s32.totalorder %s20, 0
    %p47 = por %p45, %p46
    %s48 = ssub.s32 %s14, %s21
    %p49 = scmp.eq.s32.totalorder %s48, 0
    %s51 = sadd.s32 %s50, 1
    %s52 = scalar_select %p49, %s50, %s51
    %p55 = pneg %p49
    %p56 = scmp.eq.s32.totalorder %s14, 1
    %p57 = por %p55, %p56
    %p58 = scmp.ne.s32.totalorder %s50, %s53
    %p59 = scmp.eq.s32.totalorder %s14, 0
    %p60 = por %p58, %p59
    %p61 = scmp.ne.s32.totalorder %s50, %s53
    %p62 = scmp.eq.s32.totalorder %s19, 1
    %p63 = por %p61, %p62
    %p64 = scmp.ne.s32.totalorder %s53, %s54
    %p65 = scmp.eq.s32.totalorder %s19, 0
    %p66 = por %p64, %p65
    %p67 = scmp.ne.s32.totalorder %s53, %s54
    %p68 = scmp.eq.s32.totalorder %s20, 1
    %p69 = por %p67, %p68
    %p71 = scmp.ne.s32.totalorder %s54, %s70
    %p72 = scmp.eq.s32.totalorder %s20, 0
    %p73 = por %p71, %p72
    %s75 = sadd.s32 %s74, 1
    %p78 = scmp.eq.s32.totalorder %s14, 1
    %p79 = scmp.ne.s32.totalorder %s74, %s76
    %p80 = scmp.eq.s32.totalorder %s14, 0
    %p81 = por %p79, %p80
    %p82 = scmp.ne.s32.totalorder %s74, %s76
    %p83 = scmp.eq.s32.totalorder %s19, 1
    %p84 = por %p82, %p83
    %p85 = scmp.ne.s32.totalorder %s76, %s77
    %p86 = scmp.eq.s32.totalorder %s19, 0
    %p87 = por %p85, %p86
    %p88 = scmp.ne.s32.totalorder %s76, %s77
    %p89 = scmp.eq.s32.totalorder %s20, 1
    %p90 = por %p88, %p89
    %p92 = scmp.ne.s32.totalorder %s77, %s91
    %p93 = scmp.eq.s32.totalorder %s20, 0
    %p94 = por %p92, %p93
    %s96 = sadd.s32 %s95, 1
    %p99 = scmp.eq.s32.totalorder %s14, 1
    %p100 = scmp.ne.s32.totalorder %s95, %s97
    %p101 = scmp.eq.s32.totalorder %s14, 0
    %p102 = por %p100, %p101
    %p103 = scmp.ne.s32.totalorder %s95, %s97
    %p104 = scmp.eq.s32.totalorder %s19, 1
    %p105 = por %p103, %p104
    %p106 = scmp.ne.s32.totalorder %s97, %s98
    %p107 = scmp.eq.s32.totalorder %s19, 0
    %p108 = por %p106, %p107
    %p109 = scmp.ne.s32.totalorder %s97, %s98
    %p110 = scmp.eq.s32.totalorder %s20, 1
    %p111 = por %p109, %p110
    %p113 = scmp.ne.s32.totalorder %s98, %s112
    %p114 = scmp.eq.s32.totalorder %s20, 0
    %p115 = por %p113, %p114
    %s117 = sadd.s32 %s116, 1
    %p120 = scmp.eq.s32.totalorder %s14, 1
    %p121 = scmp.ne.s32.totalorder %s116, %s118
    %p122 = scmp.eq.s32.totalorder %s14, 0
    %p123 = por %p121, %p122
    %p124 = scmp.ne.s32.totalorder %s116, %s118
    %p125 = scmp.eq.s32.totalorder %s19, 1
    %p126 = por %p124, %p125
    %p127 = scmp.ne.s32.totalorder %s118, %s119
    %p128 = scmp.eq.s32.totalorder %s19, 0
    %p129 = por %p127, %p128
    %p130 = scmp.ne.s32.totalorder %s118, %s119
    %p131 = scmp.eq.s32.totalorder %s20, 1
    %p132 = por %p130, %p131
    %p134 = scmp.ne.s32.totalorder %s119, %s133
    %p135 = scmp.eq.s32.totalorder %s20, 0
    %p136 = por %p134, %p135
    %s138 = sadd.s32 %s137, 1
    %p141 = scmp.eq.s32.totalorder %s14, 1
    %p142 = scmp.ne.s32.totalorder %s137, %s139
    %p143 = scmp.eq.s32.totalorder %s14, 0
    %p144 = por %p142, %p143
    %p145 = scmp.ne.s32.totalorder %s137, %s139
    %p146 = scmp.eq.s32.totalorder %s19, 1
    %p147 = por %p145, %p146
    %p148 = scmp.ne.s32.totalorder %s139, %s140
    %p149 = scmp.eq.s32.totalorder %s19, 0
    %p150 = por %p148, %p149
    %p151 = scmp.ne.s32.totalorder %s139, %s140
    %p152 = scmp.eq.s32.totalorder %s20, 1
    %p153 = por %p151, %p152
    %p155 = scmp.ne.s32.totalorder %s140, %s154
    %p156 = scmp.eq.s32.totalorder %s20, 0
    %p157 = por %p155, %p156
    %s158 = ssub.s32 %s14, %s21
    %p159 = scmp.eq.s32.totalorder %s158, 0
    %s161 = sadd.s32 %s160, 1
    %s162 = scalar_select %p159, %s160, %s161
    %p165 = pneg %p159
    %p166 = scmp.eq.s32.totalorder %s14, 1
    %p167 = por %p165, %p166
    %p168 = scmp.ne.s32.totalorder %s160, %s163
    %p169 = scmp.eq.s32.totalorder %s14, 0
    %p170 = por %p168, %p169
    %p171 = scmp.ne.s32.totalorder %s160, %s163
    %p172 = scmp.eq.s32.totalorder %s19, 1
    %p173 = por %p171, %p172
    %p174 = scmp.ne.s32.totalorder %s163, %s164
    %p175 = scmp.eq.s32.totalorder %s19, 0
    %p176 = por %p174, %p175
    %p177 = scmp.ne.s32.totalorder %s163, %s164
    %p178 = scmp.eq.s32.totalorder %s20, 1
    %p179 = por %p177, %p178
    %p181 = scmp.ne.s32.totalorder %s164, %s180
    %p182 = scmp.eq.s32.totalorder %s20, 0
    %p183 = por %p181, %p182
    %s184 = ssub.s32 %s14, %s21
    %p185 = scmp.eq.s32.totalorder %s184, 0
    %s187 = sadd.s32 %s186, 1
    %s188 = scalar_select %p185, %s186, %s187
    %p191 = pneg %p185
    %p192 = scmp.eq.s32.totalorder %s14, 1
    %p193 = por %p191, %p192
    %p194 = scmp.ne.s32.totalorder %s186, %s189
    %p195 = scmp.eq.s32.totalorder %s14, 0
    %p196 = por %p194, %p195
    %p197 = scmp.ne.s32.totalorder %s186, %s189
    %p198 = scmp.eq.s32.totalorder %s19, 1
    %p199 = por %p197, %p198
    %p200 = scmp.ne.s32.totalorder %s189, %s190
    %p201 = scmp.eq.s32.totalorder %s19, 0
    %p202 = por %p200, %p201
    %p203 = scmp.ne.s32.totalorder %s189, %s190
    %p204 = scmp.eq.s32.totalorder %s20, 1
    %p205 = por %p203, %p204
    %p207 = scmp.ne.s32.totalorder %s190, %s206
    %p208 = scmp.eq.s32.totalorder %s20, 0
    %p209 = por %p207, %p208
    %p210 = scmp.le.s32.totalorder 1, %s14
    %p211 = scmp.lt.s32.totalorder %s14, 3
    %p212 = pnand %p210, %p211
    %p213 = pneg %p212
    // Predicated region
    $region9: #{_lambda_.26} parent=5 // pred_check
      _
    $region10: #{_lambda_.26} parent=5 // pred_check_branch
      %215 = sbr.rel (%p212) target = $region12
    $region11: #{_lambda_.26} parent=5 // pred_region
      %s216 = ssub.s32 %s14, 1
      // Predicated region
      $region13: #{_lambda_.26} parent=11 // pred_check
        %p217 = pneg %p87
      $region14: #{_lambda_.26} parent=11 // pred_check_branch
        %219 = sbr.rel (%p217) target = $region16
      $region15: #{_lambda_.26} parent=11 // pred_region
        _
      $region16: #{_lambda_.26} parent=11 // pred_fallthru
        _
      // Predicated region
      $region17: #{_lambda_.26} parent=11 // pred_check
        %p220 = pneg %p108
      $region18: #{_lambda_.26} parent=11 // pred_check_branch
        %222 = sbr.rel (%p220) target = $region20
      $region19: #{_lambda_.26} parent=11 // pred_region
        _
      $region20: #{_lambda_.26} parent=11 // pred_fallthru
        _
      // Predicated region
      $region21: #{_lambda_.26} parent=11 // pred_check
        %p223 = pneg %p129
      $region22: #{_lambda_.26} parent=11 // pred_check_branch
        %225 = sbr.rel (%p223) target = $region24
      $region23: #{_lambda_.26} parent=11 // pred_region
        _
      $region24: #{_lambda_.26} parent=11 // pred_fallthru
        _
      // Predicated region
      $region25: #{_lambda_.26} parent=11 // pred_check
        %p226 = pneg %p150
      $region26: #{_lambda_.26} parent=11 // pred_check_branch
        %228 = sbr.rel (%p226) target = $region28
      $region27: #{_lambda_.26} parent=11 // pred_region
        _
      $region28: #{_lambda_.26} parent=11 // pred_fallthru
        _
    $region12: #{_lambda_.26} parent=5 // pred_fallthru
      _
    %p229 = scmp.lt.s32.totalorder %s14, 2
    // Predicated region
    $region29: #{_lambda_.26} parent=5 // pred_check
      %p230 = pneg %p229
    $region30: #{_lambda_.26} parent=5 // pred_check_branch
      %232 = sbr.rel (%p230) target = $region32
    $region31: #{_lambda_.26} parent=5 // pred_region
      // Predicated region
      $region33: #{_lambda_.26} parent=31 // pred_check
        %p233 = pneg %p34
      $region34: #{_lambda_.26} parent=31 // pred_check_branch
        %235 = sbr.rel (%p233) target = $region36
      $region35: #{_lambda_.26} parent=31 // pred_region
        %p236 = scmp.lt.s32.totalorder %s14, 1
        %s237 = scalar_select %p236, %s14, 1
        %s238 = smul.addr %s237, 8
        %s239 = scalar_lea.vmem %s0, %s238
      $region36: #{_lambda_.26} parent=31 // pred_fallthru
        _
      // Predicated region
      $region37: #{_lambda_.26} parent=31 // pred_check
        %p240 = pneg %p60
      $region38: #{_lambda_.26} parent=31 // pred_check_branch
        %242 = sbr.rel (%p240) target = $region40
      $region39: #{_lambda_.26} parent=31 // pred_region
        %p243 = scmp.lt.s32.totalorder %s14, 1
        %s244 = scalar_select %p243, %s14, 1
        %s245 = smul.addr %s244, 8
        %s246 = scalar_lea.vmem %s1, %s245
      $region40: #{_lambda_.26} parent=31 // pred_fallthru
        _
    $region32: #{_lambda_.26} parent=5 // pred_fallthru
      _
    %p247 = scmp.le.s32.totalorder 1, %s14
    %p248 = scmp.lt.s32.totalorder %s14, 3
    %p249 = pnand %p247, %p248
    %p250 = pneg %p249
    // Predicated region
    $region41: #{_lambda_.26} parent=5 // pred_check
      _
    $region42: #{_lambda_.26} parent=5 // pred_check_branch
      %252 = sbr.rel (%p249) target = $region44
    $region43: #{_lambda_.26} parent=5 // pred_region
      %s253 = ssub.s32 %s14, 1
      %p254 = scmp.lt.s32.totalorder %s19, 1
      %s255 = scalar_select %p254, %s19, 1
      %s256 = smul.addr %s255, 8
      %s257 = scalar_lea.vmem %s0, %s256
      %p258 = pneg %p40
      %p259 = pneg %p37
      %p260 = scmp.lt.s32.totalorder %s19, 1
      %s261 = scalar_select %p260, %s19, 1
      %s262 = smul.addr %s261, 8
      %s263 = scalar_lea.vmem %s1, %s262
      %p264 = pneg %p66
      %p265 = pneg %p63
      %p266 = pneg %p87
      %p267 = pneg %p84
      %p268 = pneg %p108
      %p269 = pneg %p105
      %p270 = pneg %p129
      %p271 = pneg %p126
      %p272 = pneg %p150
      %p273 = pneg %p147
      %p274 = pneg %p176
      %p275 = pneg %p173
      %p276 = scmp.lt.s32.totalorder %s19, 1
      %s277 = scalar_select %p276, %s19, 1
      %s278 = scalar_lea.vmem %s6, %s277
      %p279 = pneg %p202
      %p280 = pneg %p199
      %p281 = scmp.lt.s32.totalorder %s19, 1
      %s282 = scalar_select %p281, %s19, 1
      %s283 = scalar_lea.vmem %s7, %s282
      %p284 = scmp.lt.s32.totalorder %s19, 1
      %s285 = scalar_select %p284, %s19, 1
      %s286 = smul.addr %s285, 8
      %s287 = scalar_lea.vmem %s0, %s286
      %p288 = scmp.lt.s32.totalorder %s19, 1
      %s289 = scalar_select %p288, %s19, 1
      %s290 = smul.addr %s289, 8
      %s291 = scalar_lea.vmem %s1, %s290
      %p292 = scmp.lt.s32.totalorder %s19, 1
      %s293 = scalar_select %p292, %s19, 1
      %s294 = scalar_lea.vmem %s6, %s293
      %p295 = scmp.lt.s32.totalorder %s19, 1
      %s296 = scalar_select %p295, %s19, 1
      %s297 = scalar_lea.vmem %s7, %s296
      %v298 = vld [vmem:[%s287] sm:$0x1]
      %v299 = vunpack.c.l.bf16 %v298
      %v300 = vld [vmem:[%s2] sm:$0x1]
      %v301 = vmul.f32 %v299, %v300
      %v302 = vadd.f32 %v301, 0.0
      %s303 = scalar_lea.vmem %s287, 2
      %v304 = vld [vmem:[%s303] sm:$0x1]
      %v305 = vunpack.c.l.bf16 %v304
      %v306 = vld [vmem:[%s2 + $0x1] sm:$0x1]
      %v307 = vmul.f32 %v305, %v306
      %v308 = vadd.f32 %v302, %v307
      %v309 = vld [vmem:[%s2 + $0x2] sm:$0x1]
      %v312 = vunpack.c.l.s4 1983009808
      %v313 = vunpack.c.0.s8 %v312
      %v314 = vlaneseq
      %v315 = vshrl.u32 %v314, 7
      %v316 = vsub.s32 %v313, %v315
      %v317 = vrot.slane %v309, %v316
      %v318 = vrot.slane %v317, 7
      %v320 = vmul.f32 %v299, %v318
      %v322 = vrot.slane %v320, 7
      %v323 = vrot.slane %v322, 2
      %v325 = vadd.f32 %v308, %v323
      %s326 = scalar_lea.vmem %s287, 4
      %v327 = vld [vmem:[%s326] sm:$0x1]
      %v328 = vunpack.c.l.bf16 %v327
      %s329 = scalar_lea.vmem %s2, 4
      %v330 = vld [vmem:[%s329] sm:$0x1]
      %v331 = vmul.f32 %v328, %v330
      %v332 = vadd.f32 %v325, %v331
      %s333 = scalar_lea.vmem %s287, 6
      %v334 = vld [vmem:[%s333] sm:$0x1]
      %v335 = vunpack.c.l.bf16 %v334
      %v336 = vld [vmem:[%s329 + $0x1] sm:$0x1]
      %v337 = vmul.f32 %v335, %v336
      %v338 = vadd.f32 %v332, %v337
      %v339 = vld [vmem:[%s329 + $0x2] sm:$0x1]
      %v342 = vunpack.c.l.s4 1983009808
      %v343 = vunpack.c.0.s8 %v342
      %v344 = vlaneseq
      %v345 = vshrl.u32 %v344, 7
      %v346 = vsub.s32 %v343, %v345
      %v347 = vrot.slane %v339, %v346
      %v348 = vrot.slane %v347, 7
      %v350 = vmul.f32 %v328, %v348
      %v352 = vrot.slane %v350, 7
      %v353 = vrot.slane %v352, 2
      %v355 = vadd.f32 %v338, %v353
      %s356 = scalar_lea.vmem %s287, 1
      %v357 = vld [vmem:[%s356] sm:$0x1]
      %v358 = vunpack.c.l.bf16 %v357
      %s359 = scalar_lea.vmem %s2, 8
      %v360 = vld [vmem:[%s359] sm:$0x1]
      %v361 = vmul.f32 %v358, %v360
      %v362 = vadd.f32 %v355, %v361
      %s363 = scalar_lea.vmem %s287, 3
      %v364 = vld [vmem:[%s363] sm:$0x1]
      %v365 = vunpack.c.l.bf16 %v364
      %v366 = vld [vmem:[%s359 + $0x1] sm:$0x1]
      %v367 = vmul.f32 %v365, %v366
      %v368 = vadd.f32 %v362, %v367
      %v369 = vld [vmem:[%s359 + $0x2] sm:$0x1]
      %v372 = vunpack.c.l.s4 1983009808
      %v373 = vunpack.c.0.s8 %v372
      %v374 = vlaneseq
      %v375 = vshrl.u32 %v374, 7
      %v376 = vsub.s32 %v373, %v375
      %v377 = vrot.slane %v369, %v376
      %v378 = vrot.slane %v377, 7
      %v380 = vmul.f32 %v358, %v378
      %v382 = vrot.slane %v380, 7
      %v383 = vrot.slane %v382, 2
      %v385 = vadd.f32 %v368, %v383
      %v386 = vld [vmem:[%s3] sm:$0x1]
      %v387 = vadd.f32 %v385, %v386
      %v388 = vpack.c.bf16 %v387, %v387
      %vm389 = vcmask 253952
      %vm390 = vsmask.f32 256
      %vm391 = vmand %vm389, %vm390
      %v392 = vld [vmem:[%s294] sm:$0x1]
      %v393 = vsel %vm391, %v388, %v392
      %394 = vst [vmem:[%s294] sm:$0x1] %v393
      %v395 = vld [vmem:[%s291] sm:$0x1]
      %v396 = vunpack.c.l.bf16 %v395
      %v397 = vld [vmem:[%s4] sm:$0x1]
      %v398 = vmul.f32 %v396, %v397
      %v399 = vadd.f32 %v398, 0.0
      %s400 = scalar_lea.vmem %s291, 2
      %v401 = vld [vmem:[%s400] sm:$0x1]
      %v402 = vunpack.c.l.bf16 %v401
      %v403 = vld [vmem:[%s4 + $0x1] sm:$0x1]
      %v404 = vmul.f32 %v402, %v403
      %v405 = vadd.f32 %v399, %v404
      %v406 = vld [vmem:[%s4 + $0x2] sm:$0x1]
      %v409 = vunpack.c.l.s4 1983009808
      %v410 = vunpack.c.0.s8 %v409
      %v411 = vlaneseq
      %v412 = vshrl.u32 %v411, 7
      %v413 = vsub.s32 %v410, %v412
      %v414 = vrot.slane %v406, %v413
      %v415 = vrot.slane %v414, 7
      %v417 = vmul.f32 %v396, %v415
      %v419 = vrot.slane %v417, 7
      %v420 = vrot.slane %v419, 2
      %v422 = vadd.f32 %v405, %v420
      %s423 = scalar_lea.vmem %s291, 4
      %v424 = vld [vmem:[%s423] sm:$0x1]
      %v425 = vunpack.c.l.bf16 %v424
      %s426 = scalar_lea.vmem %s4, 4
      %v427 = vld [vmem:[%s426] sm:$0x1]
      %v428 = vmul.f32 %v425, %v427
      %v429 = vadd.f32 %v422, %v428
      %s430 = scalar_lea.vmem %s291, 6
      %v431 = vld [vmem:[%s430] sm:$0x1]
      %v432 = vunpack.c.l.bf16 %v431
      %v433 = vld [vmem:[%s426 + $0x1] sm:$0x1]
      %v434 = vmul.f32 %v432, %v433
      %v435 = vadd.f32 %v429, %v434
      %v436 = vld [vmem:[%s426 + $0x2] sm:$0x1]
      %v439 = vunpack.c.l.s4 1983009808
      %v440 = vunpack.c.0.s8 %v439
      %v441 = vlaneseq
      %v442 = vshrl.u32 %v441, 7
      %v443 = vsub.s32 %v440, %v442
      %v444 = vrot.slane %v436, %v443
      %v445 = vrot.slane %v444, 7
      %v447 = vmul.f32 %v425, %v445
      %v449 = vrot.slane %v447, 7
      %v450 = vrot.slane %v449, 2
      %v452 = vadd.f32 %v435, %v450
      %s453 = scalar_lea.vmem %s291, 1
      %v454 = vld [vmem:[%s453] sm:$0x1]
      %v455 = vunpack.c.l.bf16 %v454
      %s456 = scalar_lea.vmem %s4, 8
      %v457 = vld [vmem:[%s456] sm:$0x1]
      %v458 = vmul.f32 %v455, %v457
      %v459 = vadd.f32 %v452, %v458
      %s460 = scalar_lea.vmem %s291, 3
      %v461 = vld [vmem:[%s460] sm:$0x1]
      %v462 = vunpack.c.l.bf16 %v461
      %v463 = vld [vmem:[%s456 + $0x1] sm:$0x1]
      %v464 = vmul.f32 %v462, %v463
      %v465 = vadd.f32 %v459, %v464
      %v466 = vld [vmem:[%s456 + $0x2] sm:$0x1]
      %v469 = vunpack.c.l.s4 1983009808
      %v470 = vunpack.c.0.s8 %v469
      %v471 = vlaneseq
      %v472 = vshrl.u32 %v471, 7
      %v473 = vsub.s32 %v470, %v472
      %v474 = vrot.slane %v466, %v473
      %v475 = vrot.slane %v474, 7
      %v477 = vmul.f32 %v455, %v475
      %v479 = vrot.slane %v477, 7
      %v480 = vrot.slane %v479, 2
      %v482 = vadd.f32 %v465, %v480
      %v483 = vld [vmem:[%s5] sm:$0x1]
      %v484 = vadd.f32 %v482, %v483
      %v485 = vpack.c.bf16 %v484, %v484
      %v486 = vld [vmem:[%s297] sm:$0x1]
      %v487 = vsel %vm391, %v485, %v486
      %488 = vst [vmem:[%s297] sm:$0x1] %v487
      %p489 = scmp.lt.s32.totalorder %s19, 1
      %s490 = scalar_select %p489, %s19, 1
      %s491 = scalar_lea.vmem %s6, %s490
      %p492 = scmp.lt.s32.totalorder %s19, 1
      %s493 = scalar_select %p492, %s19, 1
      %s494 = scalar_lea.vmem %s7, %s493
      // Predicated region
      $region45: #{_lambda_.26} parent=43 // pred_check
        %p495 = pneg %p173
      $region46: #{_lambda_.26} parent=43 // pred_check_branch
        %497 = sbr.rel (%p495) target = $region48
      $region47: #{_lambda_.26} parent=43 // pred_region
        _
      $region48: #{_lambda_.26} parent=43 // pred_fallthru
        _
      // Predicated region
      $region49: #{_lambda_.26} parent=43 // pred_check
        %p498 = pneg %p199
      $region50: #{_lambda_.26} parent=43 // pred_check_branch
        %500 = sbr.rel (%p498) target = $region52
      $region51: #{_lambda_.26} parent=43 // pred_region
        _
      $region52: #{_lambda_.26} parent=43 // pred_fallthru
        _
    $region44: #{_lambda_.26} parent=5 // pred_fallthru
      _
    %p501 = scmp.le.s32.totalorder 2, %s14
    // Predicated region
    $region53: #{_lambda_.26} parent=5 // pred_check
      %p502 = pneg %p501
    $region54: #{_lambda_.26} parent=5 // pred_check_branch
      %504 = sbr.rel (%p502) target = $region56
    $region55: #{_lambda_.26} parent=5 // pred_region
      %s505 = ssub.s32 %s14, 2
      // Predicated region
      $region57: #{_lambda_.26} parent=55 // pred_check
        %p506 = pneg %p179
      $region58: #{_lambda_.26} parent=55 // pred_check_branch
        %508 = sbr.rel (%p506) target = $region60
      $region59: #{_lambda_.26} parent=55 // pred_region
        %p509 = scmp.lt.s32.totalorder %s20, 1
        %s510 = scalar_select %p509, %s20, 1
        %s511 = scalar_lea.vmem %s6, %s510
      $region60: #{_lambda_.26} parent=55 // pred_fallthru
        _
      // Predicated region
      $region61: #{_lambda_.26} parent=55 // pred_check
        %p512 = pneg %p205
      $region62: #{_lambda_.26} parent=55 // pred_check_branch
        %514 = sbr.rel (%p512) target = $region64
      $region63: #{_lambda_.26} parent=55 // pred_region
        %p515 = scmp.lt.s32.totalorder %s20, 1
        %s516 = scalar_select %p515, %s20, 1
        %s517 = scalar_lea.vmem %s7, %s516
      $region64: #{_lambda_.26} parent=55 // pred_fallthru
        _
    $region56: #{_lambda_.26} parent=5 // pred_fallthru
      _
  $region6: #{_lambda_.26} parent=0 // loop_footer
    %s18 = sadd.s32 1, %s14
  $region7: #{_lambda_.26} parent=0 // loop_footer_branch
    %13 = sbr.rel target = $region3
  $region8: #{_lambda_.26} parent=0 // loop_exit
    _

// kernel: _lambda_.27
$region0: #{_lambda_.27}
  #allocation0 [shape = 'u32[]', space=smem, size = 0x4, offset = 0x4, fixed_abs, tag = 'smem constant byte address 0x4 - core index']
  #allocation1 [shape = 'u32[144,128]{1,0:T(1,128)}', space=vmem, size = 0x12000, scoped, tag = 'internal scratch']
  %s0 = inlined_call_operand.vmem [shape: bf16[2,32], index: 0, kind: input, shape index: {}]
  %s1 = inlined_call_operand.vmem [shape: bf16[2,32], index: 1, kind: input, shape index: {}]
  %s2 = inlined_call_operand.vmem [shape: bf16[32,64], index: 2, kind: input, shape index: {}]
  %s3 = inlined_call_operand.vmem [shape: f32[1,64], index: 3, kind: input, shape index: {}]
  %s4 = inlined_call_operand.vmem [shape: bf16[32,64], index: 4, kind: input, shape index: {}]
  %s5 = inlined_call_operand.vmem [shape: f32[1,64], index: 5, kind: input, shape index: {}]
  %s6 = inlined_call_operand.vmem [shape: bf16[2,64], index: 6, kind: output, shape index: {}]
  %s7 = sld [smem:[#allocation0]]
  $region34: #{_lambda_.27} parent=0
    _
  %s9 = ssub.s32 1, %s7
  %s10 = scalar_select 0, %s9, %s7
  // Predicated region
  $region2: #{_lambda_.27} parent=0 // pred_check
    _
  $region3: #{_lambda_.27} parent=0 // pred_check_branch
    %12 = sbr.rel (0) target = $region5
  $region4: #{_lambda_.27} parent=0 // pred_region
    _
  $region5: #{_lambda_.27} parent=0 // pred_fallthru
    _
  // Predicated region
  $region6: #{_lambda_.27} parent=0 // pred_check
    _
  $region7: #{_lambda_.27} parent=0 // pred_check_branch
    %14 = sbr.rel (0) target = $region9
  $region8: #{_lambda_.27} parent=0 // pred_region
    _
  $region9: #{_lambda_.27} parent=0 // pred_fallthru
    _
  // Predicated region
  $region10: #{_lambda_.27} parent=0 // pred_check
    _
  $region11: #{_lambda_.27} parent=0 // pred_check_branch
    %16 = sbr.rel (0) target = $region13
  $region12: #{_lambda_.27} parent=0 // pred_region
    _
  $region13: #{_lambda_.27} parent=0 // pred_fallthru
    _
  // Predicated region
  $region14: #{_lambda_.27} parent=0 // pred_check
    _
  $region15: #{_lambda_.27} parent=0 // pred_check_branch
    %18 = sbr.rel (0) target = $region17
  $region16: #{_lambda_.27} parent=0 // pred_region
    _
  $region17: #{_lambda_.27} parent=0 // pred_fallthru
    _
  // Predicated region
  $region18: #{_lambda_.27} parent=0 // pred_check
    _
  $region19: #{_lambda_.27} parent=0 // pred_check_branch
    %20 = sbr.rel (0) target = $region21
  $region20: #{_lambda_.27} parent=0 // pred_region
    _
  $region21: #{_lambda_.27} parent=0 // pred_fallthru
    _
  // Predicated region
  $region22: #{_lambda_.27} parent=0 // pred_check
    _
  $region23: #{_lambda_.27} parent=0 // pred_check_branch
    %22 = sbr.rel (0) target = $region25
  $region24: #{_lambda_.27} parent=0 // pred_region
    _
  $region25: #{_lambda_.27} parent=0 // pred_fallthru
    _
  %v24 = vld [vmem:[%s0] sm:$0x1]
  %v25 = vld [vmem:[%s2] sm:$0xf]
  %v26 = vld [vmem:[%s2 + $0x4] sm:$0xf]
  %v27 = vld [vmem:[%s2 + $0x8] sm:$0xf]
  %v28 = vld [vmem:[%s2 + $0xc] sm:$0xf]
  %v29 = vld [vmem:[%s3] sm:$0x1]
  %v31 = vlaneseq
  %v32 = vshrl.u32 %v31, 7
  %v33 = vsub.s32 0, %v32
  %v34 = vrot.slane %v29, %v33
  %v40 = vunpack.c.l.b16 %v25
  %v41 = vunpack.c.l.b16 %v26
  %v42 = vunpack.c.l.b16 %v27
  %v43 = vunpack.c.l.b16 %v28
  %v44 = vpack.c.b16 %v41, %v40
  %v45 = vpack.c.b16 %v43, %v42
  %vm48 = vcmask 261120
  %v50 = vsel %vm48, %v24, 0
  %52 = vmatprep.subr.bf16.mxu0 0
  %53 = vmatpush1.bf16.msra.mxu0 %v44
  %54 = vmatprep.subr.bf16.mxu0 0
  %55 = vmatpush1.bf16.msra.mxu0 %v45
  %56 = vmatprep.subr.bf16.mxu0 0
  %57 = vmatpush1.bf16.msra.mxu0 0
  %58 = vmatprep.subr.bf16.mxu0 0
  %59 = vmatpush1.bf16.msra.mxu0 0
  %60 = vmatprep.subr.bf16.mxu0 0
  %61 = vmatpush1.bf16.msra.mxu0 0
  %62 = vmatprep.subr.bf16.mxu0 0
  %63 = vmatpush1.bf16.msra.mxu0 0
  %64 = vmatprep.subr.bf16.mxu0 0
  %65 = vmatpush1.bf16.msra.mxu0 0
  %66 = vmatprep.subr.bf16.mxu0 0
  %67 = vmatpush1.bf16.msra.mxu0 0
  %68 = vmatprep.subr.bf16.mxu0 0
  %69 = vmatpush1.bf16.msra.mxu0 0
  %70 = vmatprep.subr.bf16.mxu0 0
  %71 = vmatpush1.bf16.msra.mxu0 0
  %72 = vmatprep.subr.bf16.mxu0 0
  %73 = vmatpush1.bf16.msra.mxu0 0
  %74 = vmatprep.subr.bf16.mxu0 0
  %75 = vmatpush1.bf16.msra.mxu0 0
  %76 = vmatprep.subr.bf16.mxu0 0
  %77 = vmatpush1.bf16.msra.mxu0 0
  %78 = vmatprep.subr.bf16.mxu0 0
  %79 = vmatpush1.bf16.msra.mxu0 0
  %80 = vmatprep.subr.bf16.mxu0 0
  %81 = vmatpush1.bf16.msra.mxu0 0
  %82 = vmatprep.subr.bf16.mxu0 0
  %83 = vmatpush1.bf16.msra.mxu0 0
  %84 = vmatprep.mubr.bf16.mxu0 0
  %85 = vmatmul.mubr.bf16.gmra.mrb[0].mxu0 %v50
  %v86 = vpop.f32.mrb[0].mxu0
  %v87 = vadd.f32 %v34, %v86
  %v88 = vpop.f32.mrb[0].mxu0
  %v89 = vpop.f32.mrb[0].mxu0
  %v90 = vpop.f32.mrb[0].mxu0
  %91 = vdwg.mxu0
  %v92 = vmax.f32 %v87, 0.0
  %v93 = vld [vmem:[%s1] sm:$0x1]
  %v94 = vld [vmem:[%s4] sm:$0xf]
  %v95 = vld [vmem:[%s4 + $0x4] sm:$0xf]
  %v96 = vld [vmem:[%s4 + $0x8] sm:$0xf]
  %v97 = vld [vmem:[%s4 + $0xc] sm:$0xf]
  %v98 = vld [vmem:[%s5] sm:$0x1]
  %v100 = vlaneseq
  %v101 = vshrl.u32 %v100, 7
  %v102 = vsub.s32 0, %v101
  %v103 = vrot.slane %v98, %v102
  %v109 = vunpack.c.l.b16 %v94
  %v110 = vunpack.c.l.b16 %v95
  %v111 = vunpack.c.l.b16 %v96
  %v112 = vunpack.c.l.b16 %v97
  %v113 = vpack.c.b16 %v110, %v109
  %v114 = vpack.c.b16 %v112, %v111
  %v118 = vsel %vm48, %v93, 0
  %120 = vmatprep.subr.bf16.mxu0 0
  %121 = vmatpush1.bf16.msra.mxu0 %v113
  %122 = vmatprep.subr.bf16.mxu0 0
  %123 = vmatpush1.bf16.msra.mxu0 %v114
  %124 = vmatprep.subr.bf16.mxu0 0
  %125 = vmatpush1.bf16.msra.mxu0 0
  %126 = vmatprep.subr.bf16.mxu0 0
  %127 = vmatpush1.bf16.msra.mxu0 0
  %128 = vmatprep.subr.bf16.mxu0 0
  %129 = vmatpush1.bf16.msra.mxu0 0
  %130 = vmatprep.subr.bf16.mxu0 0
  %131 = vmatpush1.bf16.msra.mxu0 0
  %132 = vmatprep.subr.bf16.mxu0 0
  %133 = vmatpush1.bf16.msra.mxu0 0
  %134 = vmatprep.subr.bf16.mxu0 0
  %135 = vmatpush1.bf16.msra.mxu0 0
  %136 = vmatprep.subr.bf16.mxu0 0
  %137 = vmatpush1.bf16.msra.mxu0 0
  %138 = vmatprep.subr.bf16.mxu0 0
  %139 = vmatpush1.bf16.msra.mxu0 0
  %140 = vmatprep.subr.bf16.mxu0 0
  %141 = vmatpush1.bf16.msra.mxu0 0
  %142 = vmatprep.subr.bf16.mxu0 0
  %143 = vmatpush1.bf16.msra.mxu0 0
  %144 = vmatprep.subr.bf16.mxu0 0
  %145 = vmatpush1.bf16.msra.mxu0 0
  %146 = vmatprep.subr.bf16.mxu0 0
  %147 = vmatpush1.bf16.msra.mxu0 0
  %148 = vmatprep.subr.bf16.mxu0 0
  %149 = vmatpush1.bf16.msra.mxu0 0
  %150 = vmatprep.subr.bf16.mxu0 0
  %151 = vmatpush1.bf16.msra.mxu0 0
  %152 = vmatprep.mubr.bf16.mxu0 0
  %153 = vmatmul.mubr.bf16.gmra.mrb[0].mxu0 %v118
  %v154 = vpop.f32.mrb[0].mxu0
  %v155 = vadd.f32 %v103, %v154
  %v156 = vpop.f32.mrb[0].mxu0
  %v157 = vpop.f32.mrb[0].mxu0
  %v158 = vpop.f32.mrb[0].mxu0
  %159 = vdwg.mxu0
  %v160 = vmax.f32 %v155, 0.0
  %v161 = vadd.f32 %v92, %v160
  %v162 = vpack.c.bf16 %v161, %v161
  %vm163 = vcmask 516096
  %164 = vst.msk [vmem:[%s6] sm:$0x1] %vm163, %v162
  // Predicated region
  $region26: #{_lambda_.27} parent=0 // pred_check
    _
  $region27: #{_lambda_.27} parent=0 // pred_check_branch
    %166 = sbr.rel (0) target = $region29
  $region28: #{_lambda_.27} parent=0 // pred_region
    _
  $region29: #{_lambda_.27} parent=0 // pred_fallthru
    _
  // Predicated region
  $region30: #{_lambda_.27} parent=0 // pred_check
    _
  $region31: #{_lambda_.27} parent=0 // pred_check_branch
    %168 = sbr.rel (0) target = $region33
  $region32: #{_lambda_.27} parent=0 // pred_region
    _
  $region33: #{_lambda_.27} parent=0 // pred_fallthru
    _

// kernel: _lambda_.29
$region0: #{_lambda_.29}
  #allocation0 [shape = 'u32[]', space=smem, size = 0x4, offset = 0x4, fixed_abs, tag = 'smem constant byte address 0x4 - core index']
  #allocation1 [shape = 'u32[144,128]{1,0:T(1,128)}', space=vmem, size = 0x12000, scoped, tag = 'internal scratch']
  %s0 = inlined_call_operand.vmem [shape: bf16[2,64], index: 0, kind: input, shape index: {}]
  %s1 = inlined_call_operand.vmem [shape: bf16[64,64], index: 1, kind: input, shape index: {}]
  %s2 = inlined_call_operand.vmem [shape: f32[1,64], index: 2, kind: input, shape index: {}]
  %s3 = inlined_call_operand.vmem [shape: bf16[2,64], index: 3, kind: output, shape index: {}]
  %s4 = sld [smem:[#allocation0]]
  $region22: #{_lambda_.29} parent=0
    _
  %s6 = ssub.s32 1, %s4
  %s7 = scalar_select 0, %s6, %s4
  // Predicated region
  $region2: #{_lambda_.29} parent=0 // pred_check
    _
  $region3: #{_lambda_.29} parent=0 // pred_check_branch
    %9 = sbr.rel (0) target = $region5
  $region4: #{_lambda_.29} parent=0 // pred_region
    _
  $region5: #{_lambda_.29} parent=0 // pred_fallthru
    _
  // Predicated region
  $region6: #{_lambda_.29} parent=0 // pred_check
    _
  $region7: #{_lambda_.29} parent=0 // pred_check_branch
    %11 = sbr.rel (0) target = $region9
  $region8: #{_lambda_.29} parent=0 // pred_region
    _
  $region9: #{_lambda_.29} parent=0 // pred_fallthru
    _
  // Predicated region
  $region10: #{_lambda_.29} parent=0 // pred_check
    _
  $region11: #{_lambda_.29} parent=0 // pred_check_branch
    %13 = sbr.rel (0) target = $region13
  $region12: #{_lambda_.29} parent=0 // pred_region
    _
  $region13: #{_lambda_.29} parent=0 // pred_fallthru
    _
  %v15 = vld [vmem:[%s0] sm:$0x1]
  %v16 = vld [vmem:[%s1] sm:$0xf]
  %v17 = vld [vmem:[%s1 + $0x4] sm:$0xf]
  %v18 = vld [vmem:[%s1 + $0x8] sm:$0xf]
  %v19 = vld [vmem:[%s1 + $0xc] sm:$0xf]
  %v20 = vld [vmem:[%s1 + $0x10] sm:$0xf]
  %v21 = vld [vmem:[%s1 + $0x14] sm:$0xf]
  %v22 = vld [vmem:[%s1 + $0x18] sm:$0xf]
  %v23 = vld [vmem:[%s1 + $0x1c] sm:$0xf]
  %v24 = vld [vmem:[%s2] sm:$0x1]
  %v26 = vlaneseq
  %v27 = vshrl.u32 %v26, 7
  %v28 = vsub.s32 0, %v27
  %v29 = vrot.slane %v24, %v28
  %v39 = vunpack.c.l.b16 %v16
  %v40 = vunpack.c.l.b16 %v17
  %v41 = vunpack.c.l.b16 %v18
  %v42 = vunpack.c.l.b16 %v19
  %v43 = vunpack.c.l.b16 %v20
  %v44 = vunpack.c.l.b16 %v21
  %v45 = vunpack.c.l.b16 %v22
  %v46 = vunpack.c.l.b16 %v23
  %v47 = vpack.c.b16 %v40, %v39
  %v48 = vpack.c.b16 %v42, %v41
  %v49 = vpack.c.b16 %v44, %v43
  %v50 = vpack.c.b16 %v46, %v45
  %vm55 = vcmask 523264
  %v57 = vsel %vm55, %v15, 0
  %59 = vmatprep.subr.bf16.mxu0 0
  %60 = vmatpush1.bf16.msra.mxu0 %v47
  %61 = vmatprep.subr.bf16.mxu0 0
  %62 = vmatpush1.bf16.msra.mxu0 %v48
  %63 = vmatprep.subr.bf16.mxu0 0
  %64 = vmatpush1.bf16.msra.mxu0 %v49
  %65 = vmatprep.subr.bf16.mxu0 0
  %66 = vmatpush1.bf16.msra.mxu0 %v50
  %67 = vmatprep.subr.bf16.mxu0 0
  %68 = vmatpush1.bf16.msra.mxu0 0
  %69 = vmatprep.subr.bf16.mxu0 0
  %70 = vmatpush1.bf16.msra.mxu0 0
  %71 = vmatprep.subr.bf16.mxu0 0
  %72 = vmatpush1.bf16.msra.mxu0 0
  %73 = vmatprep.subr.bf16.mxu0 0
  %74 = vmatpush1.bf16.msra.mxu0 0
  %75 = vmatprep.subr.bf16.mxu0 0
  %76 = vmatpush1.bf16.msra.mxu0 0
  %77 = vmatprep.subr.bf16.mxu0 0
  %78 = vmatpush1.bf16.msra.mxu0 0
  %79 = vmatprep.subr.bf16.mxu0 0
  %80 = vmatpush1.bf16.msra.mxu0 0
  %81 = vmatprep.subr.bf16.mxu0 0
  %82 = vmatpush1.bf16.msra.mxu0 0
  %83 = vmatprep.subr.bf16.mxu0 0
  %84 = vmatpush1.bf16.msra.mxu0 0
  %85 = vmatprep.subr.bf16.mxu0 0
  %86 = vmatpush1.bf16.msra.mxu0 0
  %87 = vmatprep.subr.bf16.mxu0 0
  %88 = vmatpush1.bf16.msra.mxu0 0
  %89 = vmatprep.subr.bf16.mxu0 0
  %90 = vmatpush1.bf16.msra.mxu0 0
  %91 = vmatprep.mubr.bf16.mxu0 0
  %92 = vmatmul.mubr.bf16.gmra.mrb[0].mxu0 %v57
  %v93 = vpop.f32.mrb[0].mxu0
  %v94 = vadd.f32 %v29, %v93
  %v95 = vpop.f32.mrb[0].mxu0
  %v96 = vpop.f32.mrb[0].mxu0
  %v97 = vpop.f32.mrb[0].mxu0
  %98 = vdwg.mxu0
  %v99 = vmax.f32 %v94, 0.0
  %v100 = vpack.c.bf16 %v99, %v99
  %vm101 = vcmask 516096
  %102 = vst.msk [vmem:[%s3] sm:$0x1] %vm101, %v100
  // Predicated region
  $region14: #{_lambda_.29} parent=0 // pred_check
    _
  $region15: #{_lambda_.29} parent=0 // pred_check_branch
    %104 = sbr.rel (0) target = $region17
  $region16: #{_lambda_.29} parent=0 // pred_region
    _
  $region17: #{_lambda_.29} parent=0 // pred_fallthru
    _
  // Predicated region
  $region18: #{_lambda_.29} parent=0 // pred_check
    _
  $region19: #{_lambda_.29} parent=0 // pred_check_branch
    %106 = sbr.rel (0) target = $region21
  $region20: #{_lambda_.29} parent=0 // pred_region
    _
  $region21: #{_lambda_.29} parent=0 // pred_fallthru
    _

// kernel: _lambda_.28
$region0: #{_lambda_.28}
  #allocation0 [shape = 'u32[]', space=smem, size = 0x4, offset = 0x4, fixed_abs, tag = 'smem constant byte address 0x4 - core index']
  #allocation1 [shape = 'u32[144,128]{1,0:T(1,128)}', space=vmem, size = 0x12000, scoped, tag = 'internal scratch']
  #allocation2 [shape = 'f32[17,32]{1,0:T(8,128)}', space=vmem, size = 0x3000, scoped, tag = 'scratch operand']
  %s0 = inlined_call_operand.vmem [shape: bf16[2,1,64], index: 0, kind: input, shape index: {}]
  %s1 = inlined_call_operand.vmem [shape: bf16[64,32], index: 1, kind: input, shape index: {}]
  %s2 = inlined_call_operand.vmem [shape: f32[1,32], index: 2, kind: input, shape index: {}]
  %s3 = inlined_call_operand.vmem [shape: f32[3,3,32], index: 3, kind: input, shape index: {}]
  %s4 = inlined_call_operand.vmem [shape: f32[1,32], index: 4, kind: input, shape index: {}]
  %s5 = inlined_call_operand.vmem [shape: bf16[32,64], index: 5, kind: input, shape index: {}]
  %s6 = inlined_call_operand.vmem [shape: f32[1,64], index: 6, kind: input, shape index: {}]
  %s7 = inlined_call_operand.vmem [shape: bf16[64,64], index: 7, kind: input, shape index: {}]
  %s8 = inlined_call_operand.vmem [shape: bf16[2,1,64], index: 8, kind: output, shape index: {}]
  %s9 = sld [smem:[#allocation0]]
  $region65: #{_lambda_.28} parent=0
    _
  %s11 = ssub.s32 1, %s9
  %s12 = scalar_select 0, %s11, %s9
  loop: start=0, step=1, limit=4
  $region2: #{_lambda_.28} parent=0 // loop_pre_header
    _
  $region3: #{_lambda_.28} parent=0 // loop_header
    %s14 = sphi 0, %s18
    %p15 = scmp.ge.s32.totalorder %s14, 4
    %s24 = sphi 0, %s26
    %s27 = sphi 0, %s24
    %s28 = sphi 0, %s27
    %s44 = sphi 0, %s28
    %s48 = sphi 0, %s48
    %s50 = sphi 0, %s48
    %s51 = sphi 0, %s50
    %s65 = sphi 0, %s51
    %s69 = sphi 0, %s69
    %s71 = sphi 0, %s69
    %s72 = sphi 0, %s71
    %s86 = sphi 0, %s72
    %s90 = sphi 0, %s90
    %s92 = sphi 0, %s90
    %s93 = sphi 0, %s92
    %s107 = sphi 0, %s93
    %s111 = sphi 0, %s111
    %s113 = sphi 0, %s111
    %s114 = sphi 0, %s113
    %s128 = sphi 0, %s114
    %s132 = sphi 0, %s132
    %s134 = sphi 0, %s132
    %s135 = sphi 0, %s134
    %s149 = sphi 0, %s135
    %s153 = sphi 0, %s153
    %s155 = sphi 0, %s153
    %s156 = sphi 0, %s155
    %s170 = sphi 0, %s156
    %s174 = sphi 0, %s174
    %s176 = sphi 0, %s174
    %s177 = sphi 0, %s176
    %s191 = sphi 0, %s177
    %s197 = sphi 0, %s199
    %s200 = sphi 0, %s197
    %s201 = sphi 0, %s200
    %s217 = sphi 0, %s201
  $region4: #{_lambda_.28} parent=0 // loop_header_branch
    %17 = sbr.rel (%p15) target = $region8
  $region5: #{_lambda_.28} parent=0 // loop_body
    %s19 = ssub.s32 %s14, 1
    %s20 = ssub.s32 %s14, 2
    %s21 = sadd.s32 %s14, 1
    %s22 = ssub.s32 %s14, %s21
    %p23 = scmp.eq.s32.totalorder %s22, 0
    %s25 = sadd.s32 %s24, 1
    %s26 = scalar_select %p23, %s24, %s25
    %p29 = pneg %p23
    %p30 = scmp.eq.s32.totalorder %s14, 1
    %p31 = por %p29, %p30
    %p32 = scmp.ne.s32.totalorder %s24, %s27
    %p33 = scmp.eq.s32.totalorder %s14, 0
    %p34 = por %p32, %p33
    %p35 = scmp.ne.s32.totalorder %s24, %s27
    %p36 = scmp.eq.s32.totalorder %s19, 1
    %p37 = por %p35, %p36
    %p38 = scmp.ne.s32.totalorder %s27, %s28
    %p39 = scmp.eq.s32.totalorder %s19, 0
    %p40 = por %p38, %p39
    %p41 = scmp.ne.s32.totalorder %s27, %s28
    %p42 = scmp.eq.s32.totalorder %s20, 1
    %p43 = por %p41, %p42
    %p45 = scmp.ne.s32.totalorder %s28, %s44
    %p46 = scmp.eq.s32.totalorder %s20, 0
    %p47 = por %p45, %p46
    %s49 = sadd.s32 %s48, 1
    %p52 = scmp.eq.s32.totalorder %s14, 1
    %p53 = scmp.ne.s32.totalorder %s48, %s50
    %p54 = scmp.eq.s32.totalorder %s14, 0
    %p55 = por %p53, %p54
    %p56 = scmp.ne.s32.totalorder %s48, %s50
    %p57 = scmp.eq.s32.totalorder %s19, 1
    %p58 = por %p56, %p57
    %p59 = scmp.ne.s32.totalorder %s50, %s51
    %p60 = scmp.eq.s32.totalorder %s19, 0
    %p61 = por %p59, %p60
    %p62 = scmp.ne.s32.totalorder %s50, %s51
    %p63 = scmp.eq.s32.totalorder %s20, 1
    %p64 = por %p62, %p63
    %p66 = scmp.ne.s32.totalorder %s51, %s65
    %p67 = scmp.eq.s32.totalorder %s20, 0
    %p68 = por %p66, %p67
    %s70 = sadd.s32 %s69, 1
    %p73 = scmp.eq.s32.totalorder %s14, 1
    %p74 = scmp.ne.s32.totalorder %s69, %s71
    %p75 = scmp.eq.s32.totalorder %s14, 0
    %p76 = por %p74, %p75
    %p77 = scmp.ne.s32.totalorder %s69, %s71
    %p78 = scmp.eq.s32.totalorder %s19, 1
    %p79 = por %p77, %p78
    %p80 = scmp.ne.s32.totalorder %s71, %s72
    %p81 = scmp.eq.s32.totalorder %s19, 0
    %p82 = por %p80, %p81
    %p83 = scmp.ne.s32.totalorder %s71, %s72
    %p84 = scmp.eq.s32.totalorder %s20, 1
    %p85 = por %p83, %p84
    %p87 = scmp.ne.s32.totalorder %s72, %s86
    %p88 = scmp.eq.s32.totalorder %s20, 0
    %p89 = por %p87, %p88
    %s91 = sadd.s32 %s90, 1
    %p94 = scmp.eq.s32.totalorder %s14, 1
    %p95 = scmp.ne.s32.totalorder %s90, %s92
    %p96 = scmp.eq.s32.totalorder %s14, 0
    %p97 = por %p95, %p96
    %p98 = scmp.ne.s32.totalorder %s90, %s92
    %p99 = scmp.eq.s32.totalorder %s19, 1
    %p100 = por %p98, %p99
    %p101 = scmp.ne.s32.totalorder %s92, %s93
    %p102 = scmp.eq.s32.totalorder %s19, 0
    %p103 = por %p101, %p102
    %p104 = scmp.ne.s32.totalorder %s92, %s93
    %p105 = scmp.eq.s32.totalorder %s20, 1
    %p106 = por %p104, %p105
    %p108 = scmp.ne.s32.totalorder %s93, %s107
    %p109 = scmp.eq.s32.totalorder %s20, 0
    %p110 = por %p108, %p109
    %s112 = sadd.s32 %s111, 1
    %p115 = scmp.eq.s32.totalorder %s14, 1
    %p116 = scmp.ne.s32.totalorder %s111, %s113
    %p117 = scmp.eq.s32.totalorder %s14, 0
    %p118 = por %p116, %p117
    %p119 = scmp.ne.s32.totalorder %s111, %s113
    %p120 = scmp.eq.s32.totalorder %s19, 1
    %p121 = por %p119, %p120
    %p122 = scmp.ne.s32.totalorder %s113, %s114
    %p123 = scmp.eq.s32.totalorder %s19, 0
    %p124 = por %p122, %p123
    %p125 = scmp.ne.s32.totalorder %s113, %s114
    %p126 = scmp.eq.s32.totalorder %s20, 1
    %p127 = por %p125, %p126
    %p129 = scmp.ne.s32.totalorder %s114, %s128
    %p130 = scmp.eq.s32.totalorder %s20, 0
    %p131 = por %p129, %p130
    %s133 = sadd.s32 %s132, 1
    %p136 = scmp.eq.s32.totalorder %s14, 1
    %p137 = scmp.ne.s32.totalorder %s132, %s134
    %p138 = scmp.eq.s32.totalorder %s14, 0
    %p139 = por %p137, %p138
    %p140 = scmp.ne.s32.totalorder %s132, %s134
    %p141 = scmp.eq.s32.totalorder %s19, 1
    %p142 = por %p140, %p141
    %p143 = scmp.ne.s32.totalorder %s134, %s135
    %p144 = scmp.eq.s32.totalorder %s19, 0
    %p145 = por %p143, %p144
    %p146 = scmp.ne.s32.totalorder %s134, %s135
    %p147 = scmp.eq.s32.totalorder %s20, 1
    %p148 = por %p146, %p147
    %p150 = scmp.ne.s32.totalorder %s135, %s149
    %p151 = scmp.eq.s32.totalorder %s20, 0
    %p152 = por %p150, %p151
    %s154 = sadd.s32 %s153, 1
    %p157 = scmp.eq.s32.totalorder %s14, 1
    %p158 = scmp.ne.s32.totalorder %s153, %s155
    %p159 = scmp.eq.s32.totalorder %s14, 0
    %p160 = por %p158, %p159
    %p161 = scmp.ne.s32.totalorder %s153, %s155
    %p162 = scmp.eq.s32.totalorder %s19, 1
    %p163 = por %p161, %p162
    %p164 = scmp.ne.s32.totalorder %s155, %s156
    %p165 = scmp.eq.s32.totalorder %s19, 0
    %p166 = por %p164, %p165
    %p167 = scmp.ne.s32.totalorder %s155, %s156
    %p168 = scmp.eq.s32.totalorder %s20, 1
    %p169 = por %p167, %p168
    %p171 = scmp.ne.s32.totalorder %s156, %s170
    %p172 = scmp.eq.s32.totalorder %s20, 0
    %p173 = por %p171, %p172
    %s175 = sadd.s32 %s174, 1
    %p178 = scmp.eq.s32.totalorder %s14, 1
    %p179 = scmp.ne.s32.totalorder %s174, %s176
    %p180 = scmp.eq.s32.totalorder %s14, 0
    %p181 = por %p179, %p180
    %p182 = scmp.ne.s32.totalorder %s174, %s176
    %p183 = scmp.eq.s32.totalorder %s19, 1
    %p184 = por %p182, %p183
    %p185 = scmp.ne.s32.totalorder %s176, %s177
    %p186 = scmp.eq.s32.totalorder %s19, 0
    %p187 = por %p185, %p186
    %p188 = scmp.ne.s32.totalorder %s176, %s177
    %p189 = scmp.eq.s32.totalorder %s20, 1
    %p190 = por %p188, %p189
    %p192 = scmp.ne.s32.totalorder %s177, %s191
    %p193 = scmp.eq.s32.totalorder %s20, 0
    %p194 = por %p192, %p193
    %s195 = ssub.s32 %s14, %s21
    %p196 = scmp.eq.s32.totalorder %s195, 0
    %s198 = sadd.s32 %s197, 1
    %s199 = scalar_select %p196, %s197, %s198
    %p202 = pneg %p196
    %p203 = scmp.eq.s32.totalorder %s14, 1
    %p204 = por %p202, %p203
    %p205 = scmp.ne.s32.totalorder %s197, %s200
    %p206 = scmp.eq.s32.totalorder %s14, 0
    %p207 = por %p205, %p206
    %p208 = scmp.ne.s32.totalorder %s197, %s200
    %p209 = scmp.eq.s32.totalorder %s19, 1
    %p210 = por %p208, %p209
    %p211 = scmp.ne.s32.totalorder %s200, %s201
    %p212 = scmp.eq.s32.totalorder %s19, 0
    %p213 = por %p211, %p212
    %p214 = scmp.ne.s32.totalorder %s200, %s201
    %p215 = scmp.eq.s32.totalorder %s20, 1
    %p216 = por %p214, %p215
    %p218 = scmp.ne.s32.totalorder %s201, %s217
    %p219 = scmp.eq.s32.totalorder %s20, 0
    %p220 = por %p218, %p219
    %p221 = scmp.le.s32.totalorder 1, %s14
    %p222 = scmp.lt.s32.totalorder %s14, 3
    %p223 = pnand %p221, %p222
    %p224 = pneg %p223
    // Predicated region
    $region9: #{_lambda_.28} parent=5 // pred_check
      _
    $region10: #{_lambda_.28} parent=5 // pred_check_branch
      %226 = sbr.rel (%p223) target = $region12
    $region11: #{_lambda_.28} parent=5 // pred_region
      %s227 = ssub.s32 %s14, 1
      // Predicated region
      $region13: #{_lambda_.28} parent=11 // pred_check
        %p228 = pneg %p61
      $region14: #{_lambda_.28} parent=11 // pred_check_branch
        %230 = sbr.rel (%p228) target = $region16
      $region15: #{_lambda_.28} parent=11 // pred_region
        _
      $region16: #{_lambda_.28} parent=11 // pred_fallthru
        _
      // Predicated region
      $region17: #{_lambda_.28} parent=11 // pred_check
        %p231 = pneg %p82
      $region18: #{_lambda_.28} parent=11 // pred_check_branch
        %233 = sbr.rel (%p231) target = $region20
      $region19: #{_lambda_.28} parent=11 // pred_region
        _
      $region20: #{_lambda_.28} parent=11 // pred_fallthru
        _
      // Predicated region
      $region21: #{_lambda_.28} parent=11 // pred_check
        %p234 = pneg %p103
      $region22: #{_lambda_.28} parent=11 // pred_check_branch
        %236 = sbr.rel (%p234) target = $region24
      $region23: #{_lambda_.28} parent=11 // pred_region
        _
      $region24: #{_lambda_.28} parent=11 // pred_fallthru
        _
      // Predicated region
      $region25: #{_lambda_.28} parent=11 // pred_check
        %p237 = pneg %p124
      $region26: #{_lambda_.28} parent=11 // pred_check_branch
        %239 = sbr.rel (%p237) target = $region28
      $region27: #{_lambda_.28} parent=11 // pred_region
        _
      $region28: #{_lambda_.28} parent=11 // pred_fallthru
        _
      // Predicated region
      $region29: #{_lambda_.28} parent=11 // pred_check
        %p240 = pneg %p145
      $region30: #{_lambda_.28} parent=11 // pred_check_branch
        %242 = sbr.rel (%p240) target = $region32
      $region31: #{_lambda_.28} parent=11 // pred_region
        _
      $region32: #{_lambda_.28} parent=11 // pred_fallthru
        _
      // Predicated region
      $region33: #{_lambda_.28} parent=11 // pred_check
        %p243 = pneg %p166
      $region34: #{_lambda_.28} parent=11 // pred_check_branch
        %245 = sbr.rel (%p243) target = $region36
      $region35: #{_lambda_.28} parent=11 // pred_region
        _
      $region36: #{_lambda_.28} parent=11 // pred_fallthru
        _
      // Predicated region
      $region37: #{_lambda_.28} parent=11 // pred_check
        %p246 = pneg %p187
      $region38: #{_lambda_.28} parent=11 // pred_check_branch
        %248 = sbr.rel (%p246) target = $region40
      $region39: #{_lambda_.28} parent=11 // pred_region
        _
      $region40: #{_lambda_.28} parent=11 // pred_fallthru
        _
    $region12: #{_lambda_.28} parent=5 // pred_fallthru
      _
    %p249 = scmp.lt.s32.totalorder %s14, 2
    // Predicated region
    $region41: #{_lambda_.28} parent=5 // pred_check
      %p250 = pneg %p249
    $region42: #{_lambda_.28} parent=5 // pred_check_branch
      %252 = sbr.rel (%p250) target = $region44
    $region43: #{_lambda_.28} parent=5 // pred_region
      // Predicated region
      $region45: #{_lambda_.28} parent=43 // pred_check
        %p253 = pneg %p34
      $region46: #{_lambda_.28} parent=43 // pred_check_branch
        %255 = sbr.rel (%p253) target = $region48
      $region47: #{_lambda_.28} parent=43 // pred_region
        %p256 = scmp.lt.s32.totalorder %s14, 1
        %s257 = scalar_select %p256, %s14, 1
        %s258 = scalar_lea.vmem %s0, %s257
      $region48: #{_lambda_.28} parent=43 // pred_fallthru
        _
    $region44: #{_lambda_.28} parent=5 // pred_fallthru
      _
    %p259 = scmp.le.s32.totalorder 1, %s14
    %p260 = scmp.lt.s32.totalorder %s14, 3
    %p261 = pnand %p259, %p260
    %p262 = pneg %p261
    // Predicated region
    $region49: #{_lambda_.28} parent=5 // pred_check
      _
    $region50: #{_lambda_.28} parent=5 // pred_check_branch
      %264 = sbr.rel (%p261) target = $region52
    $region51: #{_lambda_.28} parent=5 // pred_region
      %s265 = ssub.s32 %s14, 1
      %p266 = scmp.lt.s32.totalorder %s19, 1
      %s267 = scalar_select %p266, %s19, 1
      %s268 = scalar_lea.vmem %s0, %s267
      %p269 = pneg %p40
      %p270 = pneg %p37
      %p271 = pneg %p61
      %p272 = pneg %p58
      %p273 = pneg %p82
      %p274 = pneg %p79
      %p275 = pneg %p103
      %p276 = pneg %p100
      %p277 = pneg %p124
      %p278 = pneg %p121
      %p279 = pneg %p145
      %p280 = pneg %p142
      %p281 = pneg %p166
      %p282 = pneg %p163
      %p283 = pneg %p187
      %p284 = pneg %p184
      %p285 = pneg %p213
      %p286 = pneg %p210
      %p287 = scmp.lt.s32.totalorder %s19, 1
      %s288 = scalar_select %p287, %s19, 1
      %s289 = scalar_lea.vmem %s8, %s288
      %p290 = scmp.lt.s32.totalorder %s19, 1
      %s291 = scalar_select %p290, %s19, 1
      %s292 = scalar_lea.vmem %s0, %s291
      %p293 = scmp.lt.s32.totalorder %s19, 1
      %s294 = scalar_select %p293, %s19, 1
      %s295 = scalar_lea.vmem %s8, %s294
      %v297 = vld [vmem:[%s292] sm:$0x1]
      %v298 = vld [vmem:[%s1] sm:$0xf]
      %v299 = vld [vmem:[%s1 + $0x4] sm:$0xf]
      %v300 = vld [vmem:[%s1 + $0x8] sm:$0xf]
      %v301 = vld [vmem:[%s1 + $0xc] sm:$0xf]
      %v302 = vld [vmem:[%s1 + $0x10] sm:$0xf]
      %v303 = vld [vmem:[%s1 + $0x14] sm:$0xf]
      %v304 = vld [vmem:[%s1 + $0x18] sm:$0xf]
      %v305 = vld [vmem:[%s1 + $0x1c] sm:$0xf]
      %v306 = vld [vmem:[%s2] sm:$0x1]
      %v315 = vunpack.c.l.b16 %v298
      %v316 = vunpack.c.l.b16 %v299
      %v317 = vunpack.c.l.b16 %v300
      %v318 = vunpack.c.l.b16 %v301
      %v319 = vunpack.c.l.b16 %v302
      %v320 = vunpack.c.l.b16 %v303
      %v321 = vunpack.c.l.b16 %v304
      %v322 = vunpack.c.l.b16 %v305
      %v323 = vpack.c.b16 %v316, %v315
      %v324 = vpack.c.b16 %v318, %v317
      %v325 = vpack.c.b16 %v320, %v319
      %v326 = vpack.c.b16 %v322, %v321
      %vm331 = vcmask 523264
      %v333 = vsel %vm331, %v297, 0
      %335 = vmatprep.subr.bf16.mxu0 0
      %336 = vmatpush1.bf16.msra.mxu0 %v323
      %337 = vmatprep.subr.bf16.mxu0 0
      %338 = vmatpush1.bf16.msra.mxu0 %v324
      %339 = vmatprep.subr.bf16.mxu0 0
      %340 = vmatpush1.bf16.msra.mxu0 %v325
      %341 = vmatprep.subr.bf16.mxu0 0
      %342 = vmatpush1.bf16.msra.mxu0 %v326
      %343 = vmatprep.subr.bf16.mxu0 0
      %344 = vmatpush1.bf16.msra.mxu0 0
      %345 = vmatprep.subr.bf16.mxu0 0
      %346 = vmatpush1.bf16.msra.mxu0 0
      %347 = vmatprep.subr.bf16.mxu0 0
      %348 = vmatpush1.bf16.msra.mxu0 0
      %349 = vmatprep.subr.bf16.mxu0 0
      %350 = vmatpush1.bf16.msra.mxu0 0
      %351 = vmatprep.subr.bf16.mxu0 0
      %352 = vmatpush1.bf16.msra.mxu0 0
      %353 = vmatprep.subr.bf16.mxu0 0
      %354 = vmatpush1.bf16.msra.mxu0 0
      %355 = vmatprep.subr.bf16.mxu0 0
      %356 = vmatpush1.bf16.msra.mxu0 0
      %357 = vmatprep.subr.bf16.mxu0 0
      %358 = vmatpush1.bf16.msra.mxu0 0
      %359 = vmatprep.subr.bf16.mxu0 0
      %360 = vmatpush1.bf16.msra.mxu0 0
      %361 = vmatprep.subr.bf16.mxu0 0
      %362 = vmatpush1.bf16.msra.mxu0 0
      %363 = vmatprep.subr.bf16.mxu0 0
      %364 = vmatpush1.bf16.msra.mxu0 0
      %365 = vmatprep.subr.bf16.mxu0 0
      %366 = vmatpush1.bf16.msra.mxu0 0
      %367 = vmatprep.mubr.bf16.mxu0 0
      %368 = vmatmul.mubr.bf16.gmra.mrb[0].mxu0 %v333
      %v369 = vpop.f32.mrb[0].mxu0
      %v370 = vadd.f32 %v306, %v369
      %v371 = vpop.f32.mrb[0].mxu0
      %v372 = vpop.f32.mrb[0].mxu0
      %v373 = vpop.f32.mrb[0].mxu0
      %374 = vdwg.mxu0
      %v375 = vmax.f32 %v370, 0.0
      %vm376 = vcmask 261120
      %377 = vst.msk [vmem:[#allocation2] sm:$0xff] %vm376, 0.0
      %378 = vst.msk [vmem:[#allocation2 + $0x9] sm:$0xff] %vm376, 0.0
      %vm379 = vcmask 253952
      %380 = vst.msk [vmem:[#allocation2 + $0x8] sm:$0x1] %vm379, %v375
      %v381 = vld [vmem:[#allocation2 + $0x6] sm:$0x1]
      %v382 = vld [vmem:[%s3] sm:$0x1]
      %v383 = vmul.f32 %v381, %v382
      %v384 = vadd.f32 %v383, 0.0
      %v385 = vld [vmem:[#allocation2 + $0x7] sm:$0x1]
      %v386 = vld [vmem:[%s3 + $0x1] sm:$0x1]
      %v387 = vmul.f32 %v385, %v386
      %v388 = vadd.f32 %v387, 0.0
      %v389 = vld [vmem:[#allocation2 + $0x8] sm:$0x1]
      %v390 = vld [vmem:[%s3 + $0x2] sm:$0x1]
      %v391 = vmul.f32 %v389, %v390
      %v392 = vadd.f32 %v391, 0.0
      %s393 = scalar_lea.vmem %s3, 4
      %v394 = vld [vmem:[%s393] sm:$0x1]
      %v395 = vmul.f32 %v385, %v394
      %v396 = vadd.f32 %v384, %v395
      %v397 = vld [vmem:[%s393 + $0x1] sm:$0x1]
      %v398 = vmul.f32 %v389, %v397
      %v399 = vadd.f32 %v388, %v398
      %v400 = vld [vmem:[#allocation2 + $0x9] sm:$0x1]
      %v401 = vld [vmem:[%s393 + $0x2] sm:$0x1]
      %v402 = vmul.f32 %v400, %v401
      %v403 = vadd.f32 %v392, %v402
      %s404 = scalar_lea.vmem %s3, 8
      %v405 = vld [vmem:[%s404] sm:$0x1]
      %v406 = vmul.f32 %v389, %v405
      %v407 = vadd.f32 %v396, %v406
      %v408 = vld [vmem:[%s404 + $0x1] sm:$0x1]
      %v409 = vmul.f32 %v400, %v408
      %v410 = vadd.f32 %v399, %v409
      %v411 = vld [vmem:[#allocation2 + $0xa] sm:$0x1]
      %v412 = vld [vmem:[%s404 + $0x2] sm:$0x1]
      %v413 = vmul.f32 %v411, %v412
      %v414 = vadd.f32 %v403, %v413
      %v415 = vmul.f32 %v407, 0.0
      %v416 = vadd.f32 %v415, %v410
      %v417 = vmul.f32 %v414, 0.0
      %v418 = vadd.f32 %v416, %v417
      %v419 = vld [vmem:[%s4] sm:$0x1]
      %v420 = vadd.f32 %v418, %v419
      %v421 = vpack.c.bf16 %v420, %v420
      %v422 = vld [vmem:[%s5] sm:$0xf]
      %v423 = vld [vmem:[%s5 + $0x4] sm:$0xf]
      %v424 = vld [vmem:[%s5 + $0x8] sm:$0xf]
      %v425 = vld [vmem:[%s5 + $0xc] sm:$0xf]
      %v426 = vld [vmem:[%s6] sm:$0x1]
      %v431 = vunpack.c.l.b16 %v422
      %v432 = vunpack.c.l.b16 %v423
      %v433 = vunpack.c.l.b16 %v424
      %v434 = vunpack.c.l.b16 %v425
      %v435 = vpack.c.b16 %v432, %v431
      %v436 = vpack.c.b16 %v434, %v433
      %v440 = vsel %vm376, %v421, 0
      %442 = vmatprep.subr.bf16.mxu0 0
      %443 = vmatpush1.bf16.msra.mxu0 %v435
      %444 = vmatprep.subr.bf16.mxu0 0
      %445 = vmatpush1.bf16.msra.mxu0 %v436
      %446 = vmatprep.subr.bf16.mxu0 0
      %447 = vmatpush1.bf16.msra.mxu0 0
      %448 = vmatprep.subr.bf16.mxu0 0
      %449 = vmatpush1.bf16.msra.mxu0 0
      %450 = vmatprep.subr.bf16.mxu0 0
      %451 = vmatpush1.bf16.msra.mxu0 0
      %452 = vmatprep.subr.bf16.mxu0 0
      %453 = vmatpush1.bf16.msra.mxu0 0
      %454 = vmatprep.subr.bf16.mxu0 0
      %455 = vmatpush1.bf16.msra.mxu0 0
      %456 = vmatprep.subr.bf16.mxu0 0
      %457 = vmatpush1.bf16.msra.mxu0 0
      %458 = vmatprep.subr.bf16.mxu0 0
      %459 = vmatpush1.bf16.msra.mxu0 0
      %460 = vmatprep.subr.bf16.mxu0 0
      %461 = vmatpush1.bf16.msra.mxu0 0
      %462 = vmatprep.subr.bf16.mxu0 0
      %463 = vmatpush1.bf16.msra.mxu0 0
      %464 = vmatprep.subr.bf16.mxu0 0
      %465 = vmatpush1.bf16.msra.mxu0 0
      %466 = vmatprep.subr.bf16.mxu0 0
      %467 = vmatpush1.bf16.msra.mxu0 0
      %468 = vmatprep.subr.bf16.mxu0 0
      %469 = vmatpush1.bf16.msra.mxu0 0
      %470 = vmatprep.subr.bf16.mxu0 0
      %471 = vmatpush1.bf16.msra.mxu0 0
      %472 = vmatprep.subr.bf16.mxu0 0
      %473 = vmatpush1.bf16.msra.mxu0 0
      %474 = vmatprep.mubr.bf16.mxu0 0
      %475 = vmatmul.mubr.bf16.gmra.mrb[0].mxu0 %v440
      %v476 = vpop.f32.mrb[0].mxu0
      %v477 = vadd.f32 %v426, %v476
      %v478 = vpop.f32.mrb[0].mxu0
      %v479 = vpop.f32.mrb[0].mxu0
      %v480 = vpop.f32.mrb[0].mxu0
      %481 = vdwg.mxu0
      %v482 = vmax.f32 %v477, 0.0
      %v483 = vld [vmem:[%s7] sm:$0xf]
      %v484 = vld [vmem:[%s7 + $0x4] sm:$0xf]
      %v485 = vld [vmem:[%s7 + $0x8] sm:$0xf]
      %v486 = vld [vmem:[%s7 + $0xc] sm:$0xf]
      %v487 = vld [vmem:[%s7 + $0x10] sm:$0xf]
      %v488 = vld [vmem:[%s7 + $0x14] sm:$0xf]
      %v489 = vld [vmem:[%s7 + $0x18] sm:$0xf]
      %v490 = vld [vmem:[%s7 + $0x1c] sm:$0xf]
      %v499 = vunpack.c.l.b16 %v483
      %v500 = vunpack.c.l.b16 %v484
      %v501 = vunpack.c.l.b16 %v485
      %v502 = vunpack.c.l.b16 %v486
      %v503 = vunpack.c.l.b16 %v487
      %v504 = vunpack.c.l.b16 %v488
      %v505 = vunpack.c.l.b16 %v489
      %v506 = vunpack.c.l.b16 %v490
      %v507 = vpack.c.b16 %v500, %v499
      %v508 = vpack.c.b16 %v502, %v501
      %v509 = vpack.c.b16 %v504, %v503
      %v510 = vpack.c.b16 %v506, %v505
      %515 = vmatprep.subr.bf16.mxu0 0
      %516 = vmatpush1.bf16.msra.mxu0 %v507
      %517 = vmatprep.subr.bf16.mxu0 0
      %518 = vmatpush1.bf16.msra.mxu0 %v508
      %519 = vmatprep.subr.bf16.mxu0 0
      %520 = vmatpush1.bf16.msra.mxu0 %v509
      %521 = vmatprep.subr.bf16.mxu0 0
      %522 = vmatpush1.bf16.msra.mxu0 %v510
      %523 = vmatprep.subr.bf16.mxu0 0
      %524 = vmatpush1.bf16.msra.mxu0 0
      %525 = vmatprep.subr.bf16.mxu0 0
      %526 = vmatpush1.bf16.msra.mxu0 0
      %527 = vmatprep.subr.bf16.mxu0 0
      %528 = vmatpush1.bf16.msra.mxu0 0
      %529 = vmatprep.subr.bf16.mxu0 0
      %530 = vmatpush1.bf16.msra.mxu0 0
      %531 = vmatprep.subr.bf16.mxu0 0
      %532 = vmatpush1.bf16.msra.mxu0 0
      %533 = vmatprep.subr.bf16.mxu0 0
      %534 = vmatpush1.bf16.msra.mxu0 0
      %535 = vmatprep.subr.bf16.mxu0 0
      %536 = vmatpush1.bf16.msra.mxu0 0
      %537 = vmatprep.subr.bf16.mxu0 0
      %538 = vmatpush1.bf16.msra.mxu0 0
      %539 = vmatprep.subr.bf16.mxu0 0
      %540 = vmatpush1.bf16.msra.mxu0 0
      %541 = vmatprep.subr.bf16.mxu0 0
      %542 = vmatpush1.bf16.msra.mxu0 0
      %543 = vmatprep.subr.bf16.mxu0 0
      %544 = vmatpush1.bf16.msra.mxu0 0
      %545 = vmatprep.subr.bf16.mxu0 0
      %546 = vmatpush1.bf16.msra.mxu0 0
      %547 = vmatprep.mubr.bf16.mxu0 0
      %548 = vmatmul.mubr.bf16.gmra.mrb[0].mxu0 %v333
      %v549 = vpop.f32.mrb[0].mxu0
      %v550 = vadd.f32 0.0, %v549
      %v551 = vpop.f32.mrb[0].mxu0
      %v552 = vpop.f32.mrb[0].mxu0
      %v553 = vpop.f32.mrb[0].mxu0
      %554 = vdwg.mxu0
      %v555 = vadd.f32 %v482, %v550
      %v556 = vpack.c.bf16 %v555, %v555
      %vm557 = vcmask 516096
      %vm558 = vsmask.f32 256
      %vm559 = vmand %vm557, %vm558
      %v560 = vld [vmem:[%s295] sm:$0x1]
      %v561 = vsel %vm559, %v556, %v560
      %562 = vst [vmem:[%s295] sm:$0x1] %v561
      %p563 = scmp.lt.s32.totalorder %s19, 1
      %s564 = scalar_select %p563, %s19, 1
      %s565 = scalar_lea.vmem %s8, %s564
      // Predicated region
      $region53: #{_lambda_.28} parent=51 // pred_check
        %p566 = pneg %p210
      $region54: #{_lambda_.28} parent=51 // pred_check_branch
        %568 = sbr.rel (%p566) target = $region56
      $region55: #{_lambda_.28} parent=51 // pred_region
        _
      $region56: #{_lambda_.28} parent=51 // pred_fallthru
        _
    $region52: #{_lambda_.28} parent=5 // pred_fallthru
      _
    %p569 = scmp.le.s32.totalorder 2, %s14
    // Predicated region
    $region57: #{_lambda_.28} parent=5 // pred_check
      %p570 = pneg %p569
    $region58: #{_lambda_.28} parent=5 // pred_check_branch
      %572 = sbr.rel (%p570) target = $region60
    $region59: #{_lambda_.28} parent=5 // pred_region
      %s573 = ssub.s32 %s14, 2
      // Predicated region
      $region61: #{_lambda_.28} parent=59 // pred_check
        %p574 = pneg %p216
      $region62: #{_lambda_.28} parent=59 // pred_check_branch
        %576 = sbr.rel (%p574) target = $region64
      $region63: #{_lambda_.28} parent=59 // pred_region
        %p577 = scmp.lt.s32.totalorder %s20, 1
        %s578 = scalar_select %p577, %s20, 1
        %s579 = scalar_lea.vmem %s8, %s578
      $region64: #{_lambda_.28} parent=59 // pred_fallthru
        _
    $region60: #{_lambda_.28} parent=5 // pred_fallthru
      _
  $region6: #{_lambda_.28} parent=0 // loop_footer
    %s18 = sadd.s32 1, %s14
  $region7: #{_lambda_.28} parent=0 // loop_footer_branch
    %13 = sbr.rel target = $region3
  $region8: #{_lambda_.28} parent=0 // loop_exit
    _

</llo_original>
